<compile_context>
chip_gen: v7x
topology: tpu7x:2x2x1
jax: 0.10.0
libtpu: 0.0.40
codegen_flags: <defaults>
</compile_context>

<pallas_src>
import math

import jax
import jax.numpy as jnp
from jax.experimental import pallas as pl
from jax.experimental.pallas import tpu as pltpu  # noqa: F401

# ---------------- model dims (small, deterministic) ----------------
B = 2        # batch
S = 8        # target sequence length
SC = 12      # cross (encoder) sequence length
D = 32       # d_model
H = 4        # n_heads
E = D // H   # head dim
DFF = 64     # d_ff
NUM_LAYERS = 2
EPS = 1e-5   # PyTorch LayerNorm default


# ---------------- kernel helpers ----------------
def _layer_norm(v, gamma_row, beta_row):
    mu = jnp.mean(v, axis=-1, keepdims=True)
    var = jnp.mean((v - mu) ** 2, axis=-1, keepdims=True)
    return (v - mu) * jax.lax.rsqrt(var + EPS) * gamma_row + beta_row


def _mha(x_q, x_kv, w_ref, b_ref, layer, base, mask):
    """Multi-head attention for one batch element.

    w_ref: (NUM_LAYERS, 8, D, D)  stacked [Wq,Wk,Wv,Wo]_self ++ [Wq,Wk,Wv,Wo]_cross,
           stored as (in, out) so the kernel does x @ W (== x @ W_pt.T).
    b_ref: (NUM_LAYERS, 8, D)     matching biases.
    base : 0 -> self-attention weights, 4 -> cross-attention weights.
    mask : (Lq, Lk) bool (True = masked out) or None.
    """
    scale = 1.0 / math.sqrt(E)
    # scale folded into q once (instead of scaling every per-head score matrix)
    q = (jnp.dot(x_q, w_ref[layer, base + 0], preferred_element_type=jnp.float32)
         + b_ref[layer, base + 0:base + 1, :]) * scale
    k = (jnp.dot(x_kv, w_ref[layer, base + 1], preferred_element_type=jnp.float32)
         + b_ref[layer, base + 1:base + 2, :])
    v = (jnp.dot(x_kv, w_ref[layer, base + 2], preferred_element_type=jnp.float32)
         + b_ref[layer, base + 2:base + 3, :])

    # heads as a leading batch dim -> one batched contraction instead of H tiny matmuls
    qh = jnp.stack([q[:, h * E:(h + 1) * E] for h in range(H)], axis=0)   # (H, Lq, E)
    kh = jnp.stack([k[:, h * E:(h + 1) * E] for h in range(H)], axis=0)   # (H, Lk, E)
    vh = jnp.stack([v[:, h * E:(h + 1) * E] for h in range(H)], axis=0)   # (H, Lk, E)

    s = jnp.einsum('hqe,hke->hqk', qh, kh, preferred_element_type=jnp.float32)
    if mask is not None:
        s = jnp.where(mask[None, :, :], -1e30, s)
    p = jnp.exp(s - jnp.max(s, axis=-1, keepdims=True))
    p = p * pl.reciprocal(jnp.sum(p, axis=-1, keepdims=True), approx=True)
    o = jnp.einsum('hqk,hke->hqe', p, vh, preferred_element_type=jnp.float32)  # (H, Lq, E)
    o = jnp.concatenate([o[h] for h in range(H)], axis=-1)                     # (Lq, D)
    return (jnp.dot(o, w_ref[layer, base + 3], preferred_element_type=jnp.float32)
            + b_ref[layer, base + 3:base + 4, :])


# ---------------- fused decoder kernel ----------------
def decoder_kernel(x_ref, cross_ref, wat_ref, bat_ref, gam_ref, bet_ref,
                   w1_ref, b1_ref, w2_ref, b2_ref, o_ref):
    # Causal mask built ONCE (hoisted out of every attention call).
    row = jax.lax.broadcasted_iota(jnp.int32, (S, S), 0)
    col = jax.lax.broadcasted_iota(jnp.int32, (S, S), 1)
    causal_mask = col > row                                       # True = masked out

    for b in range(B):                                            # static unroll, B == 2
        x = x_ref[b].astype(jnp.float32)                          # (S, D)
        cross = cross_ref[b].astype(jnp.float32)                  # (SC, D)

        for l in range(NUM_LAYERS):                               # static unroll, 2 layers
            # self-attention (causal) + residual + LN1   (dropout == identity, eval mode)
            x = _layer_norm(x + _mha(x, x, wat_ref, bat_ref, l, 0, causal_mask),
                            gam_ref[3 * l + 0:3 * l + 1, :],
                            bet_ref[3 * l + 0:3 * l + 1, :])
            # cross-attention (unmasked) + residual + LN2
            x = _layer_norm(x + _mha(x, cross, wat_ref, bat_ref, l, 4, None),
                            gam_ref[3 * l + 1:3 * l + 2, :],
                            bet_ref[3 * l + 1:3 * l + 2, :])
            # position-wise FFN (kernel_size=1 convs == matmuls over channels), ReLU
            y = jnp.maximum(
                jnp.dot(x, w1_ref[l], preferred_element_type=jnp.float32) + b1_ref[l], 0.0)
            y = jnp.dot(y, w2_ref[l], preferred_element_type=jnp.float32) + b2_ref[l]
            # residual + LN3
            x = _layer_norm(x + y,
                            gam_ref[3 * l + 2:3 * l + 3, :],
                            bet_ref[3 * l + 2:3 * l + 3, :])

        # final Decoder LayerNorm fused into the same kernel
        x = _layer_norm(x,
                        gam_ref[3 * NUM_LAYERS:3 * NUM_LAYERS + 1, :],
                        bet_ref[3 * NUM_LAYERS:3 * NUM_LAYERS + 1, :])
        o_ref[b] = x.astype(o_ref.dtype)


# ---------------- wrapper ----------------
@jax.jit
def decoder_forward(x, cross, params):
    # Single pallas_call, no grid: every operand is tiny, so the full arrays live in VMEM
    # for the whole (fused) forward pass.
    return pl.pallas_call(
        decoder_kernel,
        out_shape=jax.ShapeDtypeStruct((B, S, D), x.dtype),
    )(x, cross,
      params["w_attn"], params["b_attn"],
      params["gammas"], params["betas"],
      params["w1"], params["b1"], params["w2"], params["b2"])


# ---------------- deterministic parameter init ----------------
def init_params(key):
    ks = jax.random.split(key, 6)
    scale = 0.1
    return {
        # per-layer stacked attention weights: [Wq,Wk,Wv,Wo]_self ++ [Wq,Wk,Wv,Wo]_cross
        "w_attn": jax.random.normal(ks[0], (NUM_LAYERS, 8, D, D), jnp.float32) * scale,
        "b_attn": jax.random.normal(ks[1], (NUM_LAYERS, 8, D), jnp.float32) * scale,
        # LN params: rows 3l..3l+2 = per-layer LN1..LN3, last row = final Decoder norm
        "gammas": jnp.ones((3 * NUM_LAYERS + 1, D), jnp.float32),
        "betas": jnp.zeros((3 * NUM_LAYERS + 1, D), jnp.float32),
        # FFN (1x1 conv) weights stacked per layer, stored as (in, out)
        "w1": jax.random.normal(ks[2], (NUM_LAYERS, D, DFF), jnp.float32) * scale,
        "b1": jax.random.normal(ks[3], (NUM_LAYERS, 1, DFF), jnp.float32) * scale,
        "w2": jax.random.normal(ks[4], (NUM_LAYERS, DFF, D), jnp.float32) * scale,
        "b2": jax.random.normal(ks[5], (NUM_LAYERS, 1, D), jnp.float32) * scale,
    }


if __name__ == "__main__":
    key = jax.random.PRNGKey(0)
    k_x, k_c, k_p = jax.random.split(key, 3)

    x = jax.random.normal(k_x, (B, S, D), jnp.float32)       # decoder input  (B, L, d_model)
    cross = jax.random.normal(k_c, (B, SC, D), jnp.float32)  # encoder output (B, S, d_model)
    params = init_params(k_p)

    # TODO(synk): x_mask / cross_mask are None here; self-attn uses the standard causal mask,
    # cross-attn is unmasked (typical Informer decoder configuration).
    out = decoder_forward(x, cross, params)
    out = jax.block_until_ready(out)

    assert out.shape == (B, S, D) and bool(jnp.all(jnp.isfinite(out)))
    print("KERNEL_OK")
</pallas_src>

<mosaic_0001>
module attributes {stable_mosaic.version = 11 : i64} {
  func.func @decoder_kernel(%arg0: memref<2x8x32xf32, #tpu.memory_space<vmem>>, %arg1: memref<2x12x32xf32, #tpu.memory_space<vmem>>, %arg2: memref<2x8x32x32xf32, #tpu.memory_space<vmem>>, %arg3: memref<2x8x32xf32, #tpu.memory_space<vmem>>, %arg4: memref<7x32xf32, #tpu.memory_space<vmem>>, %arg5: memref<7x32xf32, #tpu.memory_space<vmem>>, %arg6: memref<2x32x64xf32, #tpu.memory_space<vmem>>, %arg7: memref<2x1x64xf32, #tpu.memory_space<vmem>>, %arg8: memref<2x64x32xf32, #tpu.memory_space<vmem>>, %arg9: memref<2x1x32xf32, #tpu.memory_space<vmem>>, %arg10: memref<2x8x32xf32, #tpu.memory_space<vmem>>) attributes {dimension_semantics = [], scalar_prefetch = 0 : i64, scratch_operands = 0 : i64, tpu.core_type = #tpu.core_type<tc>} {
    %0 = tpu.iota {dimensions = array<i32: 0>} : vector<8x8xi32>
    %1 = tpu.iota {dimensions = array<i32: 1>} : vector<8x8xi32>
    %2 = arith.cmpi sgt, %1, %0 : vector<8x8xi32>
    %c0 = arith.constant 0 : index
    %c0_0 = arith.constant 0 : index
    %c0_1 = arith.constant 0 : index
    %3 = vector.load %arg0[%c0, %c0_0, %c0_1] : memref<2x8x32xf32, #tpu.memory_space<vmem>>, vector<1x8x32xf32>
    %4 = vector.shape_cast %3 : vector<1x8x32xf32> to vector<8x32xf32>
    %c0_2 = arith.constant 0 : index
    %c0_3 = arith.constant 0 : index
    %c0_4 = arith.constant 0 : index
    %5 = vector.load %arg1[%c0_2, %c0_3, %c0_4] : memref<2x12x32xf32, #tpu.memory_space<vmem>>, vector<1x12x32xf32>
    %6 = vector.shape_cast %5 : vector<1x12x32xf32> to vector<12x32xf32>
    %c0_5 = arith.constant 0 : index
    %c0_6 = arith.constant 0 : index
    %c0_7 = arith.constant 0 : index
    %c0_8 = arith.constant 0 : index
    %7 = vector.load %arg2[%c0_5, %c0_6, %c0_7, %c0_8] : memref<2x8x32x32xf32, #tpu.memory_space<vmem>>, vector<1x1x32x32xf32>
    %8 = vector.shape_cast %7 : vector<1x1x32x32xf32> to vector<32x32xf32>
    %cst = arith.constant dense<0.000000e+00> : vector<8x32xf32>
    %9 = tpu.matmul %4, %8, %cst {dimension_numbers = #tpu.dot_dimension_numbers<[1], [0], [0], [1], [0, 0, 1, 1], [], []>} : vector<8x32xf32>, vector<32x32xf32>, vector<8x32xf32> -> vector<8x32xf32>
    %c0_9 = arith.constant 0 : index
    %c0_10 = arith.constant 0 : index
    %c0_11 = arith.constant 0 : index
    %10 = vector.load %arg3[%c0_9, %c0_10, %c0_11] : memref<2x8x32xf32, #tpu.memory_space<vmem>>, vector<1x1x32xf32>
    %11 = vector.shape_cast %10 : vector<1x1x32xf32> to vector<1x32xf32>
    %12 = vector.broadcast %11 : vector<1x32xf32> to vector<8x32xf32>
    %13 = arith.addf %9, %12 : vector<8x32xf32>
    %cst_12 = arith.constant 0.353553385 : f32
    %14 = vector.broadcast %cst_12 : f32 to vector<8x32xf32>
    %15 = arith.mulf %13, %14 : vector<8x32xf32>
    %c0_13 = arith.constant 0 : index
    %c1 = arith.constant 1 : index
    %c0_14 = arith.constant 0 : index
    %c0_15 = arith.constant 0 : index
    %16 = vector.load %arg2[%c0_13, %c1, %c0_14, %c0_15] : memref<2x8x32x32xf32, #tpu.memory_space<vmem>>, vector<1x1x32x32xf32>
    %17 = vector.shape_cast %16 : vector<1x1x32x32xf32> to vector<32x32xf32>
    %cst_16 = arith.constant dense<0.000000e+00> : vector<8x32xf32>
    %18 = tpu.matmul %4, %17, %cst_16 {dimension_numbers = #tpu.dot_dimension_numbers<[1], [0], [0], [1], [0, 0, 1, 1], [], []>} : vector<8x32xf32>, vector<32x32xf32>, vector<8x32xf32> -> vector<8x32xf32>
    %c0_17 = arith.constant 0 : index
    %c1_18 = arith.constant 1 : index
    %c0_19 = arith.constant 0 : index
    %19 = vector.load %arg3[%c0_17, %c1_18, %c0_19] : memref<2x8x32xf32, #tpu.memory_space<vmem>>, vector<1x1x32xf32>
    %20 = vector.shape_cast %19 : vector<1x1x32xf32> to vector<1x32xf32>
    %21 = vector.broadcast %20 : vector<1x32xf32> to vector<8x32xf32>
    %22 = arith.addf %18, %21 : vector<8x32xf32>
    %c0_20 = arith.constant 0 : index
    %c2 = arith.constant 2 : index
    %c0_21 = arith.constant 0 : index
    %c0_22 = arith.constant 0 : index
    %23 = vector.load %arg2[%c0_20, %c2, %c0_21, %c0_22] : memref<2x8x32x32xf32, #tpu.memory_space<vmem>>, vector<1x1x32x32xf32>
    %24 = vector.shape_cast %23 : vector<1x1x32x32xf32> to vector<32x32xf32>
    %cst_23 = arith.constant dense<0.000000e+00> : vector<8x32xf32>
    %25 = tpu.matmul %4, %24, %cst_23 {dimension_numbers = #tpu.dot_dimension_numbers<[1], [0], [0], [1], [0, 0, 1, 1], [], []>} : vector<8x32xf32>, vector<32x32xf32>, vector<8x32xf32> -> vector<8x32xf32>
    %c0_24 = arith.constant 0 : index
    %c2_25 = arith.constant 2 : index
    %c0_26 = arith.constant 0 : index
    %26 = vector.load %arg3[%c0_24, %c2_25, %c0_26] : memref<2x8x32xf32, #tpu.memory_space<vmem>>, vector<1x1x32xf32>
    %27 = vector.shape_cast %26 : vector<1x1x32xf32> to vector<1x32xf32>
    %28 = vector.broadcast %27 : vector<1x32xf32> to vector<8x32xf32>
    %29 = arith.addf %25, %28 : vector<8x32xf32>
    %30 = vector.extract_strided_slice %15 {offsets = [0, 0], sizes = [8, 8], strides = [1, 1]} : vector<8x32xf32> to vector<8x8xf32>
    %31 = vector.extract_strided_slice %15 {offsets = [0, 8], sizes = [8, 8], strides = [1, 1]} : vector<8x32xf32> to vector<8x8xf32>
    %32 = vector.extract_strided_slice %15 {offsets = [0, 16], sizes = [8, 8], strides = [1, 1]} : vector<8x32xf32> to vector<8x8xf32>
    %33 = vector.extract_strided_slice %15 {offsets = [0, 24], sizes = [8, 8], strides = [1, 1]} : vector<8x32xf32> to vector<8x8xf32>
    %34 = vector.shape_cast %30 : vector<8x8xf32> to vector<1x8x8xf32>
    %35 = vector.shape_cast %31 : vector<8x8xf32> to vector<1x8x8xf32>
    %36 = vector.shape_cast %32 : vector<8x8xf32> to vector<1x8x8xf32>
    %37 = vector.shape_cast %33 : vector<8x8xf32> to vector<1x8x8xf32>
    %38 = tpu.concatenate %34, %35, %36, %37 in 0 : vector<1x8x8xf32>, vector<1x8x8xf32>, vector<1x8x8xf32>, vector<1x8x8xf32> -> vector<4x8x8xf32>
    %39 = vector.extract_strided_slice %22 {offsets = [0, 0], sizes = [8, 8], strides = [1, 1]} : vector<8x32xf32> to vector<8x8xf32>
    %40 = vector.extract_strided_slice %22 {offsets = [0, 8], sizes = [8, 8], strides = [1, 1]} : vector<8x32xf32> to vector<8x8xf32>
    %41 = vector.extract_strided_slice %22 {offsets = [0, 16], sizes = [8, 8], strides = [1, 1]} : vector<8x32xf32> to vector<8x8xf32>
    %42 = vector.extract_strided_slice %22 {offsets = [0, 24], sizes = [8, 8], strides = [1, 1]} : vector<8x32xf32> to vector<8x8xf32>
    %43 = vector.shape_cast %39 : vector<8x8xf32> to vector<1x8x8xf32>
    %44 = vector.shape_cast %40 : vector<8x8xf32> to vector<1x8x8xf32>
    %45 = vector.shape_cast %41 : vector<8x8xf32> to vector<1x8x8xf32>
    %46 = vector.shape_cast %42 : vector<8x8xf32> to vector<1x8x8xf32>
    %47 = tpu.concatenate %43, %44, %45, %46 in 0 : vector<1x8x8xf32>, vector<1x8x8xf32>, vector<1x8x8xf32>, vector<1x8x8xf32> -> vector<4x8x8xf32>
    %48 = vector.extract_strided_slice %29 {offsets = [0, 0], sizes = [8, 8], strides = [1, 1]} : vector<8x32xf32> to vector<8x8xf32>
    %49 = vector.extract_strided_slice %29 {offsets = [0, 8], sizes = [8, 8], strides = [1, 1]} : vector<8x32xf32> to vector<8x8xf32>
    %50 = vector.extract_strided_slice %29 {offsets = [0, 16], sizes = [8, 8], strides = [1, 1]} : vector<8x32xf32> to vector<8x8xf32>
    %51 = vector.extract_strided_slice %29 {offsets = [0, 24], sizes = [8, 8], strides = [1, 1]} : vector<8x32xf32> to vector<8x8xf32>
    %52 = vector.shape_cast %48 : vector<8x8xf32> to vector<1x8x8xf32>
    %53 = vector.shape_cast %49 : vector<8x8xf32> to vector<1x8x8xf32>
    %54 = vector.shape_cast %50 : vector<8x8xf32> to vector<1x8x8xf32>
    %55 = vector.shape_cast %51 : vector<8x8xf32> to vector<1x8x8xf32>
    %56 = tpu.concatenate %52, %53, %54, %55 in 0 : vector<1x8x8xf32>, vector<1x8x8xf32>, vector<1x8x8xf32>, vector<1x8x8xf32> -> vector<4x8x8xf32>
    "tpu.trace_start"() <{level = 10 : i32, message = "hqe,hke->hqk"}> : () -> ()
    %cst_27 = arith.constant dense<0.000000e+00> : vector<4x8x8xf32>
    %57 = tpu.matmul %38, %47, %cst_27 {dimension_numbers = #tpu.dot_dimension_numbers<[2], [2], [1], [1], [0, 0, 0, 1, 1, 1], [0], [0]>} : vector<4x8x8xf32>, vector<4x8x8xf32>, vector<4x8x8xf32> -> vector<4x8x8xf32>
    "tpu.trace_stop"() : () -> ()
    %58 = vector.shape_cast %2 : vector<8x8xi1> to vector<1x8x8xi1>
    %cst_28 = arith.constant -1.000000e+30 : f32
    %59 = vector.shape_cast %58 : vector<1x8x8xi1> to vector<1x8x8xi1>
    %60 = vector.broadcast %59 : vector<1x8x8xi1> to vector<4x8x8xi1>
    %61 = vector.broadcast %cst_28 : f32 to vector<4x8x8xf32>
    %62 = arith.select %60, %61, %57 : vector<4x8x8xi1>, vector<4x8x8xf32>
    %cst_29 = arith.constant dense<0xFF800000> : vector<4x8xf32>
    %63 = vector.multi_reduction <maximumf>, %62, %cst_29 [2] : vector<4x8x8xf32> to vector<4x8xf32>
    %64 = vector.shape_cast %63 : vector<4x8xf32> to vector<4x8x1xf32>
    %65 = vector.broadcast %64 : vector<4x8x1xf32> to vector<4x8x8xf32>
    %66 = arith.subf %62, %65 : vector<4x8x8xf32>
    %67 = math.exp %66 : vector<4x8x8xf32>
    %cst_30 = arith.constant dense<0.000000e+00> : vector<4x8xf32>
    %68 = vector.multi_reduction <add>, %67, %cst_30 [2] : vector<4x8x8xf32> to vector<4x8xf32>
    %69 = vector.shape_cast %68 : vector<4x8xf32> to vector<4x8x1xf32>
    %70 = tpu.reciprocal %69 {approx = true} : vector<4x8x1xf32> -> vector<4x8x1xf32>
    %71 = vector.broadcast %70 : vector<4x8x1xf32> to vector<4x8x8xf32>
    %72 = arith.mulf %67, %71 : vector<4x8x8xf32>
    "tpu.trace_start"() <{level = 10 : i32, message = "hqk,hke->hqe"}> : () -> ()
    %cst_31 = arith.constant dense<0.000000e+00> : vector<4x8x8xf32>
    %73 = tpu.matmul %72, %56, %cst_31 {dimension_numbers = #tpu.dot_dimension_numbers<[2], [1], [1], [2], [0, 0, 0, 1, 1, 2], [0], [0]>} : vector<4x8x8xf32>, vector<4x8x8xf32>, vector<4x8x8xf32> -> vector<4x8x8xf32>
    "tpu.trace_stop"() : () -> ()
    %74 = vector.extract_strided_slice %73 {offsets = [0, 0, 0], sizes = [1, 8, 8], strides = [1, 1, 1]} : vector<4x8x8xf32> to vector<1x8x8xf32>
    %75 = vector.shape_cast %74 : vector<1x8x8xf32> to vector<8x8xf32>
    %76 = vector.extract_strided_slice %73 {offsets = [1, 0, 0], sizes = [1, 8, 8], strides = [1, 1, 1]} : vector<4x8x8xf32> to vector<1x8x8xf32>
    %77 = vector.shape_cast %76 : vector<1x8x8xf32> to vector<8x8xf32>
    %78 = vector.extract_strided_slice %73 {offsets = [2, 0, 0], sizes = [1, 8, 8], strides = [1, 1, 1]} : vector<4x8x8xf32> to vector<1x8x8xf32>
    %79 = vector.shape_cast %78 : vector<1x8x8xf32> to vector<8x8xf32>
    %80 = vector.extract_strided_slice %73 {offsets = [3, 0, 0], sizes = [1, 8, 8], strides = [1, 1, 1]} : vector<4x8x8xf32> to vector<1x8x8xf32>
    %81 = vector.shape_cast %80 : vector<1x8x8xf32> to vector<8x8xf32>
    %82 = tpu.concatenate %75, %77, %79, %81 in 1 : vector<8x8xf32>, vector<8x8xf32>, vector<8x8xf32>, vector<8x8xf32> -> vector<8x32xf32>
    %c0_32 = arith.constant 0 : index
    %c3 = arith.constant 3 : index
    %c0_33 = arith.constant 0 : index
    %c0_34 = arith.constant 0 : index
    %83 = vector.load %arg2[%c0_32, %c3, %c0_33, %c0_34] : memref<2x8x32x32xf32, #tpu.memory_space<vmem>>, vector<1x1x32x32xf32>
    %84 = vector.shape_cast %83 : vector<1x1x32x32xf32> to vector<32x32xf32>
    %cst_35 = arith.constant dense<0.000000e+00> : vector<8x32xf32>
    %85 = tpu.matmul %82, %84, %cst_35 {dimension_numbers = #tpu.dot_dimension_numbers<[1], [0], [0], [1], [0, 0, 1, 1], [], []>} : vector<8x32xf32>, vector<32x32xf32>, vector<8x32xf32> -> vector<8x32xf32>
    %c0_36 = arith.constant 0 : index
    %c3_37 = arith.constant 3 : index
    %c0_38 = arith.constant 0 : index
    %86 = vector.load %arg3[%c0_36, %c3_37, %c0_38] : memref<2x8x32xf32, #tpu.memory_space<vmem>>, vector<1x1x32xf32>
    %87 = vector.shape_cast %86 : vector<1x1x32xf32> to vector<1x32xf32>
    %88 = vector.broadcast %87 : vector<1x32xf32> to vector<8x32xf32>
    %89 = arith.addf %85, %88 : vector<8x32xf32>
    %90 = arith.addf %4, %89 : vector<8x32xf32>
    %c0_39 = arith.constant 0 : index
    %c0_40 = arith.constant 0 : index
    %91 = vector.load %arg4[%c0_39, %c0_40] : memref<7x32xf32, #tpu.memory_space<vmem>>, vector<1x32xf32>
    %c0_41 = arith.constant 0 : index
    %c0_42 = arith.constant 0 : index
    %92 = vector.load %arg5[%c0_41, %c0_42] : memref<7x32xf32, #tpu.memory_space<vmem>>, vector<1x32xf32>
    %cst_43 = arith.constant dense<0.000000e+00> : vector<8xf32>
    %93 = vector.multi_reduction <add>, %90, %cst_43 [1] : vector<8x32xf32> to vector<8xf32>
    %94 = vector.shape_cast %93 : vector<8xf32> to vector<8x1xf32>
    %cst_44 = arith.constant 3.200000e+01 : f32
    %95 = vector.broadcast %cst_44 : f32 to vector<8x1xf32>
    %96 = arith.divf %94, %95 : vector<8x1xf32>
    %97 = vector.broadcast %96 : vector<8x1xf32> to vector<8x32xf32>
    %98 = arith.subf %90, %97 : vector<8x32xf32>
    %99 = arith.mulf %98, %98 : vector<8x32xf32>
    %cst_45 = arith.constant dense<0.000000e+00> : vector<8xf32>
    %100 = vector.multi_reduction <add>, %99, %cst_45 [1] : vector<8x32xf32> to vector<8xf32>
    %101 = vector.shape_cast %100 : vector<8xf32> to vector<8x1xf32>
    %cst_46 = arith.constant 3.200000e+01 : f32
    %102 = vector.broadcast %cst_46 : f32 to vector<8x1xf32>
    %103 = arith.divf %101, %102 : vector<8x1xf32>
    %104 = vector.broadcast %96 : vector<8x1xf32> to vector<8x32xf32>
    %105 = arith.subf %90, %104 : vector<8x32xf32>
    %cst_47 = arith.constant 9.99999974E-6 : f32
    %106 = vector.broadcast %cst_47 : f32 to vector<8x1xf32>
    %107 = arith.addf %103, %106 : vector<8x1xf32>
    %108 = math.rsqrt %107 : vector<8x1xf32>
    %109 = vector.broadcast %108 : vector<8x1xf32> to vector<8x32xf32>
    %110 = arith.mulf %105, %109 : vector<8x32xf32>
    %111 = vector.broadcast %91 : vector<1x32xf32> to vector<8x32xf32>
    %112 = arith.mulf %110, %111 : vector<8x32xf32>
    %113 = vector.broadcast %92 : vector<1x32xf32> to vector<8x32xf32>
    %114 = arith.addf %112, %113 : vector<8x32xf32>
    %c0_48 = arith.constant 0 : index
    %c4 = arith.constant 4 : index
    %c0_49 = arith.constant 0 : index
    %c0_50 = arith.constant 0 : index
    %115 = vector.load %arg2[%c0_48, %c4, %c0_49, %c0_50] : memref<2x8x32x32xf32, #tpu.memory_space<vmem>>, vector<1x1x32x32xf32>
    %116 = vector.shape_cast %115 : vector<1x1x32x32xf32> to vector<32x32xf32>
    %cst_51 = arith.constant dense<0.000000e+00> : vector<8x32xf32>
    %117 = tpu.matmul %114, %116, %cst_51 {dimension_numbers = #tpu.dot_dimension_numbers<[1], [0], [0], [1], [0, 0, 1, 1], [], []>} : vector<8x32xf32>, vector<32x32xf32>, vector<8x32xf32> -> vector<8x32xf32>
    %c0_52 = arith.constant 0 : index
    %c4_53 = arith.constant 4 : index
    %c0_54 = arith.constant 0 : index
    %118 = vector.load %arg3[%c0_52, %c4_53, %c0_54] : memref<2x8x32xf32, #tpu.memory_space<vmem>>, vector<1x1x32xf32>
    %119 = vector.shape_cast %118 : vector<1x1x32xf32> to vector<1x32xf32>
    %120 = vector.broadcast %119 : vector<1x32xf32> to vector<8x32xf32>
    %121 = arith.addf %117, %120 : vector<8x32xf32>
    %cst_55 = arith.constant 0.353553385 : f32
    %122 = vector.broadcast %cst_55 : f32 to vector<8x32xf32>
    %123 = arith.mulf %121, %122 : vector<8x32xf32>
    %c0_56 = arith.constant 0 : index
    %c5 = arith.constant 5 : index
    %c0_57 = arith.constant 0 : index
    %c0_58 = arith.constant 0 : index
    %124 = vector.load %arg2[%c0_56, %c5, %c0_57, %c0_58] : memref<2x8x32x32xf32, #tpu.memory_space<vmem>>, vector<1x1x32x32xf32>
    %125 = vector.shape_cast %124 : vector<1x1x32x32xf32> to vector<32x32xf32>
    %cst_59 = arith.constant dense<0.000000e+00> : vector<12x32xf32>
    %126 = tpu.matmul %6, %125, %cst_59 {dimension_numbers = #tpu.dot_dimension_numbers<[1], [0], [0], [1], [0, 0, 1, 1], [], []>} : vector<12x32xf32>, vector<32x32xf32>, vector<12x32xf32> -> vector<12x32xf32>
    %c0_60 = arith.constant 0 : index
    %c5_61 = arith.constant 5 : index
    %c0_62 = arith.constant 0 : index
    %127 = vector.load %arg3[%c0_60, %c5_61, %c0_62] : memref<2x8x32xf32, #tpu.memory_space<vmem>>, vector<1x1x32xf32>
    %128 = vector.shape_cast %127 : vector<1x1x32xf32> to vector<1x32xf32>
    %129 = vector.broadcast %128 : vector<1x32xf32> to vector<12x32xf32>
    %130 = arith.addf %126, %129 : vector<12x32xf32>
    %c0_63 = arith.constant 0 : index
    %c6 = arith.constant 6 : index
    %c0_64 = arith.constant 0 : index
    %c0_65 = arith.constant 0 : index
    %131 = vector.load %arg2[%c0_63, %c6, %c0_64, %c0_65] : memref<2x8x32x32xf32, #tpu.memory_space<vmem>>, vector<1x1x32x32xf32>
    %132 = vector.shape_cast %131 : vector<1x1x32x32xf32> to vector<32x32xf32>
    %cst_66 = arith.constant dense<0.000000e+00> : vector<12x32xf32>
    %133 = tpu.matmul %6, %132, %cst_66 {dimension_numbers = #tpu.dot_dimension_numbers<[1], [0], [0], [1], [0, 0, 1, 1], [], []>} : vector<12x32xf32>, vector<32x32xf32>, vector<12x32xf32> -> vector<12x32xf32>
    %c0_67 = arith.constant 0 : index
    %c6_68 = arith.constant 6 : index
    %c0_69 = arith.constant 0 : index
    %134 = vector.load %arg3[%c0_67, %c6_68, %c0_69] : memref<2x8x32xf32, #tpu.memory_space<vmem>>, vector<1x1x32xf32>
    %135 = vector.shape_cast %134 : vector<1x1x32xf32> to vector<1x32xf32>
    %136 = vector.broadcast %135 : vector<1x32xf32> to vector<12x32xf32>
    %137 = arith.addf %133, %136 : vector<12x32xf32>
    %138 = vector.extract_strided_slice %123 {offsets = [0, 0], sizes = [8, 8], strides = [1, 1]} : vector<8x32xf32> to vector<8x8xf32>
    %139 = vector.extract_strided_slice %123 {offsets = [0, 8], sizes = [8, 8], strides = [1, 1]} : vector<8x32xf32> to vector<8x8xf32>
    %140 = vector.extract_strided_slice %123 {offsets = [0, 16], sizes = [8, 8], strides = [1, 1]} : vector<8x32xf32> to vector<8x8xf32>
    %141 = vector.extract_strided_slice %123 {offsets = [0, 24], sizes = [8, 8], strides = [1, 1]} : vector<8x32xf32> to vector<8x8xf32>
    %142 = vector.shape_cast %138 : vector<8x8xf32> to vector<1x8x8xf32>
    %143 = vector.shape_cast %139 : vector<8x8xf32> to vector<1x8x8xf32>
    %144 = vector.shape_cast %140 : vector<8x8xf32> to vector<1x8x8xf32>
    %145 = vector.shape_cast %141 : vector<8x8xf32> to vector<1x8x8xf32>
    %146 = tpu.concatenate %142, %143, %144, %145 in 0 : vector<1x8x8xf32>, vector<1x8x8xf32>, vector<1x8x8xf32>, vector<1x8x8xf32> -> vector<4x8x8xf32>
    %147 = vector.extract_strided_slice %130 {offsets = [0, 0], sizes = [12, 8], strides = [1, 1]} : vector<12x32xf32> to vector<12x8xf32>
    %148 = vector.extract_strided_slice %130 {offsets = [0, 8], sizes = [12, 8], strides = [1, 1]} : vector<12x32xf32> to vector<12x8xf32>
    %149 = vector.extract_strided_slice %130 {offsets = [0, 16], sizes = [12, 8], strides = [1, 1]} : vector<12x32xf32> to vector<12x8xf32>
    %150 = vector.extract_strided_slice %130 {offsets = [0, 24], sizes = [12, 8], strides = [1, 1]} : vector<12x32xf32> to vector<12x8xf32>
    %151 = vector.shape_cast %147 : vector<12x8xf32> to vector<1x12x8xf32>
    %152 = vector.shape_cast %148 : vector<12x8xf32> to vector<1x12x8xf32>
    %153 = vector.shape_cast %149 : vector<12x8xf32> to vector<1x12x8xf32>
    %154 = vector.shape_cast %150 : vector<12x8xf32> to vector<1x12x8xf32>
    %155 = tpu.concatenate %151, %152, %153, %154 in 0 : vector<1x12x8xf32>, vector<1x12x8xf32>, vector<1x12x8xf32>, vector<1x12x8xf32> -> vector<4x12x8xf32>
    %156 = vector.extract_strided_slice %137 {offsets = [0, 0], sizes = [12, 8], strides = [1, 1]} : vector<12x32xf32> to vector<12x8xf32>
    %157 = vector.extract_strided_slice %137 {offsets = [0, 8], sizes = [12, 8], strides = [1, 1]} : vector<12x32xf32> to vector<12x8xf32>
    %158 = vector.extract_strided_slice %137 {offsets = [0, 16], sizes = [12, 8], strides = [1, 1]} : vector<12x32xf32> to vector<12x8xf32>
    %159 = vector.extract_strided_slice %137 {offsets = [0, 24], sizes = [12, 8], strides = [1, 1]} : vector<12x32xf32> to vector<12x8xf32>
    %160 = vector.shape_cast %156 : vector<12x8xf32> to vector<1x12x8xf32>
    %161 = vector.shape_cast %157 : vector<12x8xf32> to vector<1x12x8xf32>
    %162 = vector.shape_cast %158 : vector<12x8xf32> to vector<1x12x8xf32>
    %163 = vector.shape_cast %159 : vector<12x8xf32> to vector<1x12x8xf32>
    %164 = tpu.concatenate %160, %161, %162, %163 in 0 : vector<1x12x8xf32>, vector<1x12x8xf32>, vector<1x12x8xf32>, vector<1x12x8xf32> -> vector<4x12x8xf32>
    "tpu.trace_start"() <{level = 10 : i32, message = "hqe,hke->hqk"}> : () -> ()
    %cst_70 = arith.constant dense<0.000000e+00> : vector<4x8x12xf32>
    %165 = tpu.matmul %146, %155, %cst_70 {dimension_numbers = #tpu.dot_dimension_numbers<[2], [2], [1], [1], [0, 0, 0, 1, 1, 1], [0], [0]>} : vector<4x8x8xf32>, vector<4x12x8xf32>, vector<4x8x12xf32> -> vector<4x8x12xf32>
    "tpu.trace_stop"() : () -> ()
    %cst_71 = arith.constant dense<0xFF800000> : vector<4x8xf32>
    %166 = vector.multi_reduction <maximumf>, %165, %cst_71 [2] : vector<4x8x12xf32> to vector<4x8xf32>
    %167 = vector.shape_cast %166 : vector<4x8xf32> to vector<4x8x1xf32>
    %168 = vector.broadcast %167 : vector<4x8x1xf32> to vector<4x8x12xf32>
    %169 = arith.subf %165, %168 : vector<4x8x12xf32>
    %170 = math.exp %169 : vector<4x8x12xf32>
    %cst_72 = arith.constant dense<0.000000e+00> : vector<4x8xf32>
    %171 = vector.multi_reduction <add>, %170, %cst_72 [2] : vector<4x8x12xf32> to vector<4x8xf32>
    %172 = vector.shape_cast %171 : vector<4x8xf32> to vector<4x8x1xf32>
    %173 = tpu.reciprocal %172 {approx = true} : vector<4x8x1xf32> -> vector<4x8x1xf32>
    %174 = vector.broadcast %173 : vector<4x8x1xf32> to vector<4x8x12xf32>
    %175 = arith.mulf %170, %174 : vector<4x8x12xf32>
    "tpu.trace_start"() <{level = 10 : i32, message = "hqk,hke->hqe"}> : () -> ()
    %cst_73 = arith.constant dense<0.000000e+00> : vector<4x8x8xf32>
    %176 = tpu.matmul %175, %164, %cst_73 {dimension_numbers = #tpu.dot_dimension_numbers<[2], [1], [1], [2], [0, 0, 0, 1, 1, 2], [0], [0]>} : vector<4x8x12xf32>, vector<4x12x8xf32>, vector<4x8x8xf32> -> vector<4x8x8xf32>
    "tpu.trace_stop"() : () -> ()
    %177 = vector.extract_strided_slice %176 {offsets = [0, 0, 0], sizes = [1, 8, 8], strides = [1, 1, 1]} : vector<4x8x8xf32> to vector<1x8x8xf32>
    %178 = vector.shape_cast %177 : vector<1x8x8xf32> to vector<8x8xf32>
    %179 = vector.extract_strided_slice %176 {offsets = [1, 0, 0], sizes = [1, 8, 8], strides = [1, 1, 1]} : vector<4x8x8xf32> to vector<1x8x8xf32>
    %180 = vector.shape_cast %179 : vector<1x8x8xf32> to vector<8x8xf32>
    %181 = vector.extract_strided_slice %176 {offsets = [2, 0, 0], sizes = [1, 8, 8], strides = [1, 1, 1]} : vector<4x8x8xf32> to vector<1x8x8xf32>
    %182 = vector.shape_cast %181 : vector<1x8x8xf32> to vector<8x8xf32>
    %183 = vector.extract_strided_slice %176 {offsets = [3, 0, 0], sizes = [1, 8, 8], strides = [1, 1, 1]} : vector<4x8x8xf32> to vector<1x8x8xf32>
    %184 = vector.shape_cast %183 : vector<1x8x8xf32> to vector<8x8xf32>
    %185 = tpu.concatenate %178, %180, %182, %184 in 1 : vector<8x8xf32>, vector<8x8xf32>, vector<8x8xf32>, vector<8x8xf32> -> vector<8x32xf32>
    %c0_74 = arith.constant 0 : index
    %c7 = arith.constant 7 : index
    %c0_75 = arith.constant 0 : index
    %c0_76 = arith.constant 0 : index
    %186 = vector.load %arg2[%c0_74, %c7, %c0_75, %c0_76] : memref<2x8x32x32xf32, #tpu.memory_space<vmem>>, vector<1x1x32x32xf32>
    %187 = vector.shape_cast %186 : vector<1x1x32x32xf32> to vector<32x32xf32>
    %cst_77 = arith.constant dense<0.000000e+00> : vector<8x32xf32>
    %188 = tpu.matmul %185, %187, %cst_77 {dimension_numbers = #tpu.dot_dimension_numbers<[1], [0], [0], [1], [0, 0, 1, 1], [], []>} : vector<8x32xf32>, vector<32x32xf32>, vector<8x32xf32> -> vector<8x32xf32>
    %c0_78 = arith.constant 0 : index
    %c7_79 = arith.constant 7 : index
    %c0_80 = arith.constant 0 : index
    %189 = vector.load %arg3[%c0_78, %c7_79, %c0_80] : memref<2x8x32xf32, #tpu.memory_space<vmem>>, vector<1x1x32xf32>
    %190 = vector.shape_cast %189 : vector<1x1x32xf32> to vector<1x32xf32>
    %191 = vector.broadcast %190 : vector<1x32xf32> to vector<8x32xf32>
    %192 = arith.addf %188, %191 : vector<8x32xf32>
    %193 = arith.addf %114, %192 : vector<8x32xf32>
    %c1_81 = arith.constant 1 : index
    %c0_82 = arith.constant 0 : index
    %194 = vector.load %arg4[%c1_81, %c0_82] : memref<7x32xf32, #tpu.memory_space<vmem>>, vector<1x32xf32>
    %c1_83 = arith.constant 1 : index
    %c0_84 = arith.constant 0 : index
    %195 = vector.load %arg5[%c1_83, %c0_84] : memref<7x32xf32, #tpu.memory_space<vmem>>, vector<1x32xf32>
    %cst_85 = arith.constant dense<0.000000e+00> : vector<8xf32>
    %196 = vector.multi_reduction <add>, %193, %cst_85 [1] : vector<8x32xf32> to vector<8xf32>
    %197 = vector.shape_cast %196 : vector<8xf32> to vector<8x1xf32>
    %cst_86 = arith.constant 3.200000e+01 : f32
    %198 = vector.broadcast %cst_86 : f32 to vector<8x1xf32>
    %199 = arith.divf %197, %198 : vector<8x1xf32>
    %200 = vector.broadcast %199 : vector<8x1xf32> to vector<8x32xf32>
    %201 = arith.subf %193, %200 : vector<8x32xf32>
    %202 = arith.mulf %201, %201 : vector<8x32xf32>
    %cst_87 = arith.constant dense<0.000000e+00> : vector<8xf32>
    %203 = vector.multi_reduction <add>, %202, %cst_87 [1] : vector<8x32xf32> to vector<8xf32>
    %204 = vector.shape_cast %203 : vector<8xf32> to vector<8x1xf32>
    %cst_88 = arith.constant 3.200000e+01 : f32
    %205 = vector.broadcast %cst_88 : f32 to vector<8x1xf32>
    %206 = arith.divf %204, %205 : vector<8x1xf32>
    %207 = vector.broadcast %199 : vector<8x1xf32> to vector<8x32xf32>
    %208 = arith.subf %193, %207 : vector<8x32xf32>
    %cst_89 = arith.constant 9.99999974E-6 : f32
    %209 = vector.broadcast %cst_89 : f32 to vector<8x1xf32>
    %210 = arith.addf %206, %209 : vector<8x1xf32>
    %211 = math.rsqrt %210 : vector<8x1xf32>
    %212 = vector.broadcast %211 : vector<8x1xf32> to vector<8x32xf32>
    %213 = arith.mulf %208, %212 : vector<8x32xf32>
    %214 = vector.broadcast %194 : vector<1x32xf32> to vector<8x32xf32>
    %215 = arith.mulf %213, %214 : vector<8x32xf32>
    %216 = vector.broadcast %195 : vector<1x32xf32> to vector<8x32xf32>
    %217 = arith.addf %215, %216 : vector<8x32xf32>
    %c0_90 = arith.constant 0 : index
    %c0_91 = arith.constant 0 : index
    %c0_92 = arith.constant 0 : index
    %218 = vector.load %arg6[%c0_90, %c0_91, %c0_92] : memref<2x32x64xf32, #tpu.memory_space<vmem>>, vector<1x32x64xf32>
    %219 = vector.shape_cast %218 : vector<1x32x64xf32> to vector<32x64xf32>
    %cst_93 = arith.constant dense<0.000000e+00> : vector<8x64xf32>
    %220 = tpu.matmul %217, %219, %cst_93 {dimension_numbers = #tpu.dot_dimension_numbers<[1], [0], [0], [1], [0, 0, 1, 1], [], []>} : vector<8x32xf32>, vector<32x64xf32>, vector<8x64xf32> -> vector<8x64xf32>
    %c0_94 = arith.constant 0 : index
    %c0_95 = arith.constant 0 : index
    %c0_96 = arith.constant 0 : index
    %221 = vector.load %arg7[%c0_94, %c0_95, %c0_96] : memref<2x1x64xf32, #tpu.memory_space<vmem>>, vector<1x1x64xf32>
    %222 = vector.shape_cast %221 : vector<1x1x64xf32> to vector<1x64xf32>
    %223 = vector.broadcast %222 : vector<1x64xf32> to vector<8x64xf32>
    %224 = arith.addf %220, %223 : vector<8x64xf32>
    %cst_97 = arith.constant 0.000000e+00 : f32
    %225 = vector.broadcast %cst_97 : f32 to vector<8x64xf32>
    %226 = arith.maximumf %224, %225 : vector<8x64xf32>
    %c0_98 = arith.constant 0 : index
    %c0_99 = arith.constant 0 : index
    %c0_100 = arith.constant 0 : index
    %227 = vector.load %arg8[%c0_98, %c0_99, %c0_100] : memref<2x64x32xf32, #tpu.memory_space<vmem>>, vector<1x64x32xf32>
    %228 = vector.shape_cast %227 : vector<1x64x32xf32> to vector<64x32xf32>
    %cst_101 = arith.constant dense<0.000000e+00> : vector<8x32xf32>
    %229 = tpu.matmul %226, %228, %cst_101 {dimension_numbers = #tpu.dot_dimension_numbers<[1], [0], [0], [1], [0, 0, 1, 1], [], []>} : vector<8x64xf32>, vector<64x32xf32>, vector<8x32xf32> -> vector<8x32xf32>
    %c0_102 = arith.constant 0 : index
    %c0_103 = arith.constant 0 : index
    %c0_104 = arith.constant 0 : index
    %230 = vector.load %arg9[%c0_102, %c0_103, %c0_104] : memref<2x1x32xf32, #tpu.memory_space<vmem>>, vector<1x1x32xf32>
    %231 = vector.shape_cast %230 : vector<1x1x32xf32> to vector<1x32xf32>
    %232 = vector.broadcast %231 : vector<1x32xf32> to vector<8x32xf32>
    %233 = arith.addf %229, %232 : vector<8x32xf32>
    %234 = arith.addf %217, %233 : vector<8x32xf32>
    %c2_105 = arith.constant 2 : index
    %c0_106 = arith.constant 0 : index
    %235 = vector.load %arg4[%c2_105, %c0_106] : memref<7x32xf32, #tpu.memory_space<vmem>>, vector<1x32xf32>
    %c2_107 = arith.constant 2 : index
    %c0_108 = arith.constant 0 : index
    %236 = vector.load %arg5[%c2_107, %c0_108] : memref<7x32xf32, #tpu.memory_space<vmem>>, vector<1x32xf32>
    %cst_109 = arith.constant dense<0.000000e+00> : vector<8xf32>
    %237 = vector.multi_reduction <add>, %234, %cst_109 [1] : vector<8x32xf32> to vector<8xf32>
    %238 = vector.shape_cast %237 : vector<8xf32> to vector<8x1xf32>
    %cst_110 = arith.constant 3.200000e+01 : f32
    %239 = vector.broadcast %cst_110 : f32 to vector<8x1xf32>
    %240 = arith.divf %238, %239 : vector<8x1xf32>
    %241 = vector.broadcast %240 : vector<8x1xf32> to vector<8x32xf32>
    %242 = arith.subf %234, %241 : vector<8x32xf32>
    %243 = arith.mulf %242, %242 : vector<8x32xf32>
    %cst_111 = arith.constant dense<0.000000e+00> : vector<8xf32>
    %244 = vector.multi_reduction <add>, %243, %cst_111 [1] : vector<8x32xf32> to vector<8xf32>
    %245 = vector.shape_cast %244 : vector<8xf32> to vector<8x1xf32>
    %cst_112 = arith.constant 3.200000e+01 : f32
    %246 = vector.broadcast %cst_112 : f32 to vector<8x1xf32>
    %247 = arith.divf %245, %246 : vector<8x1xf32>
    %248 = vector.broadcast %240 : vector<8x1xf32> to vector<8x32xf32>
    %249 = arith.subf %234, %248 : vector<8x32xf32>
    %cst_113 = arith.constant 9.99999974E-6 : f32
    %250 = vector.broadcast %cst_113 : f32 to vector<8x1xf32>
    %251 = arith.addf %247, %250 : vector<8x1xf32>
    %252 = math.rsqrt %251 : vector<8x1xf32>
    %253 = vector.broadcast %252 : vector<8x1xf32> to vector<8x32xf32>
    %254 = arith.mulf %249, %253 : vector<8x32xf32>
    %255 = vector.broadcast %235 : vector<1x32xf32> to vector<8x32xf32>
    %256 = arith.mulf %254, %255 : vector<8x32xf32>
    %257 = vector.broadcast %236 : vector<1x32xf32> to vector<8x32xf32>
    %258 = arith.addf %256, %257 : vector<8x32xf32>
    %c1_114 = arith.constant 1 : index
    %c0_115 = arith.constant 0 : index
    %c0_116 = arith.constant 0 : index
    %c0_117 = arith.constant 0 : index
    %259 = vector.load %arg2[%c1_114, %c0_115, %c0_116, %c0_117] : memref<2x8x32x32xf32, #tpu.memory_space<vmem>>, vector<1x1x32x32xf32>
    %260 = vector.shape_cast %259 : vector<1x1x32x32xf32> to vector<32x32xf32>
    %cst_118 = arith.constant dense<0.000000e+00> : vector<8x32xf32>
    %261 = tpu.matmul %258, %260, %cst_118 {dimension_numbers = #tpu.dot_dimension_numbers<[1], [0], [0], [1], [0, 0, 1, 1], [], []>} : vector<8x32xf32>, vector<32x32xf32>, vector<8x32xf32> -> vector<8x32xf32>
    %c1_119 = arith.constant 1 : index
    %c0_120 = arith.constant 0 : index
    %c0_121 = arith.constant 0 : index
    %262 = vector.load %arg3[%c1_119, %c0_120, %c0_121] : memref<2x8x32xf32, #tpu.memory_space<vmem>>, vector<1x1x32xf32>
    %263 = vector.shape_cast %262 : vector<1x1x32xf32> to vector<1x32xf32>
    %264 = vector.broadcast %263 : vector<1x32xf32> to vector<8x32xf32>
    %265 = arith.addf %261, %264 : vector<8x32xf32>
    %cst_122 = arith.constant 0.353553385 : f32
    %266 = vector.broadcast %cst_122 : f32 to vector<8x32xf32>
    %267 = arith.mulf %265, %266 : vector<8x32xf32>
    %c1_123 = arith.constant 1 : index
    %c1_124 = arith.constant 1 : index
    %c0_125 = arith.constant 0 : index
    %c0_126 = arith.constant 0 : index
    %268 = vector.load %arg2[%c1_123, %c1_124, %c0_125, %c0_126] : memref<2x8x32x32xf32, #tpu.memory_space<vmem>>, vector<1x1x32x32xf32>
    %269 = vector.shape_cast %268 : vector<1x1x32x32xf32> to vector<32x32xf32>
    %cst_127 = arith.constant dense<0.000000e+00> : vector<8x32xf32>
    %270 = tpu.matmul %258, %269, %cst_127 {dimension_numbers = #tpu.dot_dimension_numbers<[1], [0], [0], [1], [0, 0, 1, 1], [], []>} : vector<8x32xf32>, vector<32x32xf32>, vector<8x32xf32> -> vector<8x32xf32>
    %c1_128 = arith.constant 1 : index
    %c1_129 = arith.constant 1 : index
    %c0_130 = arith.constant 0 : index
    %271 = vector.load %arg3[%c1_128, %c1_129, %c0_130] : memref<2x8x32xf32, #tpu.memory_space<vmem>>, vector<1x1x32xf32>
    %272 = vector.shape_cast %271 : vector<1x1x32xf32> to vector<1x32xf32>
    %273 = vector.broadcast %272 : vector<1x32xf32> to vector<8x32xf32>
    %274 = arith.addf %270, %273 : vector<8x32xf32>
    %c1_131 = arith.constant 1 : index
    %c2_132 = arith.constant 2 : index
    %c0_133 = arith.constant 0 : index
    %c0_134 = arith.constant 0 : index
    %275 = vector.load %arg2[%c1_131, %c2_132, %c0_133, %c0_134] : memref<2x8x32x32xf32, #tpu.memory_space<vmem>>, vector<1x1x32x32xf32>
    %276 = vector.shape_cast %275 : vector<1x1x32x32xf32> to vector<32x32xf32>
    %cst_135 = arith.constant dense<0.000000e+00> : vector<8x32xf32>
    %277 = tpu.matmul %258, %276, %cst_135 {dimension_numbers = #tpu.dot_dimension_numbers<[1], [0], [0], [1], [0, 0, 1, 1], [], []>} : vector<8x32xf32>, vector<32x32xf32>, vector<8x32xf32> -> vector<8x32xf32>
    %c1_136 = arith.constant 1 : index
    %c2_137 = arith.constant 2 : index
    %c0_138 = arith.constant 0 : index
    %278 = vector.load %arg3[%c1_136, %c2_137, %c0_138] : memref<2x8x32xf32, #tpu.memory_space<vmem>>, vector<1x1x32xf32>
    %279 = vector.shape_cast %278 : vector<1x1x32xf32> to vector<1x32xf32>
    %280 = vector.broadcast %279 : vector<1x32xf32> to vector<8x32xf32>
    %281 = arith.addf %277, %280 : vector<8x32xf32>
    %282 = vector.extract_strided_slice %267 {offsets = [0, 0], sizes = [8, 8], strides = [1, 1]} : vector<8x32xf32> to vector<8x8xf32>
    %283 = vector.extract_strided_slice %267 {offsets = [0, 8], sizes = [8, 8], strides = [1, 1]} : vector<8x32xf32> to vector<8x8xf32>
    %284 = vector.extract_strided_slice %267 {offsets = [0, 16], sizes = [8, 8], strides = [1, 1]} : vector<8x32xf32> to vector<8x8xf32>
    %285 = vector.extract_strided_slice %267 {offsets = [0, 24], sizes = [8, 8], strides = [1, 1]} : vector<8x32xf32> to vector<8x8xf32>
    %286 = vector.shape_cast %282 : vector<8x8xf32> to vector<1x8x8xf32>
    %287 = vector.shape_cast %283 : vector<8x8xf32> to vector<1x8x8xf32>
    %288 = vector.shape_cast %284 : vector<8x8xf32> to vector<1x8x8xf32>
    %289 = vector.shape_cast %285 : vector<8x8xf32> to vector<1x8x8xf32>
    %290 = tpu.concatenate %286, %287, %288, %289 in 0 : vector<1x8x8xf32>, vector<1x8x8xf32>, vector<1x8x8xf32>, vector<1x8x8xf32> -> vector<4x8x8xf32>
    %291 = vector.extract_strided_slice %274 {offsets = [0, 0], sizes = [8, 8], strides = [1, 1]} : vector<8x32xf32> to vector<8x8xf32>
    %292 = vector.extract_strided_slice %274 {offsets = [0, 8], sizes = [8, 8], strides = [1, 1]} : vector<8x32xf32> to vector<8x8xf32>
    %293 = vector.extract_strided_slice %274 {offsets = [0, 16], sizes = [8, 8], strides = [1, 1]} : vector<8x32xf32> to vector<8x8xf32>
    %294 = vector.extract_strided_slice %274 {offsets = [0, 24], sizes = [8, 8], strides = [1, 1]} : vector<8x32xf32> to vector<8x8xf32>
    %295 = vector.shape_cast %291 : vector<8x8xf32> to vector<1x8x8xf32>
    %296 = vector.shape_cast %292 : vector<8x8xf32> to vector<1x8x8xf32>
    %297 = vector.shape_cast %293 : vector<8x8xf32> to vector<1x8x8xf32>
    %298 = vector.shape_cast %294 : vector<8x8xf32> to vector<1x8x8xf32>
    %299 = tpu.concatenate %295, %296, %297, %298 in 0 : vector<1x8x8xf32>, vector<1x8x8xf32>, vector<1x8x8xf32>, vector<1x8x8xf32> -> vector<4x8x8xf32>
    %300 = vector.extract_strided_slice %281 {offsets = [0, 0], sizes = [8, 8], strides = [1, 1]} : vector<8x32xf32> to vector<8x8xf32>
    %301 = vector.extract_strided_slice %281 {offsets = [0, 8], sizes = [8, 8], strides = [1, 1]} : vector<8x32xf32> to vector<8x8xf32>
    %302 = vector.extract_strided_slice %281 {offsets = [0, 16], sizes = [8, 8], strides = [1, 1]} : vector<8x32xf32> to vector<8x8xf32>
    %303 = vector.extract_strided_slice %281 {offsets = [0, 24], sizes = [8, 8], strides = [1, 1]} : vector<8x32xf32> to vector<8x8xf32>
    %304 = vector.shape_cast %300 : vector<8x8xf32> to vector<1x8x8xf32>
    %305 = vector.shape_cast %301 : vector<8x8xf32> to vector<1x8x8xf32>
    %306 = vector.shape_cast %302 : vector<8x8xf32> to vector<1x8x8xf32>
    %307 = vector.shape_cast %303 : vector<8x8xf32> to vector<1x8x8xf32>
    %308 = tpu.concatenate %304, %305, %306, %307 in 0 : vector<1x8x8xf32>, vector<1x8x8xf32>, vector<1x8x8xf32>, vector<1x8x8xf32> -> vector<4x8x8xf32>
    "tpu.trace_start"() <{level = 10 : i32, message = "hqe,hke->hqk"}> : () -> ()
    %cst_139 = arith.constant dense<0.000000e+00> : vector<4x8x8xf32>
    %309 = tpu.matmul %290, %299, %cst_139 {dimension_numbers = #tpu.dot_dimension_numbers<[2], [2], [1], [1], [0, 0, 0, 1, 1, 1], [0], [0]>} : vector<4x8x8xf32>, vector<4x8x8xf32>, vector<4x8x8xf32> -> vector<4x8x8xf32>
    "tpu.trace_stop"() : () -> ()
    %310 = vector.shape_cast %2 : vector<8x8xi1> to vector<1x8x8xi1>
    %cst_140 = arith.constant -1.000000e+30 : f32
    %311 = vector.shape_cast %310 : vector<1x8x8xi1> to vector<1x8x8xi1>
    %312 = vector.broadcast %311 : vector<1x8x8xi1> to vector<4x8x8xi1>
    %313 = vector.broadcast %cst_140 : f32 to vector<4x8x8xf32>
    %314 = arith.select %312, %313, %309 : vector<4x8x8xi1>, vector<4x8x8xf32>
    %cst_141 = arith.constant dense<0xFF800000> : vector<4x8xf32>
    %315 = vector.multi_reduction <maximumf>, %314, %cst_141 [2] : vector<4x8x8xf32> to vector<4x8xf32>
    %316 = vector.shape_cast %315 : vector<4x8xf32> to vector<4x8x1xf32>
    %317 = vector.broadcast %316 : vector<4x8x1xf32> to vector<4x8x8xf32>
    %318 = arith.subf %314, %317 : vector<4x8x8xf32>
    %319 = math.exp %318 : vector<4x8x8xf32>
    %cst_142 = arith.constant dense<0.000000e+00> : vector<4x8xf32>
    %320 = vector.multi_reduction <add>, %319, %cst_142 [2] : vector<4x8x8xf32> to vector<4x8xf32>
    %321 = vector.shape_cast %320 : vector<4x8xf32> to vector<4x8x1xf32>
    %322 = tpu.reciprocal %321 {approx = true} : vector<4x8x1xf32> -> vector<4x8x1xf32>
    %323 = vector.broadcast %322 : vector<4x8x1xf32> to vector<4x8x8xf32>
    %324 = arith.mulf %319, %323 : vector<4x8x8xf32>
    "tpu.trace_start"() <{level = 10 : i32, message = "hqk,hke->hqe"}> : () -> ()
    %cst_143 = arith.constant dense<0.000000e+00> : vector<4x8x8xf32>
    %325 = tpu.matmul %324, %308, %cst_143 {dimension_numbers = #tpu.dot_dimension_numbers<[2], [1], [1], [2], [0, 0, 0, 1, 1, 2], [0], [0]>} : vector<4x8x8xf32>, vector<4x8x8xf32>, vector<4x8x8xf32> -> vector<4x8x8xf32>
    "tpu.trace_stop"() : () -> ()
    %326 = vector.extract_strided_slice %325 {offsets = [0, 0, 0], sizes = [1, 8, 8], strides = [1, 1, 1]} : vector<4x8x8xf32> to vector<1x8x8xf32>
    %327 = vector.shape_cast %326 : vector<1x8x8xf32> to vector<8x8xf32>
    %328 = vector.extract_strided_slice %325 {offsets = [1, 0, 0], sizes = [1, 8, 8], strides = [1, 1, 1]} : vector<4x8x8xf32> to vector<1x8x8xf32>
    %329 = vector.shape_cast %328 : vector<1x8x8xf32> to vector<8x8xf32>
    %330 = vector.extract_strided_slice %325 {offsets = [2, 0, 0], sizes = [1, 8, 8], strides = [1, 1, 1]} : vector<4x8x8xf32> to vector<1x8x8xf32>
    %331 = vector.shape_cast %330 : vector<1x8x8xf32> to vector<8x8xf32>
    %332 = vector.extract_strided_slice %325 {offsets = [3, 0, 0], sizes = [1, 8, 8], strides = [1, 1, 1]} : vector<4x8x8xf32> to vector<1x8x8xf32>
    %333 = vector.shape_cast %332 : vector<1x8x8xf32> to vector<8x8xf32>
    %334 = tpu.concatenate %327, %329, %331, %333 in 1 : vector<8x8xf32>, vector<8x8xf32>, vector<8x8xf32>, vector<8x8xf32> -> vector<8x32xf32>
    %c1_144 = arith.constant 1 : index
    %c3_145 = arith.constant 3 : index
    %c0_146 = arith.constant 0 : index
    %c0_147 = arith.constant 0 : index
    %335 = vector.load %arg2[%c1_144, %c3_145, %c0_146, %c0_147] : memref<2x8x32x32xf32, #tpu.memory_space<vmem>>, vector<1x1x32x32xf32>
    %336 = vector.shape_cast %335 : vector<1x1x32x32xf32> to vector<32x32xf32>
    %cst_148 = arith.constant dense<0.000000e+00> : vector<8x32xf32>
    %337 = tpu.matmul %334, %336, %cst_148 {dimension_numbers = #tpu.dot_dimension_numbers<[1], [0], [0], [1], [0, 0, 1, 1], [], []>} : vector<8x32xf32>, vector<32x32xf32>, vector<8x32xf32> -> vector<8x32xf32>
    %c1_149 = arith.constant 1 : index
    %c3_150 = arith.constant 3 : index
    %c0_151 = arith.constant 0 : index
    %338 = vector.load %arg3[%c1_149, %c3_150, %c0_151] : memref<2x8x32xf32, #tpu.memory_space<vmem>>, vector<1x1x32xf32>
    %339 = vector.shape_cast %338 : vector<1x1x32xf32> to vector<1x32xf32>
    %340 = vector.broadcast %339 : vector<1x32xf32> to vector<8x32xf32>
    %341 = arith.addf %337, %340 : vector<8x32xf32>
    %342 = arith.addf %258, %341 : vector<8x32xf32>
    %c3_152 = arith.constant 3 : index
    %c0_153 = arith.constant 0 : index
    %343 = vector.load %arg4[%c3_152, %c0_153] : memref<7x32xf32, #tpu.memory_space<vmem>>, vector<1x32xf32>
    %c3_154 = arith.constant 3 : index
    %c0_155 = arith.constant 0 : index
    %344 = vector.load %arg5[%c3_154, %c0_155] : memref<7x32xf32, #tpu.memory_space<vmem>>, vector<1x32xf32>
    %cst_156 = arith.constant dense<0.000000e+00> : vector<8xf32>
    %345 = vector.multi_reduction <add>, %342, %cst_156 [1] : vector<8x32xf32> to vector<8xf32>
    %346 = vector.shape_cast %345 : vector<8xf32> to vector<8x1xf32>
    %cst_157 = arith.constant 3.200000e+01 : f32
    %347 = vector.broadcast %cst_157 : f32 to vector<8x1xf32>
    %348 = arith.divf %346, %347 : vector<8x1xf32>
    %349 = vector.broadcast %348 : vector<8x1xf32> to vector<8x32xf32>
    %350 = arith.subf %342, %349 : vector<8x32xf32>
    %351 = arith.mulf %350, %350 : vector<8x32xf32>
    %cst_158 = arith.constant dense<0.000000e+00> : vector<8xf32>
    %352 = vector.multi_reduction <add>, %351, %cst_158 [1] : vector<8x32xf32> to vector<8xf32>
    %353 = vector.shape_cast %352 : vector<8xf32> to vector<8x1xf32>
    %cst_159 = arith.constant 3.200000e+01 : f32
    %354 = vector.broadcast %cst_159 : f32 to vector<8x1xf32>
    %355 = arith.divf %353, %354 : vector<8x1xf32>
    %356 = vector.broadcast %348 : vector<8x1xf32> to vector<8x32xf32>
    %357 = arith.subf %342, %356 : vector<8x32xf32>
    %cst_160 = arith.constant 9.99999974E-6 : f32
    %358 = vector.broadcast %cst_160 : f32 to vector<8x1xf32>
    %359 = arith.addf %355, %358 : vector<8x1xf32>
    %360 = math.rsqrt %359 : vector<8x1xf32>
    %361 = vector.broadcast %360 : vector<8x1xf32> to vector<8x32xf32>
    %362 = arith.mulf %357, %361 : vector<8x32xf32>
    %363 = vector.broadcast %343 : vector<1x32xf32> to vector<8x32xf32>
    %364 = arith.mulf %362, %363 : vector<8x32xf32>
    %365 = vector.broadcast %344 : vector<1x32xf32> to vector<8x32xf32>
    %366 = arith.addf %364, %365 : vector<8x32xf32>
    %c1_161 = arith.constant 1 : index
    %c4_162 = arith.constant 4 : index
    %c0_163 = arith.constant 0 : index
    %c0_164 = arith.constant 0 : index
    %367 = vector.load %arg2[%c1_161, %c4_162, %c0_163, %c0_164] : memref<2x8x32x32xf32, #tpu.memory_space<vmem>>, vector<1x1x32x32xf32>
    %368 = vector.shape_cast %367 : vector<1x1x32x32xf32> to vector<32x32xf32>
    %cst_165 = arith.constant dense<0.000000e+00> : vector<8x32xf32>
    %369 = tpu.matmul %366, %368, %cst_165 {dimension_numbers = #tpu.dot_dimension_numbers<[1], [0], [0], [1], [0, 0, 1, 1], [], []>} : vector<8x32xf32>, vector<32x32xf32>, vector<8x32xf32> -> vector<8x32xf32>
    %c1_166 = arith.constant 1 : index
    %c4_167 = arith.constant 4 : index
    %c0_168 = arith.constant 0 : index
    %370 = vector.load %arg3[%c1_166, %c4_167, %c0_168] : memref<2x8x32xf32, #tpu.memory_space<vmem>>, vector<1x1x32xf32>
    %371 = vector.shape_cast %370 : vector<1x1x32xf32> to vector<1x32xf32>
    %372 = vector.broadcast %371 : vector<1x32xf32> to vector<8x32xf32>
    %373 = arith.addf %369, %372 : vector<8x32xf32>
    %cst_169 = arith.constant 0.353553385 : f32
    %374 = vector.broadcast %cst_169 : f32 to vector<8x32xf32>
    %375 = arith.mulf %373, %374 : vector<8x32xf32>
    %c1_170 = arith.constant 1 : index
    %c5_171 = arith.constant 5 : index
    %c0_172 = arith.constant 0 : index
    %c0_173 = arith.constant 0 : index
    %376 = vector.load %arg2[%c1_170, %c5_171, %c0_172, %c0_173] : memref<2x8x32x32xf32, #tpu.memory_space<vmem>>, vector<1x1x32x32xf32>
    %377 = vector.shape_cast %376 : vector<1x1x32x32xf32> to vector<32x32xf32>
    %cst_174 = arith.constant dense<0.000000e+00> : vector<12x32xf32>
    %378 = tpu.matmul %6, %377, %cst_174 {dimension_numbers = #tpu.dot_dimension_numbers<[1], [0], [0], [1], [0, 0, 1, 1], [], []>} : vector<12x32xf32>, vector<32x32xf32>, vector<12x32xf32> -> vector<12x32xf32>
    %c1_175 = arith.constant 1 : index
    %c5_176 = arith.constant 5 : index
    %c0_177 = arith.constant 0 : index
    %379 = vector.load %arg3[%c1_175, %c5_176, %c0_177] : memref<2x8x32xf32, #tpu.memory_space<vmem>>, vector<1x1x32xf32>
    %380 = vector.shape_cast %379 : vector<1x1x32xf32> to vector<1x32xf32>
    %381 = vector.broadcast %380 : vector<1x32xf32> to vector<12x32xf32>
    %382 = arith.addf %378, %381 : vector<12x32xf32>
    %c1_178 = arith.constant 1 : index
    %c6_179 = arith.constant 6 : index
    %c0_180 = arith.constant 0 : index
    %c0_181 = arith.constant 0 : index
    %383 = vector.load %arg2[%c1_178, %c6_179, %c0_180, %c0_181] : memref<2x8x32x32xf32, #tpu.memory_space<vmem>>, vector<1x1x32x32xf32>
    %384 = vector.shape_cast %383 : vector<1x1x32x32xf32> to vector<32x32xf32>
    %cst_182 = arith.constant dense<0.000000e+00> : vector<12x32xf32>
    %385 = tpu.matmul %6, %384, %cst_182 {dimension_numbers = #tpu.dot_dimension_numbers<[1], [0], [0], [1], [0, 0, 1, 1], [], []>} : vector<12x32xf32>, vector<32x32xf32>, vector<12x32xf32> -> vector<12x32xf32>
    %c1_183 = arith.constant 1 : index
    %c6_184 = arith.constant 6 : index
    %c0_185 = arith.constant 0 : index
    %386 = vector.load %arg3[%c1_183, %c6_184, %c0_185] : memref<2x8x32xf32, #tpu.memory_space<vmem>>, vector<1x1x32xf32>
    %387 = vector.shape_cast %386 : vector<1x1x32xf32> to vector<1x32xf32>
    %388 = vector.broadcast %387 : vector<1x32xf32> to vector<12x32xf32>
    %389 = arith.addf %385, %388 : vector<12x32xf32>
    %390 = vector.extract_strided_slice %375 {offsets = [0, 0], sizes = [8, 8], strides = [1, 1]} : vector<8x32xf32> to vector<8x8xf32>
    %391 = vector.extract_strided_slice %375 {offsets = [0, 8], sizes = [8, 8], strides = [1, 1]} : vector<8x32xf32> to vector<8x8xf32>
    %392 = vector.extract_strided_slice %375 {offsets = [0, 16], sizes = [8, 8], strides = [1, 1]} : vector<8x32xf32> to vector<8x8xf32>
    %393 = vector.extract_strided_slice %375 {offsets = [0, 24], sizes = [8, 8], strides = [1, 1]} : vector<8x32xf32> to vector<8x8xf32>
    %394 = vector.shape_cast %390 : vector<8x8xf32> to vector<1x8x8xf32>
    %395 = vector.shape_cast %391 : vector<8x8xf32> to vector<1x8x8xf32>
    %396 = vector.shape_cast %392 : vector<8x8xf32> to vector<1x8x8xf32>
    %397 = vector.shape_cast %393 : vector<8x8xf32> to vector<1x8x8xf32>
    %398 = tpu.concatenate %394, %395, %396, %397 in 0 : vector<1x8x8xf32>, vector<1x8x8xf32>, vector<1x8x8xf32>, vector<1x8x8xf32> -> vector<4x8x8xf32>
    %399 = vector.extract_strided_slice %382 {offsets = [0, 0], sizes = [12, 8], strides = [1, 1]} : vector<12x32xf32> to vector<12x8xf32>
    %400 = vector.extract_strided_slice %382 {offsets = [0, 8], sizes = [12, 8], strides = [1, 1]} : vector<12x32xf32> to vector<12x8xf32>
    %401 = vector.extract_strided_slice %382 {offsets = [0, 16], sizes = [12, 8], strides = [1, 1]} : vector<12x32xf32> to vector<12x8xf32>
    %402 = vector.extract_strided_slice %382 {offsets = [0, 24], sizes = [12, 8], strides = [1, 1]} : vector<12x32xf32> to vector<12x8xf32>
    %403 = vector.shape_cast %399 : vector<12x8xf32> to vector<1x12x8xf32>
    %404 = vector.shape_cast %400 : vector<12x8xf32> to vector<1x12x8xf32>
    %405 = vector.shape_cast %401 : vector<12x8xf32> to vector<1x12x8xf32>
    %406 = vector.shape_cast %402 : vector<12x8xf32> to vector<1x12x8xf32>
    %407 = tpu.concatenate %403, %404, %405, %406 in 0 : vector<1x12x8xf32>, vector<1x12x8xf32>, vector<1x12x8xf32>, vector<1x12x8xf32> -> vector<4x12x8xf32>
    %408 = vector.extract_strided_slice %389 {offsets = [0, 0], sizes = [12, 8], strides = [1, 1]} : vector<12x32xf32> to vector<12x8xf32>
    %409 = vector.extract_strided_slice %389 {offsets = [0, 8], sizes = [12, 8], strides = [1, 1]} : vector<12x32xf32> to vector<12x8xf32>
    %410 = vector.extract_strided_slice %389 {offsets = [0, 16], sizes = [12, 8], strides = [1, 1]} : vector<12x32xf32> to vector<12x8xf32>
    %411 = vector.extract_strided_slice %389 {offsets = [0, 24], sizes = [12, 8], strides = [1, 1]} : vector<12x32xf32> to vector<12x8xf32>
    %412 = vector.shape_cast %408 : vector<12x8xf32> to vector<1x12x8xf32>
    %413 = vector.shape_cast %409 : vector<12x8xf32> to vector<1x12x8xf32>
    %414 = vector.shape_cast %410 : vector<12x8xf32> to vector<1x12x8xf32>
    %415 = vector.shape_cast %411 : vector<12x8xf32> to vector<1x12x8xf32>
    %416 = tpu.concatenate %412, %413, %414, %415 in 0 : vector<1x12x8xf32>, vector<1x12x8xf32>, vector<1x12x8xf32>, vector<1x12x8xf32> -> vector<4x12x8xf32>
    "tpu.trace_start"() <{level = 10 : i32, message = "hqe,hke->hqk"}> : () -> ()
    %cst_186 = arith.constant dense<0.000000e+00> : vector<4x8x12xf32>
    %417 = tpu.matmul %398, %407, %cst_186 {dimension_numbers = #tpu.dot_dimension_numbers<[2], [2], [1], [1], [0, 0, 0, 1, 1, 1], [0], [0]>} : vector<4x8x8xf32>, vector<4x12x8xf32>, vector<4x8x12xf32> -> vector<4x8x12xf32>
    "tpu.trace_stop"() : () -> ()
    %cst_187 = arith.constant dense<0xFF800000> : vector<4x8xf32>
    %418 = vector.multi_reduction <maximumf>, %417, %cst_187 [2] : vector<4x8x12xf32> to vector<4x8xf32>
    %419 = vector.shape_cast %418 : vector<4x8xf32> to vector<4x8x1xf32>
    %420 = vector.broadcast %419 : vector<4x8x1xf32> to vector<4x8x12xf32>
    %421 = arith.subf %417, %420 : vector<4x8x12xf32>
    %422 = math.exp %421 : vector<4x8x12xf32>
    %cst_188 = arith.constant dense<0.000000e+00> : vector<4x8xf32>
    %423 = vector.multi_reduction <add>, %422, %cst_188 [2] : vector<4x8x12xf32> to vector<4x8xf32>
    %424 = vector.shape_cast %423 : vector<4x8xf32> to vector<4x8x1xf32>
    %425 = tpu.reciprocal %424 {approx = true} : vector<4x8x1xf32> -> vector<4x8x1xf32>
    %426 = vector.broadcast %425 : vector<4x8x1xf32> to vector<4x8x12xf32>
    %427 = arith.mulf %422, %426 : vector<4x8x12xf32>
    "tpu.trace_start"() <{level = 10 : i32, message = "hqk,hke->hqe"}> : () -> ()
    %cst_189 = arith.constant dense<0.000000e+00> : vector<4x8x8xf32>
    %428 = tpu.matmul %427, %416, %cst_189 {dimension_numbers = #tpu.dot_dimension_numbers<[2], [1], [1], [2], [0, 0, 0, 1, 1, 2], [0], [0]>} : vector<4x8x12xf32>, vector<4x12x8xf32>, vector<4x8x8xf32> -> vector<4x8x8xf32>
    "tpu.trace_stop"() : () -> ()
    %429 = vector.extract_strided_slice %428 {offsets = [0, 0, 0], sizes = [1, 8, 8], strides = [1, 1, 1]} : vector<4x8x8xf32> to vector<1x8x8xf32>
    %430 = vector.shape_cast %429 : vector<1x8x8xf32> to vector<8x8xf32>
    %431 = vector.extract_strided_slice %428 {offsets = [1, 0, 0], sizes = [1, 8, 8], strides = [1, 1, 1]} : vector<4x8x8xf32> to vector<1x8x8xf32>
    %432 = vector.shape_cast %431 : vector<1x8x8xf32> to vector<8x8xf32>
    %433 = vector.extract_strided_slice %428 {offsets = [2, 0, 0], sizes = [1, 8, 8], strides = [1, 1, 1]} : vector<4x8x8xf32> to vector<1x8x8xf32>
    %434 = vector.shape_cast %433 : vector<1x8x8xf32> to vector<8x8xf32>
    %435 = vector.extract_strided_slice %428 {offsets = [3, 0, 0], sizes = [1, 8, 8], strides = [1, 1, 1]} : vector<4x8x8xf32> to vector<1x8x8xf32>
    %436 = vector.shape_cast %435 : vector<1x8x8xf32> to vector<8x8xf32>
    %437 = tpu.concatenate %430, %432, %434, %436 in 1 : vector<8x8xf32>, vector<8x8xf32>, vector<8x8xf32>, vector<8x8xf32> -> vector<8x32xf32>
    %c1_190 = arith.constant 1 : index
    %c7_191 = arith.constant 7 : index
    %c0_192 = arith.constant 0 : index
    %c0_193 = arith.constant 0 : index
    %438 = vector.load %arg2[%c1_190, %c7_191, %c0_192, %c0_193] : memref<2x8x32x32xf32, #tpu.memory_space<vmem>>, vector<1x1x32x32xf32>
    %439 = vector.shape_cast %438 : vector<1x1x32x32xf32> to vector<32x32xf32>
    %cst_194 = arith.constant dense<0.000000e+00> : vector<8x32xf32>
    %440 = tpu.matmul %437, %439, %cst_194 {dimension_numbers = #tpu.dot_dimension_numbers<[1], [0], [0], [1], [0, 0, 1, 1], [], []>} : vector<8x32xf32>, vector<32x32xf32>, vector<8x32xf32> -> vector<8x32xf32>
    %c1_195 = arith.constant 1 : index
    %c7_196 = arith.constant 7 : index
    %c0_197 = arith.constant 0 : index
    %441 = vector.load %arg3[%c1_195, %c7_196, %c0_197] : memref<2x8x32xf32, #tpu.memory_space<vmem>>, vector<1x1x32xf32>
    %442 = vector.shape_cast %441 : vector<1x1x32xf32> to vector<1x32xf32>
    %443 = vector.broadcast %442 : vector<1x32xf32> to vector<8x32xf32>
    %444 = arith.addf %440, %443 : vector<8x32xf32>
    %445 = arith.addf %366, %444 : vector<8x32xf32>
    %c4_198 = arith.constant 4 : index
    %c0_199 = arith.constant 0 : index
    %446 = vector.load %arg4[%c4_198, %c0_199] : memref<7x32xf32, #tpu.memory_space<vmem>>, vector<1x32xf32>
    %c4_200 = arith.constant 4 : index
    %c0_201 = arith.constant 0 : index
    %447 = vector.load %arg5[%c4_200, %c0_201] : memref<7x32xf32, #tpu.memory_space<vmem>>, vector<1x32xf32>
    %cst_202 = arith.constant dense<0.000000e+00> : vector<8xf32>
    %448 = vector.multi_reduction <add>, %445, %cst_202 [1] : vector<8x32xf32> to vector<8xf32>
    %449 = vector.shape_cast %448 : vector<8xf32> to vector<8x1xf32>
    %cst_203 = arith.constant 3.200000e+01 : f32
    %450 = vector.broadcast %cst_203 : f32 to vector<8x1xf32>
    %451 = arith.divf %449, %450 : vector<8x1xf32>
    %452 = vector.broadcast %451 : vector<8x1xf32> to vector<8x32xf32>
    %453 = arith.subf %445, %452 : vector<8x32xf32>
    %454 = arith.mulf %453, %453 : vector<8x32xf32>
    %cst_204 = arith.constant dense<0.000000e+00> : vector<8xf32>
    %455 = vector.multi_reduction <add>, %454, %cst_204 [1] : vector<8x32xf32> to vector<8xf32>
    %456 = vector.shape_cast %455 : vector<8xf32> to vector<8x1xf32>
    %cst_205 = arith.constant 3.200000e+01 : f32
    %457 = vector.broadcast %cst_205 : f32 to vector<8x1xf32>
    %458 = arith.divf %456, %457 : vector<8x1xf32>
    %459 = vector.broadcast %451 : vector<8x1xf32> to vector<8x32xf32>
    %460 = arith.subf %445, %459 : vector<8x32xf32>
    %cst_206 = arith.constant 9.99999974E-6 : f32
    %461 = vector.broadcast %cst_206 : f32 to vector<8x1xf32>
    %462 = arith.addf %458, %461 : vector<8x1xf32>
    %463 = math.rsqrt %462 : vector<8x1xf32>
    %464 = vector.broadcast %463 : vector<8x1xf32> to vector<8x32xf32>
    %465 = arith.mulf %460, %464 : vector<8x32xf32>
    %466 = vector.broadcast %446 : vector<1x32xf32> to vector<8x32xf32>
    %467 = arith.mulf %465, %466 : vector<8x32xf32>
    %468 = vector.broadcast %447 : vector<1x32xf32> to vector<8x32xf32>
    %469 = arith.addf %467, %468 : vector<8x32xf32>
    %c1_207 = arith.constant 1 : index
    %c0_208 = arith.constant 0 : index
    %c0_209 = arith.constant 0 : index
    %470 = vector.load %arg6[%c1_207, %c0_208, %c0_209] : memref<2x32x64xf32, #tpu.memory_space<vmem>>, vector<1x32x64xf32>
    %471 = vector.shape_cast %470 : vector<1x32x64xf32> to vector<32x64xf32>
    %cst_210 = arith.constant dense<0.000000e+00> : vector<8x64xf32>
    %472 = tpu.matmul %469, %471, %cst_210 {dimension_numbers = #tpu.dot_dimension_numbers<[1], [0], [0], [1], [0, 0, 1, 1], [], []>} : vector<8x32xf32>, vector<32x64xf32>, vector<8x64xf32> -> vector<8x64xf32>
    %c1_211 = arith.constant 1 : index
    %c0_212 = arith.constant 0 : index
    %c0_213 = arith.constant 0 : index
    %473 = vector.load %arg7[%c1_211, %c0_212, %c0_213] : memref<2x1x64xf32, #tpu.memory_space<vmem>>, vector<1x1x64xf32>
    %474 = vector.shape_cast %473 : vector<1x1x64xf32> to vector<1x64xf32>
    %475 = vector.broadcast %474 : vector<1x64xf32> to vector<8x64xf32>
    %476 = arith.addf %472, %475 : vector<8x64xf32>
    %cst_214 = arith.constant 0.000000e+00 : f32
    %477 = vector.broadcast %cst_214 : f32 to vector<8x64xf32>
    %478 = arith.maximumf %476, %477 : vector<8x64xf32>
    %c1_215 = arith.constant 1 : index
    %c0_216 = arith.constant 0 : index
    %c0_217 = arith.constant 0 : index
    %479 = vector.load %arg8[%c1_215, %c0_216, %c0_217] : memref<2x64x32xf32, #tpu.memory_space<vmem>>, vector<1x64x32xf32>
    %480 = vector.shape_cast %479 : vector<1x64x32xf32> to vector<64x32xf32>
    %cst_218 = arith.constant dense<0.000000e+00> : vector<8x32xf32>
    %481 = tpu.matmul %478, %480, %cst_218 {dimension_numbers = #tpu.dot_dimension_numbers<[1], [0], [0], [1], [0, 0, 1, 1], [], []>} : vector<8x64xf32>, vector<64x32xf32>, vector<8x32xf32> -> vector<8x32xf32>
    %c1_219 = arith.constant 1 : index
    %c0_220 = arith.constant 0 : index
    %c0_221 = arith.constant 0 : index
    %482 = vector.load %arg9[%c1_219, %c0_220, %c0_221] : memref<2x1x32xf32, #tpu.memory_space<vmem>>, vector<1x1x32xf32>
    %483 = vector.shape_cast %482 : vector<1x1x32xf32> to vector<1x32xf32>
    %484 = vector.broadcast %483 : vector<1x32xf32> to vector<8x32xf32>
    %485 = arith.addf %481, %484 : vector<8x32xf32>
    %486 = arith.addf %469, %485 : vector<8x32xf32>
    %c5_222 = arith.constant 5 : index
    %c0_223 = arith.constant 0 : index
    %487 = vector.load %arg4[%c5_222, %c0_223] : memref<7x32xf32, #tpu.memory_space<vmem>>, vector<1x32xf32>
    %c5_224 = arith.constant 5 : index
    %c0_225 = arith.constant 0 : index
    %488 = vector.load %arg5[%c5_224, %c0_225] : memref<7x32xf32, #tpu.memory_space<vmem>>, vector<1x32xf32>
    %cst_226 = arith.constant dense<0.000000e+00> : vector<8xf32>
    %489 = vector.multi_reduction <add>, %486, %cst_226 [1] : vector<8x32xf32> to vector<8xf32>
    %490 = vector.shape_cast %489 : vector<8xf32> to vector<8x1xf32>
    %cst_227 = arith.constant 3.200000e+01 : f32
    %491 = vector.broadcast %cst_227 : f32 to vector<8x1xf32>
    %492 = arith.divf %490, %491 : vector<8x1xf32>
    %493 = vector.broadcast %492 : vector<8x1xf32> to vector<8x32xf32>
    %494 = arith.subf %486, %493 : vector<8x32xf32>
    %495 = arith.mulf %494, %494 : vector<8x32xf32>
    %cst_228 = arith.constant dense<0.000000e+00> : vector<8xf32>
    %496 = vector.multi_reduction <add>, %495, %cst_228 [1] : vector<8x32xf32> to vector<8xf32>
    %497 = vector.shape_cast %496 : vector<8xf32> to vector<8x1xf32>
    %cst_229 = arith.constant 3.200000e+01 : f32
    %498 = vector.broadcast %cst_229 : f32 to vector<8x1xf32>
    %499 = arith.divf %497, %498 : vector<8x1xf32>
    %500 = vector.broadcast %492 : vector<8x1xf32> to vector<8x32xf32>
    %501 = arith.subf %486, %500 : vector<8x32xf32>
    %cst_230 = arith.constant 9.99999974E-6 : f32
    %502 = vector.broadcast %cst_230 : f32 to vector<8x1xf32>
    %503 = arith.addf %499, %502 : vector<8x1xf32>
    %504 = math.rsqrt %503 : vector<8x1xf32>
    %505 = vector.broadcast %504 : vector<8x1xf32> to vector<8x32xf32>
    %506 = arith.mulf %501, %505 : vector<8x32xf32>
    %507 = vector.broadcast %487 : vector<1x32xf32> to vector<8x32xf32>
    %508 = arith.mulf %506, %507 : vector<8x32xf32>
    %509 = vector.broadcast %488 : vector<1x32xf32> to vector<8x32xf32>
    %510 = arith.addf %508, %509 : vector<8x32xf32>
    %c6_231 = arith.constant 6 : index
    %c0_232 = arith.constant 0 : index
    %511 = vector.load %arg4[%c6_231, %c0_232] : memref<7x32xf32, #tpu.memory_space<vmem>>, vector<1x32xf32>
    %c6_233 = arith.constant 6 : index
    %c0_234 = arith.constant 0 : index
    %512 = vector.load %arg5[%c6_233, %c0_234] : memref<7x32xf32, #tpu.memory_space<vmem>>, vector<1x32xf32>
    %cst_235 = arith.constant dense<0.000000e+00> : vector<8xf32>
    %513 = vector.multi_reduction <add>, %510, %cst_235 [1] : vector<8x32xf32> to vector<8xf32>
    %514 = vector.shape_cast %513 : vector<8xf32> to vector<8x1xf32>
    %cst_236 = arith.constant 3.200000e+01 : f32
    %515 = vector.broadcast %cst_236 : f32 to vector<8x1xf32>
    %516 = arith.divf %514, %515 : vector<8x1xf32>
    %517 = vector.broadcast %516 : vector<8x1xf32> to vector<8x32xf32>
    %518 = arith.subf %510, %517 : vector<8x32xf32>
    %519 = arith.mulf %518, %518 : vector<8x32xf32>
    %cst_237 = arith.constant dense<0.000000e+00> : vector<8xf32>
    %520 = vector.multi_reduction <add>, %519, %cst_237 [1] : vector<8x32xf32> to vector<8xf32>
    %521 = vector.shape_cast %520 : vector<8xf32> to vector<8x1xf32>
    %cst_238 = arith.constant 3.200000e+01 : f32
    %522 = vector.broadcast %cst_238 : f32 to vector<8x1xf32>
    %523 = arith.divf %521, %522 : vector<8x1xf32>
    %524 = vector.broadcast %516 : vector<8x1xf32> to vector<8x32xf32>
    %525 = arith.subf %510, %524 : vector<8x32xf32>
    %cst_239 = arith.constant 9.99999974E-6 : f32
    %526 = vector.broadcast %cst_239 : f32 to vector<8x1xf32>
    %527 = arith.addf %523, %526 : vector<8x1xf32>
    %528 = math.rsqrt %527 : vector<8x1xf32>
    %529 = vector.broadcast %528 : vector<8x1xf32> to vector<8x32xf32>
    %530 = arith.mulf %525, %529 : vector<8x32xf32>
    %531 = vector.broadcast %511 : vector<1x32xf32> to vector<8x32xf32>
    %532 = arith.mulf %530, %531 : vector<8x32xf32>
    %533 = vector.broadcast %512 : vector<1x32xf32> to vector<8x32xf32>
    %534 = arith.addf %532, %533 : vector<8x32xf32>
    %c0_240 = arith.constant 0 : index
    %c0_241 = arith.constant 0 : index
    %c0_242 = arith.constant 0 : index
    %535 = vector.load %arg10[%c0_240, %c0_241, %c0_242] : memref<2x8x32xf32, #tpu.memory_space<vmem>>, vector<1x8x32xf32>
    %536 = vector.shape_cast %535 : vector<1x8x32xf32> to vector<8x32xf32>
    %537 = vector.shape_cast %534 : vector<8x32xf32> to vector<1x8x32xf32>
    tpu.vector_store %arg10[%c0_240, %c0_241, %c0_242], %537 {strides = array<i32>} : memref<2x8x32xf32, #tpu.memory_space<vmem>>, vector<1x8x32xf32>,
    %c1_243 = arith.constant 1 : index
    %c0_244 = arith.constant 0 : index
    %c0_245 = arith.constant 0 : index
    %538 = vector.load %arg0[%c1_243, %c0_244, %c0_245] : memref<2x8x32xf32, #tpu.memory_space<vmem>>, vector<1x8x32xf32>
    %539 = vector.shape_cast %538 : vector<1x8x32xf32> to vector<8x32xf32>
    %c1_246 = arith.constant 1 : index
    %c0_247 = arith.constant 0 : index
    %c0_248 = arith.constant 0 : index
    %540 = vector.load %arg1[%c1_246, %c0_247, %c0_248] : memref<2x12x32xf32, #tpu.memory_space<vmem>>, vector<1x12x32xf32>
    %541 = vector.shape_cast %540 : vector<1x12x32xf32> to vector<12x32xf32>
    %c0_249 = arith.constant 0 : index
    %c0_250 = arith.constant 0 : index
    %c0_251 = arith.constant 0 : index
    %c0_252 = arith.constant 0 : index
    %542 = vector.load %arg2[%c0_249, %c0_250, %c0_251, %c0_252] : memref<2x8x32x32xf32, #tpu.memory_space<vmem>>, vector<1x1x32x32xf32>
    %543 = vector.shape_cast %542 : vector<1x1x32x32xf32> to vector<32x32xf32>
    %cst_253 = arith.constant dense<0.000000e+00> : vector<8x32xf32>
    %544 = tpu.matmul %539, %543, %cst_253 {dimension_numbers = #tpu.dot_dimension_numbers<[1], [0], [0], [1], [0, 0, 1, 1], [], []>} : vector<8x32xf32>, vector<32x32xf32>, vector<8x32xf32> -> vector<8x32xf32>
    %c0_254 = arith.constant 0 : index
    %c0_255 = arith.constant 0 : index
    %c0_256 = arith.constant 0 : index
    %545 = vector.load %arg3[%c0_254, %c0_255, %c0_256] : memref<2x8x32xf32, #tpu.memory_space<vmem>>, vector<1x1x32xf32>
    %546 = vector.shape_cast %545 : vector<1x1x32xf32> to vector<1x32xf32>
    %547 = vector.broadcast %546 : vector<1x32xf32> to vector<8x32xf32>
    %548 = arith.addf %544, %547 : vector<8x32xf32>
    %cst_257 = arith.constant 0.353553385 : f32
    %549 = vector.broadcast %cst_257 : f32 to vector<8x32xf32>
    %550 = arith.mulf %548, %549 : vector<8x32xf32>
    %c0_258 = arith.constant 0 : index
    %c1_259 = arith.constant 1 : index
    %c0_260 = arith.constant 0 : index
    %c0_261 = arith.constant 0 : index
    %551 = vector.load %arg2[%c0_258, %c1_259, %c0_260, %c0_261] : memref<2x8x32x32xf32, #tpu.memory_space<vmem>>, vector<1x1x32x32xf32>
    %552 = vector.shape_cast %551 : vector<1x1x32x32xf32> to vector<32x32xf32>
    %cst_262 = arith.constant dense<0.000000e+00> : vector<8x32xf32>
    %553 = tpu.matmul %539, %552, %cst_262 {dimension_numbers = #tpu.dot_dimension_numbers<[1], [0], [0], [1], [0, 0, 1, 1], [], []>} : vector<8x32xf32>, vector<32x32xf32>, vector<8x32xf32> -> vector<8x32xf32>
    %c0_263 = arith.constant 0 : index
    %c1_264 = arith.constant 1 : index
    %c0_265 = arith.constant 0 : index
    %554 = vector.load %arg3[%c0_263, %c1_264, %c0_265] : memref<2x8x32xf32, #tpu.memory_space<vmem>>, vector<1x1x32xf32>
    %555 = vector.shape_cast %554 : vector<1x1x32xf32> to vector<1x32xf32>
    %556 = vector.broadcast %555 : vector<1x32xf32> to vector<8x32xf32>
    %557 = arith.addf %553, %556 : vector<8x32xf32>
    %c0_266 = arith.constant 0 : index
    %c2_267 = arith.constant 2 : index
    %c0_268 = arith.constant 0 : index
    %c0_269 = arith.constant 0 : index
    %558 = vector.load %arg2[%c0_266, %c2_267, %c0_268, %c0_269] : memref<2x8x32x32xf32, #tpu.memory_space<vmem>>, vector<1x1x32x32xf32>
    %559 = vector.shape_cast %558 : vector<1x1x32x32xf32> to vector<32x32xf32>
    %cst_270 = arith.constant dense<0.000000e+00> : vector<8x32xf32>
    %560 = tpu.matmul %539, %559, %cst_270 {dimension_numbers = #tpu.dot_dimension_numbers<[1], [0], [0], [1], [0, 0, 1, 1], [], []>} : vector<8x32xf32>, vector<32x32xf32>, vector<8x32xf32> -> vector<8x32xf32>
    %c0_271 = arith.constant 0 : index
    %c2_272 = arith.constant 2 : index
    %c0_273 = arith.constant 0 : index
    %561 = vector.load %arg3[%c0_271, %c2_272, %c0_273] : memref<2x8x32xf32, #tpu.memory_space<vmem>>, vector<1x1x32xf32>
    %562 = vector.shape_cast %561 : vector<1x1x32xf32> to vector<1x32xf32>
    %563 = vector.broadcast %562 : vector<1x32xf32> to vector<8x32xf32>
    %564 = arith.addf %560, %563 : vector<8x32xf32>
    %565 = vector.extract_strided_slice %550 {offsets = [0, 0], sizes = [8, 8], strides = [1, 1]} : vector<8x32xf32> to vector<8x8xf32>
    %566 = vector.extract_strided_slice %550 {offsets = [0, 8], sizes = [8, 8], strides = [1, 1]} : vector<8x32xf32> to vector<8x8xf32>
    %567 = vector.extract_strided_slice %550 {offsets = [0, 16], sizes = [8, 8], strides = [1, 1]} : vector<8x32xf32> to vector<8x8xf32>
    %568 = vector.extract_strided_slice %550 {offsets = [0, 24], sizes = [8, 8], strides = [1, 1]} : vector<8x32xf32> to vector<8x8xf32>
    %569 = vector.shape_cast %565 : vector<8x8xf32> to vector<1x8x8xf32>
    %570 = vector.shape_cast %566 : vector<8x8xf32> to vector<1x8x8xf32>
    %571 = vector.shape_cast %567 : vector<8x8xf32> to vector<1x8x8xf32>
    %572 = vector.shape_cast %568 : vector<8x8xf32> to vector<1x8x8xf32>
    %573 = tpu.concatenate %569, %570, %571, %572 in 0 : vector<1x8x8xf32>, vector<1x8x8xf32>, vector<1x8x8xf32>, vector<1x8x8xf32> -> vector<4x8x8xf32>
    %574 = vector.extract_strided_slice %557 {offsets = [0, 0], sizes = [8, 8], strides = [1, 1]} : vector<8x32xf32> to vector<8x8xf32>
    %575 = vector.extract_strided_slice %557 {offsets = [0, 8], sizes = [8, 8], strides = [1, 1]} : vector<8x32xf32> to vector<8x8xf32>
    %576 = vector.extract_strided_slice %557 {offsets = [0, 16], sizes = [8, 8], strides = [1, 1]} : vector<8x32xf32> to vector<8x8xf32>
    %577 = vector.extract_strided_slice %557 {offsets = [0, 24], sizes = [8, 8], strides = [1, 1]} : vector<8x32xf32> to vector<8x8xf32>
    %578 = vector.shape_cast %574 : vector<8x8xf32> to vector<1x8x8xf32>
    %579 = vector.shape_cast %575 : vector<8x8xf32> to vector<1x8x8xf32>
    %580 = vector.shape_cast %576 : vector<8x8xf32> to vector<1x8x8xf32>
    %581 = vector.shape_cast %577 : vector<8x8xf32> to vector<1x8x8xf32>
    %582 = tpu.concatenate %578, %579, %580, %581 in 0 : vector<1x8x8xf32>, vector<1x8x8xf32>, vector<1x8x8xf32>, vector<1x8x8xf32> -> vector<4x8x8xf32>
    %583 = vector.extract_strided_slice %564 {offsets = [0, 0], sizes = [8, 8], strides = [1, 1]} : vector<8x32xf32> to vector<8x8xf32>
    %584 = vector.extract_strided_slice %564 {offsets = [0, 8], sizes = [8, 8], strides = [1, 1]} : vector<8x32xf32> to vector<8x8xf32>
    %585 = vector.extract_strided_slice %564 {offsets = [0, 16], sizes = [8, 8], strides = [1, 1]} : vector<8x32xf32> to vector<8x8xf32>
    %586 = vector.extract_strided_slice %564 {offsets = [0, 24], sizes = [8, 8], strides = [1, 1]} : vector<8x32xf32> to vector<8x8xf32>
    %587 = vector.shape_cast %583 : vector<8x8xf32> to vector<1x8x8xf32>
    %588 = vector.shape_cast %584 : vector<8x8xf32> to vector<1x8x8xf32>
    %589 = vector.shape_cast %585 : vector<8x8xf32> to vector<1x8x8xf32>
    %590 = vector.shape_cast %586 : vector<8x8xf32> to vector<1x8x8xf32>
    %591 = tpu.concatenate %587, %588, %589, %590 in 0 : vector<1x8x8xf32>, vector<1x8x8xf32>, vector<1x8x8xf32>, vector<1x8x8xf32> -> vector<4x8x8xf32>
    "tpu.trace_start"() <{level = 10 : i32, message = "hqe,hke->hqk"}> : () -> ()
    %cst_274 = arith.constant dense<0.000000e+00> : vector<4x8x8xf32>
    %592 = tpu.matmul %573, %582, %cst_274 {dimension_numbers = #tpu.dot_dimension_numbers<[2], [2], [1], [1], [0, 0, 0, 1, 1, 1], [0], [0]>} : vector<4x8x8xf32>, vector<4x8x8xf32>, vector<4x8x8xf32> -> vector<4x8x8xf32>
    "tpu.trace_stop"() : () -> ()
    %593 = vector.shape_cast %2 : vector<8x8xi1> to vector<1x8x8xi1>
    %cst_275 = arith.constant -1.000000e+30 : f32
    %594 = vector.shape_cast %593 : vector<1x8x8xi1> to vector<1x8x8xi1>
    %595 = vector.broadcast %594 : vector<1x8x8xi1> to vector<4x8x8xi1>
    %596 = vector.broadcast %cst_275 : f32 to vector<4x8x8xf32>
    %597 = arith.select %595, %596, %592 : vector<4x8x8xi1>, vector<4x8x8xf32>
    %cst_276 = arith.constant dense<0xFF800000> : vector<4x8xf32>
    %598 = vector.multi_reduction <maximumf>, %597, %cst_276 [2] : vector<4x8x8xf32> to vector<4x8xf32>
    %599 = vector.shape_cast %598 : vector<4x8xf32> to vector<4x8x1xf32>
    %600 = vector.broadcast %599 : vector<4x8x1xf32> to vector<4x8x8xf32>
    %601 = arith.subf %597, %600 : vector<4x8x8xf32>
    %602 = math.exp %601 : vector<4x8x8xf32>
    %cst_277 = arith.constant dense<0.000000e+00> : vector<4x8xf32>
    %603 = vector.multi_reduction <add>, %602, %cst_277 [2] : vector<4x8x8xf32> to vector<4x8xf32>
    %604 = vector.shape_cast %603 : vector<4x8xf32> to vector<4x8x1xf32>
    %605 = tpu.reciprocal %604 {approx = true} : vector<4x8x1xf32> -> vector<4x8x1xf32>
    %606 = vector.broadcast %605 : vector<4x8x1xf32> to vector<4x8x8xf32>
    %607 = arith.mulf %602, %606 : vector<4x8x8xf32>
    "tpu.trace_start"() <{level = 10 : i32, message = "hqk,hke->hqe"}> : () -> ()
    %cst_278 = arith.constant dense<0.000000e+00> : vector<4x8x8xf32>
    %608 = tpu.matmul %607, %591, %cst_278 {dimension_numbers = #tpu.dot_dimension_numbers<[2], [1], [1], [2], [0, 0, 0, 1, 1, 2], [0], [0]>} : vector<4x8x8xf32>, vector<4x8x8xf32>, vector<4x8x8xf32> -> vector<4x8x8xf32>
    "tpu.trace_stop"() : () -> ()
    %609 = vector.extract_strided_slice %608 {offsets = [0, 0, 0], sizes = [1, 8, 8], strides = [1, 1, 1]} : vector<4x8x8xf32> to vector<1x8x8xf32>
    %610 = vector.shape_cast %609 : vector<1x8x8xf32> to vector<8x8xf32>
    %611 = vector.extract_strided_slice %608 {offsets = [1, 0, 0], sizes = [1, 8, 8], strides = [1, 1, 1]} : vector<4x8x8xf32> to vector<1x8x8xf32>
    %612 = vector.shape_cast %611 : vector<1x8x8xf32> to vector<8x8xf32>
    %613 = vector.extract_strided_slice %608 {offsets = [2, 0, 0], sizes = [1, 8, 8], strides = [1, 1, 1]} : vector<4x8x8xf32> to vector<1x8x8xf32>
    %614 = vector.shape_cast %613 : vector<1x8x8xf32> to vector<8x8xf32>
    %615 = vector.extract_strided_slice %608 {offsets = [3, 0, 0], sizes = [1, 8, 8], strides = [1, 1, 1]} : vector<4x8x8xf32> to vector<1x8x8xf32>
    %616 = vector.shape_cast %615 : vector<1x8x8xf32> to vector<8x8xf32>
    %617 = tpu.concatenate %610, %612, %614, %616 in 1 : vector<8x8xf32>, vector<8x8xf32>, vector<8x8xf32>, vector<8x8xf32> -> vector<8x32xf32>
    %c0_279 = arith.constant 0 : index
    %c3_280 = arith.constant 3 : index
    %c0_281 = arith.constant 0 : index
    %c0_282 = arith.constant 0 : index
    %618 = vector.load %arg2[%c0_279, %c3_280, %c0_281, %c0_282] : memref<2x8x32x32xf32, #tpu.memory_space<vmem>>, vector<1x1x32x32xf32>
    %619 = vector.shape_cast %618 : vector<1x1x32x32xf32> to vector<32x32xf32>
    %cst_283 = arith.constant dense<0.000000e+00> : vector<8x32xf32>
    %620 = tpu.matmul %617, %619, %cst_283 {dimension_numbers = #tpu.dot_dimension_numbers<[1], [0], [0], [1], [0, 0, 1, 1], [], []>} : vector<8x32xf32>, vector<32x32xf32>, vector<8x32xf32> -> vector<8x32xf32>
    %c0_284 = arith.constant 0 : index
    %c3_285 = arith.constant 3 : index
    %c0_286 = arith.constant 0 : index
    %621 = vector.load %arg3[%c0_284, %c3_285, %c0_286] : memref<2x8x32xf32, #tpu.memory_space<vmem>>, vector<1x1x32xf32>
    %622 = vector.shape_cast %621 : vector<1x1x32xf32> to vector<1x32xf32>
    %623 = vector.broadcast %622 : vector<1x32xf32> to vector<8x32xf32>
    %624 = arith.addf %620, %623 : vector<8x32xf32>
    %625 = arith.addf %539, %624 : vector<8x32xf32>
    %c0_287 = arith.constant 0 : index
    %c0_288 = arith.constant 0 : index
    %626 = vector.load %arg4[%c0_287, %c0_288] : memref<7x32xf32, #tpu.memory_space<vmem>>, vector<1x32xf32>
    %c0_289 = arith.constant 0 : index
    %c0_290 = arith.constant 0 : index
    %627 = vector.load %arg5[%c0_289, %c0_290] : memref<7x32xf32, #tpu.memory_space<vmem>>, vector<1x32xf32>
    %cst_291 = arith.constant dense<0.000000e+00> : vector<8xf32>
    %628 = vector.multi_reduction <add>, %625, %cst_291 [1] : vector<8x32xf32> to vector<8xf32>
    %629 = vector.shape_cast %628 : vector<8xf32> to vector<8x1xf32>
    %cst_292 = arith.constant 3.200000e+01 : f32
    %630 = vector.broadcast %cst_292 : f32 to vector<8x1xf32>
    %631 = arith.divf %629, %630 : vector<8x1xf32>
    %632 = vector.broadcast %631 : vector<8x1xf32> to vector<8x32xf32>
    %633 = arith.subf %625, %632 : vector<8x32xf32>
    %634 = arith.mulf %633, %633 : vector<8x32xf32>
    %cst_293 = arith.constant dense<0.000000e+00> : vector<8xf32>
    %635 = vector.multi_reduction <add>, %634, %cst_293 [1] : vector<8x32xf32> to vector<8xf32>
    %636 = vector.shape_cast %635 : vector<8xf32> to vector<8x1xf32>
    %cst_294 = arith.constant 3.200000e+01 : f32
    %637 = vector.broadcast %cst_294 : f32 to vector<8x1xf32>
    %638 = arith.divf %636, %637 : vector<8x1xf32>
    %639 = vector.broadcast %631 : vector<8x1xf32> to vector<8x32xf32>
    %640 = arith.subf %625, %639 : vector<8x32xf32>
    %cst_295 = arith.constant 9.99999974E-6 : f32
    %641 = vector.broadcast %cst_295 : f32 to vector<8x1xf32>
    %642 = arith.addf %638, %641 : vector<8x1xf32>
    %643 = math.rsqrt %642 : vector<8x1xf32>
    %644 = vector.broadcast %643 : vector<8x1xf32> to vector<8x32xf32>
    %645 = arith.mulf %640, %644 : vector<8x32xf32>
    %646 = vector.broadcast %626 : vector<1x32xf32> to vector<8x32xf32>
    %647 = arith.mulf %645, %646 : vector<8x32xf32>
    %648 = vector.broadcast %627 : vector<1x32xf32> to vector<8x32xf32>
    %649 = arith.addf %647, %648 : vector<8x32xf32>
    %c0_296 = arith.constant 0 : index
    %c4_297 = arith.constant 4 : index
    %c0_298 = arith.constant 0 : index
    %c0_299 = arith.constant 0 : index
    %650 = vector.load %arg2[%c0_296, %c4_297, %c0_298, %c0_299] : memref<2x8x32x32xf32, #tpu.memory_space<vmem>>, vector<1x1x32x32xf32>
    %651 = vector.shape_cast %650 : vector<1x1x32x32xf32> to vector<32x32xf32>
    %cst_300 = arith.constant dense<0.000000e+00> : vector<8x32xf32>
    %652 = tpu.matmul %649, %651, %cst_300 {dimension_numbers = #tpu.dot_dimension_numbers<[1], [0], [0], [1], [0, 0, 1, 1], [], []>} : vector<8x32xf32>, vector<32x32xf32>, vector<8x32xf32> -> vector<8x32xf32>
    %c0_301 = arith.constant 0 : index
    %c4_302 = arith.constant 4 : index
    %c0_303 = arith.constant 0 : index
    %653 = vector.load %arg3[%c0_301, %c4_302, %c0_303] : memref<2x8x32xf32, #tpu.memory_space<vmem>>, vector<1x1x32xf32>
    %654 = vector.shape_cast %653 : vector<1x1x32xf32> to vector<1x32xf32>
    %655 = vector.broadcast %654 : vector<1x32xf32> to vector<8x32xf32>
    %656 = arith.addf %652, %655 : vector<8x32xf32>
    %cst_304 = arith.constant 0.353553385 : f32
    %657 = vector.broadcast %cst_304 : f32 to vector<8x32xf32>
    %658 = arith.mulf %656, %657 : vector<8x32xf32>
    %c0_305 = arith.constant 0 : index
    %c5_306 = arith.constant 5 : index
    %c0_307 = arith.constant 0 : index
    %c0_308 = arith.constant 0 : index
    %659 = vector.load %arg2[%c0_305, %c5_306, %c0_307, %c0_308] : memref<2x8x32x32xf32, #tpu.memory_space<vmem>>, vector<1x1x32x32xf32>
    %660 = vector.shape_cast %659 : vector<1x1x32x32xf32> to vector<32x32xf32>
    %cst_309 = arith.constant dense<0.000000e+00> : vector<12x32xf32>
    %661 = tpu.matmul %541, %660, %cst_309 {dimension_numbers = #tpu.dot_dimension_numbers<[1], [0], [0], [1], [0, 0, 1, 1], [], []>} : vector<12x32xf32>, vector<32x32xf32>, vector<12x32xf32> -> vector<12x32xf32>
    %c0_310 = arith.constant 0 : index
    %c5_311 = arith.constant 5 : index
    %c0_312 = arith.constant 0 : index
    %662 = vector.load %arg3[%c0_310, %c5_311, %c0_312] : memref<2x8x32xf32, #tpu.memory_space<vmem>>, vector<1x1x32xf32>
    %663 = vector.shape_cast %662 : vector<1x1x32xf32> to vector<1x32xf32>
    %664 = vector.broadcast %663 : vector<1x32xf32> to vector<12x32xf32>
    %665 = arith.addf %661, %664 : vector<12x32xf32>
    %c0_313 = arith.constant 0 : index
    %c6_314 = arith.constant 6 : index
    %c0_315 = arith.constant 0 : index
    %c0_316 = arith.constant 0 : index
    %666 = vector.load %arg2[%c0_313, %c6_314, %c0_315, %c0_316] : memref<2x8x32x32xf32, #tpu.memory_space<vmem>>, vector<1x1x32x32xf32>
    %667 = vector.shape_cast %666 : vector<1x1x32x32xf32> to vector<32x32xf32>
    %cst_317 = arith.constant dense<0.000000e+00> : vector<12x32xf32>
    %668 = tpu.matmul %541, %667, %cst_317 {dimension_numbers = #tpu.dot_dimension_numbers<[1], [0], [0], [1], [0, 0, 1, 1], [], []>} : vector<12x32xf32>, vector<32x32xf32>, vector<12x32xf32> -> vector<12x32xf32>
    %c0_318 = arith.constant 0 : index
    %c6_319 = arith.constant 6 : index
    %c0_320 = arith.constant 0 : index
    %669 = vector.load %arg3[%c0_318, %c6_319, %c0_320] : memref<2x8x32xf32, #tpu.memory_space<vmem>>, vector<1x1x32xf32>
    %670 = vector.shape_cast %669 : vector<1x1x32xf32> to vector<1x32xf32>
    %671 = vector.broadcast %670 : vector<1x32xf32> to vector<12x32xf32>
    %672 = arith.addf %668, %671 : vector<12x32xf32>
    %673 = vector.extract_strided_slice %658 {offsets = [0, 0], sizes = [8, 8], strides = [1, 1]} : vector<8x32xf32> to vector<8x8xf32>
    %674 = vector.extract_strided_slice %658 {offsets = [0, 8], sizes = [8, 8], strides = [1, 1]} : vector<8x32xf32> to vector<8x8xf32>
    %675 = vector.extract_strided_slice %658 {offsets = [0, 16], sizes = [8, 8], strides = [1, 1]} : vector<8x32xf32> to vector<8x8xf32>
    %676 = vector.extract_strided_slice %658 {offsets = [0, 24], sizes = [8, 8], strides = [1, 1]} : vector<8x32xf32> to vector<8x8xf32>
    %677 = vector.shape_cast %673 : vector<8x8xf32> to vector<1x8x8xf32>
    %678 = vector.shape_cast %674 : vector<8x8xf32> to vector<1x8x8xf32>
    %679 = vector.shape_cast %675 : vector<8x8xf32> to vector<1x8x8xf32>
    %680 = vector.shape_cast %676 : vector<8x8xf32> to vector<1x8x8xf32>
    %681 = tpu.concatenate %677, %678, %679, %680 in 0 : vector<1x8x8xf32>, vector<1x8x8xf32>, vector<1x8x8xf32>, vector<1x8x8xf32> -> vector<4x8x8xf32>
    %682 = vector.extract_strided_slice %665 {offsets = [0, 0], sizes = [12, 8], strides = [1, 1]} : vector<12x32xf32> to vector<12x8xf32>
    %683 = vector.extract_strided_slice %665 {offsets = [0, 8], sizes = [12, 8], strides = [1, 1]} : vector<12x32xf32> to vector<12x8xf32>
    %684 = vector.extract_strided_slice %665 {offsets = [0, 16], sizes = [12, 8], strides = [1, 1]} : vector<12x32xf32> to vector<12x8xf32>
    %685 = vector.extract_strided_slice %665 {offsets = [0, 24], sizes = [12, 8], strides = [1, 1]} : vector<12x32xf32> to vector<12x8xf32>
    %686 = vector.shape_cast %682 : vector<12x8xf32> to vector<1x12x8xf32>
    %687 = vector.shape_cast %683 : vector<12x8xf32> to vector<1x12x8xf32>
    %688 = vector.shape_cast %684 : vector<12x8xf32> to vector<1x12x8xf32>
    %689 = vector.shape_cast %685 : vector<12x8xf32> to vector<1x12x8xf32>
    %690 = tpu.concatenate %686, %687, %688, %689 in 0 : vector<1x12x8xf32>, vector<1x12x8xf32>, vector<1x12x8xf32>, vector<1x12x8xf32> -> vector<4x12x8xf32>
    %691 = vector.extract_strided_slice %672 {offsets = [0, 0], sizes = [12, 8], strides = [1, 1]} : vector<12x32xf32> to vector<12x8xf32>
    %692 = vector.extract_strided_slice %672 {offsets = [0, 8], sizes = [12, 8], strides = [1, 1]} : vector<12x32xf32> to vector<12x8xf32>
    %693 = vector.extract_strided_slice %672 {offsets = [0, 16], sizes = [12, 8], strides = [1, 1]} : vector<12x32xf32> to vector<12x8xf32>
    %694 = vector.extract_strided_slice %672 {offsets = [0, 24], sizes = [12, 8], strides = [1, 1]} : vector<12x32xf32> to vector<12x8xf32>
    %695 = vector.shape_cast %691 : vector<12x8xf32> to vector<1x12x8xf32>
    %696 = vector.shape_cast %692 : vector<12x8xf32> to vector<1x12x8xf32>
    %697 = vector.shape_cast %693 : vector<12x8xf32> to vector<1x12x8xf32>
    %698 = vector.shape_cast %694 : vector<12x8xf32> to vector<1x12x8xf32>
    %699 = tpu.concatenate %695, %696, %697, %698 in 0 : vector<1x12x8xf32>, vector<1x12x8xf32>, vector<1x12x8xf32>, vector<1x12x8xf32> -> vector<4x12x8xf32>
    "tpu.trace_start"() <{level = 10 : i32, message = "hqe,hke->hqk"}> : () -> ()
    %cst_321 = arith.constant dense<0.000000e+00> : vector<4x8x12xf32>
    %700 = tpu.matmul %681, %690, %cst_321 {dimension_numbers = #tpu.dot_dimension_numbers<[2], [2], [1], [1], [0, 0, 0, 1, 1, 1], [0], [0]>} : vector<4x8x8xf32>, vector<4x12x8xf32>, vector<4x8x12xf32> -> vector<4x8x12xf32>
    "tpu.trace_stop"() : () -> ()
    %cst_322 = arith.constant dense<0xFF800000> : vector<4x8xf32>
    %701 = vector.multi_reduction <maximumf>, %700, %cst_322 [2] : vector<4x8x12xf32> to vector<4x8xf32>
    %702 = vector.shape_cast %701 : vector<4x8xf32> to vector<4x8x1xf32>
    %703 = vector.broadcast %702 : vector<4x8x1xf32> to vector<4x8x12xf32>
    %704 = arith.subf %700, %703 : vector<4x8x12xf32>
    %705 = math.exp %704 : vector<4x8x12xf32>
    %cst_323 = arith.constant dense<0.000000e+00> : vector<4x8xf32>
    %706 = vector.multi_reduction <add>, %705, %cst_323 [2] : vector<4x8x12xf32> to vector<4x8xf32>
    %707 = vector.shape_cast %706 : vector<4x8xf32> to vector<4x8x1xf32>
    %708 = tpu.reciprocal %707 {approx = true} : vector<4x8x1xf32> -> vector<4x8x1xf32>
    %709 = vector.broadcast %708 : vector<4x8x1xf32> to vector<4x8x12xf32>
    %710 = arith.mulf %705, %709 : vector<4x8x12xf32>
    "tpu.trace_start"() <{level = 10 : i32, message = "hqk,hke->hqe"}> : () -> ()
    %cst_324 = arith.constant dense<0.000000e+00> : vector<4x8x8xf32>
    %711 = tpu.matmul %710, %699, %cst_324 {dimension_numbers = #tpu.dot_dimension_numbers<[2], [1], [1], [2], [0, 0, 0, 1, 1, 2], [0], [0]>} : vector<4x8x12xf32>, vector<4x12x8xf32>, vector<4x8x8xf32> -> vector<4x8x8xf32>
    "tpu.trace_stop"() : () -> ()
    %712 = vector.extract_strided_slice %711 {offsets = [0, 0, 0], sizes = [1, 8, 8], strides = [1, 1, 1]} : vector<4x8x8xf32> to vector<1x8x8xf32>
    %713 = vector.shape_cast %712 : vector<1x8x8xf32> to vector<8x8xf32>
    %714 = vector.extract_strided_slice %711 {offsets = [1, 0, 0], sizes = [1, 8, 8], strides = [1, 1, 1]} : vector<4x8x8xf32> to vector<1x8x8xf32>
    %715 = vector.shape_cast %714 : vector<1x8x8xf32> to vector<8x8xf32>
    %716 = vector.extract_strided_slice %711 {offsets = [2, 0, 0], sizes = [1, 8, 8], strides = [1, 1, 1]} : vector<4x8x8xf32> to vector<1x8x8xf32>
    %717 = vector.shape_cast %716 : vector<1x8x8xf32> to vector<8x8xf32>
    %718 = vector.extract_strided_slice %711 {offsets = [3, 0, 0], sizes = [1, 8, 8], strides = [1, 1, 1]} : vector<4x8x8xf32> to vector<1x8x8xf32>
    %719 = vector.shape_cast %718 : vector<1x8x8xf32> to vector<8x8xf32>
    %720 = tpu.concatenate %713, %715, %717, %719 in 1 : vector<8x8xf32>, vector<8x8xf32>, vector<8x8xf32>, vector<8x8xf32> -> vector<8x32xf32>
    %c0_325 = arith.constant 0 : index
    %c7_326 = arith.constant 7 : index
    %c0_327 = arith.constant 0 : index
    %c0_328 = arith.constant 0 : index
    %721 = vector.load %arg2[%c0_325, %c7_326, %c0_327, %c0_328] : memref<2x8x32x32xf32, #tpu.memory_space<vmem>>, vector<1x1x32x32xf32>
    %722 = vector.shape_cast %721 : vector<1x1x32x32xf32> to vector<32x32xf32>
    %cst_329 = arith.constant dense<0.000000e+00> : vector<8x32xf32>
    %723 = tpu.matmul %720, %722, %cst_329 {dimension_numbers = #tpu.dot_dimension_numbers<[1], [0], [0], [1], [0, 0, 1, 1], [], []>} : vector<8x32xf32>, vector<32x32xf32>, vector<8x32xf32> -> vector<8x32xf32>
    %c0_330 = arith.constant 0 : index
    %c7_331 = arith.constant 7 : index
    %c0_332 = arith.constant 0 : index
    %724 = vector.load %arg3[%c0_330, %c7_331, %c0_332] : memref<2x8x32xf32, #tpu.memory_space<vmem>>, vector<1x1x32xf32>
    %725 = vector.shape_cast %724 : vector<1x1x32xf32> to vector<1x32xf32>
    %726 = vector.broadcast %725 : vector<1x32xf32> to vector<8x32xf32>
    %727 = arith.addf %723, %726 : vector<8x32xf32>
    %728 = arith.addf %649, %727 : vector<8x32xf32>
    %c1_333 = arith.constant 1 : index
    %c0_334 = arith.constant 0 : index
    %729 = vector.load %arg4[%c1_333, %c0_334] : memref<7x32xf32, #tpu.memory_space<vmem>>, vector<1x32xf32>
    %c1_335 = arith.constant 1 : index
    %c0_336 = arith.constant 0 : index
    %730 = vector.load %arg5[%c1_335, %c0_336] : memref<7x32xf32, #tpu.memory_space<vmem>>, vector<1x32xf32>
    %cst_337 = arith.constant dense<0.000000e+00> : vector<8xf32>
    %731 = vector.multi_reduction <add>, %728, %cst_337 [1] : vector<8x32xf32> to vector<8xf32>
    %732 = vector.shape_cast %731 : vector<8xf32> to vector<8x1xf32>
    %cst_338 = arith.constant 3.200000e+01 : f32
    %733 = vector.broadcast %cst_338 : f32 to vector<8x1xf32>
    %734 = arith.divf %732, %733 : vector<8x1xf32>
    %735 = vector.broadcast %734 : vector<8x1xf32> to vector<8x32xf32>
    %736 = arith.subf %728, %735 : vector<8x32xf32>
    %737 = arith.mulf %736, %736 : vector<8x32xf32>
    %cst_339 = arith.constant dense<0.000000e+00> : vector<8xf32>
    %738 = vector.multi_reduction <add>, %737, %cst_339 [1] : vector<8x32xf32> to vector<8xf32>
    %739 = vector.shape_cast %738 : vector<8xf32> to vector<8x1xf32>
    %cst_340 = arith.constant 3.200000e+01 : f32
    %740 = vector.broadcast %cst_340 : f32 to vector<8x1xf32>
    %741 = arith.divf %739, %740 : vector<8x1xf32>
    %742 = vector.broadcast %734 : vector<8x1xf32> to vector<8x32xf32>
    %743 = arith.subf %728, %742 : vector<8x32xf32>
    %cst_341 = arith.constant 9.99999974E-6 : f32
    %744 = vector.broadcast %cst_341 : f32 to vector<8x1xf32>
    %745 = arith.addf %741, %744 : vector<8x1xf32>
    %746 = math.rsqrt %745 : vector<8x1xf32>
    %747 = vector.broadcast %746 : vector<8x1xf32> to vector<8x32xf32>
    %748 = arith.mulf %743, %747 : vector<8x32xf32>
    %749 = vector.broadcast %729 : vector<1x32xf32> to vector<8x32xf32>
    %750 = arith.mulf %748, %749 : vector<8x32xf32>
    %751 = vector.broadcast %730 : vector<1x32xf32> to vector<8x32xf32>
    %752 = arith.addf %750, %751 : vector<8x32xf32>
    %c0_342 = arith.constant 0 : index
    %c0_343 = arith.constant 0 : index
    %c0_344 = arith.constant 0 : index
    %753 = vector.load %arg6[%c0_342, %c0_343, %c0_344] : memref<2x32x64xf32, #tpu.memory_space<vmem>>, vector<1x32x64xf32>
    %754 = vector.shape_cast %753 : vector<1x32x64xf32> to vector<32x64xf32>
    %cst_345 = arith.constant dense<0.000000e+00> : vector<8x64xf32>
    %755 = tpu.matmul %752, %754, %cst_345 {dimension_numbers = #tpu.dot_dimension_numbers<[1], [0], [0], [1], [0, 0, 1, 1], [], []>} : vector<8x32xf32>, vector<32x64xf32>, vector<8x64xf32> -> vector<8x64xf32>
    %c0_346 = arith.constant 0 : index
    %c0_347 = arith.constant 0 : index
    %c0_348 = arith.constant 0 : index
    %756 = vector.load %arg7[%c0_346, %c0_347, %c0_348] : memref<2x1x64xf32, #tpu.memory_space<vmem>>, vector<1x1x64xf32>
    %757 = vector.shape_cast %756 : vector<1x1x64xf32> to vector<1x64xf32>
    %758 = vector.broadcast %757 : vector<1x64xf32> to vector<8x64xf32>
    %759 = arith.addf %755, %758 : vector<8x64xf32>
    %cst_349 = arith.constant 0.000000e+00 : f32
    %760 = vector.broadcast %cst_349 : f32 to vector<8x64xf32>
    %761 = arith.maximumf %759, %760 : vector<8x64xf32>
    %c0_350 = arith.constant 0 : index
    %c0_351 = arith.constant 0 : index
    %c0_352 = arith.constant 0 : index
    %762 = vector.load %arg8[%c0_350, %c0_351, %c0_352] : memref<2x64x32xf32, #tpu.memory_space<vmem>>, vector<1x64x32xf32>
    %763 = vector.shape_cast %762 : vector<1x64x32xf32> to vector<64x32xf32>
    %cst_353 = arith.constant dense<0.000000e+00> : vector<8x32xf32>
    %764 = tpu.matmul %761, %763, %cst_353 {dimension_numbers = #tpu.dot_dimension_numbers<[1], [0], [0], [1], [0, 0, 1, 1], [], []>} : vector<8x64xf32>, vector<64x32xf32>, vector<8x32xf32> -> vector<8x32xf32>
    %c0_354 = arith.constant 0 : index
    %c0_355 = arith.constant 0 : index
    %c0_356 = arith.constant 0 : index
    %765 = vector.load %arg9[%c0_354, %c0_355, %c0_356] : memref<2x1x32xf32, #tpu.memory_space<vmem>>, vector<1x1x32xf32>
    %766 = vector.shape_cast %765 : vector<1x1x32xf32> to vector<1x32xf32>
    %767 = vector.broadcast %766 : vector<1x32xf32> to vector<8x32xf32>
    %768 = arith.addf %764, %767 : vector<8x32xf32>
    %769 = arith.addf %752, %768 : vector<8x32xf32>
    %c2_357 = arith.constant 2 : index
    %c0_358 = arith.constant 0 : index
    %770 = vector.load %arg4[%c2_357, %c0_358] : memref<7x32xf32, #tpu.memory_space<vmem>>, vector<1x32xf32>
    %c2_359 = arith.constant 2 : index
    %c0_360 = arith.constant 0 : index
    %771 = vector.load %arg5[%c2_359, %c0_360] : memref<7x32xf32, #tpu.memory_space<vmem>>, vector<1x32xf32>
    %cst_361 = arith.constant dense<0.000000e+00> : vector<8xf32>
    %772 = vector.multi_reduction <add>, %769, %cst_361 [1] : vector<8x32xf32> to vector<8xf32>
    %773 = vector.shape_cast %772 : vector<8xf32> to vector<8x1xf32>
    %cst_362 = arith.constant 3.200000e+01 : f32
    %774 = vector.broadcast %cst_362 : f32 to vector<8x1xf32>
    %775 = arith.divf %773, %774 : vector<8x1xf32>
    %776 = vector.broadcast %775 : vector<8x1xf32> to vector<8x32xf32>
    %777 = arith.subf %769, %776 : vector<8x32xf32>
    %778 = arith.mulf %777, %777 : vector<8x32xf32>
    %cst_363 = arith.constant dense<0.000000e+00> : vector<8xf32>
    %779 = vector.multi_reduction <add>, %778, %cst_363 [1] : vector<8x32xf32> to vector<8xf32>
    %780 = vector.shape_cast %779 : vector<8xf32> to vector<8x1xf32>
    %cst_364 = arith.constant 3.200000e+01 : f32
    %781 = vector.broadcast %cst_364 : f32 to vector<8x1xf32>
    %782 = arith.divf %780, %781 : vector<8x1xf32>
    %783 = vector.broadcast %775 : vector<8x1xf32> to vector<8x32xf32>
    %784 = arith.subf %769, %783 : vector<8x32xf32>
    %cst_365 = arith.constant 9.99999974E-6 : f32
    %785 = vector.broadcast %cst_365 : f32 to vector<8x1xf32>
    %786 = arith.addf %782, %785 : vector<8x1xf32>
    %787 = math.rsqrt %786 : vector<8x1xf32>
    %788 = vector.broadcast %787 : vector<8x1xf32> to vector<8x32xf32>
    %789 = arith.mulf %784, %788 : vector<8x32xf32>
    %790 = vector.broadcast %770 : vector<1x32xf32> to vector<8x32xf32>
    %791 = arith.mulf %789, %790 : vector<8x32xf32>
    %792 = vector.broadcast %771 : vector<1x32xf32> to vector<8x32xf32>
    %793 = arith.addf %791, %792 : vector<8x32xf32>
    %c1_366 = arith.constant 1 : index
    %c0_367 = arith.constant 0 : index
    %c0_368 = arith.constant 0 : index
    %c0_369 = arith.constant 0 : index
    %794 = vector.load %arg2[%c1_366, %c0_367, %c0_368, %c0_369] : memref<2x8x32x32xf32, #tpu.memory_space<vmem>>, vector<1x1x32x32xf32>
    %795 = vector.shape_cast %794 : vector<1x1x32x32xf32> to vector<32x32xf32>
    %cst_370 = arith.constant dense<0.000000e+00> : vector<8x32xf32>
    %796 = tpu.matmul %793, %795, %cst_370 {dimension_numbers = #tpu.dot_dimension_numbers<[1], [0], [0], [1], [0, 0, 1, 1], [], []>} : vector<8x32xf32>, vector<32x32xf32>, vector<8x32xf32> -> vector<8x32xf32>
    %c1_371 = arith.constant 1 : index
    %c0_372 = arith.constant 0 : index
    %c0_373 = arith.constant 0 : index
    %797 = vector.load %arg3[%c1_371, %c0_372, %c0_373] : memref<2x8x32xf32, #tpu.memory_space<vmem>>, vector<1x1x32xf32>
    %798 = vector.shape_cast %797 : vector<1x1x32xf32> to vector<1x32xf32>
    %799 = vector.broadcast %798 : vector<1x32xf32> to vector<8x32xf32>
    %800 = arith.addf %796, %799 : vector<8x32xf32>
    %cst_374 = arith.constant 0.353553385 : f32
    %801 = vector.broadcast %cst_374 : f32 to vector<8x32xf32>
    %802 = arith.mulf %800, %801 : vector<8x32xf32>
    %c1_375 = arith.constant 1 : index
    %c1_376 = arith.constant 1 : index
    %c0_377 = arith.constant 0 : index
    %c0_378 = arith.constant 0 : index
    %803 = vector.load %arg2[%c1_375, %c1_376, %c0_377, %c0_378] : memref<2x8x32x32xf32, #tpu.memory_space<vmem>>, vector<1x1x32x32xf32>
    %804 = vector.shape_cast %803 : vector<1x1x32x32xf32> to vector<32x32xf32>
    %cst_379 = arith.constant dense<0.000000e+00> : vector<8x32xf32>
    %805 = tpu.matmul %793, %804, %cst_379 {dimension_numbers = #tpu.dot_dimension_numbers<[1], [0], [0], [1], [0, 0, 1, 1], [], []>} : vector<8x32xf32>, vector<32x32xf32>, vector<8x32xf32> -> vector<8x32xf32>
    %c1_380 = arith.constant 1 : index
    %c1_381 = arith.constant 1 : index
    %c0_382 = arith.constant 0 : index
    %806 = vector.load %arg3[%c1_380, %c1_381, %c0_382] : memref<2x8x32xf32, #tpu.memory_space<vmem>>, vector<1x1x32xf32>
    %807 = vector.shape_cast %806 : vector<1x1x32xf32> to vector<1x32xf32>
    %808 = vector.broadcast %807 : vector<1x32xf32> to vector<8x32xf32>
    %809 = arith.addf %805, %808 : vector<8x32xf32>
    %c1_383 = arith.constant 1 : index
    %c2_384 = arith.constant 2 : index
    %c0_385 = arith.constant 0 : index
    %c0_386 = arith.constant 0 : index
    %810 = vector.load %arg2[%c1_383, %c2_384, %c0_385, %c0_386] : memref<2x8x32x32xf32, #tpu.memory_space<vmem>>, vector<1x1x32x32xf32>
    %811 = vector.shape_cast %810 : vector<1x1x32x32xf32> to vector<32x32xf32>
    %cst_387 = arith.constant dense<0.000000e+00> : vector<8x32xf32>
    %812 = tpu.matmul %793, %811, %cst_387 {dimension_numbers = #tpu.dot_dimension_numbers<[1], [0], [0], [1], [0, 0, 1, 1], [], []>} : vector<8x32xf32>, vector<32x32xf32>, vector<8x32xf32> -> vector<8x32xf32>
    %c1_388 = arith.constant 1 : index
    %c2_389 = arith.constant 2 : index
    %c0_390 = arith.constant 0 : index
    %813 = vector.load %arg3[%c1_388, %c2_389, %c0_390] : memref<2x8x32xf32, #tpu.memory_space<vmem>>, vector<1x1x32xf32>
    %814 = vector.shape_cast %813 : vector<1x1x32xf32> to vector<1x32xf32>
    %815 = vector.broadcast %814 : vector<1x32xf32> to vector<8x32xf32>
    %816 = arith.addf %812, %815 : vector<8x32xf32>
    %817 = vector.extract_strided_slice %802 {offsets = [0, 0], sizes = [8, 8], strides = [1, 1]} : vector<8x32xf32> to vector<8x8xf32>
    %818 = vector.extract_strided_slice %802 {offsets = [0, 8], sizes = [8, 8], strides = [1, 1]} : vector<8x32xf32> to vector<8x8xf32>
    %819 = vector.extract_strided_slice %802 {offsets = [0, 16], sizes = [8, 8], strides = [1, 1]} : vector<8x32xf32> to vector<8x8xf32>
    %820 = vector.extract_strided_slice %802 {offsets = [0, 24], sizes = [8, 8], strides = [1, 1]} : vector<8x32xf32> to vector<8x8xf32>
    %821 = vector.shape_cast %817 : vector<8x8xf32> to vector<1x8x8xf32>
    %822 = vector.shape_cast %818 : vector<8x8xf32> to vector<1x8x8xf32>
    %823 = vector.shape_cast %819 : vector<8x8xf32> to vector<1x8x8xf32>
    %824 = vector.shape_cast %820 : vector<8x8xf32> to vector<1x8x8xf32>
    %825 = tpu.concatenate %821, %822, %823, %824 in 0 : vector<1x8x8xf32>, vector<1x8x8xf32>, vector<1x8x8xf32>, vector<1x8x8xf32> -> vector<4x8x8xf32>
    %826 = vector.extract_strided_slice %809 {offsets = [0, 0], sizes = [8, 8], strides = [1, 1]} : vector<8x32xf32> to vector<8x8xf32>
    %827 = vector.extract_strided_slice %809 {offsets = [0, 8], sizes = [8, 8], strides = [1, 1]} : vector<8x32xf32> to vector<8x8xf32>
    %828 = vector.extract_strided_slice %809 {offsets = [0, 16], sizes = [8, 8], strides = [1, 1]} : vector<8x32xf32> to vector<8x8xf32>
    %829 = vector.extract_strided_slice %809 {offsets = [0, 24], sizes = [8, 8], strides = [1, 1]} : vector<8x32xf32> to vector<8x8xf32>
    %830 = vector.shape_cast %826 : vector<8x8xf32> to vector<1x8x8xf32>
    %831 = vector.shape_cast %827 : vector<8x8xf32> to vector<1x8x8xf32>
    %832 = vector.shape_cast %828 : vector<8x8xf32> to vector<1x8x8xf32>
    %833 = vector.shape_cast %829 : vector<8x8xf32> to vector<1x8x8xf32>
    %834 = tpu.concatenate %830, %831, %832, %833 in 0 : vector<1x8x8xf32>, vector<1x8x8xf32>, vector<1x8x8xf32>, vector<1x8x8xf32> -> vector<4x8x8xf32>
    %835 = vector.extract_strided_slice %816 {offsets = [0, 0], sizes = [8, 8], strides = [1, 1]} : vector<8x32xf32> to vector<8x8xf32>
    %836 = vector.extract_strided_slice %816 {offsets = [0, 8], sizes = [8, 8], strides = [1, 1]} : vector<8x32xf32> to vector<8x8xf32>
    %837 = vector.extract_strided_slice %816 {offsets = [0, 16], sizes = [8, 8], strides = [1, 1]} : vector<8x32xf32> to vector<8x8xf32>
    %838 = vector.extract_strided_slice %816 {offsets = [0, 24], sizes = [8, 8], strides = [1, 1]} : vector<8x32xf32> to vector<8x8xf32>
    %839 = vector.shape_cast %835 : vector<8x8xf32> to vector<1x8x8xf32>
    %840 = vector.shape_cast %836 : vector<8x8xf32> to vector<1x8x8xf32>
    %841 = vector.shape_cast %837 : vector<8x8xf32> to vector<1x8x8xf32>
    %842 = vector.shape_cast %838 : vector<8x8xf32> to vector<1x8x8xf32>
    %843 = tpu.concatenate %839, %840, %841, %842 in 0 : vector<1x8x8xf32>, vector<1x8x8xf32>, vector<1x8x8xf32>, vector<1x8x8xf32> -> vector<4x8x8xf32>
    "tpu.trace_start"() <{level = 10 : i32, message = "hqe,hke->hqk"}> : () -> ()
    %cst_391 = arith.constant dense<0.000000e+00> : vector<4x8x8xf32>
    %844 = tpu.matmul %825, %834, %cst_391 {dimension_numbers = #tpu.dot_dimension_numbers<[2], [2], [1], [1], [0, 0, 0, 1, 1, 1], [0], [0]>} : vector<4x8x8xf32>, vector<4x8x8xf32>, vector<4x8x8xf32> -> vector<4x8x8xf32>
    "tpu.trace_stop"() : () -> ()
    %845 = vector.shape_cast %2 : vector<8x8xi1> to vector<1x8x8xi1>
    %cst_392 = arith.constant -1.000000e+30 : f32
    %846 = vector.shape_cast %845 : vector<1x8x8xi1> to vector<1x8x8xi1>
    %847 = vector.broadcast %846 : vector<1x8x8xi1> to vector<4x8x8xi1>
    %848 = vector.broadcast %cst_392 : f32 to vector<4x8x8xf32>
    %849 = arith.select %847, %848, %844 : vector<4x8x8xi1>, vector<4x8x8xf32>
    %cst_393 = arith.constant dense<0xFF800000> : vector<4x8xf32>
    %850 = vector.multi_reduction <maximumf>, %849, %cst_393 [2] : vector<4x8x8xf32> to vector<4x8xf32>
    %851 = vector.shape_cast %850 : vector<4x8xf32> to vector<4x8x1xf32>
    %852 = vector.broadcast %851 : vector<4x8x1xf32> to vector<4x8x8xf32>
    %853 = arith.subf %849, %852 : vector<4x8x8xf32>
    %854 = math.exp %853 : vector<4x8x8xf32>
    %cst_394 = arith.constant dense<0.000000e+00> : vector<4x8xf32>
    %855 = vector.multi_reduction <add>, %854, %cst_394 [2] : vector<4x8x8xf32> to vector<4x8xf32>
    %856 = vector.shape_cast %855 : vector<4x8xf32> to vector<4x8x1xf32>
    %857 = tpu.reciprocal %856 {approx = true} : vector<4x8x1xf32> -> vector<4x8x1xf32>
    %858 = vector.broadcast %857 : vector<4x8x1xf32> to vector<4x8x8xf32>
    %859 = arith.mulf %854, %858 : vector<4x8x8xf32>
    "tpu.trace_start"() <{level = 10 : i32, message = "hqk,hke->hqe"}> : () -> ()
    %cst_395 = arith.constant dense<0.000000e+00> : vector<4x8x8xf32>
    %860 = tpu.matmul %859, %843, %cst_395 {dimension_numbers = #tpu.dot_dimension_numbers<[2], [1], [1], [2], [0, 0, 0, 1, 1, 2], [0], [0]>} : vector<4x8x8xf32>, vector<4x8x8xf32>, vector<4x8x8xf32> -> vector<4x8x8xf32>
    "tpu.trace_stop"() : () -> ()
    %861 = vector.extract_strided_slice %860 {offsets = [0, 0, 0], sizes = [1, 8, 8], strides = [1, 1, 1]} : vector<4x8x8xf32> to vector<1x8x8xf32>
    %862 = vector.shape_cast %861 : vector<1x8x8xf32> to vector<8x8xf32>
    %863 = vector.extract_strided_slice %860 {offsets = [1, 0, 0], sizes = [1, 8, 8], strides = [1, 1, 1]} : vector<4x8x8xf32> to vector<1x8x8xf32>
    %864 = vector.shape_cast %863 : vector<1x8x8xf32> to vector<8x8xf32>
    %865 = vector.extract_strided_slice %860 {offsets = [2, 0, 0], sizes = [1, 8, 8], strides = [1, 1, 1]} : vector<4x8x8xf32> to vector<1x8x8xf32>
    %866 = vector.shape_cast %865 : vector<1x8x8xf32> to vector<8x8xf32>
    %867 = vector.extract_strided_slice %860 {offsets = [3, 0, 0], sizes = [1, 8, 8], strides = [1, 1, 1]} : vector<4x8x8xf32> to vector<1x8x8xf32>
    %868 = vector.shape_cast %867 : vector<1x8x8xf32> to vector<8x8xf32>
    %869 = tpu.concatenate %862, %864, %866, %868 in 1 : vector<8x8xf32>, vector<8x8xf32>, vector<8x8xf32>, vector<8x8xf32> -> vector<8x32xf32>
    %c1_396 = arith.constant 1 : index
    %c3_397 = arith.constant 3 : index
    %c0_398 = arith.constant 0 : index
    %c0_399 = arith.constant 0 : index
    %870 = vector.load %arg2[%c1_396, %c3_397, %c0_398, %c0_399] : memref<2x8x32x32xf32, #tpu.memory_space<vmem>>, vector<1x1x32x32xf32>
    %871 = vector.shape_cast %870 : vector<1x1x32x32xf32> to vector<32x32xf32>
    %cst_400 = arith.constant dense<0.000000e+00> : vector<8x32xf32>
    %872 = tpu.matmul %869, %871, %cst_400 {dimension_numbers = #tpu.dot_dimension_numbers<[1], [0], [0], [1], [0, 0, 1, 1], [], []>} : vector<8x32xf32>, vector<32x32xf32>, vector<8x32xf32> -> vector<8x32xf32>
    %c1_401 = arith.constant 1 : index
    %c3_402 = arith.constant 3 : index
    %c0_403 = arith.constant 0 : index
    %873 = vector.load %arg3[%c1_401, %c3_402, %c0_403] : memref<2x8x32xf32, #tpu.memory_space<vmem>>, vector<1x1x32xf32>
    %874 = vector.shape_cast %873 : vector<1x1x32xf32> to vector<1x32xf32>
    %875 = vector.broadcast %874 : vector<1x32xf32> to vector<8x32xf32>
    %876 = arith.addf %872, %875 : vector<8x32xf32>
    %877 = arith.addf %793, %876 : vector<8x32xf32>
    %c3_404 = arith.constant 3 : index
    %c0_405 = arith.constant 0 : index
    %878 = vector.load %arg4[%c3_404, %c0_405] : memref<7x32xf32, #tpu.memory_space<vmem>>, vector<1x32xf32>
    %c3_406 = arith.constant 3 : index
    %c0_407 = arith.constant 0 : index
    %879 = vector.load %arg5[%c3_406, %c0_407] : memref<7x32xf32, #tpu.memory_space<vmem>>, vector<1x32xf32>
    %cst_408 = arith.constant dense<0.000000e+00> : vector<8xf32>
    %880 = vector.multi_reduction <add>, %877, %cst_408 [1] : vector<8x32xf32> to vector<8xf32>
    %881 = vector.shape_cast %880 : vector<8xf32> to vector<8x1xf32>
    %cst_409 = arith.constant 3.200000e+01 : f32
    %882 = vector.broadcast %cst_409 : f32 to vector<8x1xf32>
    %883 = arith.divf %881, %882 : vector<8x1xf32>
    %884 = vector.broadcast %883 : vector<8x1xf32> to vector<8x32xf32>
    %885 = arith.subf %877, %884 : vector<8x32xf32>
    %886 = arith.mulf %885, %885 : vector<8x32xf32>
    %cst_410 = arith.constant dense<0.000000e+00> : vector<8xf32>
    %887 = vector.multi_reduction <add>, %886, %cst_410 [1] : vector<8x32xf32> to vector<8xf32>
    %888 = vector.shape_cast %887 : vector<8xf32> to vector<8x1xf32>
    %cst_411 = arith.constant 3.200000e+01 : f32
    %889 = vector.broadcast %cst_411 : f32 to vector<8x1xf32>
    %890 = arith.divf %888, %889 : vector<8x1xf32>
    %891 = vector.broadcast %883 : vector<8x1xf32> to vector<8x32xf32>
    %892 = arith.subf %877, %891 : vector<8x32xf32>
    %cst_412 = arith.constant 9.99999974E-6 : f32
    %893 = vector.broadcast %cst_412 : f32 to vector<8x1xf32>
    %894 = arith.addf %890, %893 : vector<8x1xf32>
    %895 = math.rsqrt %894 : vector<8x1xf32>
    %896 = vector.broadcast %895 : vector<8x1xf32> to vector<8x32xf32>
    %897 = arith.mulf %892, %896 : vector<8x32xf32>
    %898 = vector.broadcast %878 : vector<1x32xf32> to vector<8x32xf32>
    %899 = arith.mulf %897, %898 : vector<8x32xf32>
    %900 = vector.broadcast %879 : vector<1x32xf32> to vector<8x32xf32>
    %901 = arith.addf %899, %900 : vector<8x32xf32>
    %c1_413 = arith.constant 1 : index
    %c4_414 = arith.constant 4 : index
    %c0_415 = arith.constant 0 : index
    %c0_416 = arith.constant 0 : index
    %902 = vector.load %arg2[%c1_413, %c4_414, %c0_415, %c0_416] : memref<2x8x32x32xf32, #tpu.memory_space<vmem>>, vector<1x1x32x32xf32>
    %903 = vector.shape_cast %902 : vector<1x1x32x32xf32> to vector<32x32xf32>
    %cst_417 = arith.constant dense<0.000000e+00> : vector<8x32xf32>
    %904 = tpu.matmul %901, %903, %cst_417 {dimension_numbers = #tpu.dot_dimension_numbers<[1], [0], [0], [1], [0, 0, 1, 1], [], []>} : vector<8x32xf32>, vector<32x32xf32>, vector<8x32xf32> -> vector<8x32xf32>
    %c1_418 = arith.constant 1 : index
    %c4_419 = arith.constant 4 : index
    %c0_420 = arith.constant 0 : index
    %905 = vector.load %arg3[%c1_418, %c4_419, %c0_420] : memref<2x8x32xf32, #tpu.memory_space<vmem>>, vector<1x1x32xf32>
    %906 = vector.shape_cast %905 : vector<1x1x32xf32> to vector<1x32xf32>
    %907 = vector.broadcast %906 : vector<1x32xf32> to vector<8x32xf32>
    %908 = arith.addf %904, %907 : vector<8x32xf32>
    %cst_421 = arith.constant 0.353553385 : f32
    %909 = vector.broadcast %cst_421 : f32 to vector<8x32xf32>
    %910 = arith.mulf %908, %909 : vector<8x32xf32>
    %c1_422 = arith.constant 1 : index
    %c5_423 = arith.constant 5 : index
    %c0_424 = arith.constant 0 : index
    %c0_425 = arith.constant 0 : index
    %911 = vector.load %arg2[%c1_422, %c5_423, %c0_424, %c0_425] : memref<2x8x32x32xf32, #tpu.memory_space<vmem>>, vector<1x1x32x32xf32>
    %912 = vector.shape_cast %911 : vector<1x1x32x32xf32> to vector<32x32xf32>
    %cst_426 = arith.constant dense<0.000000e+00> : vector<12x32xf32>
    %913 = tpu.matmul %541, %912, %cst_426 {dimension_numbers = #tpu.dot_dimension_numbers<[1], [0], [0], [1], [0, 0, 1, 1], [], []>} : vector<12x32xf32>, vector<32x32xf32>, vector<12x32xf32> -> vector<12x32xf32>
    %c1_427 = arith.constant 1 : index
    %c5_428 = arith.constant 5 : index
    %c0_429 = arith.constant 0 : index
    %914 = vector.load %arg3[%c1_427, %c5_428, %c0_429] : memref<2x8x32xf32, #tpu.memory_space<vmem>>, vector<1x1x32xf32>
    %915 = vector.shape_cast %914 : vector<1x1x32xf32> to vector<1x32xf32>
    %916 = vector.broadcast %915 : vector<1x32xf32> to vector<12x32xf32>
    %917 = arith.addf %913, %916 : vector<12x32xf32>
    %c1_430 = arith.constant 1 : index
    %c6_431 = arith.constant 6 : index
    %c0_432 = arith.constant 0 : index
    %c0_433 = arith.constant 0 : index
    %918 = vector.load %arg2[%c1_430, %c6_431, %c0_432, %c0_433] : memref<2x8x32x32xf32, #tpu.memory_space<vmem>>, vector<1x1x32x32xf32>
    %919 = vector.shape_cast %918 : vector<1x1x32x32xf32> to vector<32x32xf32>
    %cst_434 = arith.constant dense<0.000000e+00> : vector<12x32xf32>
    %920 = tpu.matmul %541, %919, %cst_434 {dimension_numbers = #tpu.dot_dimension_numbers<[1], [0], [0], [1], [0, 0, 1, 1], [], []>} : vector<12x32xf32>, vector<32x32xf32>, vector<12x32xf32> -> vector<12x32xf32>
    %c1_435 = arith.constant 1 : index
    %c6_436 = arith.constant 6 : index
    %c0_437 = arith.constant 0 : index
    %921 = vector.load %arg3[%c1_435, %c6_436, %c0_437] : memref<2x8x32xf32, #tpu.memory_space<vmem>>, vector<1x1x32xf32>
    %922 = vector.shape_cast %921 : vector<1x1x32xf32> to vector<1x32xf32>
    %923 = vector.broadcast %922 : vector<1x32xf32> to vector<12x32xf32>
    %924 = arith.addf %920, %923 : vector<12x32xf32>
    %925 = vector.extract_strided_slice %910 {offsets = [0, 0], sizes = [8, 8], strides = [1, 1]} : vector<8x32xf32> to vector<8x8xf32>
    %926 = vector.extract_strided_slice %910 {offsets = [0, 8], sizes = [8, 8], strides = [1, 1]} : vector<8x32xf32> to vector<8x8xf32>
    %927 = vector.extract_strided_slice %910 {offsets = [0, 16], sizes = [8, 8], strides = [1, 1]} : vector<8x32xf32> to vector<8x8xf32>
    %928 = vector.extract_strided_slice %910 {offsets = [0, 24], sizes = [8, 8], strides = [1, 1]} : vector<8x32xf32> to vector<8x8xf32>
    %929 = vector.shape_cast %925 : vector<8x8xf32> to vector<1x8x8xf32>
    %930 = vector.shape_cast %926 : vector<8x8xf32> to vector<1x8x8xf32>
    %931 = vector.shape_cast %927 : vector<8x8xf32> to vector<1x8x8xf32>
    %932 = vector.shape_cast %928 : vector<8x8xf32> to vector<1x8x8xf32>
    %933 = tpu.concatenate %929, %930, %931, %932 in 0 : vector<1x8x8xf32>, vector<1x8x8xf32>, vector<1x8x8xf32>, vector<1x8x8xf32> -> vector<4x8x8xf32>
    %934 = vector.extract_strided_slice %917 {offsets = [0, 0], sizes = [12, 8], strides = [1, 1]} : vector<12x32xf32> to vector<12x8xf32>
    %935 = vector.extract_strided_slice %917 {offsets = [0, 8], sizes = [12, 8], strides = [1, 1]} : vector<12x32xf32> to vector<12x8xf32>
    %936 = vector.extract_strided_slice %917 {offsets = [0, 16], sizes = [12, 8], strides = [1, 1]} : vector<12x32xf32> to vector<12x8xf32>
    %937 = vector.extract_strided_slice %917 {offsets = [0, 24], sizes = [12, 8], strides = [1, 1]} : vector<12x32xf32> to vector<12x8xf32>
    %938 = vector.shape_cast %934 : vector<12x8xf32> to vector<1x12x8xf32>
    %939 = vector.shape_cast %935 : vector<12x8xf32> to vector<1x12x8xf32>
    %940 = vector.shape_cast %936 : vector<12x8xf32> to vector<1x12x8xf32>
    %941 = vector.shape_cast %937 : vector<12x8xf32> to vector<1x12x8xf32>
    %942 = tpu.concatenate %938, %939, %940, %941 in 0 : vector<1x12x8xf32>, vector<1x12x8xf32>, vector<1x12x8xf32>, vector<1x12x8xf32> -> vector<4x12x8xf32>
    %943 = vector.extract_strided_slice %924 {offsets = [0, 0], sizes = [12, 8], strides = [1, 1]} : vector<12x32xf32> to vector<12x8xf32>
    %944 = vector.extract_strided_slice %924 {offsets = [0, 8], sizes = [12, 8], strides = [1, 1]} : vector<12x32xf32> to vector<12x8xf32>
    %945 = vector.extract_strided_slice %924 {offsets = [0, 16], sizes = [12, 8], strides = [1, 1]} : vector<12x32xf32> to vector<12x8xf32>
    %946 = vector.extract_strided_slice %924 {offsets = [0, 24], sizes = [12, 8], strides = [1, 1]} : vector<12x32xf32> to vector<12x8xf32>
    %947 = vector.shape_cast %943 : vector<12x8xf32> to vector<1x12x8xf32>
    %948 = vector.shape_cast %944 : vector<12x8xf32> to vector<1x12x8xf32>
    %949 = vector.shape_cast %945 : vector<12x8xf32> to vector<1x12x8xf32>
    %950 = vector.shape_cast %946 : vector<12x8xf32> to vector<1x12x8xf32>
    %951 = tpu.concatenate %947, %948, %949, %950 in 0 : vector<1x12x8xf32>, vector<1x12x8xf32>, vector<1x12x8xf32>, vector<1x12x8xf32> -> vector<4x12x8xf32>
    "tpu.trace_start"() <{level = 10 : i32, message = "hqe,hke->hqk"}> : () -> ()
    %cst_438 = arith.constant dense<0.000000e+00> : vector<4x8x12xf32>
    %952 = tpu.matmul %933, %942, %cst_438 {dimension_numbers = #tpu.dot_dimension_numbers<[2], [2], [1], [1], [0, 0, 0, 1, 1, 1], [0], [0]>} : vector<4x8x8xf32>, vector<4x12x8xf32>, vector<4x8x12xf32> -> vector<4x8x12xf32>
    "tpu.trace_stop"() : () -> ()
    %cst_439 = arith.constant dense<0xFF800000> : vector<4x8xf32>
    %953 = vector.multi_reduction <maximumf>, %952, %cst_439 [2] : vector<4x8x12xf32> to vector<4x8xf32>
    %954 = vector.shape_cast %953 : vector<4x8xf32> to vector<4x8x1xf32>
    %955 = vector.broadcast %954 : vector<4x8x1xf32> to vector<4x8x12xf32>
    %956 = arith.subf %952, %955 : vector<4x8x12xf32>
    %957 = math.exp %956 : vector<4x8x12xf32>
    %cst_440 = arith.constant dense<0.000000e+00> : vector<4x8xf32>
    %958 = vector.multi_reduction <add>, %957, %cst_440 [2] : vector<4x8x12xf32> to vector<4x8xf32>
    %959 = vector.shape_cast %958 : vector<4x8xf32> to vector<4x8x1xf32>
    %960 = tpu.reciprocal %959 {approx = true} : vector<4x8x1xf32> -> vector<4x8x1xf32>
    %961 = vector.broadcast %960 : vector<4x8x1xf32> to vector<4x8x12xf32>
    %962 = arith.mulf %957, %961 : vector<4x8x12xf32>
    "tpu.trace_start"() <{level = 10 : i32, message = "hqk,hke->hqe"}> : () -> ()
    %cst_441 = arith.constant dense<0.000000e+00> : vector<4x8x8xf32>
    %963 = tpu.matmul %962, %951, %cst_441 {dimension_numbers = #tpu.dot_dimension_numbers<[2], [1], [1], [2], [0, 0, 0, 1, 1, 2], [0], [0]>} : vector<4x8x12xf32>, vector<4x12x8xf32>, vector<4x8x8xf32> -> vector<4x8x8xf32>
    "tpu.trace_stop"() : () -> ()
    %964 = vector.extract_strided_slice %963 {offsets = [0, 0, 0], sizes = [1, 8, 8], strides = [1, 1, 1]} : vector<4x8x8xf32> to vector<1x8x8xf32>
    %965 = vector.shape_cast %964 : vector<1x8x8xf32> to vector<8x8xf32>
    %966 = vector.extract_strided_slice %963 {offsets = [1, 0, 0], sizes = [1, 8, 8], strides = [1, 1, 1]} : vector<4x8x8xf32> to vector<1x8x8xf32>
    %967 = vector.shape_cast %966 : vector<1x8x8xf32> to vector<8x8xf32>
    %968 = vector.extract_strided_slice %963 {offsets = [2, 0, 0], sizes = [1, 8, 8], strides = [1, 1, 1]} : vector<4x8x8xf32> to vector<1x8x8xf32>
    %969 = vector.shape_cast %968 : vector<1x8x8xf32> to vector<8x8xf32>
    %970 = vector.extract_strided_slice %963 {offsets = [3, 0, 0], sizes = [1, 8, 8], strides = [1, 1, 1]} : vector<4x8x8xf32> to vector<1x8x8xf32>
    %971 = vector.shape_cast %970 : vector<1x8x8xf32> to vector<8x8xf32>
    %972 = tpu.concatenate %965, %967, %969, %971 in 1 : vector<8x8xf32>, vector<8x8xf32>, vector<8x8xf32>, vector<8x8xf32> -> vector<8x32xf32>
    %c1_442 = arith.constant 1 : index
    %c7_443 = arith.constant 7 : index
    %c0_444 = arith.constant 0 : index
    %c0_445 = arith.constant 0 : index
    %973 = vector.load %arg2[%c1_442, %c7_443, %c0_444, %c0_445] : memref<2x8x32x32xf32, #tpu.memory_space<vmem>>, vector<1x1x32x32xf32>
    %974 = vector.shape_cast %973 : vector<1x1x32x32xf32> to vector<32x32xf32>
    %cst_446 = arith.constant dense<0.000000e+00> : vector<8x32xf32>
    %975 = tpu.matmul %972, %974, %cst_446 {dimension_numbers = #tpu.dot_dimension_numbers<[1], [0], [0], [1], [0, 0, 1, 1], [], []>} : vector<8x32xf32>, vector<32x32xf32>, vector<8x32xf32> -> vector<8x32xf32>
    %c1_447 = arith.constant 1 : index
    %c7_448 = arith.constant 7 : index
    %c0_449 = arith.constant 0 : index
    %976 = vector.load %arg3[%c1_447, %c7_448, %c0_449] : memref<2x8x32xf32, #tpu.memory_space<vmem>>, vector<1x1x32xf32>
    %977 = vector.shape_cast %976 : vector<1x1x32xf32> to vector<1x32xf32>
    %978 = vector.broadcast %977 : vector<1x32xf32> to vector<8x32xf32>
    %979 = arith.addf %975, %978 : vector<8x32xf32>
    %980 = arith.addf %901, %979 : vector<8x32xf32>
    %c4_450 = arith.constant 4 : index
    %c0_451 = arith.constant 0 : index
    %981 = vector.load %arg4[%c4_450, %c0_451] : memref<7x32xf32, #tpu.memory_space<vmem>>, vector<1x32xf32>
    %c4_452 = arith.constant 4 : index
    %c0_453 = arith.constant 0 : index
    %982 = vector.load %arg5[%c4_452, %c0_453] : memref<7x32xf32, #tpu.memory_space<vmem>>, vector<1x32xf32>
    %cst_454 = arith.constant dense<0.000000e+00> : vector<8xf32>
    %983 = vector.multi_reduction <add>, %980, %cst_454 [1] : vector<8x32xf32> to vector<8xf32>
    %984 = vector.shape_cast %983 : vector<8xf32> to vector<8x1xf32>
    %cst_455 = arith.constant 3.200000e+01 : f32
    %985 = vector.broadcast %cst_455 : f32 to vector<8x1xf32>
    %986 = arith.divf %984, %985 : vector<8x1xf32>
    %987 = vector.broadcast %986 : vector<8x1xf32> to vector<8x32xf32>
    %988 = arith.subf %980, %987 : vector<8x32xf32>
    %989 = arith.mulf %988, %988 : vector<8x32xf32>
    %cst_456 = arith.constant dense<0.000000e+00> : vector<8xf32>
    %990 = vector.multi_reduction <add>, %989, %cst_456 [1] : vector<8x32xf32> to vector<8xf32>
    %991 = vector.shape_cast %990 : vector<8xf32> to vector<8x1xf32>
    %cst_457 = arith.constant 3.200000e+01 : f32
    %992 = vector.broadcast %cst_457 : f32 to vector<8x1xf32>
    %993 = arith.divf %991, %992 : vector<8x1xf32>
    %994 = vector.broadcast %986 : vector<8x1xf32> to vector<8x32xf32>
    %995 = arith.subf %980, %994 : vector<8x32xf32>
    %cst_458 = arith.constant 9.99999974E-6 : f32
    %996 = vector.broadcast %cst_458 : f32 to vector<8x1xf32>
    %997 = arith.addf %993, %996 : vector<8x1xf32>
    %998 = math.rsqrt %997 : vector<8x1xf32>
    %999 = vector.broadcast %998 : vector<8x1xf32> to vector<8x32xf32>
    %1000 = arith.mulf %995, %999 : vector<8x32xf32>
    %1001 = vector.broadcast %981 : vector<1x32xf32> to vector<8x32xf32>
    %1002 = arith.mulf %1000, %1001 : vector<8x32xf32>
    %1003 = vector.broadcast %982 : vector<1x32xf32> to vector<8x32xf32>
    %1004 = arith.addf %1002, %1003 : vector<8x32xf32>
    %c1_459 = arith.constant 1 : index
    %c0_460 = arith.constant 0 : index
    %c0_461 = arith.constant 0 : index
    %1005 = vector.load %arg6[%c1_459, %c0_460, %c0_461] : memref<2x32x64xf32, #tpu.memory_space<vmem>>, vector<1x32x64xf32>
    %1006 = vector.shape_cast %1005 : vector<1x32x64xf32> to vector<32x64xf32>
    %cst_462 = arith.constant dense<0.000000e+00> : vector<8x64xf32>
    %1007 = tpu.matmul %1004, %1006, %cst_462 {dimension_numbers = #tpu.dot_dimension_numbers<[1], [0], [0], [1], [0, 0, 1, 1], [], []>} : vector<8x32xf32>, vector<32x64xf32>, vector<8x64xf32> -> vector<8x64xf32>
    %c1_463 = arith.constant 1 : index
    %c0_464 = arith.constant 0 : index
    %c0_465 = arith.constant 0 : index
    %1008 = vector.load %arg7[%c1_463, %c0_464, %c0_465] : memref<2x1x64xf32, #tpu.memory_space<vmem>>, vector<1x1x64xf32>
    %1009 = vector.shape_cast %1008 : vector<1x1x64xf32> to vector<1x64xf32>
    %1010 = vector.broadcast %1009 : vector<1x64xf32> to vector<8x64xf32>
    %1011 = arith.addf %1007, %1010 : vector<8x64xf32>
    %cst_466 = arith.constant 0.000000e+00 : f32
    %1012 = vector.broadcast %cst_466 : f32 to vector<8x64xf32>
    %1013 = arith.maximumf %1011, %1012 : vector<8x64xf32>
    %c1_467 = arith.constant 1 : index
    %c0_468 = arith.constant 0 : index
    %c0_469 = arith.constant 0 : index
    %1014 = vector.load %arg8[%c1_467, %c0_468, %c0_469] : memref<2x64x32xf32, #tpu.memory_space<vmem>>, vector<1x64x32xf32>
    %1015 = vector.shape_cast %1014 : vector<1x64x32xf32> to vector<64x32xf32>
    %cst_470 = arith.constant dense<0.000000e+00> : vector<8x32xf32>
    %1016 = tpu.matmul %1013, %1015, %cst_470 {dimension_numbers = #tpu.dot_dimension_numbers<[1], [0], [0], [1], [0, 0, 1, 1], [], []>} : vector<8x64xf32>, vector<64x32xf32>, vector<8x32xf32> -> vector<8x32xf32>
    %c1_471 = arith.constant 1 : index
    %c0_472 = arith.constant 0 : index
    %c0_473 = arith.constant 0 : index
    %1017 = vector.load %arg9[%c1_471, %c0_472, %c0_473] : memref<2x1x32xf32, #tpu.memory_space<vmem>>, vector<1x1x32xf32>
    %1018 = vector.shape_cast %1017 : vector<1x1x32xf32> to vector<1x32xf32>
    %1019 = vector.broadcast %1018 : vector<1x32xf32> to vector<8x32xf32>
    %1020 = arith.addf %1016, %1019 : vector<8x32xf32>
    %1021 = arith.addf %1004, %1020 : vector<8x32xf32>
    %c5_474 = arith.constant 5 : index
    %c0_475 = arith.constant 0 : index
    %1022 = vector.load %arg4[%c5_474, %c0_475] : memref<7x32xf32, #tpu.memory_space<vmem>>, vector<1x32xf32>
    %c5_476 = arith.constant 5 : index
    %c0_477 = arith.constant 0 : index
    %1023 = vector.load %arg5[%c5_476, %c0_477] : memref<7x32xf32, #tpu.memory_space<vmem>>, vector<1x32xf32>
    %cst_478 = arith.constant dense<0.000000e+00> : vector<8xf32>
    %1024 = vector.multi_reduction <add>, %1021, %cst_478 [1] : vector<8x32xf32> to vector<8xf32>
    %1025 = vector.shape_cast %1024 : vector<8xf32> to vector<8x1xf32>
    %cst_479 = arith.constant 3.200000e+01 : f32
    %1026 = vector.broadcast %cst_479 : f32 to vector<8x1xf32>
    %1027 = arith.divf %1025, %1026 : vector<8x1xf32>
    %1028 = vector.broadcast %1027 : vector<8x1xf32> to vector<8x32xf32>
    %1029 = arith.subf %1021, %1028 : vector<8x32xf32>
    %1030 = arith.mulf %1029, %1029 : vector<8x32xf32>
    %cst_480 = arith.constant dense<0.000000e+00> : vector<8xf32>
    %1031 = vector.multi_reduction <add>, %1030, %cst_480 [1] : vector<8x32xf32> to vector<8xf32>
    %1032 = vector.shape_cast %1031 : vector<8xf32> to vector<8x1xf32>
    %cst_481 = arith.constant 3.200000e+01 : f32
    %1033 = vector.broadcast %cst_481 : f32 to vector<8x1xf32>
    %1034 = arith.divf %1032, %1033 : vector<8x1xf32>
    %1035 = vector.broadcast %1027 : vector<8x1xf32> to vector<8x32xf32>
    %1036 = arith.subf %1021, %1035 : vector<8x32xf32>
    %cst_482 = arith.constant 9.99999974E-6 : f32
    %1037 = vector.broadcast %cst_482 : f32 to vector<8x1xf32>
    %1038 = arith.addf %1034, %1037 : vector<8x1xf32>
    %1039 = math.rsqrt %1038 : vector<8x1xf32>
    %1040 = vector.broadcast %1039 : vector<8x1xf32> to vector<8x32xf32>
    %1041 = arith.mulf %1036, %1040 : vector<8x32xf32>
    %1042 = vector.broadcast %1022 : vector<1x32xf32> to vector<8x32xf32>
    %1043 = arith.mulf %1041, %1042 : vector<8x32xf32>
    %1044 = vector.broadcast %1023 : vector<1x32xf32> to vector<8x32xf32>
    %1045 = arith.addf %1043, %1044 : vector<8x32xf32>
    %c6_483 = arith.constant 6 : index
    %c0_484 = arith.constant 0 : index
    %1046 = vector.load %arg4[%c6_483, %c0_484] : memref<7x32xf32, #tpu.memory_space<vmem>>, vector<1x32xf32>
    %c6_485 = arith.constant 6 : index
    %c0_486 = arith.constant 0 : index
    %1047 = vector.load %arg5[%c6_485, %c0_486] : memref<7x32xf32, #tpu.memory_space<vmem>>, vector<1x32xf32>
    %cst_487 = arith.constant dense<0.000000e+00> : vector<8xf32>
    %1048 = vector.multi_reduction <add>, %1045, %cst_487 [1] : vector<8x32xf32> to vector<8xf32>
    %1049 = vector.shape_cast %1048 : vector<8xf32> to vector<8x1xf32>
    %cst_488 = arith.constant 3.200000e+01 : f32
    %1050 = vector.broadcast %cst_488 : f32 to vector<8x1xf32>
    %1051 = arith.divf %1049, %1050 : vector<8x1xf32>
    %1052 = vector.broadcast %1051 : vector<8x1xf32> to vector<8x32xf32>
    %1053 = arith.subf %1045, %1052 : vector<8x32xf32>
    %1054 = arith.mulf %1053, %1053 : vector<8x32xf32>
    %cst_489 = arith.constant dense<0.000000e+00> : vector<8xf32>
    %1055 = vector.multi_reduction <add>, %1054, %cst_489 [1] : vector<8x32xf32> to vector<8xf32>
    %1056 = vector.shape_cast %1055 : vector<8xf32> to vector<8x1xf32>
    %cst_490 = arith.constant 3.200000e+01 : f32
    %1057 = vector.broadcast %cst_490 : f32 to vector<8x1xf32>
    %1058 = arith.divf %1056, %1057 : vector<8x1xf32>
    %1059 = vector.broadcast %1051 : vector<8x1xf32> to vector<8x32xf32>
    %1060 = arith.subf %1045, %1059 : vector<8x32xf32>
    %cst_491 = arith.constant 9.99999974E-6 : f32
    %1061 = vector.broadcast %cst_491 : f32 to vector<8x1xf32>
    %1062 = arith.addf %1058, %1061 : vector<8x1xf32>
    %1063 = math.rsqrt %1062 : vector<8x1xf32>
    %1064 = vector.broadcast %1063 : vector<8x1xf32> to vector<8x32xf32>
    %1065 = arith.mulf %1060, %1064 : vector<8x32xf32>
    %1066 = vector.broadcast %1046 : vector<1x32xf32> to vector<8x32xf32>
    %1067 = arith.mulf %1065, %1066 : vector<8x32xf32>
    %1068 = vector.broadcast %1047 : vector<1x32xf32> to vector<8x32xf32>
    %1069 = arith.addf %1067, %1068 : vector<8x32xf32>
    %c1_492 = arith.constant 1 : index
    %c0_493 = arith.constant 0 : index
    %c0_494 = arith.constant 0 : index
    %1070 = vector.load %arg10[%c1_492, %c0_493, %c0_494] : memref<2x8x32xf32, #tpu.memory_space<vmem>>, vector<1x8x32xf32>
    %1071 = vector.shape_cast %1070 : vector<1x8x32xf32> to vector<8x32xf32>
    %1072 = vector.shape_cast %1069 : vector<8x32xf32> to vector<1x8x32xf32>
    tpu.vector_store %arg10[%c1_492, %c0_493, %c0_494], %1072 {strides = array<i32>} : memref<2x8x32xf32, #tpu.memory_space<vmem>>, vector<1x8x32xf32>,
    return
  }
}

</mosaic_0001>

<llo_original>
// kernel: decoder_forward.1
$region0: #{decoder_forward.1}
  #allocation0 [shape = 'u32[]', space=smem, size = 0x4, offset = 0x4, fixed_abs, tag = 'smem constant byte address 0x4 - core index']
  #allocation1 [shape = 'u32[144,128]{1,0:T(1,128)}', space=vmem, size = 0x12000, scoped, tag = 'internal scratch']
  %s0 = inlined_call_operand.vmem [shape: f32[2,8,32], index: 0, kind: input, shape index: {}]
  %s1 = inlined_call_operand.vmem [shape: f32[2,12,32], index: 1, kind: input, shape index: {}]
  %s2 = inlined_call_operand.hbm [shape: f32[2,8,32,32], index: 2, kind: input, shape index: {}]
  %s3 = inlined_call_operand.vmem [shape: f32[2,8,32], index: 3, kind: input, shape index: {}]
  %s4 = inlined_call_operand.vmem [shape: f32[7,32], index: 4, kind: input, shape index: {}]
  %s5 = inlined_call_operand.vmem [shape: f32[7,32], index: 5, kind: input, shape index: {}]
  %s6 = inlined_call_operand.vmem [shape: f32[2,32,64], index: 6, kind: input, shape index: {}]
  %s7 = inlined_call_operand.vmem [shape: f32[2,1,64], index: 7, kind: input, shape index: {}]
  %s8 = inlined_call_operand.vmem [shape: f32[2,64,32], index: 8, kind: input, shape index: {}]
  %s9 = inlined_call_operand.vmem [shape: f32[2,1,32], index: 9, kind: input, shape index: {}]
  %s10 = inlined_call_operand.hbm [shape: f32[2,8,32], index: 10, kind: output, shape index: {}]
  %s11 = sld [smem:[#allocation0]]
  $region54: #{decoder_forward.1} parent=0
    _
  %s13 = ssub.s32 1, %s11
  %s14 = scalar_select 0, %s13, %s11
  $region1: #{decoder_forward.1} parent=0
    #allocation2 [shape = 'u8[262144]{0}', space=vmem, size = 0x40000, scoped, tag = 'input window, operand 2, single buffered']
    #allocation3 [shape = 's32[1]{0}', space=sflag, size = 0x4, scoped, tag = 'scoped memory for decoder_forward.1']
    #allocation4 [shape = 's32[1]{0}', space=sflag, size = 0x4, scoped, tag = 'scoped memory for decoder_forward.1']
    #allocation5 [shape = 'u8[8192]{0}', space=vmem, size = 0x2000, scoped, tag = 'output window, operand 0, single buffered']
    %15 = vsyncpa [#allocation3], 0
    %16 = vsyncpa [#allocation4], 0
    // Predicated region
    $region2: #{decoder_forward.1} parent=1 // pred_check
      _
    $region3: #{decoder_forward.1} parent=1 // pred_check_branch
      %18 = sbr.rel (0) target = $region5
    $region4: #{decoder_forward.1} parent=1 // pred_region
      _
    $region5: #{decoder_forward.1} parent=1 // pred_fallthru
      _
    // Predicated region
    $region6: #{decoder_forward.1} parent=1 // pred_check
      _
    $region7: #{decoder_forward.1} parent=1 // pred_check_branch
      %20 = sbr.rel (0) target = $region9
    $region8: #{decoder_forward.1} parent=1 // pred_region
      _
    $region9: #{decoder_forward.1} parent=1 // pred_fallthru
      _
    // Predicated region
    $region10: #{decoder_forward.1} parent=1 // pred_check
      _
    $region11: #{decoder_forward.1} parent=1 // pred_check_branch
      %22 = sbr.rel (0) target = $region13
    $region12: #{decoder_forward.1} parent=1 // pred_region
      %s24 = ssub.s32 8192, 8192
      %25 = vsyncadd [#allocation3], %s24
      %s26 = sshll.u32 [#allocation2], 4
      %s27 = int_to_ptr.vmem [resolvable:$true] %s26
      %32 = dma.hbm_to_vmem [thread:$0]  %s2, 8192, %s27, [#allocation3], 128, 128, 8
    $region13: #{decoder_forward.1} parent=1 // pred_fallthru
      _
    // Predicated region
    $region14: #{decoder_forward.1} parent=1 // pred_check
      _
    $region15: #{decoder_forward.1} parent=1 // pred_check_branch
      %34 = sbr.rel (0) target = $region17
    $region16: #{decoder_forward.1} parent=1 // pred_region
      _
    $region17: #{decoder_forward.1} parent=1 // pred_fallthru
      _
    // Predicated region
    $region18: #{decoder_forward.1} parent=1 // pred_check
      _
    $region19: #{decoder_forward.1} parent=1 // pred_check_branch
      %36 = sbr.rel (0) target = $region21
    $region20: #{decoder_forward.1} parent=1 // pred_region
      _
    $region21: #{decoder_forward.1} parent=1 // pred_fallthru
      _
    // Predicated region
    $region22: #{decoder_forward.1} parent=1 // pred_check
      _
    $region23: #{decoder_forward.1} parent=1 // pred_check_branch
      %38 = sbr.rel (0) target = $region25
    $region24: #{decoder_forward.1} parent=1 // pred_region
      _
    $region25: #{decoder_forward.1} parent=1 // pred_fallthru
      _
    // Predicated region
    $region26: #{decoder_forward.1} parent=1 // pred_check
      _
    $region27: #{decoder_forward.1} parent=1 // pred_check_branch
      %40 = sbr.rel (0) target = $region29
    $region28: #{decoder_forward.1} parent=1 // pred_region
      _
    $region29: #{decoder_forward.1} parent=1 // pred_fallthru
      _
    // Predicated region
    $region30: #{decoder_forward.1} parent=1 // pred_check
      _
    $region31: #{decoder_forward.1} parent=1 // pred_check_branch
      %42 = sbr.rel (0) target = $region33
    $region32: #{decoder_forward.1} parent=1 // pred_region
      _
    $region33: #{decoder_forward.1} parent=1 // pred_fallthru
      _
    // Predicated region
    $region34: #{decoder_forward.1} parent=1 // pred_check
      _
    $region35: #{decoder_forward.1} parent=1 // pred_check_branch
      %44 = sbr.rel (0) target = $region37
    $region36: #{decoder_forward.1} parent=1 // pred_region
      _
    $region37: #{decoder_forward.1} parent=1 // pred_fallthru
      _
    // Predicated region
    $region38: #{decoder_forward.1} parent=1 // pred_check
      _
    $region39: #{decoder_forward.1} parent=1 // pred_check_branch
      %46 = sbr.rel (0) target = $region41
    $region40: #{decoder_forward.1} parent=1 // pred_region
      _
    $region41: #{decoder_forward.1} parent=1 // pred_fallthru
      _
    // Predicated region
    $region42: #{decoder_forward.1} parent=1 // pred_check
      _
    $region43: #{decoder_forward.1} parent=1 // pred_check_branch
      %48 = sbr.rel (0) target = $region45
    $region44: #{decoder_forward.1} parent=1 // pred_region
      %49 = dma.done [#allocation3], 8192
    $region45: #{decoder_forward.1} parent=1 // pred_fallthru
      _
    %v50 = vlaneseq
    %v51 = vshrl.u32 %v50, 7
    %v52 = vlaneseq
    %v53 = vand.u32 %v52, 127
    %vm54 = vcmp.gt.s32.totalorder %v53, %v51
    %v55 = vld [vmem:[%s0] sm:$0xff]
    %v56 = vld [vmem:[%s1] sm:$0xff]
    %v57 = vld [vmem:[%s1 + $0x8] sm:$0xf]
    %v58 = vld [vmem:[#allocation2] sm:$0xff]
    %v59 = vld [vmem:[#allocation2 + $0x8] sm:$0xff]
    %v60 = vld [vmem:[#allocation2 + $0x10] sm:$0xff]
    %v61 = vld [vmem:[#allocation2 + $0x18] sm:$0xff]
    %v62 = vld [vmem:[%s3] sm:$0x1]
    %v63 = vlaneseq
    %v64 = vshrl.u32 %v63, 7
    %v65 = vsub.s32 0, %v64
    %v66 = vrot.slane %v62, %v65
    %vm67 = vcmask 261120
    %v69 = vsel %vm67, %v55, 0
    %71 = vmatprep.subr.mxu0 0.0
    %72 = vmatpush1.msra.mxu0 %v58
    %73 = vmatprep.subr.mxu0 0.0
    %74 = vmatpush1.msra.mxu0 %v59
    %75 = vmatprep.subr.mxu0 0.0
    %76 = vmatpush1.msra.mxu0 %v60
    %77 = vmatprep.subr.mxu0 0.0
    %78 = vmatpush1.msra.mxu0 %v61
    %79 = vmatprep.subr.mxu0 0.0
    %80 = vmatpush1.msra.mxu0 0.0
    %81 = vmatprep.subr.mxu0 0.0
    %82 = vmatpush1.msra.mxu0 0.0
    %83 = vmatprep.subr.mxu0 0.0
    %84 = vmatpush1.msra.mxu0 0.0
    %85 = vmatprep.subr.mxu0 0.0
    %86 = vmatpush1.msra.mxu0 0.0
    %87 = vmatprep.subr.mxu0 0.0
    %88 = vmatpush1.msra.mxu0 0.0
    %89 = vmatprep.subr.mxu0 0.0
    %90 = vmatpush1.msra.mxu0 0.0
    %91 = vmatprep.subr.mxu0 0.0
    %92 = vmatpush1.msra.mxu0 0.0
    %93 = vmatprep.subr.mxu0 0.0
    %94 = vmatpush1.msra.mxu0 0.0
    %95 = vmatprep.subr.mxu0 0.0
    %96 = vmatpush1.msra.mxu0 0.0
    %97 = vmatprep.subr.mxu0 0.0
    %98 = vmatpush1.msra.mxu0 0.0
    %99 = vmatprep.subr.mxu0 0.0
    %100 = vmatpush1.msra.mxu0 0.0
    %101 = vmatprep.subr.mxu0 0.0
    %102 = vmatpush1.msra.mxu0 0.0
    %103 = vmatprep.subr.mxu0 0.0
    %104 = vmatpush1.msra.mxu0 0.0
    %105 = vmatprep.subr.mxu0 0.0
    %106 = vmatpush1.msra.mxu0 0.0
    %107 = vmatprep.subr.mxu0 0.0
    %108 = vmatpush1.msra.mxu0 0.0
    %109 = vmatprep.subr.mxu0 0.0
    %110 = vmatpush1.msra.mxu0 0.0
    %111 = vmatprep.subr.mxu0 0.0
    %112 = vmatpush1.msra.mxu0 0.0
    %113 = vmatprep.subr.mxu0 0.0
    %114 = vmatpush1.msra.mxu0 0.0
    %115 = vmatprep.subr.mxu0 0.0
    %116 = vmatpush1.msra.mxu0 0.0
    %117 = vmatprep.subr.mxu0 0.0
    %118 = vmatpush1.msra.mxu0 0.0
    %119 = vmatprep.subr.mxu0 0.0
    %120 = vmatpush1.msra.mxu0 0.0
    %121 = vmatprep.subr.mxu0 0.0
    %122 = vmatpush1.msra.mxu0 0.0
    %123 = vmatprep.subr.mxu0 0.0
    %124 = vmatpush1.msra.mxu0 0.0
    %125 = vmatprep.subr.mxu0 0.0
    %126 = vmatpush1.msra.mxu0 0.0
    %127 = vmatprep.subr.mxu0 0.0
    %128 = vmatpush1.msra.mxu0 0.0
    %129 = vmatprep.subr.mxu0 0.0
    %130 = vmatpush1.msra.mxu0 0.0
    %131 = vmatprep.subr.mxu0 0.0
    %132 = vmatpush1.msra.mxu0 0.0
    %133 = vmatprep.subr.mxu0 0.0
    %134 = vmatpush1.msra.mxu0 0.0
    %135 = vmatprep.mubr.f32.mxu0 0.0
    %136 = vmatmul.mubr.f32.gmra.mrb[0].mxu0 %v69
    %v137 = vpop.f32.mrb[0].mxu0
    %v138 = vadd.f32 %v66, %v137
    %v139 = vpop.f32.mrb[0].mxu0
    %140 = vdwg.mxu0
    %v141 = vmul.f32 %v138, 0.35355338
    %s142 = scalar_lea.vmem [#allocation2], 32
    %v143 = vld [vmem:[%s142] sm:$0xff]
    %v144 = vld [vmem:[%s142 + $0x8] sm:$0xff]
    %v145 = vld [vmem:[%s142 + $0x10] sm:$0xff]
    %v146 = vld [vmem:[%s142 + $0x18] sm:$0xff]
    %v147 = vld [vmem:[%s3 + $0x1] sm:$0x1]
    %v148 = vlaneseq
    %v149 = vshrl.u32 %v148, 7
    %v150 = vsub.s32 0, %v149
    %v151 = vrot.slane %v147, %v150
    %152 = vmatprep.subr.mxu0 0.0
    %153 = vmatpush1.msra.mxu0 %v143
    %154 = vmatprep.subr.mxu0 0.0
    %155 = vmatpush1.msra.mxu0 %v144
    %156 = vmatprep.subr.mxu0 0.0
    %157 = vmatpush1.msra.mxu0 %v145
    %158 = vmatprep.subr.mxu0 0.0
    %159 = vmatpush1.msra.mxu0 %v146
    %160 = vmatprep.subr.mxu0 0.0
    %161 = vmatpush1.msra.mxu0 0.0
    %162 = vmatprep.subr.mxu0 0.0
    %163 = vmatpush1.msra.mxu0 0.0
    %164 = vmatprep.subr.mxu0 0.0
    %165 = vmatpush1.msra.mxu0 0.0
    %166 = vmatprep.subr.mxu0 0.0
    %167 = vmatpush1.msra.mxu0 0.0
    %168 = vmatprep.subr.mxu0 0.0
    %169 = vmatpush1.msra.mxu0 0.0
    %170 = vmatprep.subr.mxu0 0.0
    %171 = vmatpush1.msra.mxu0 0.0
    %172 = vmatprep.subr.mxu0 0.0
    %173 = vmatpush1.msra.mxu0 0.0
    %174 = vmatprep.subr.mxu0 0.0
    %175 = vmatpush1.msra.mxu0 0.0
    %176 = vmatprep.subr.mxu0 0.0
    %177 = vmatpush1.msra.mxu0 0.0
    %178 = vmatprep.subr.mxu0 0.0
    %179 = vmatpush1.msra.mxu0 0.0
    %180 = vmatprep.subr.mxu0 0.0
    %181 = vmatpush1.msra.mxu0 0.0
    %182 = vmatprep.subr.mxu0 0.0
    %183 = vmatpush1.msra.mxu0 0.0
    %184 = vmatprep.subr.mxu0 0.0
    %185 = vmatpush1.msra.mxu0 0.0
    %186 = vmatprep.subr.mxu0 0.0
    %187 = vmatpush1.msra.mxu0 0.0
    %188 = vmatprep.subr.mxu0 0.0
    %189 = vmatpush1.msra.mxu0 0.0
    %190 = vmatprep.subr.mxu0 0.0
    %191 = vmatpush1.msra.mxu0 0.0
    %192 = vmatprep.subr.mxu0 0.0
    %193 = vmatpush1.msra.mxu0 0.0
    %194 = vmatprep.subr.mxu0 0.0
    %195 = vmatpush1.msra.mxu0 0.0
    %196 = vmatprep.subr.mxu0 0.0
    %197 = vmatpush1.msra.mxu0 0.0
    %198 = vmatprep.subr.mxu0 0.0
    %199 = vmatpush1.msra.mxu0 0.0
    %200 = vmatprep.subr.mxu0 0.0
    %201 = vmatpush1.msra.mxu0 0.0
    %202 = vmatprep.subr.mxu0 0.0
    %203 = vmatpush1.msra.mxu0 0.0
    %204 = vmatprep.subr.mxu0 0.0
    %205 = vmatpush1.msra.mxu0 0.0
    %206 = vmatprep.subr.mxu0 0.0
    %207 = vmatpush1.msra.mxu0 0.0
    %208 = vmatprep.subr.mxu0 0.0
    %209 = vmatpush1.msra.mxu0 0.0
    %210 = vmatprep.subr.mxu0 0.0
    %211 = vmatpush1.msra.mxu0 0.0
    %212 = vmatprep.subr.mxu0 0.0
    %213 = vmatpush1.msra.mxu0 0.0
    %214 = vmatprep.subr.mxu0 0.0
    %215 = vmatpush1.msra.mxu0 0.0
    %216 = vmatprep.mubr.f32.mxu0 0.0
    %217 = vmatmul.mubr.f32.gmra.mrb[0].mxu0 %v69
    %v218 = vpop.f32.mrb[0].mxu0
    %v219 = vadd.f32 %v151, %v218
    %v220 = vpop.f32.mrb[0].mxu0
    %221 = vdwg.mxu0
    %s222 = scalar_lea.vmem [#allocation2], 64
    %v223 = vld [vmem:[%s222] sm:$0xff]
    %v224 = vld [vmem:[%s222 + $0x8] sm:$0xff]
    %v225 = vld [vmem:[%s222 + $0x10] sm:$0xff]
    %v226 = vld [vmem:[%s222 + $0x18] sm:$0xff]
    %v227 = vld [vmem:[%s3 + $0x2] sm:$0x1]
    %v228 = vlaneseq
    %v229 = vshrl.u32 %v228, 7
    %v230 = vsub.s32 0, %v229
    %v231 = vrot.slane %v227, %v230
    %232 = vmatprep.subr.mxu0 0.0
    %233 = vmatpush1.msra.mxu0 %v223
    %234 = vmatprep.subr.mxu0 0.0
    %235 = vmatpush1.msra.mxu0 %v224
    %236 = vmatprep.subr.mxu0 0.0
    %237 = vmatpush1.msra.mxu0 %v225
    %238 = vmatprep.subr.mxu0 0.0
    %239 = vmatpush1.msra.mxu0 %v226
    %240 = vmatprep.subr.mxu0 0.0
    %241 = vmatpush1.msra.mxu0 0.0
    %242 = vmatprep.subr.mxu0 0.0
    %243 = vmatpush1.msra.mxu0 0.0
    %244 = vmatprep.subr.mxu0 0.0
    %245 = vmatpush1.msra.mxu0 0.0
    %246 = vmatprep.subr.mxu0 0.0
    %247 = vmatpush1.msra.mxu0 0.0
    %248 = vmatprep.subr.mxu0 0.0
    %249 = vmatpush1.msra.mxu0 0.0
    %250 = vmatprep.subr.mxu0 0.0
    %251 = vmatpush1.msra.mxu0 0.0
    %252 = vmatprep.subr.mxu0 0.0
    %253 = vmatpush1.msra.mxu0 0.0
    %254 = vmatprep.subr.mxu0 0.0
    %255 = vmatpush1.msra.mxu0 0.0
    %256 = vmatprep.subr.mxu0 0.0
    %257 = vmatpush1.msra.mxu0 0.0
    %258 = vmatprep.subr.mxu0 0.0
    %259 = vmatpush1.msra.mxu0 0.0
    %260 = vmatprep.subr.mxu0 0.0
    %261 = vmatpush1.msra.mxu0 0.0
    %262 = vmatprep.subr.mxu0 0.0
    %263 = vmatpush1.msra.mxu0 0.0
    %264 = vmatprep.subr.mxu0 0.0
    %265 = vmatpush1.msra.mxu0 0.0
    %266 = vmatprep.subr.mxu0 0.0
    %267 = vmatpush1.msra.mxu0 0.0
    %268 = vmatprep.subr.mxu0 0.0
    %269 = vmatpush1.msra.mxu0 0.0
    %270 = vmatprep.subr.mxu0 0.0
    %271 = vmatpush1.msra.mxu0 0.0
    %272 = vmatprep.subr.mxu0 0.0
    %273 = vmatpush1.msra.mxu0 0.0
    %274 = vmatprep.subr.mxu0 0.0
    %275 = vmatpush1.msra.mxu0 0.0
    %276 = vmatprep.subr.mxu0 0.0
    %277 = vmatpush1.msra.mxu0 0.0
    %278 = vmatprep.subr.mxu0 0.0
    %279 = vmatpush1.msra.mxu0 0.0
    %280 = vmatprep.subr.mxu0 0.0
    %281 = vmatpush1.msra.mxu0 0.0
    %282 = vmatprep.subr.mxu0 0.0
    %283 = vmatpush1.msra.mxu0 0.0
    %284 = vmatprep.subr.mxu0 0.0
    %285 = vmatpush1.msra.mxu0 0.0
    %286 = vmatprep.subr.mxu0 0.0
    %287 = vmatpush1.msra.mxu0 0.0
    %288 = vmatprep.subr.mxu0 0.0
    %289 = vmatpush1.msra.mxu0 0.0
    %290 = vmatprep.subr.mxu0 0.0
    %291 = vmatpush1.msra.mxu0 0.0
    %292 = vmatprep.subr.mxu0 0.0
    %293 = vmatpush1.msra.mxu0 0.0
    %294 = vmatprep.subr.mxu0 0.0
    %295 = vmatpush1.msra.mxu0 0.0
    %296 = vmatprep.mubr.f32.mxu0 0.0
    %297 = vmatmul.mubr.f32.gmra.mrb[0].mxu0 %v69
    %v298 = vpop.f32.mrb[0].mxu0
    %v299 = vadd.f32 %v231, %v298
    %v300 = vpop.f32.mrb[0].mxu0
    %301 = vdwg.mxu0
    %303 = vrot.lane.b32.xlu0 %v141, 120
    %v304 = vpop.permute.xlu0 %303
    %305 = vrot.lane.b32.xlu0 %v141, 112
    %v306 = vpop.permute.xlu0 %305
    %307 = vrot.lane.b32.xlu0 %v141, 104
    %v308 = vpop.permute.xlu0 %307
    %310 = vrot.lane.b32.xlu0 %v219, 120
    %v311 = vpop.permute.xlu0 %310
    %312 = vrot.lane.b32.xlu0 %v219, 112
    %v313 = vpop.permute.xlu0 %312
    %314 = vrot.lane.b32.xlu0 %v219, 104
    %v315 = vpop.permute.xlu0 %314
    %317 = vrot.lane.b32.xlu0 %v299, 120
    %v318 = vpop.permute.xlu0 %317
    %320 = vrot.lane.b32.xlu0 %v299, 112
    %v321 = vpop.permute.xlu0 %320
    %323 = vrot.lane.b32.xlu0 %v299, 104
    %v324 = vpop.permute.xlu0 %323
    %vm326 = vcmask 64512
    %v327 = vsel %vm326, %v141, 0
    %v329 = vsel %vm326, %v219, 0
    %331 = vmatprep.subr.mxu0 0.0
    %332 = vmatpush1.xpose.msra.mxu0 %v329
    %333 = vmatprep.subr.mxu0 0.0
    %334 = vmatpush1.xpose.msra.mxu0 0.0
    %335 = vmatprep.subr.mxu0 0.0
    %336 = vmatpush1.xpose.msra.mxu0 0.0
    %337 = vmatprep.subr.mxu0 0.0
    %338 = vmatpush1.xpose.msra.mxu0 0.0
    %339 = vmatprep.subr.mxu0 0.0
    %340 = vmatpush1.xpose.msra.mxu0 0.0
    %341 = vmatprep.subr.mxu0 0.0
    %342 = vmatpush1.xpose.msra.mxu0 0.0
    %343 = vmatprep.subr.mxu0 0.0
    %344 = vmatpush1.xpose.msra.mxu0 0.0
    %345 = vmatprep.subr.mxu0 0.0
    %346 = vmatpush1.xpose.msra.mxu0 0.0
    %347 = vmatprep.subr.mxu0 0.0
    %348 = vmatpush1.xpose.msra.mxu0 0.0
    %349 = vmatprep.subr.mxu0 0.0
    %350 = vmatpush1.xpose.msra.mxu0 0.0
    %351 = vmatprep.subr.mxu0 0.0
    %352 = vmatpush1.xpose.msra.mxu0 0.0
    %353 = vmatprep.subr.mxu0 0.0
    %354 = vmatpush1.xpose.msra.mxu0 0.0
    %355 = vmatprep.subr.mxu0 0.0
    %356 = vmatpush1.xpose.msra.mxu0 0.0
    %357 = vmatprep.subr.mxu0 0.0
    %358 = vmatpush1.xpose.msra.mxu0 0.0
    %359 = vmatprep.subr.mxu0 0.0
    %360 = vmatpush1.xpose.msra.mxu0 0.0
    %361 = vmatprep.subr.mxu0 0.0
    %362 = vmatpush1.xpose.msra.mxu0 0.0
    %363 = vmatprep.subr.mxu0 0.0
    %364 = vmatpush1.xpose.msra.mxu0 0.0
    %365 = vmatprep.subr.mxu0 0.0
    %366 = vmatpush1.xpose.msra.mxu0 0.0
    %367 = vmatprep.subr.mxu0 0.0
    %368 = vmatpush1.xpose.msra.mxu0 0.0
    %369 = vmatprep.subr.mxu0 0.0
    %370 = vmatpush1.xpose.msra.mxu0 0.0
    %371 = vmatprep.subr.mxu0 0.0
    %372 = vmatpush1.xpose.msra.mxu0 0.0
    %373 = vmatprep.subr.mxu0 0.0
    %374 = vmatpush1.xpose.msra.mxu0 0.0
    %375 = vmatprep.subr.mxu0 0.0
    %376 = vmatpush1.xpose.msra.mxu0 0.0
    %377 = vmatprep.subr.mxu0 0.0
    %378 = vmatpush1.xpose.msra.mxu0 0.0
    %379 = vmatprep.subr.mxu0 0.0
    %380 = vmatpush1.xpose.msra.mxu0 0.0
    %381 = vmatprep.subr.mxu0 0.0
    %382 = vmatpush1.xpose.msra.mxu0 0.0
    %383 = vmatprep.subr.mxu0 0.0
    %384 = vmatpush1.xpose.msra.mxu0 0.0
    %385 = vmatprep.subr.mxu0 0.0
    %386 = vmatpush1.xpose.msra.mxu0 0.0
    %387 = vmatprep.subr.mxu0 0.0
    %388 = vmatpush1.xpose.msra.mxu0 0.0
    %389 = vmatprep.subr.mxu0 0.0
    %390 = vmatpush1.xpose.msra.mxu0 0.0
    %391 = vmatprep.subr.mxu0 0.0
    %392 = vmatpush1.xpose.msra.mxu0 0.0
    %393 = vmatprep.subr.mxu0 0.0
    %394 = vmatpush1.xpose.msra.mxu0 0.0
    %395 = vmatprep.mubr.f32.mxu0 0.0
    %396 = vmatmul.mubr.f32.gmra.mrb[0].mxu0 %v327
    %v397 = vpop.f32.mrb[0].mxu0
    %v398 = vadd.f32 0.0, %v397
    %v399 = vpop.f32.mrb[0].mxu0
    %400 = vdwg.mxu0
    %v401 = vsel %vm326, %v304, 0
    %v403 = vsel %vm326, %v311, 0
    %405 = vmatprep.subr.mxu0 0.0
    %406 = vmatpush1.xpose.msra.mxu0 %v403
    %407 = vmatprep.subr.mxu0 0.0
    %408 = vmatpush1.xpose.msra.mxu0 0.0
    %409 = vmatprep.subr.mxu0 0.0
    %410 = vmatpush1.xpose.msra.mxu0 0.0
    %411 = vmatprep.subr.mxu0 0.0
    %412 = vmatpush1.xpose.msra.mxu0 0.0
    %413 = vmatprep.subr.mxu0 0.0
    %414 = vmatpush1.xpose.msra.mxu0 0.0
    %415 = vmatprep.subr.mxu0 0.0
    %416 = vmatpush1.xpose.msra.mxu0 0.0
    %417 = vmatprep.subr.mxu0 0.0
    %418 = vmatpush1.xpose.msra.mxu0 0.0
    %419 = vmatprep.subr.mxu0 0.0
    %420 = vmatpush1.xpose.msra.mxu0 0.0
    %421 = vmatprep.subr.mxu0 0.0
    %422 = vmatpush1.xpose.msra.mxu0 0.0
    %423 = vmatprep.subr.mxu0 0.0
    %424 = vmatpush1.xpose.msra.mxu0 0.0
    %425 = vmatprep.subr.mxu0 0.0
    %426 = vmatpush1.xpose.msra.mxu0 0.0
    %427 = vmatprep.subr.mxu0 0.0
    %428 = vmatpush1.xpose.msra.mxu0 0.0
    %429 = vmatprep.subr.mxu0 0.0
    %430 = vmatpush1.xpose.msra.mxu0 0.0
    %431 = vmatprep.subr.mxu0 0.0
    %432 = vmatpush1.xpose.msra.mxu0 0.0
    %433 = vmatprep.subr.mxu0 0.0
    %434 = vmatpush1.xpose.msra.mxu0 0.0
    %435 = vmatprep.subr.mxu0 0.0
    %436 = vmatpush1.xpose.msra.mxu0 0.0
    %437 = vmatprep.subr.mxu0 0.0
    %438 = vmatpush1.xpose.msra.mxu0 0.0
    %439 = vmatprep.subr.mxu0 0.0
    %440 = vmatpush1.xpose.msra.mxu0 0.0
    %441 = vmatprep.subr.mxu0 0.0
    %442 = vmatpush1.xpose.msra.mxu0 0.0
    %443 = vmatprep.subr.mxu0 0.0
    %444 = vmatpush1.xpose.msra.mxu0 0.0
    %445 = vmatprep.subr.mxu0 0.0
    %446 = vmatpush1.xpose.msra.mxu0 0.0
    %447 = vmatprep.subr.mxu0 0.0
    %448 = vmatpush1.xpose.msra.mxu0 0.0
    %449 = vmatprep.subr.mxu0 0.0
    %450 = vmatpush1.xpose.msra.mxu0 0.0
    %451 = vmatprep.subr.mxu0 0.0
    %452 = vmatpush1.xpose.msra.mxu0 0.0
    %453 = vmatprep.subr.mxu0 0.0
    %454 = vmatpush1.xpose.msra.mxu0 0.0
    %455 = vmatprep.subr.mxu0 0.0
    %456 = vmatpush1.xpose.msra.mxu0 0.0
    %457 = vmatprep.subr.mxu0 0.0
    %458 = vmatpush1.xpose.msra.mxu0 0.0
    %459 = vmatprep.subr.mxu0 0.0
    %460 = vmatpush1.xpose.msra.mxu0 0.0
    %461 = vmatprep.subr.mxu0 0.0
    %462 = vmatpush1.xpose.msra.mxu0 0.0
    %463 = vmatprep.subr.mxu0 0.0
    %464 = vmatpush1.xpose.msra.mxu0 0.0
    %465 = vmatprep.subr.mxu0 0.0
    %466 = vmatpush1.xpose.msra.mxu0 0.0
    %467 = vmatprep.subr.mxu0 0.0
    %468 = vmatpush1.xpose.msra.mxu0 0.0
    %469 = vmatprep.mubr.f32.mxu0 0.0
    %470 = vmatmul.mubr.f32.gmra.mrb[0].mxu0 %v401
    %v471 = vpop.f32.mrb[0].mxu0
    %v472 = vadd.f32 0.0, %v471
    %v473 = vpop.f32.mrb[0].mxu0
    %474 = vdwg.mxu0
    %v475 = vsel %vm326, %v306, 0
    %v477 = vsel %vm326, %v313, 0
    %479 = vmatprep.subr.mxu0 0.0
    %480 = vmatpush1.xpose.msra.mxu0 %v477
    %481 = vmatprep.subr.mxu0 0.0
    %482 = vmatpush1.xpose.msra.mxu0 0.0
    %483 = vmatprep.subr.mxu0 0.0
    %484 = vmatpush1.xpose.msra.mxu0 0.0
    %485 = vmatprep.subr.mxu0 0.0
    %486 = vmatpush1.xpose.msra.mxu0 0.0
    %487 = vmatprep.subr.mxu0 0.0
    %488 = vmatpush1.xpose.msra.mxu0 0.0
    %489 = vmatprep.subr.mxu0 0.0
    %490 = vmatpush1.xpose.msra.mxu0 0.0
    %491 = vmatprep.subr.mxu0 0.0
    %492 = vmatpush1.xpose.msra.mxu0 0.0
    %493 = vmatprep.subr.mxu0 0.0
    %494 = vmatpush1.xpose.msra.mxu0 0.0
    %495 = vmatprep.subr.mxu0 0.0
    %496 = vmatpush1.xpose.msra.mxu0 0.0
    %497 = vmatprep.subr.mxu0 0.0
    %498 = vmatpush1.xpose.msra.mxu0 0.0
    %499 = vmatprep.subr.mxu0 0.0
    %500 = vmatpush1.xpose.msra.mxu0 0.0
    %501 = vmatprep.subr.mxu0 0.0
    %502 = vmatpush1.xpose.msra.mxu0 0.0
    %503 = vmatprep.subr.mxu0 0.0
    %504 = vmatpush1.xpose.msra.mxu0 0.0
    %505 = vmatprep.subr.mxu0 0.0
    %506 = vmatpush1.xpose.msra.mxu0 0.0
    %507 = vmatprep.subr.mxu0 0.0
    %508 = vmatpush1.xpose.msra.mxu0 0.0
    %509 = vmatprep.subr.mxu0 0.0
    %510 = vmatpush1.xpose.msra.mxu0 0.0
    %511 = vmatprep.subr.mxu0 0.0
    %512 = vmatpush1.xpose.msra.mxu0 0.0
    %513 = vmatprep.subr.mxu0 0.0
    %514 = vmatpush1.xpose.msra.mxu0 0.0
    %515 = vmatprep.subr.mxu0 0.0
    %516 = vmatpush1.xpose.msra.mxu0 0.0
    %517 = vmatprep.subr.mxu0 0.0
    %518 = vmatpush1.xpose.msra.mxu0 0.0
    %519 = vmatprep.subr.mxu0 0.0
    %520 = vmatpush1.xpose.msra.mxu0 0.0
    %521 = vmatprep.subr.mxu0 0.0
    %522 = vmatpush1.xpose.msra.mxu0 0.0
    %523 = vmatprep.subr.mxu0 0.0
    %524 = vmatpush1.xpose.msra.mxu0 0.0
    %525 = vmatprep.subr.mxu0 0.0
    %526 = vmatpush1.xpose.msra.mxu0 0.0
    %527 = vmatprep.subr.mxu0 0.0
    %528 = vmatpush1.xpose.msra.mxu0 0.0
    %529 = vmatprep.subr.mxu0 0.0
    %530 = vmatpush1.xpose.msra.mxu0 0.0
    %531 = vmatprep.subr.mxu0 0.0
    %532 = vmatpush1.xpose.msra.mxu0 0.0
    %533 = vmatprep.subr.mxu0 0.0
    %534 = vmatpush1.xpose.msra.mxu0 0.0
    %535 = vmatprep.subr.mxu0 0.0
    %536 = vmatpush1.xpose.msra.mxu0 0.0
    %537 = vmatprep.subr.mxu0 0.0
    %538 = vmatpush1.xpose.msra.mxu0 0.0
    %539 = vmatprep.subr.mxu0 0.0
    %540 = vmatpush1.xpose.msra.mxu0 0.0
    %541 = vmatprep.subr.mxu0 0.0
    %542 = vmatpush1.xpose.msra.mxu0 0.0
    %543 = vmatprep.mubr.f32.mxu0 0.0
    %544 = vmatmul.mubr.f32.gmra.mrb[0].mxu0 %v475
    %v545 = vpop.f32.mrb[0].mxu0
    %v546 = vadd.f32 0.0, %v545
    %v547 = vpop.f32.mrb[0].mxu0
    %548 = vdwg.mxu0
    %v549 = vsel %vm326, %v308, 0
    %v551 = vsel %vm326, %v315, 0
    %553 = vmatprep.subr.mxu0 0.0
    %554 = vmatpush1.xpose.msra.mxu0 %v551
    %555 = vmatprep.subr.mxu0 0.0
    %556 = vmatpush1.xpose.msra.mxu0 0.0
    %557 = vmatprep.subr.mxu0 0.0
    %558 = vmatpush1.xpose.msra.mxu0 0.0
    %559 = vmatprep.subr.mxu0 0.0
    %560 = vmatpush1.xpose.msra.mxu0 0.0
    %561 = vmatprep.subr.mxu0 0.0
    %562 = vmatpush1.xpose.msra.mxu0 0.0
    %563 = vmatprep.subr.mxu0 0.0
    %564 = vmatpush1.xpose.msra.mxu0 0.0
    %565 = vmatprep.subr.mxu0 0.0
    %566 = vmatpush1.xpose.msra.mxu0 0.0
    %567 = vmatprep.subr.mxu0 0.0
    %568 = vmatpush1.xpose.msra.mxu0 0.0
    %569 = vmatprep.subr.mxu0 0.0
    %570 = vmatpush1.xpose.msra.mxu0 0.0
    %571 = vmatprep.subr.mxu0 0.0
    %572 = vmatpush1.xpose.msra.mxu0 0.0
    %573 = vmatprep.subr.mxu0 0.0
    %574 = vmatpush1.xpose.msra.mxu0 0.0
    %575 = vmatprep.subr.mxu0 0.0
    %576 = vmatpush1.xpose.msra.mxu0 0.0
    %577 = vmatprep.subr.mxu0 0.0
    %578 = vmatpush1.xpose.msra.mxu0 0.0
    %579 = vmatprep.subr.mxu0 0.0
    %580 = vmatpush1.xpose.msra.mxu0 0.0
    %581 = vmatprep.subr.mxu0 0.0
    %582 = vmatpush1.xpose.msra.mxu0 0.0
    %583 = vmatprep.subr.mxu0 0.0
    %584 = vmatpush1.xpose.msra.mxu0 0.0
    %585 = vmatprep.subr.mxu0 0.0
    %586 = vmatpush1.xpose.msra.mxu0 0.0
    %587 = vmatprep.subr.mxu0 0.0
    %588 = vmatpush1.xpose.msra.mxu0 0.0
    %589 = vmatprep.subr.mxu0 0.0
    %590 = vmatpush1.xpose.msra.mxu0 0.0
    %591 = vmatprep.subr.mxu0 0.0
    %592 = vmatpush1.xpose.msra.mxu0 0.0
    %593 = vmatprep.subr.mxu0 0.0
    %594 = vmatpush1.xpose.msra.mxu0 0.0
    %595 = vmatprep.subr.mxu0 0.0
    %596 = vmatpush1.xpose.msra.mxu0 0.0
    %597 = vmatprep.subr.mxu0 0.0
    %598 = vmatpush1.xpose.msra.mxu0 0.0
    %599 = vmatprep.subr.mxu0 0.0
    %600 = vmatpush1.xpose.msra.mxu0 0.0
    %601 = vmatprep.subr.mxu0 0.0
    %602 = vmatpush1.xpose.msra.mxu0 0.0
    %603 = vmatprep.subr.mxu0 0.0
    %604 = vmatpush1.xpose.msra.mxu0 0.0
    %605 = vmatprep.subr.mxu0 0.0
    %606 = vmatpush1.xpose.msra.mxu0 0.0
    %607 = vmatprep.subr.mxu0 0.0
    %608 = vmatpush1.xpose.msra.mxu0 0.0
    %609 = vmatprep.subr.mxu0 0.0
    %610 = vmatpush1.xpose.msra.mxu0 0.0
    %611 = vmatprep.subr.mxu0 0.0
    %612 = vmatpush1.xpose.msra.mxu0 0.0
    %613 = vmatprep.subr.mxu0 0.0
    %614 = vmatpush1.xpose.msra.mxu0 0.0
    %615 = vmatprep.subr.mxu0 0.0
    %616 = vmatpush1.xpose.msra.mxu0 0.0
    %617 = vmatprep.mubr.f32.mxu0 0.0
    %618 = vmatmul.mubr.f32.gmra.mrb[0].mxu0 %v549
    %v619 = vpop.f32.mrb[0].mxu0
    %v620 = vadd.f32 0.0, %v619
    %v621 = vpop.f32.mrb[0].mxu0
    %622 = vdwg.mxu0
    %v623 = vsel %vm54, 1, 0
    %vm624 = vcmp.eq.s32.totalorder %v623, 1
    %v625 = vsel %vm624, -1e+30, %v398
    %v626 = vsel %vm624, -1e+30, %v472
    %v627 = vsel %vm624, -1e+30, %v546
    %v628 = vsel %vm624, -1e+30, %v620
    %v629 = vsel %vm326, %v625, -inf
    %630 = vmax.xlane.f32.xlu0 %v629
    %v631 = vpop.xlane.xlu0 %630
    %v632 = vsel %vm326, %v626, -inf
    %633 = vmax.xlane.f32.xlu0 %v632
    %v634 = vpop.xlane.xlu0 %633
    %v635 = vsel %vm326, %v627, -inf
    %636 = vmax.xlane.f32.xlu0 %v635
    %v637 = vpop.xlane.xlu0 %636
    %v638 = vsel %vm326, %v628, -inf
    %639 = vmax.xlane.f32.xlu0 %v638
    %v640 = vpop.xlane.xlu0 %639
    %v641 = vsub.f32 %v625, %v631
    %v642 = vsub.f32 %v626, %v634
    %v643 = vsub.f32 %v627, %v637
    %v644 = vsub.f32 %v628, %v640
    %v645 = vmul.f32 %v641, 1.442695
    %v646 = vpow.pop %v645
    %v647 = vmul.f32 %v642, 1.442695
    %v648 = vpow.pop %v647
    %v649 = vmul.f32 %v643, 1.442695
    %v650 = vpow.pop %v649
    %v651 = vmul.f32 %v644, 1.442695
    %v652 = vpow.pop %v651
    %v653 = vsel %vm326, %v646, 0.0
    %654 = vadd.xlane.f32.xlu0 %v653
    %v655 = vpop.xlane.xlu0 %654
    %v656 = vsel %vm326, %v648, 0.0
    %657 = vadd.xlane.f32.xlu0 %v656
    %v658 = vpop.xlane.xlu0 %657
    %v659 = vsel %vm326, %v650, 0.0
    %660 = vadd.xlane.f32.xlu0 %v659
    %v661 = vpop.xlane.xlu0 %660
    %v662 = vsel %vm326, %v652, 0.0
    %663 = vadd.xlane.f32.xlu0 %v662
    %v664 = vpop.xlane.xlu0 %663
    %v665 = vrcp.pop %v655
    %v666 = vrcp.pop %v658
    %v667 = vrcp.pop %v661
    %v668 = vrcp.pop %v664
    %v669 = vmul.f32 %v646, %v665
    %v670 = vmul.f32 %v648, %v666
    %v671 = vmul.f32 %v650, %v667
    %v672 = vmul.f32 %v652, %v668
    %v674 = vsel %vm326, %v669, 0
    %676 = vmatprep.subr.mxu0 0.0
    %677 = vmatpush1.msra.mxu0 %v299
    %678 = vmatprep.subr.mxu0 0.0
    %679 = vmatpush1.msra.mxu0 0.0
    %680 = vmatprep.subr.mxu0 0.0
    %681 = vmatpush1.msra.mxu0 0.0
    %682 = vmatprep.subr.mxu0 0.0
    %683 = vmatpush1.msra.mxu0 0.0
    %684 = vmatprep.subr.mxu0 0.0
    %685 = vmatpush1.msra.mxu0 0.0
    %686 = vmatprep.subr.mxu0 0.0
    %687 = vmatpush1.msra.mxu0 0.0
    %688 = vmatprep.subr.mxu0 0.0
    %689 = vmatpush1.msra.mxu0 0.0
    %690 = vmatprep.subr.mxu0 0.0
    %691 = vmatpush1.msra.mxu0 0.0
    %692 = vmatprep.subr.mxu0 0.0
    %693 = vmatpush1.msra.mxu0 0.0
    %694 = vmatprep.subr.mxu0 0.0
    %695 = vmatpush1.msra.mxu0 0.0
    %696 = vmatprep.subr.mxu0 0.0
    %697 = vmatpush1.msra.mxu0 0.0
    %698 = vmatprep.subr.mxu0 0.0
    %699 = vmatpush1.msra.mxu0 0.0
    %700 = vmatprep.subr.mxu0 0.0
    %701 = vmatpush1.msra.mxu0 0.0
    %702 = vmatprep.subr.mxu0 0.0
    %703 = vmatpush1.msra.mxu0 0.0
    %704 = vmatprep.subr.mxu0 0.0
    %705 = vmatpush1.msra.mxu0 0.0
    %706 = vmatprep.subr.mxu0 0.0
    %707 = vmatpush1.msra.mxu0 0.0
    %708 = vmatprep.subr.mxu0 0.0
    %709 = vmatpush1.msra.mxu0 0.0
    %710 = vmatprep.subr.mxu0 0.0
    %711 = vmatpush1.msra.mxu0 0.0
    %712 = vmatprep.subr.mxu0 0.0
    %713 = vmatpush1.msra.mxu0 0.0
    %714 = vmatprep.subr.mxu0 0.0
    %715 = vmatpush1.msra.mxu0 0.0
    %716 = vmatprep.subr.mxu0 0.0
    %717 = vmatpush1.msra.mxu0 0.0
    %718 = vmatprep.subr.mxu0 0.0
    %719 = vmatpush1.msra.mxu0 0.0
    %720 = vmatprep.subr.mxu0 0.0
    %721 = vmatpush1.msra.mxu0 0.0
    %722 = vmatprep.subr.mxu0 0.0
    %723 = vmatpush1.msra.mxu0 0.0
    %724 = vmatprep.subr.mxu0 0.0
    %725 = vmatpush1.msra.mxu0 0.0
    %726 = vmatprep.subr.mxu0 0.0
    %727 = vmatpush1.msra.mxu0 0.0
    %728 = vmatprep.subr.mxu0 0.0
    %729 = vmatpush1.msra.mxu0 0.0
    %730 = vmatprep.subr.mxu0 0.0
    %731 = vmatpush1.msra.mxu0 0.0
    %732 = vmatprep.subr.mxu0 0.0
    %733 = vmatpush1.msra.mxu0 0.0
    %734 = vmatprep.subr.mxu0 0.0
    %735 = vmatpush1.msra.mxu0 0.0
    %736 = vmatprep.subr.mxu0 0.0
    %737 = vmatpush1.msra.mxu0 0.0
    %738 = vmatprep.subr.mxu0 0.0
    %739 = vmatpush1.msra.mxu0 0.0
    %740 = vmatprep.mubr.f32.mxu0 0.0
    %741 = vmatmul.mubr.f32.gmra.mrb[0].mxu0 %v674
    %v742 = vpop.f32.mrb[0].mxu0
    %v743 = vadd.f32 0.0, %v742
    %v744 = vpop.f32.mrb[0].mxu0
    %745 = vdwg.mxu0
    %v747 = vsel %vm326, %v670, 0
    %749 = vmatprep.subr.mxu0 0.0
    %750 = vmatpush1.msra.mxu0 %v318
    %751 = vmatprep.subr.mxu0 0.0
    %752 = vmatpush1.msra.mxu0 0.0
    %753 = vmatprep.subr.mxu0 0.0
    %754 = vmatpush1.msra.mxu0 0.0
    %755 = vmatprep.subr.mxu0 0.0
    %756 = vmatpush1.msra.mxu0 0.0
    %757 = vmatprep.subr.mxu0 0.0
    %758 = vmatpush1.msra.mxu0 0.0
    %759 = vmatprep.subr.mxu0 0.0
    %760 = vmatpush1.msra.mxu0 0.0
    %761 = vmatprep.subr.mxu0 0.0
    %762 = vmatpush1.msra.mxu0 0.0
    %763 = vmatprep.subr.mxu0 0.0
    %764 = vmatpush1.msra.mxu0 0.0
    %765 = vmatprep.subr.mxu0 0.0
    %766 = vmatpush1.msra.mxu0 0.0
    %767 = vmatprep.subr.mxu0 0.0
    %768 = vmatpush1.msra.mxu0 0.0
    %769 = vmatprep.subr.mxu0 0.0
    %770 = vmatpush1.msra.mxu0 0.0
    %771 = vmatprep.subr.mxu0 0.0
    %772 = vmatpush1.msra.mxu0 0.0
    %773 = vmatprep.subr.mxu0 0.0
    %774 = vmatpush1.msra.mxu0 0.0
    %775 = vmatprep.subr.mxu0 0.0
    %776 = vmatpush1.msra.mxu0 0.0
    %777 = vmatprep.subr.mxu0 0.0
    %778 = vmatpush1.msra.mxu0 0.0
    %779 = vmatprep.subr.mxu0 0.0
    %780 = vmatpush1.msra.mxu0 0.0
    %781 = vmatprep.subr.mxu0 0.0
    %782 = vmatpush1.msra.mxu0 0.0
    %783 = vmatprep.subr.mxu0 0.0
    %784 = vmatpush1.msra.mxu0 0.0
    %785 = vmatprep.subr.mxu0 0.0
    %786 = vmatpush1.msra.mxu0 0.0
    %787 = vmatprep.subr.mxu0 0.0
    %788 = vmatpush1.msra.mxu0 0.0
    %789 = vmatprep.subr.mxu0 0.0
    %790 = vmatpush1.msra.mxu0 0.0
    %791 = vmatprep.subr.mxu0 0.0
    %792 = vmatpush1.msra.mxu0 0.0
    %793 = vmatprep.subr.mxu0 0.0
    %794 = vmatpush1.msra.mxu0 0.0
    %795 = vmatprep.subr.mxu0 0.0
    %796 = vmatpush1.msra.mxu0 0.0
    %797 = vmatprep.subr.mxu0 0.0
    %798 = vmatpush1.msra.mxu0 0.0
    %799 = vmatprep.subr.mxu0 0.0
    %800 = vmatpush1.msra.mxu0 0.0
    %801 = vmatprep.subr.mxu0 0.0
    %802 = vmatpush1.msra.mxu0 0.0
    %803 = vmatprep.subr.mxu0 0.0
    %804 = vmatpush1.msra.mxu0 0.0
    %805 = vmatprep.subr.mxu0 0.0
    %806 = vmatpush1.msra.mxu0 0.0
    %807 = vmatprep.subr.mxu0 0.0
    %808 = vmatpush1.msra.mxu0 0.0
    %809 = vmatprep.subr.mxu0 0.0
    %810 = vmatpush1.msra.mxu0 0.0
    %811 = vmatprep.subr.mxu0 0.0
    %812 = vmatpush1.msra.mxu0 0.0
    %813 = vmatprep.mubr.f32.mxu0 0.0
    %814 = vmatmul.mubr.f32.gmra.mrb[0].mxu0 %v747
    %v815 = vpop.f32.mrb[0].mxu0
    %v816 = vadd.f32 0.0, %v815
    %v817 = vpop.f32.mrb[0].mxu0
    %818 = vdwg.mxu0
    %v820 = vsel %vm326, %v671, 0
    %822 = vmatprep.subr.mxu0 0.0
    %823 = vmatpush1.msra.mxu0 %v321
    %824 = vmatprep.subr.mxu0 0.0
    %825 = vmatpush1.msra.mxu0 0.0
    %826 = vmatprep.subr.mxu0 0.0
    %827 = vmatpush1.msra.mxu0 0.0
    %828 = vmatprep.subr.mxu0 0.0
    %829 = vmatpush1.msra.mxu0 0.0
    %830 = vmatprep.subr.mxu0 0.0
    %831 = vmatpush1.msra.mxu0 0.0
    %832 = vmatprep.subr.mxu0 0.0
    %833 = vmatpush1.msra.mxu0 0.0
    %834 = vmatprep.subr.mxu0 0.0
    %835 = vmatpush1.msra.mxu0 0.0
    %836 = vmatprep.subr.mxu0 0.0
    %837 = vmatpush1.msra.mxu0 0.0
    %838 = vmatprep.subr.mxu0 0.0
    %839 = vmatpush1.msra.mxu0 0.0
    %840 = vmatprep.subr.mxu0 0.0
    %841 = vmatpush1.msra.mxu0 0.0
    %842 = vmatprep.subr.mxu0 0.0
    %843 = vmatpush1.msra.mxu0 0.0
    %844 = vmatprep.subr.mxu0 0.0
    %845 = vmatpush1.msra.mxu0 0.0
    %846 = vmatprep.subr.mxu0 0.0
    %847 = vmatpush1.msra.mxu0 0.0
    %848 = vmatprep.subr.mxu0 0.0
    %849 = vmatpush1.msra.mxu0 0.0
    %850 = vmatprep.subr.mxu0 0.0
    %851 = vmatpush1.msra.mxu0 0.0
    %852 = vmatprep.subr.mxu0 0.0
    %853 = vmatpush1.msra.mxu0 0.0
    %854 = vmatprep.subr.mxu0 0.0
    %855 = vmatpush1.msra.mxu0 0.0
    %856 = vmatprep.subr.mxu0 0.0
    %857 = vmatpush1.msra.mxu0 0.0
    %858 = vmatprep.subr.mxu0 0.0
    %859 = vmatpush1.msra.mxu0 0.0
    %860 = vmatprep.subr.mxu0 0.0
    %861 = vmatpush1.msra.mxu0 0.0
    %862 = vmatprep.subr.mxu0 0.0
    %863 = vmatpush1.msra.mxu0 0.0
    %864 = vmatprep.subr.mxu0 0.0
    %865 = vmatpush1.msra.mxu0 0.0
    %866 = vmatprep.subr.mxu0 0.0
    %867 = vmatpush1.msra.mxu0 0.0
    %868 = vmatprep.subr.mxu0 0.0
    %869 = vmatpush1.msra.mxu0 0.0
    %870 = vmatprep.subr.mxu0 0.0
    %871 = vmatpush1.msra.mxu0 0.0
    %872 = vmatprep.subr.mxu0 0.0
    %873 = vmatpush1.msra.mxu0 0.0
    %874 = vmatprep.subr.mxu0 0.0
    %875 = vmatpush1.msra.mxu0 0.0
    %876 = vmatprep.subr.mxu0 0.0
    %877 = vmatpush1.msra.mxu0 0.0
    %878 = vmatprep.subr.mxu0 0.0
    %879 = vmatpush1.msra.mxu0 0.0
    %880 = vmatprep.subr.mxu0 0.0
    %881 = vmatpush1.msra.mxu0 0.0
    %882 = vmatprep.subr.mxu0 0.0
    %883 = vmatpush1.msra.mxu0 0.0
    %884 = vmatprep.subr.mxu0 0.0
    %885 = vmatpush1.msra.mxu0 0.0
    %886 = vmatprep.mubr.f32.mxu0 0.0
    %887 = vmatmul.mubr.f32.gmra.mrb[0].mxu0 %v820
    %v888 = vpop.f32.mrb[0].mxu0
    %v889 = vadd.f32 0.0, %v888
    %v890 = vpop.f32.mrb[0].mxu0
    %891 = vdwg.mxu0
    %v893 = vsel %vm326, %v672, 0
    %895 = vmatprep.subr.mxu0 0.0
    %896 = vmatpush1.msra.mxu0 %v324
    %897 = vmatprep.subr.mxu0 0.0
    %898 = vmatpush1.msra.mxu0 0.0
    %899 = vmatprep.subr.mxu0 0.0
    %900 = vmatpush1.msra.mxu0 0.0
    %901 = vmatprep.subr.mxu0 0.0
    %902 = vmatpush1.msra.mxu0 0.0
    %903 = vmatprep.subr.mxu0 0.0
    %904 = vmatpush1.msra.mxu0 0.0
    %905 = vmatprep.subr.mxu0 0.0
    %906 = vmatpush1.msra.mxu0 0.0
    %907 = vmatprep.subr.mxu0 0.0
    %908 = vmatpush1.msra.mxu0 0.0
    %909 = vmatprep.subr.mxu0 0.0
    %910 = vmatpush1.msra.mxu0 0.0
    %911 = vmatprep.subr.mxu0 0.0
    %912 = vmatpush1.msra.mxu0 0.0
    %913 = vmatprep.subr.mxu0 0.0
    %914 = vmatpush1.msra.mxu0 0.0
    %915 = vmatprep.subr.mxu0 0.0
    %916 = vmatpush1.msra.mxu0 0.0
    %917 = vmatprep.subr.mxu0 0.0
    %918 = vmatpush1.msra.mxu0 0.0
    %919 = vmatprep.subr.mxu0 0.0
    %920 = vmatpush1.msra.mxu0 0.0
    %921 = vmatprep.subr.mxu0 0.0
    %922 = vmatpush1.msra.mxu0 0.0
    %923 = vmatprep.subr.mxu0 0.0
    %924 = vmatpush1.msra.mxu0 0.0
    %925 = vmatprep.subr.mxu0 0.0
    %926 = vmatpush1.msra.mxu0 0.0
    %927 = vmatprep.subr.mxu0 0.0
    %928 = vmatpush1.msra.mxu0 0.0
    %929 = vmatprep.subr.mxu0 0.0
    %930 = vmatpush1.msra.mxu0 0.0
    %931 = vmatprep.subr.mxu0 0.0
    %932 = vmatpush1.msra.mxu0 0.0
    %933 = vmatprep.subr.mxu0 0.0
    %934 = vmatpush1.msra.mxu0 0.0
    %935 = vmatprep.subr.mxu0 0.0
    %936 = vmatpush1.msra.mxu0 0.0
    %937 = vmatprep.subr.mxu0 0.0
    %938 = vmatpush1.msra.mxu0 0.0
    %939 = vmatprep.subr.mxu0 0.0
    %940 = vmatpush1.msra.mxu0 0.0
    %941 = vmatprep.subr.mxu0 0.0
    %942 = vmatpush1.msra.mxu0 0.0
    %943 = vmatprep.subr.mxu0 0.0
    %944 = vmatpush1.msra.mxu0 0.0
    %945 = vmatprep.subr.mxu0 0.0
    %946 = vmatpush1.msra.mxu0 0.0
    %947 = vmatprep.subr.mxu0 0.0
    %948 = vmatpush1.msra.mxu0 0.0
    %949 = vmatprep.subr.mxu0 0.0
    %950 = vmatpush1.msra.mxu0 0.0
    %951 = vmatprep.subr.mxu0 0.0
    %952 = vmatpush1.msra.mxu0 0.0
    %953 = vmatprep.subr.mxu0 0.0
    %954 = vmatpush1.msra.mxu0 0.0
    %955 = vmatprep.subr.mxu0 0.0
    %956 = vmatpush1.msra.mxu0 0.0
    %957 = vmatprep.subr.mxu0 0.0
    %958 = vmatpush1.msra.mxu0 0.0
    %959 = vmatprep.mubr.f32.mxu0 0.0
    %960 = vmatmul.mubr.f32.gmra.mrb[0].mxu0 %v893
    %v961 = vpop.f32.mrb[0].mxu0
    %v962 = vadd.f32 0.0, %v961
    %v963 = vpop.f32.mrb[0].mxu0
    %964 = vdwg.mxu0
    %966 = vrot.lane.b32.xlu0 %v816, 8
    %v967 = vpop.permute.xlu0 %966
    %970 = vrot.lane.b32.xlu0 %v889, 16
    %v971 = vpop.permute.xlu0 %970
    %974 = vrot.lane.b32.xlu0 %v962, 24
    %v975 = vpop.permute.xlu0 %974
    %v977 = vsel %vm326, %v743, %v967
    %vm978 = vcmask 130048
    %v979 = vsel %vm978, %v977, %v971
    %vm980 = vcmask 195584
    %v981 = vsel %vm980, %v979, %v975
    %s982 = scalar_lea.vmem [#allocation2], 96
    %v983 = vld [vmem:[%s982] sm:$0xff]
    %v984 = vld [vmem:[%s982 + $0x8] sm:$0xff]
    %v985 = vld [vmem:[%s982 + $0x10] sm:$0xff]
    %v986 = vld [vmem:[%s982 + $0x18] sm:$0xff]
    %v987 = vld [vmem:[%s3 + $0x3] sm:$0x1]
    %v988 = vlaneseq
    %v989 = vshrl.u32 %v988, 7
    %v990 = vsub.s32 0, %v989
    %v991 = vrot.slane %v987, %v990
    %v993 = vsel %vm67, %v981, 0
    %995 = vmatprep.subr.mxu0 0.0
    %996 = vmatpush1.msra.mxu0 %v983
    %997 = vmatprep.subr.mxu0 0.0
    %998 = vmatpush1.msra.mxu0 %v984
    %999 = vmatprep.subr.mxu0 0.0
    %1000 = vmatpush1.msra.mxu0 %v985
    %1001 = vmatprep.subr.mxu0 0.0
    %1002 = vmatpush1.msra.mxu0 %v986
    %1003 = vmatprep.subr.mxu0 0.0
    %1004 = vmatpush1.msra.mxu0 0.0
    %1005 = vmatprep.subr.mxu0 0.0
    %1006 = vmatpush1.msra.mxu0 0.0
    %1007 = vmatprep.subr.mxu0 0.0
    %1008 = vmatpush1.msra.mxu0 0.0
    %1009 = vmatprep.subr.mxu0 0.0
    %1010 = vmatpush1.msra.mxu0 0.0
    %1011 = vmatprep.subr.mxu0 0.0
    %1012 = vmatpush1.msra.mxu0 0.0
    %1013 = vmatprep.subr.mxu0 0.0
    %1014 = vmatpush1.msra.mxu0 0.0
    %1015 = vmatprep.subr.mxu0 0.0
    %1016 = vmatpush1.msra.mxu0 0.0
    %1017 = vmatprep.subr.mxu0 0.0
    %1018 = vmatpush1.msra.mxu0 0.0
    %1019 = vmatprep.subr.mxu0 0.0
    %1020 = vmatpush1.msra.mxu0 0.0
    %1021 = vmatprep.subr.mxu0 0.0
    %1022 = vmatpush1.msra.mxu0 0.0
    %1023 = vmatprep.subr.mxu0 0.0
    %1024 = vmatpush1.msra.mxu0 0.0
    %1025 = vmatprep.subr.mxu0 0.0
    %1026 = vmatpush1.msra.mxu0 0.0
    %1027 = vmatprep.subr.mxu0 0.0
    %1028 = vmatpush1.msra.mxu0 0.0
    %1029 = vmatprep.subr.mxu0 0.0
    %1030 = vmatpush1.msra.mxu0 0.0
    %1031 = vmatprep.subr.mxu0 0.0
    %1032 = vmatpush1.msra.mxu0 0.0
    %1033 = vmatprep.subr.mxu0 0.0
    %1034 = vmatpush1.msra.mxu0 0.0
    %1035 = vmatprep.subr.mxu0 0.0
    %1036 = vmatpush1.msra.mxu0 0.0
    %1037 = vmatprep.subr.mxu0 0.0
    %1038 = vmatpush1.msra.mxu0 0.0
    %1039 = vmatprep.subr.mxu0 0.0
    %1040 = vmatpush1.msra.mxu0 0.0
    %1041 = vmatprep.subr.mxu0 0.0
    %1042 = vmatpush1.msra.mxu0 0.0
    %1043 = vmatprep.subr.mxu0 0.0
    %1044 = vmatpush1.msra.mxu0 0.0
    %1045 = vmatprep.subr.mxu0 0.0
    %1046 = vmatpush1.msra.mxu0 0.0
    %1047 = vmatprep.subr.mxu0 0.0
    %1048 = vmatpush1.msra.mxu0 0.0
    %1049 = vmatprep.subr.mxu0 0.0
    %1050 = vmatpush1.msra.mxu0 0.0
    %1051 = vmatprep.subr.mxu0 0.0
    %1052 = vmatpush1.msra.mxu0 0.0
    %1053 = vmatprep.subr.mxu0 0.0
    %1054 = vmatpush1.msra.mxu0 0.0
    %1055 = vmatprep.subr.mxu0 0.0
    %1056 = vmatpush1.msra.mxu0 0.0
    %1057 = vmatprep.subr.mxu0 0.0
    %1058 = vmatpush1.msra.mxu0 0.0
    %1059 = vmatprep.mubr.f32.mxu0 0.0
    %1060 = vmatmul.mubr.f32.gmra.mrb[0].mxu0 %v993
    %v1061 = vpop.f32.mrb[0].mxu0
    %v1062 = vadd.f32 %v991, %v1061
    %v1063 = vpop.f32.mrb[0].mxu0
    %1064 = vdwg.mxu0
    %v1065 = vadd.f32 %v55, %v1062
    %v1066 = vld [vmem:[%s4] sm:$0x1]
    %v1067 = vld [vmem:[%s5] sm:$0x1]
    %v1068 = vsel %vm67, %v1065, 0.0
    %1069 = vadd.xlane.f32.xlu0 %v1068
    %v1070 = vpop.xlane.xlu0 %1069
    %v1071 = vrcp.pop 32.0
    %v1072 = vmul.f32 %v1070, %v1071
    %v1073 = vsub.f32 %v1065, %v1072
    %v1074 = vmul.f32 %v1073, %v1073
    %v1075 = vsel %vm67, %v1074, 0.0
    %1076 = vadd.xlane.f32.xlu0 %v1075
    %v1077 = vpop.xlane.xlu0 %1076
    %v1078 = vmul.f32 %v1077, %v1071
    %v1079 = vadd.f32 %v1078, 1e-05
    %v1080 = vrsqrt.pop %v1079
    %v1081 = vmul.f32 %v1073, %v1080
    %v1082 = vlaneseq
    %v1083 = vshrl.u32 %v1082, 7
    %v1084 = vsub.s32 0, %v1083
    %v1085 = vrot.slane %v1066, %v1084
    %v1086 = vmul.f32 %v1081, %v1085
    %v1087 = vlaneseq
    %v1088 = vshrl.u32 %v1087, 7
    %v1089 = vsub.s32 0, %v1088
    %v1090 = vrot.slane %v1067, %v1089
    %v1091 = vadd.f32 %v1086, %v1090
    %s1092 = scalar_lea.vmem [#allocation2], 128
    %v1093 = vld [vmem:[%s1092] sm:$0xff]
    %v1094 = vld [vmem:[%s1092 + $0x8] sm:$0xff]
    %v1095 = vld [vmem:[%s1092 + $0x10] sm:$0xff]
    %v1096 = vld [vmem:[%s1092 + $0x18] sm:$0xff]
    %v1097 = vld [vmem:[%s3 + $0x4] sm:$0x1]
    %v1098 = vlaneseq
    %v1099 = vshrl.u32 %v1098, 7
    %v1100 = vsub.s32 0, %v1099
    %v1101 = vrot.slane %v1097, %v1100
    %v1103 = vsel %vm67, %v1091, 0
    %1105 = vmatprep.subr.mxu0 0.0
    %1106 = vmatpush1.msra.mxu0 %v1093
    %1107 = vmatprep.subr.mxu0 0.0
    %1108 = vmatpush1.msra.mxu0 %v1094
    %1109 = vmatprep.subr.mxu0 0.0
    %1110 = vmatpush1.msra.mxu0 %v1095
    %1111 = vmatprep.subr.mxu0 0.0
    %1112 = vmatpush1.msra.mxu0 %v1096
    %1113 = vmatprep.subr.mxu0 0.0
    %1114 = vmatpush1.msra.mxu0 0.0
    %1115 = vmatprep.subr.mxu0 0.0
    %1116 = vmatpush1.msra.mxu0 0.0
    %1117 = vmatprep.subr.mxu0 0.0
    %1118 = vmatpush1.msra.mxu0 0.0
    %1119 = vmatprep.subr.mxu0 0.0
    %1120 = vmatpush1.msra.mxu0 0.0
    %1121 = vmatprep.subr.mxu0 0.0
    %1122 = vmatpush1.msra.mxu0 0.0
    %1123 = vmatprep.subr.mxu0 0.0
    %1124 = vmatpush1.msra.mxu0 0.0
    %1125 = vmatprep.subr.mxu0 0.0
    %1126 = vmatpush1.msra.mxu0 0.0
    %1127 = vmatprep.subr.mxu0 0.0
    %1128 = vmatpush1.msra.mxu0 0.0
    %1129 = vmatprep.subr.mxu0 0.0
    %1130 = vmatpush1.msra.mxu0 0.0
    %1131 = vmatprep.subr.mxu0 0.0
    %1132 = vmatpush1.msra.mxu0 0.0
    %1133 = vmatprep.subr.mxu0 0.0
    %1134 = vmatpush1.msra.mxu0 0.0
    %1135 = vmatprep.subr.mxu0 0.0
    %1136 = vmatpush1.msra.mxu0 0.0
    %1137 = vmatprep.subr.mxu0 0.0
    %1138 = vmatpush1.msra.mxu0 0.0
    %1139 = vmatprep.subr.mxu0 0.0
    %1140 = vmatpush1.msra.mxu0 0.0
    %1141 = vmatprep.subr.mxu0 0.0
    %1142 = vmatpush1.msra.mxu0 0.0
    %1143 = vmatprep.subr.mxu0 0.0
    %1144 = vmatpush1.msra.mxu0 0.0
    %1145 = vmatprep.subr.mxu0 0.0
    %1146 = vmatpush1.msra.mxu0 0.0
    %1147 = vmatprep.subr.mxu0 0.0
    %1148 = vmatpush1.msra.mxu0 0.0
    %1149 = vmatprep.subr.mxu0 0.0
    %1150 = vmatpush1.msra.mxu0 0.0
    %1151 = vmatprep.subr.mxu0 0.0
    %1152 = vmatpush1.msra.mxu0 0.0
    %1153 = vmatprep.subr.mxu0 0.0
    %1154 = vmatpush1.msra.mxu0 0.0
    %1155 = vmatprep.subr.mxu0 0.0
    %1156 = vmatpush1.msra.mxu0 0.0
    %1157 = vmatprep.subr.mxu0 0.0
    %1158 = vmatpush1.msra.mxu0 0.0
    %1159 = vmatprep.subr.mxu0 0.0
    %1160 = vmatpush1.msra.mxu0 0.0
    %1161 = vmatprep.subr.mxu0 0.0
    %1162 = vmatpush1.msra.mxu0 0.0
    %1163 = vmatprep.subr.mxu0 0.0
    %1164 = vmatpush1.msra.mxu0 0.0
    %1165 = vmatprep.subr.mxu0 0.0
    %1166 = vmatpush1.msra.mxu0 0.0
    %1167 = vmatprep.subr.mxu0 0.0
    %1168 = vmatpush1.msra.mxu0 0.0
    %1169 = vmatprep.mubr.f32.mxu0 0.0
    %1170 = vmatmul.mubr.f32.gmra.mrb[0].mxu0 %v1103
    %v1171 = vpop.f32.mrb[0].mxu0
    %v1172 = vadd.f32 %v1101, %v1171
    %v1173 = vpop.f32.mrb[0].mxu0
    %1174 = vdwg.mxu0
    %v1175 = vmul.f32 %v1172, 0.35355338
    %s1176 = scalar_lea.vmem [#allocation2], 160
    %v1177 = vld [vmem:[%s1176] sm:$0xff]
    %v1178 = vld [vmem:[%s1176 + $0x8] sm:$0xff]
    %v1179 = vld [vmem:[%s1176 + $0x10] sm:$0xff]
    %v1180 = vld [vmem:[%s1176 + $0x18] sm:$0xff]
    %v1181 = vld [vmem:[%s3 + $0x5] sm:$0x1]
    %v1182 = vlaneseq
    %v1183 = vshrl.u32 %v1182, 7
    %v1184 = vsub.s32 0, %v1183
    %v1185 = vrot.slane %v1181, %v1184
    %v1187 = vsel %vm67, %v56, 0
    %v1190 = vsel %vm67, %v57, 0
    %1192 = vmatprep.subr.mxu0 0.0
    %1193 = vmatpush1.msra.mxu0 %v1177
    %1194 = vmatprep.subr.mxu0 0.0
    %1195 = vmatpush1.msra.mxu0 %v1178
    %1196 = vmatprep.subr.mxu0 0.0
    %1197 = vmatpush1.msra.mxu0 %v1179
    %1198 = vmatprep.subr.mxu0 0.0
    %1199 = vmatpush1.msra.mxu0 %v1180
    %1200 = vmatprep.subr.mxu0 0.0
    %1201 = vmatpush1.msra.mxu0 0.0
    %1202 = vmatprep.subr.mxu0 0.0
    %1203 = vmatpush1.msra.mxu0 0.0
    %1204 = vmatprep.subr.mxu0 0.0
    %1205 = vmatpush1.msra.mxu0 0.0
    %1206 = vmatprep.subr.mxu0 0.0
    %1207 = vmatpush1.msra.mxu0 0.0
    %1208 = vmatprep.subr.mxu0 0.0
    %1209 = vmatpush1.msra.mxu0 0.0
    %1210 = vmatprep.subr.mxu0 0.0
    %1211 = vmatpush1.msra.mxu0 0.0
    %1212 = vmatprep.subr.mxu0 0.0
    %1213 = vmatpush1.msra.mxu0 0.0
    %1214 = vmatprep.subr.mxu0 0.0
    %1215 = vmatpush1.msra.mxu0 0.0
    %1216 = vmatprep.subr.mxu0 0.0
    %1217 = vmatpush1.msra.mxu0 0.0
    %1218 = vmatprep.subr.mxu0 0.0
    %1219 = vmatpush1.msra.mxu0 0.0
    %1220 = vmatprep.subr.mxu0 0.0
    %1221 = vmatpush1.msra.mxu0 0.0
    %1222 = vmatprep.subr.mxu0 0.0
    %1223 = vmatpush1.msra.mxu0 0.0
    %1224 = vmatprep.subr.mxu0 0.0
    %1225 = vmatpush1.msra.mxu0 0.0
    %1226 = vmatprep.subr.mxu0 0.0
    %1227 = vmatpush1.msra.mxu0 0.0
    %1228 = vmatprep.subr.mxu0 0.0
    %1229 = vmatpush1.msra.mxu0 0.0
    %1230 = vmatprep.subr.mxu0 0.0
    %1231 = vmatpush1.msra.mxu0 0.0
    %1232 = vmatprep.subr.mxu0 0.0
    %1233 = vmatpush1.msra.mxu0 0.0
    %1234 = vmatprep.subr.mxu0 0.0
    %1235 = vmatpush1.msra.mxu0 0.0
    %1236 = vmatprep.subr.mxu0 0.0
    %1237 = vmatpush1.msra.mxu0 0.0
    %1238 = vmatprep.subr.mxu0 0.0
    %1239 = vmatpush1.msra.mxu0 0.0
    %1240 = vmatprep.subr.mxu0 0.0
    %1241 = vmatpush1.msra.mxu0 0.0
    %1242 = vmatprep.subr.mxu0 0.0
    %1243 = vmatpush1.msra.mxu0 0.0
    %1244 = vmatprep.subr.mxu0 0.0
    %1245 = vmatpush1.msra.mxu0 0.0
    %1246 = vmatprep.subr.mxu0 0.0
    %1247 = vmatpush1.msra.mxu0 0.0
    %1248 = vmatprep.subr.mxu0 0.0
    %1249 = vmatpush1.msra.mxu0 0.0
    %1250 = vmatprep.subr.mxu0 0.0
    %1251 = vmatpush1.msra.mxu0 0.0
    %1252 = vmatprep.subr.mxu0 0.0
    %1253 = vmatpush1.msra.mxu0 0.0
    %1254 = vmatprep.subr.mxu0 0.0
    %1255 = vmatpush1.msra.mxu0 0.0
    %1256 = vmatprep.mubr.f32.mxu0 0.0
    %1257 = vmatmul.mubr.f32.gmra.mrb[0].mxu0 %v1187
    %v1258 = vpop.f32.mrb[0].mxu0
    %v1259 = vadd.f32 %v1185, %v1258
    %v1260 = vpop.f32.mrb[0].mxu0
    %1261 = vmatprep.mubr.f32.mxu0 0.0
    %1262 = vmatmul.mubr.f32.gmra.mrb[0].mxu0 %v1190
    %v1263 = vpop.f32.mrb[0].mxu0
    %v1264 = vadd.f32 %v1185, %v1263
    %v1265 = vpop.f32.mrb[0].mxu0
    %1266 = vdwg.mxu0
    %s1267 = scalar_lea.vmem [#allocation2], 192
    %v1268 = vld [vmem:[%s1267] sm:$0xff]
    %v1269 = vld [vmem:[%s1267 + $0x8] sm:$0xff]
    %v1270 = vld [vmem:[%s1267 + $0x10] sm:$0xff]
    %v1271 = vld [vmem:[%s1267 + $0x18] sm:$0xff]
    %v1272 = vld [vmem:[%s3 + $0x6] sm:$0x1]
    %v1273 = vlaneseq
    %v1274 = vshrl.u32 %v1273, 7
    %v1275 = vsub.s32 0, %v1274
    %v1276 = vrot.slane %v1272, %v1275
    %1277 = vmatprep.subr.mxu0 0.0
    %1278 = vmatpush1.msra.mxu0 %v1268
    %1279 = vmatprep.subr.mxu0 0.0
    %1280 = vmatpush1.msra.mxu0 %v1269
    %1281 = vmatprep.subr.mxu0 0.0
    %1282 = vmatpush1.msra.mxu0 %v1270
    %1283 = vmatprep.subr.mxu0 0.0
    %1284 = vmatpush1.msra.mxu0 %v1271
    %1285 = vmatprep.subr.mxu0 0.0
    %1286 = vmatpush1.msra.mxu0 0.0
    %1287 = vmatprep.subr.mxu0 0.0
    %1288 = vmatpush1.msra.mxu0 0.0
    %1289 = vmatprep.subr.mxu0 0.0
    %1290 = vmatpush1.msra.mxu0 0.0
    %1291 = vmatprep.subr.mxu0 0.0
    %1292 = vmatpush1.msra.mxu0 0.0
    %1293 = vmatprep.subr.mxu0 0.0
    %1294 = vmatpush1.msra.mxu0 0.0
    %1295 = vmatprep.subr.mxu0 0.0
    %1296 = vmatpush1.msra.mxu0 0.0
    %1297 = vmatprep.subr.mxu0 0.0
    %1298 = vmatpush1.msra.mxu0 0.0
    %1299 = vmatprep.subr.mxu0 0.0
    %1300 = vmatpush1.msra.mxu0 0.0
    %1301 = vmatprep.subr.mxu0 0.0
    %1302 = vmatpush1.msra.mxu0 0.0
    %1303 = vmatprep.subr.mxu0 0.0
    %1304 = vmatpush1.msra.mxu0 0.0
    %1305 = vmatprep.subr.mxu0 0.0
    %1306 = vmatpush1.msra.mxu0 0.0
    %1307 = vmatprep.subr.mxu0 0.0
    %1308 = vmatpush1.msra.mxu0 0.0
    %1309 = vmatprep.subr.mxu0 0.0
    %1310 = vmatpush1.msra.mxu0 0.0
    %1311 = vmatprep.subr.mxu0 0.0
    %1312 = vmatpush1.msra.mxu0 0.0
    %1313 = vmatprep.subr.mxu0 0.0
    %1314 = vmatpush1.msra.mxu0 0.0
    %1315 = vmatprep.subr.mxu0 0.0
    %1316 = vmatpush1.msra.mxu0 0.0
    %1317 = vmatprep.subr.mxu0 0.0
    %1318 = vmatpush1.msra.mxu0 0.0
    %1319 = vmatprep.subr.mxu0 0.0
    %1320 = vmatpush1.msra.mxu0 0.0
    %1321 = vmatprep.subr.mxu0 0.0
    %1322 = vmatpush1.msra.mxu0 0.0
    %1323 = vmatprep.subr.mxu0 0.0
    %1324 = vmatpush1.msra.mxu0 0.0
    %1325 = vmatprep.subr.mxu0 0.0
    %1326 = vmatpush1.msra.mxu0 0.0
    %1327 = vmatprep.subr.mxu0 0.0
    %1328 = vmatpush1.msra.mxu0 0.0
    %1329 = vmatprep.subr.mxu0 0.0
    %1330 = vmatpush1.msra.mxu0 0.0
    %1331 = vmatprep.subr.mxu0 0.0
    %1332 = vmatpush1.msra.mxu0 0.0
    %1333 = vmatprep.subr.mxu0 0.0
    %1334 = vmatpush1.msra.mxu0 0.0
    %1335 = vmatprep.subr.mxu0 0.0
    %1336 = vmatpush1.msra.mxu0 0.0
    %1337 = vmatprep.subr.mxu0 0.0
    %1338 = vmatpush1.msra.mxu0 0.0
    %1339 = vmatprep.subr.mxu0 0.0
    %1340 = vmatpush1.msra.mxu0 0.0
    %1341 = vmatprep.mubr.f32.mxu0 0.0
    %1342 = vmatmul.mubr.f32.gmra.mrb[0].mxu0 %v1187
    %v1343 = vpop.f32.mrb[0].mxu0
    %v1344 = vadd.f32 %v1276, %v1343
    %v1345 = vpop.f32.mrb[0].mxu0
    %1346 = vmatprep.mubr.f32.mxu0 0.0
    %1347 = vmatmul.mubr.f32.gmra.mrb[0].mxu0 %v1190
    %v1348 = vpop.f32.mrb[0].mxu0
    %v1349 = vadd.f32 %v1276, %v1348
    %v1350 = vpop.f32.mrb[0].mxu0
    %1351 = vdwg.mxu0
    %1353 = vrot.lane.b32.xlu0 %v1175, 120
    %v1354 = vpop.permute.xlu0 %1353
    %1355 = vrot.lane.b32.xlu0 %v1175, 112
    %v1356 = vpop.permute.xlu0 %1355
    %1357 = vrot.lane.b32.xlu0 %v1175, 104
    %v1358 = vpop.permute.xlu0 %1357
    %1361 = vrot.lane.b32.xlu0 %v1259, 120
    %v1362 = vpop.permute.xlu0 %1361
    %1363 = vrot.lane.b32.xlu0 %v1264, 120
    %v1364 = vpop.permute.xlu0 %1363
    %1365 = vrot.lane.b32.xlu0 %v1259, 112
    %v1366 = vpop.permute.xlu0 %1365
    %1367 = vrot.lane.b32.xlu0 %v1264, 112
    %v1368 = vpop.permute.xlu0 %1367
    %1369 = vrot.lane.b32.xlu0 %v1259, 104
    %v1370 = vpop.permute.xlu0 %1369
    %1371 = vrot.lane.b32.xlu0 %v1264, 104
    %v1372 = vpop.permute.xlu0 %1371
    %1375 = vrot.lane.b32.xlu0 %v1344, 120
    %v1376 = vpop.permute.xlu0 %1375
    %1377 = vrot.lane.b32.xlu0 %v1349, 120
    %v1378 = vpop.permute.xlu0 %1377
    %1380 = vrot.lane.b32.xlu0 %v1344, 112
    %v1381 = vpop.permute.xlu0 %1380
    %1382 = vrot.lane.b32.xlu0 %v1349, 112
    %v1383 = vpop.permute.xlu0 %1382
    %1385 = vrot.lane.b32.xlu0 %v1344, 104
    %v1386 = vpop.permute.xlu0 %1385
    %1387 = vrot.lane.b32.xlu0 %v1349, 104
    %v1388 = vpop.permute.xlu0 %1387
    %v1390 = vsel %vm326, %v1175, 0
    %v1392 = vsel %vm326, %v1259, 0
    %v1394 = vsel %vm326, %v1264, 0
    %1396 = vmatprep.subr.mxu0 0.0
    %1397 = vmatpush1.xpose.msra.mxu0 %v1392
    %1398 = vmatprep.subr.mxu0 0.0
    %1399 = vmatpush1.xpose.msra.mxu0 %v1394
    %1400 = vmatprep.subr.mxu0 0.0
    %1401 = vmatpush1.xpose.msra.mxu0 0.0
    %1402 = vmatprep.subr.mxu0 0.0
    %1403 = vmatpush1.xpose.msra.mxu0 0.0
    %1404 = vmatprep.subr.mxu0 0.0
    %1405 = vmatpush1.xpose.msra.mxu0 0.0
    %1406 = vmatprep.subr.mxu0 0.0
    %1407 = vmatpush1.xpose.msra.mxu0 0.0
    %1408 = vmatprep.subr.mxu0 0.0
    %1409 = vmatpush1.xpose.msra.mxu0 0.0
    %1410 = vmatprep.subr.mxu0 0.0
    %1411 = vmatpush1.xpose.msra.mxu0 0.0
    %1412 = vmatprep.subr.mxu0 0.0
    %1413 = vmatpush1.xpose.msra.mxu0 0.0
    %1414 = vmatprep.subr.mxu0 0.0
    %1415 = vmatpush1.xpose.msra.mxu0 0.0
    %1416 = vmatprep.subr.mxu0 0.0
    %1417 = vmatpush1.xpose.msra.mxu0 0.0
    %1418 = vmatprep.subr.mxu0 0.0
    %1419 = vmatpush1.xpose.msra.mxu0 0.0
    %1420 = vmatprep.subr.mxu0 0.0
    %1421 = vmatpush1.xpose.msra.mxu0 0.0
    %1422 = vmatprep.subr.mxu0 0.0
    %1423 = vmatpush1.xpose.msra.mxu0 0.0
    %1424 = vmatprep.subr.mxu0 0.0
    %1425 = vmatpush1.xpose.msra.mxu0 0.0
    %1426 = vmatprep.subr.mxu0 0.0
    %1427 = vmatpush1.xpose.msra.mxu0 0.0
    %1428 = vmatprep.subr.mxu0 0.0
    %1429 = vmatpush1.xpose.msra.mxu0 0.0
    %1430 = vmatprep.subr.mxu0 0.0
    %1431 = vmatpush1.xpose.msra.mxu0 0.0
    %1432 = vmatprep.subr.mxu0 0.0
    %1433 = vmatpush1.xpose.msra.mxu0 0.0
    %1434 = vmatprep.subr.mxu0 0.0
    %1435 = vmatpush1.xpose.msra.mxu0 0.0
    %1436 = vmatprep.subr.mxu0 0.0
    %1437 = vmatpush1.xpose.msra.mxu0 0.0
    %1438 = vmatprep.subr.mxu0 0.0
    %1439 = vmatpush1.xpose.msra.mxu0 0.0
    %1440 = vmatprep.subr.mxu0 0.0
    %1441 = vmatpush1.xpose.msra.mxu0 0.0
    %1442 = vmatprep.subr.mxu0 0.0
    %1443 = vmatpush1.xpose.msra.mxu0 0.0
    %1444 = vmatprep.subr.mxu0 0.0
    %1445 = vmatpush1.xpose.msra.mxu0 0.0
    %1446 = vmatprep.subr.mxu0 0.0
    %1447 = vmatpush1.xpose.msra.mxu0 0.0
    %1448 = vmatprep.subr.mxu0 0.0
    %1449 = vmatpush1.xpose.msra.mxu0 0.0
    %1450 = vmatprep.subr.mxu0 0.0
    %1451 = vmatpush1.xpose.msra.mxu0 0.0
    %1452 = vmatprep.subr.mxu0 0.0
    %1453 = vmatpush1.xpose.msra.mxu0 0.0
    %1454 = vmatprep.subr.mxu0 0.0
    %1455 = vmatpush1.xpose.msra.mxu0 0.0
    %1456 = vmatprep.subr.mxu0 0.0
    %1457 = vmatpush1.xpose.msra.mxu0 0.0
    %1458 = vmatprep.subr.mxu0 0.0
    %1459 = vmatpush1.xpose.msra.mxu0 0.0
    %1460 = vmatprep.mubr.f32.mxu0 0.0
    %1461 = vmatmul.mubr.f32.gmra.mrb[0].mxu0 %v1390
    %v1462 = vpop.f32.mrb[0].mxu0
    %v1463 = vadd.f32 0.0, %v1462
    %v1464 = vpop.f32.mrb[0].mxu0
    %1465 = vdwg.mxu0
    %v1466 = vsel %vm326, %v1354, 0
    %v1468 = vsel %vm326, %v1362, 0
    %v1470 = vsel %vm326, %v1364, 0
    %1472 = vmatprep.subr.mxu0 0.0
    %1473 = vmatpush1.xpose.msra.mxu0 %v1468
    %1474 = vmatprep.subr.mxu0 0.0
    %1475 = vmatpush1.xpose.msra.mxu0 %v1470
    %1476 = vmatprep.subr.mxu0 0.0
    %1477 = vmatpush1.xpose.msra.mxu0 0.0
    %1478 = vmatprep.subr.mxu0 0.0
    %1479 = vmatpush1.xpose.msra.mxu0 0.0
    %1480 = vmatprep.subr.mxu0 0.0
    %1481 = vmatpush1.xpose.msra.mxu0 0.0
    %1482 = vmatprep.subr.mxu0 0.0
    %1483 = vmatpush1.xpose.msra.mxu0 0.0
    %1484 = vmatprep.subr.mxu0 0.0
    %1485 = vmatpush1.xpose.msra.mxu0 0.0
    %1486 = vmatprep.subr.mxu0 0.0
    %1487 = vmatpush1.xpose.msra.mxu0 0.0
    %1488 = vmatprep.subr.mxu0 0.0
    %1489 = vmatpush1.xpose.msra.mxu0 0.0
    %1490 = vmatprep.subr.mxu0 0.0
    %1491 = vmatpush1.xpose.msra.mxu0 0.0
    %1492 = vmatprep.subr.mxu0 0.0
    %1493 = vmatpush1.xpose.msra.mxu0 0.0
    %1494 = vmatprep.subr.mxu0 0.0
    %1495 = vmatpush1.xpose.msra.mxu0 0.0
    %1496 = vmatprep.subr.mxu0 0.0
    %1497 = vmatpush1.xpose.msra.mxu0 0.0
    %1498 = vmatprep.subr.mxu0 0.0
    %1499 = vmatpush1.xpose.msra.mxu0 0.0
    %1500 = vmatprep.subr.mxu0 0.0
    %1501 = vmatpush1.xpose.msra.mxu0 0.0
    %1502 = vmatprep.subr.mxu0 0.0
    %1503 = vmatpush1.xpose.msra.mxu0 0.0
    %1504 = vmatprep.subr.mxu0 0.0
    %1505 = vmatpush1.xpose.msra.mxu0 0.0
    %1506 = vmatprep.subr.mxu0 0.0
    %1507 = vmatpush1.xpose.msra.mxu0 0.0
    %1508 = vmatprep.subr.mxu0 0.0
    %1509 = vmatpush1.xpose.msra.mxu0 0.0
    %1510 = vmatprep.subr.mxu0 0.0
    %1511 = vmatpush1.xpose.msra.mxu0 0.0
    %1512 = vmatprep.subr.mxu0 0.0
    %1513 = vmatpush1.xpose.msra.mxu0 0.0
    %1514 = vmatprep.subr.mxu0 0.0
    %1515 = vmatpush1.xpose.msra.mxu0 0.0
    %1516 = vmatprep.subr.mxu0 0.0
    %1517 = vmatpush1.xpose.msra.mxu0 0.0
    %1518 = vmatprep.subr.mxu0 0.0
    %1519 = vmatpush1.xpose.msra.mxu0 0.0
    %1520 = vmatprep.subr.mxu0 0.0
    %1521 = vmatpush1.xpose.msra.mxu0 0.0
    %1522 = vmatprep.subr.mxu0 0.0
    %1523 = vmatpush1.xpose.msra.mxu0 0.0
    %1524 = vmatprep.subr.mxu0 0.0
    %1525 = vmatpush1.xpose.msra.mxu0 0.0
    %1526 = vmatprep.subr.mxu0 0.0
    %1527 = vmatpush1.xpose.msra.mxu0 0.0
    %1528 = vmatprep.subr.mxu0 0.0
    %1529 = vmatpush1.xpose.msra.mxu0 0.0
    %1530 = vmatprep.subr.mxu0 0.0
    %1531 = vmatpush1.xpose.msra.mxu0 0.0
    %1532 = vmatprep.subr.mxu0 0.0
    %1533 = vmatpush1.xpose.msra.mxu0 0.0
    %1534 = vmatprep.subr.mxu0 0.0
    %1535 = vmatpush1.xpose.msra.mxu0 0.0
    %1536 = vmatprep.mubr.f32.mxu0 0.0
    %1537 = vmatmul.mubr.f32.gmra.mrb[0].mxu0 %v1466
    %v1538 = vpop.f32.mrb[0].mxu0
    %v1539 = vadd.f32 0.0, %v1538
    %v1540 = vpop.f32.mrb[0].mxu0
    %1541 = vdwg.mxu0
    %v1542 = vsel %vm326, %v1356, 0
    %v1544 = vsel %vm326, %v1366, 0
    %v1546 = vsel %vm326, %v1368, 0
    %1548 = vmatprep.subr.mxu0 0.0
    %1549 = vmatpush1.xpose.msra.mxu0 %v1544
    %1550 = vmatprep.subr.mxu0 0.0
    %1551 = vmatpush1.xpose.msra.mxu0 %v1546
    %1552 = vmatprep.subr.mxu0 0.0
    %1553 = vmatpush1.xpose.msra.mxu0 0.0
    %1554 = vmatprep.subr.mxu0 0.0
    %1555 = vmatpush1.xpose.msra.mxu0 0.0
    %1556 = vmatprep.subr.mxu0 0.0
    %1557 = vmatpush1.xpose.msra.mxu0 0.0
    %1558 = vmatprep.subr.mxu0 0.0
    %1559 = vmatpush1.xpose.msra.mxu0 0.0
    %1560 = vmatprep.subr.mxu0 0.0
    %1561 = vmatpush1.xpose.msra.mxu0 0.0
    %1562 = vmatprep.subr.mxu0 0.0
    %1563 = vmatpush1.xpose.msra.mxu0 0.0
    %1564 = vmatprep.subr.mxu0 0.0
    %1565 = vmatpush1.xpose.msra.mxu0 0.0
    %1566 = vmatprep.subr.mxu0 0.0
    %1567 = vmatpush1.xpose.msra.mxu0 0.0
    %1568 = vmatprep.subr.mxu0 0.0
    %1569 = vmatpush1.xpose.msra.mxu0 0.0
    %1570 = vmatprep.subr.mxu0 0.0
    %1571 = vmatpush1.xpose.msra.mxu0 0.0
    %1572 = vmatprep.subr.mxu0 0.0
    %1573 = vmatpush1.xpose.msra.mxu0 0.0
    %1574 = vmatprep.subr.mxu0 0.0
    %1575 = vmatpush1.xpose.msra.mxu0 0.0
    %1576 = vmatprep.subr.mxu0 0.0
    %1577 = vmatpush1.xpose.msra.mxu0 0.0
    %1578 = vmatprep.subr.mxu0 0.0
    %1579 = vmatpush1.xpose.msra.mxu0 0.0
    %1580 = vmatprep.subr.mxu0 0.0
    %1581 = vmatpush1.xpose.msra.mxu0 0.0
    %1582 = vmatprep.subr.mxu0 0.0
    %1583 = vmatpush1.xpose.msra.mxu0 0.0
    %1584 = vmatprep.subr.mxu0 0.0
    %1585 = vmatpush1.xpose.msra.mxu0 0.0
    %1586 = vmatprep.subr.mxu0 0.0
    %1587 = vmatpush1.xpose.msra.mxu0 0.0
    %1588 = vmatprep.subr.mxu0 0.0
    %1589 = vmatpush1.xpose.msra.mxu0 0.0
    %1590 = vmatprep.subr.mxu0 0.0
    %1591 = vmatpush1.xpose.msra.mxu0 0.0
    %1592 = vmatprep.subr.mxu0 0.0
    %1593 = vmatpush1.xpose.msra.mxu0 0.0
    %1594 = vmatprep.subr.mxu0 0.0
    %1595 = vmatpush1.xpose.msra.mxu0 0.0
    %1596 = vmatprep.subr.mxu0 0.0
    %1597 = vmatpush1.xpose.msra.mxu0 0.0
    %1598 = vmatprep.subr.mxu0 0.0
    %1599 = vmatpush1.xpose.msra.mxu0 0.0
    %1600 = vmatprep.subr.mxu0 0.0
    %1601 = vmatpush1.xpose.msra.mxu0 0.0
    %1602 = vmatprep.subr.mxu0 0.0
    %1603 = vmatpush1.xpose.msra.mxu0 0.0
    %1604 = vmatprep.subr.mxu0 0.0
    %1605 = vmatpush1.xpose.msra.mxu0 0.0
    %1606 = vmatprep.subr.mxu0 0.0
    %1607 = vmatpush1.xpose.msra.mxu0 0.0
    %1608 = vmatprep.subr.mxu0 0.0
    %1609 = vmatpush1.xpose.msra.mxu0 0.0
    %1610 = vmatprep.subr.mxu0 0.0
    %1611 = vmatpush1.xpose.msra.mxu0 0.0
    %1612 = vmatprep.mubr.f32.mxu0 0.0
    %1613 = vmatmul.mubr.f32.gmra.mrb[0].mxu0 %v1542
    %v1614 = vpop.f32.mrb[0].mxu0
    %v1615 = vadd.f32 0.0, %v1614
    %v1616 = vpop.f32.mrb[0].mxu0
    %1617 = vdwg.mxu0
    %v1618 = vsel %vm326, %v1358, 0
    %v1620 = vsel %vm326, %v1370, 0
    %v1622 = vsel %vm326, %v1372, 0
    %1624 = vmatprep.subr.mxu0 0.0
    %1625 = vmatpush1.xpose.msra.mxu0 %v1620
    %1626 = vmatprep.subr.mxu0 0.0
    %1627 = vmatpush1.xpose.msra.mxu0 %v1622
    %1628 = vmatprep.subr.mxu0 0.0
    %1629 = vmatpush1.xpose.msra.mxu0 0.0
    %1630 = vmatprep.subr.mxu0 0.0
    %1631 = vmatpush1.xpose.msra.mxu0 0.0
    %1632 = vmatprep.subr.mxu0 0.0
    %1633 = vmatpush1.xpose.msra.mxu0 0.0
    %1634 = vmatprep.subr.mxu0 0.0
    %1635 = vmatpush1.xpose.msra.mxu0 0.0
    %1636 = vmatprep.subr.mxu0 0.0
    %1637 = vmatpush1.xpose.msra.mxu0 0.0
    %1638 = vmatprep.subr.mxu0 0.0
    %1639 = vmatpush1.xpose.msra.mxu0 0.0
    %1640 = vmatprep.subr.mxu0 0.0
    %1641 = vmatpush1.xpose.msra.mxu0 0.0
    %1642 = vmatprep.subr.mxu0 0.0
    %1643 = vmatpush1.xpose.msra.mxu0 0.0
    %1644 = vmatprep.subr.mxu0 0.0
    %1645 = vmatpush1.xpose.msra.mxu0 0.0
    %1646 = vmatprep.subr.mxu0 0.0
    %1647 = vmatpush1.xpose.msra.mxu0 0.0
    %1648 = vmatprep.subr.mxu0 0.0
    %1649 = vmatpush1.xpose.msra.mxu0 0.0
    %1650 = vmatprep.subr.mxu0 0.0
    %1651 = vmatpush1.xpose.msra.mxu0 0.0
    %1652 = vmatprep.subr.mxu0 0.0
    %1653 = vmatpush1.xpose.msra.mxu0 0.0
    %1654 = vmatprep.subr.mxu0 0.0
    %1655 = vmatpush1.xpose.msra.mxu0 0.0
    %1656 = vmatprep.subr.mxu0 0.0
    %1657 = vmatpush1.xpose.msra.mxu0 0.0
    %1658 = vmatprep.subr.mxu0 0.0
    %1659 = vmatpush1.xpose.msra.mxu0 0.0
    %1660 = vmatprep.subr.mxu0 0.0
    %1661 = vmatpush1.xpose.msra.mxu0 0.0
    %1662 = vmatprep.subr.mxu0 0.0
    %1663 = vmatpush1.xpose.msra.mxu0 0.0
    %1664 = vmatprep.subr.mxu0 0.0
    %1665 = vmatpush1.xpose.msra.mxu0 0.0
    %1666 = vmatprep.subr.mxu0 0.0
    %1667 = vmatpush1.xpose.msra.mxu0 0.0
    %1668 = vmatprep.subr.mxu0 0.0
    %1669 = vmatpush1.xpose.msra.mxu0 0.0
    %1670 = vmatprep.subr.mxu0 0.0
    %1671 = vmatpush1.xpose.msra.mxu0 0.0
    %1672 = vmatprep.subr.mxu0 0.0
    %1673 = vmatpush1.xpose.msra.mxu0 0.0
    %1674 = vmatprep.subr.mxu0 0.0
    %1675 = vmatpush1.xpose.msra.mxu0 0.0
    %1676 = vmatprep.subr.mxu0 0.0
    %1677 = vmatpush1.xpose.msra.mxu0 0.0
    %1678 = vmatprep.subr.mxu0 0.0
    %1679 = vmatpush1.xpose.msra.mxu0 0.0
    %1680 = vmatprep.subr.mxu0 0.0
    %1681 = vmatpush1.xpose.msra.mxu0 0.0
    %1682 = vmatprep.subr.mxu0 0.0
    %1683 = vmatpush1.xpose.msra.mxu0 0.0
    %1684 = vmatprep.subr.mxu0 0.0
    %1685 = vmatpush1.xpose.msra.mxu0 0.0
    %1686 = vmatprep.subr.mxu0 0.0
    %1687 = vmatpush1.xpose.msra.mxu0 0.0
    %1688 = vmatprep.mubr.f32.mxu0 0.0
    %1689 = vmatmul.mubr.f32.gmra.mrb[0].mxu0 %v1618
    %v1690 = vpop.f32.mrb[0].mxu0
    %v1691 = vadd.f32 0.0, %v1690
    %v1692 = vpop.f32.mrb[0].mxu0
    %1693 = vdwg.mxu0
    %vm1694 = vcmask 97280
    %v1695 = vsel %vm1694, %v1463, -inf
    %1696 = vmax.xlane.f32.xlu0 %v1695
    %v1697 = vpop.xlane.xlu0 %1696
    %v1698 = vsel %vm1694, %v1539, -inf
    %1699 = vmax.xlane.f32.xlu0 %v1698
    %v1700 = vpop.xlane.xlu0 %1699
    %v1701 = vsel %vm1694, %v1615, -inf
    %1702 = vmax.xlane.f32.xlu0 %v1701
    %v1703 = vpop.xlane.xlu0 %1702
    %v1704 = vsel %vm1694, %v1691, -inf
    %1705 = vmax.xlane.f32.xlu0 %v1704
    %v1706 = vpop.xlane.xlu0 %1705
    %v1707 = vsub.f32 %v1463, %v1697
    %v1708 = vsub.f32 %v1539, %v1700
    %v1709 = vsub.f32 %v1615, %v1703
    %v1710 = vsub.f32 %v1691, %v1706
    %v1711 = vmul.f32 %v1707, 1.442695
    %v1712 = vpow.pop %v1711
    %v1713 = vmul.f32 %v1708, 1.442695
    %v1714 = vpow.pop %v1713
    %v1715 = vmul.f32 %v1709, 1.442695
    %v1716 = vpow.pop %v1715
    %v1717 = vmul.f32 %v1710, 1.442695
    %v1718 = vpow.pop %v1717
    %v1719 = vsel %vm1694, %v1712, 0.0
    %1720 = vadd.xlane.f32.xlu0 %v1719
    %v1721 = vpop.xlane.xlu0 %1720
    %v1722 = vsel %vm1694, %v1714, 0.0
    %1723 = vadd.xlane.f32.xlu0 %v1722
    %v1724 = vpop.xlane.xlu0 %1723
    %v1725 = vsel %vm1694, %v1716, 0.0
    %1726 = vadd.xlane.f32.xlu0 %v1725
    %v1727 = vpop.xlane.xlu0 %1726
    %v1728 = vsel %vm1694, %v1718, 0.0
    %1729 = vadd.xlane.f32.xlu0 %v1728
    %v1730 = vpop.xlane.xlu0 %1729
    %v1731 = vrcp.pop %v1721
    %v1732 = vrcp.pop %v1724
    %v1733 = vrcp.pop %v1727
    %v1734 = vrcp.pop %v1730
    %v1735 = vmul.f32 %v1712, %v1731
    %v1736 = vmul.f32 %v1714, %v1732
    %v1737 = vmul.f32 %v1716, %v1733
    %v1738 = vmul.f32 %v1718, %v1734
    %v1740 = vsel %vm1694, %v1735, 0
    %vm1742 = vcmask 1043456
    %v1743 = vsel %vm1742, %v1349, 0
    %1745 = vmatprep.subr.mxu0 0.0
    %1746 = vmatpush1.msra.mxu0 %v1344
    %1747 = vmatprep.subr.mxu0 0.0
    %1748 = vmatpush1.msra.mxu0 %v1743
    %1749 = vmatprep.subr.mxu0 0.0
    %1750 = vmatpush1.msra.mxu0 0.0
    %1751 = vmatprep.subr.mxu0 0.0
    %1752 = vmatpush1.msra.mxu0 0.0
    %1753 = vmatprep.subr.mxu0 0.0
    %1754 = vmatpush1.msra.mxu0 0.0
    %1755 = vmatprep.subr.mxu0 0.0
    %1756 = vmatpush1.msra.mxu0 0.0
    %1757 = vmatprep.subr.mxu0 0.0
    %1758 = vmatpush1.msra.mxu0 0.0
    %1759 = vmatprep.subr.mxu0 0.0
    %1760 = vmatpush1.msra.mxu0 0.0
    %1761 = vmatprep.subr.mxu0 0.0
    %1762 = vmatpush1.msra.mxu0 0.0
    %1763 = vmatprep.subr.mxu0 0.0
    %1764 = vmatpush1.msra.mxu0 0.0
    %1765 = vmatprep.subr.mxu0 0.0
    %1766 = vmatpush1.msra.mxu0 0.0
    %1767 = vmatprep.subr.mxu0 0.0
    %1768 = vmatpush1.msra.mxu0 0.0
    %1769 = vmatprep.subr.mxu0 0.0
    %1770 = vmatpush1.msra.mxu0 0.0
    %1771 = vmatprep.subr.mxu0 0.0
    %1772 = vmatpush1.msra.mxu0 0.0
    %1773 = vmatprep.subr.mxu0 0.0
    %1774 = vmatpush1.msra.mxu0 0.0
    %1775 = vmatprep.subr.mxu0 0.0
    %1776 = vmatpush1.msra.mxu0 0.0
    %1777 = vmatprep.subr.mxu0 0.0
    %1778 = vmatpush1.msra.mxu0 0.0
    %1779 = vmatprep.subr.mxu0 0.0
    %1780 = vmatpush1.msra.mxu0 0.0
    %1781 = vmatprep.subr.mxu0 0.0
    %1782 = vmatpush1.msra.mxu0 0.0
    %1783 = vmatprep.subr.mxu0 0.0
    %1784 = vmatpush1.msra.mxu0 0.0
    %1785 = vmatprep.subr.mxu0 0.0
    %1786 = vmatpush1.msra.mxu0 0.0
    %1787 = vmatprep.subr.mxu0 0.0
    %1788 = vmatpush1.msra.mxu0 0.0
    %1789 = vmatprep.subr.mxu0 0.0
    %1790 = vmatpush1.msra.mxu0 0.0
    %1791 = vmatprep.subr.mxu0 0.0
    %1792 = vmatpush1.msra.mxu0 0.0
    %1793 = vmatprep.subr.mxu0 0.0
    %1794 = vmatpush1.msra.mxu0 0.0
    %1795 = vmatprep.subr.mxu0 0.0
    %1796 = vmatpush1.msra.mxu0 0.0
    %1797 = vmatprep.subr.mxu0 0.0
    %1798 = vmatpush1.msra.mxu0 0.0
    %1799 = vmatprep.subr.mxu0 0.0
    %1800 = vmatpush1.msra.mxu0 0.0
    %1801 = vmatprep.subr.mxu0 0.0
    %1802 = vmatpush1.msra.mxu0 0.0
    %1803 = vmatprep.subr.mxu0 0.0
    %1804 = vmatpush1.msra.mxu0 0.0
    %1805 = vmatprep.subr.mxu0 0.0
    %1806 = vmatpush1.msra.mxu0 0.0
    %1807 = vmatprep.subr.mxu0 0.0
    %1808 = vmatpush1.msra.mxu0 0.0
    %1809 = vmatprep.mubr.f32.mxu0 0.0
    %1810 = vmatmul.mubr.f32.gmra.mrb[0].mxu0 %v1740
    %v1811 = vpop.f32.mrb[0].mxu0
    %v1812 = vadd.f32 0.0, %v1811
    %v1813 = vpop.f32.mrb[0].mxu0
    %1814 = vdwg.mxu0
    %v1816 = vsel %vm1694, %v1736, 0
    %v1818 = vsel %vm1742, %v1378, 0
    %1820 = vmatprep.subr.mxu0 0.0
    %1821 = vmatpush1.msra.mxu0 %v1376
    %1822 = vmatprep.subr.mxu0 0.0
    %1823 = vmatpush1.msra.mxu0 %v1818
    %1824 = vmatprep.subr.mxu0 0.0
    %1825 = vmatpush1.msra.mxu0 0.0
    %1826 = vmatprep.subr.mxu0 0.0
    %1827 = vmatpush1.msra.mxu0 0.0
    %1828 = vmatprep.subr.mxu0 0.0
    %1829 = vmatpush1.msra.mxu0 0.0
    %1830 = vmatprep.subr.mxu0 0.0
    %1831 = vmatpush1.msra.mxu0 0.0
    %1832 = vmatprep.subr.mxu0 0.0
    %1833 = vmatpush1.msra.mxu0 0.0
    %1834 = vmatprep.subr.mxu0 0.0
    %1835 = vmatpush1.msra.mxu0 0.0
    %1836 = vmatprep.subr.mxu0 0.0
    %1837 = vmatpush1.msra.mxu0 0.0
    %1838 = vmatprep.subr.mxu0 0.0
    %1839 = vmatpush1.msra.mxu0 0.0
    %1840 = vmatprep.subr.mxu0 0.0
    %1841 = vmatpush1.msra.mxu0 0.0
    %1842 = vmatprep.subr.mxu0 0.0
    %1843 = vmatpush1.msra.mxu0 0.0
    %1844 = vmatprep.subr.mxu0 0.0
    %1845 = vmatpush1.msra.mxu0 0.0
    %1846 = vmatprep.subr.mxu0 0.0
    %1847 = vmatpush1.msra.mxu0 0.0
    %1848 = vmatprep.subr.mxu0 0.0
    %1849 = vmatpush1.msra.mxu0 0.0
    %1850 = vmatprep.subr.mxu0 0.0
    %1851 = vmatpush1.msra.mxu0 0.0
    %1852 = vmatprep.subr.mxu0 0.0
    %1853 = vmatpush1.msra.mxu0 0.0
    %1854 = vmatprep.subr.mxu0 0.0
    %1855 = vmatpush1.msra.mxu0 0.0
    %1856 = vmatprep.subr.mxu0 0.0
    %1857 = vmatpush1.msra.mxu0 0.0
    %1858 = vmatprep.subr.mxu0 0.0
    %1859 = vmatpush1.msra.mxu0 0.0
    %1860 = vmatprep.subr.mxu0 0.0
    %1861 = vmatpush1.msra.mxu0 0.0
    %1862 = vmatprep.subr.mxu0 0.0
    %1863 = vmatpush1.msra.mxu0 0.0
    %1864 = vmatprep.subr.mxu0 0.0
    %1865 = vmatpush1.msra.mxu0 0.0
    %1866 = vmatprep.subr.mxu0 0.0
    %1867 = vmatpush1.msra.mxu0 0.0
    %1868 = vmatprep.subr.mxu0 0.0
    %1869 = vmatpush1.msra.mxu0 0.0
    %1870 = vmatprep.subr.mxu0 0.0
    %1871 = vmatpush1.msra.mxu0 0.0
    %1872 = vmatprep.subr.mxu0 0.0
    %1873 = vmatpush1.msra.mxu0 0.0
    %1874 = vmatprep.subr.mxu0 0.0
    %1875 = vmatpush1.msra.mxu0 0.0
    %1876 = vmatprep.subr.mxu0 0.0
    %1877 = vmatpush1.msra.mxu0 0.0
    %1878 = vmatprep.subr.mxu0 0.0
    %1879 = vmatpush1.msra.mxu0 0.0
    %1880 = vmatprep.subr.mxu0 0.0
    %1881 = vmatpush1.msra.mxu0 0.0
    %1882 = vmatprep.subr.mxu0 0.0
    %1883 = vmatpush1.msra.mxu0 0.0
    %1884 = vmatprep.mubr.f32.mxu0 0.0
    %1885 = vmatmul.mubr.f32.gmra.mrb[0].mxu0 %v1816
    %v1886 = vpop.f32.mrb[0].mxu0
    %v1887 = vadd.f32 0.0, %v1886
    %v1888 = vpop.f32.mrb[0].mxu0
    %1889 = vdwg.mxu0
    %v1891 = vsel %vm1694, %v1737, 0
    %v1893 = vsel %vm1742, %v1383, 0
    %1895 = vmatprep.subr.mxu0 0.0
    %1896 = vmatpush1.msra.mxu0 %v1381
    %1897 = vmatprep.subr.mxu0 0.0
    %1898 = vmatpush1.msra.mxu0 %v1893
    %1899 = vmatprep.subr.mxu0 0.0
    %1900 = vmatpush1.msra.mxu0 0.0
    %1901 = vmatprep.subr.mxu0 0.0
    %1902 = vmatpush1.msra.mxu0 0.0
    %1903 = vmatprep.subr.mxu0 0.0
    %1904 = vmatpush1.msra.mxu0 0.0
    %1905 = vmatprep.subr.mxu0 0.0
    %1906 = vmatpush1.msra.mxu0 0.0
    %1907 = vmatprep.subr.mxu0 0.0
    %1908 = vmatpush1.msra.mxu0 0.0
    %1909 = vmatprep.subr.mxu0 0.0
    %1910 = vmatpush1.msra.mxu0 0.0
    %1911 = vmatprep.subr.mxu0 0.0
    %1912 = vmatpush1.msra.mxu0 0.0
    %1913 = vmatprep.subr.mxu0 0.0
    %1914 = vmatpush1.msra.mxu0 0.0
    %1915 = vmatprep.subr.mxu0 0.0
    %1916 = vmatpush1.msra.mxu0 0.0
    %1917 = vmatprep.subr.mxu0 0.0
    %1918 = vmatpush1.msra.mxu0 0.0
    %1919 = vmatprep.subr.mxu0 0.0
    %1920 = vmatpush1.msra.mxu0 0.0
    %1921 = vmatprep.subr.mxu0 0.0
    %1922 = vmatpush1.msra.mxu0 0.0
    %1923 = vmatprep.subr.mxu0 0.0
    %1924 = vmatpush1.msra.mxu0 0.0
    %1925 = vmatprep.subr.mxu0 0.0
    %1926 = vmatpush1.msra.mxu0 0.0
    %1927 = vmatprep.subr.mxu0 0.0
    %1928 = vmatpush1.msra.mxu0 0.0
    %1929 = vmatprep.subr.mxu0 0.0
    %1930 = vmatpush1.msra.mxu0 0.0
    %1931 = vmatprep.subr.mxu0 0.0
    %1932 = vmatpush1.msra.mxu0 0.0
    %1933 = vmatprep.subr.mxu0 0.0
    %1934 = vmatpush1.msra.mxu0 0.0
    %1935 = vmatprep.subr.mxu0 0.0
    %1936 = vmatpush1.msra.mxu0 0.0
    %1937 = vmatprep.subr.mxu0 0.0
    %1938 = vmatpush1.msra.mxu0 0.0
    %1939 = vmatprep.subr.mxu0 0.0
    %1940 = vmatpush1.msra.mxu0 0.0
    %1941 = vmatprep.subr.mxu0 0.0
    %1942 = vmatpush1.msra.mxu0 0.0
    %1943 = vmatprep.subr.mxu0 0.0
    %1944 = vmatpush1.msra.mxu0 0.0
    %1945 = vmatprep.subr.mxu0 0.0
    %1946 = vmatpush1.msra.mxu0 0.0
    %1947 = vmatprep.subr.mxu0 0.0
    %1948 = vmatpush1.msra.mxu0 0.0
    %1949 = vmatprep.subr.mxu0 0.0
    %1950 = vmatpush1.msra.mxu0 0.0
    %1951 = vmatprep.subr.mxu0 0.0
    %1952 = vmatpush1.msra.mxu0 0.0
    %1953 = vmatprep.subr.mxu0 0.0
    %1954 = vmatpush1.msra.mxu0 0.0
    %1955 = vmatprep.subr.mxu0 0.0
    %1956 = vmatpush1.msra.mxu0 0.0
    %1957 = vmatprep.subr.mxu0 0.0
    %1958 = vmatpush1.msra.mxu0 0.0
    %1959 = vmatprep.mubr.f32.mxu0 0.0
    %1960 = vmatmul.mubr.f32.gmra.mrb[0].mxu0 %v1891
    %v1961 = vpop.f32.mrb[0].mxu0
    %v1962 = vadd.f32 0.0, %v1961
    %v1963 = vpop.f32.mrb[0].mxu0
    %1964 = vdwg.mxu0
    %v1966 = vsel %vm1694, %v1738, 0
    %v1968 = vsel %vm1742, %v1388, 0
    %1970 = vmatprep.subr.mxu0 0.0
    %1971 = vmatpush1.msra.mxu0 %v1386
    %1972 = vmatprep.subr.mxu0 0.0
    %1973 = vmatpush1.msra.mxu0 %v1968
    %1974 = vmatprep.subr.mxu0 0.0
    %1975 = vmatpush1.msra.mxu0 0.0
    %1976 = vmatprep.subr.mxu0 0.0
    %1977 = vmatpush1.msra.mxu0 0.0
    %1978 = vmatprep.subr.mxu0 0.0
    %1979 = vmatpush1.msra.mxu0 0.0
    %1980 = vmatprep.subr.mxu0 0.0
    %1981 = vmatpush1.msra.mxu0 0.0
    %1982 = vmatprep.subr.mxu0 0.0
    %1983 = vmatpush1.msra.mxu0 0.0
    %1984 = vmatprep.subr.mxu0 0.0
    %1985 = vmatpush1.msra.mxu0 0.0
    %1986 = vmatprep.subr.mxu0 0.0
    %1987 = vmatpush1.msra.mxu0 0.0
    %1988 = vmatprep.subr.mxu0 0.0
    %1989 = vmatpush1.msra.mxu0 0.0
    %1990 = vmatprep.subr.mxu0 0.0
    %1991 = vmatpush1.msra.mxu0 0.0
    %1992 = vmatprep.subr.mxu0 0.0
    %1993 = vmatpush1.msra.mxu0 0.0
    %1994 = vmatprep.subr.mxu0 0.0
    %1995 = vmatpush1.msra.mxu0 0.0
    %1996 = vmatprep.subr.mxu0 0.0
    %1997 = vmatpush1.msra.mxu0 0.0
    %1998 = vmatprep.subr.mxu0 0.0
    %1999 = vmatpush1.msra.mxu0 0.0
    %2000 = vmatprep.subr.mxu0 0.0
    %2001 = vmatpush1.msra.mxu0 0.0
    %2002 = vmatprep.subr.mxu0 0.0
    %2003 = vmatpush1.msra.mxu0 0.0
    %2004 = vmatprep.subr.mxu0 0.0
    %2005 = vmatpush1.msra.mxu0 0.0
    %2006 = vmatprep.subr.mxu0 0.0
    %2007 = vmatpush1.msra.mxu0 0.0
    %2008 = vmatprep.subr.mxu0 0.0
    %2009 = vmatpush1.msra.mxu0 0.0
    %2010 = vmatprep.subr.mxu0 0.0
    %2011 = vmatpush1.msra.mxu0 0.0
    %2012 = vmatprep.subr.mxu0 0.0
    %2013 = vmatpush1.msra.mxu0 0.0
    %2014 = vmatprep.subr.mxu0 0.0
    %2015 = vmatpush1.msra.mxu0 0.0
    %2016 = vmatprep.subr.mxu0 0.0
    %2017 = vmatpush1.msra.mxu0 0.0
    %2018 = vmatprep.subr.mxu0 0.0
    %2019 = vmatpush1.msra.mxu0 0.0
    %2020 = vmatprep.subr.mxu0 0.0
    %2021 = vmatpush1.msra.mxu0 0.0
    %2022 = vmatprep.subr.mxu0 0.0
    %2023 = vmatpush1.msra.mxu0 0.0
    %2024 = vmatprep.subr.mxu0 0.0
    %2025 = vmatpush1.msra.mxu0 0.0
    %2026 = vmatprep.subr.mxu0 0.0
    %2027 = vmatpush1.msra.mxu0 0.0
    %2028 = vmatprep.subr.mxu0 0.0
    %2029 = vmatpush1.msra.mxu0 0.0
    %2030 = vmatprep.subr.mxu0 0.0
    %2031 = vmatpush1.msra.mxu0 0.0
    %2032 = vmatprep.subr.mxu0 0.0
    %2033 = vmatpush1.msra.mxu0 0.0
    %2034 = vmatprep.mubr.f32.mxu0 0.0
    %2035 = vmatmul.mubr.f32.gmra.mrb[0].mxu0 %v1966
    %v2036 = vpop.f32.mrb[0].mxu0
    %v2037 = vadd.f32 0.0, %v2036
    %v2038 = vpop.f32.mrb[0].mxu0
    %2039 = vdwg.mxu0
    %2041 = vrot.lane.b32.xlu0 %v1887, 8
    %v2042 = vpop.permute.xlu0 %2041
    %2045 = vrot.lane.b32.xlu0 %v1962, 16
    %v2046 = vpop.permute.xlu0 %2045
    %2049 = vrot.lane.b32.xlu0 %v2037, 24
    %v2050 = vpop.permute.xlu0 %2049
    %v2052 = vsel %vm326, %v1812, %v2042
    %v2053 = vsel %vm978, %v2052, %v2046
    %v2054 = vsel %vm980, %v2053, %v2050
    %s2055 = scalar_lea.vmem [#allocation2], 224
    %v2056 = vld [vmem:[%s2055] sm:$0xff]
    %v2057 = vld [vmem:[%s2055 + $0x8] sm:$0xff]
    %v2058 = vld [vmem:[%s2055 + $0x10] sm:$0xff]
    %v2059 = vld [vmem:[%s2055 + $0x18] sm:$0xff]
    %v2060 = vld [vmem:[%s3 + $0x7] sm:$0x1]
    %v2061 = vlaneseq
    %v2062 = vshrl.u32 %v2061, 7
    %v2063 = vsub.s32 0, %v2062
    %v2064 = vrot.slane %v2060, %v2063
    %v2066 = vsel %vm67, %v2054, 0
    %2068 = vmatprep.subr.mxu0 0.0
    %2069 = vmatpush1.msra.mxu0 %v2056
    %2070 = vmatprep.subr.mxu0 0.0
    %2071 = vmatpush1.msra.mxu0 %v2057
    %2072 = vmatprep.subr.mxu0 0.0
    %2073 = vmatpush1.msra.mxu0 %v2058
    %2074 = vmatprep.subr.mxu0 0.0
    %2075 = vmatpush1.msra.mxu0 %v2059
    %2076 = vmatprep.subr.mxu0 0.0
    %2077 = vmatpush1.msra.mxu0 0.0
    %2078 = vmatprep.subr.mxu0 0.0
    %2079 = vmatpush1.msra.mxu0 0.0
    %2080 = vmatprep.subr.mxu0 0.0
    %2081 = vmatpush1.msra.mxu0 0.0
    %2082 = vmatprep.subr.mxu0 0.0
    %2083 = vmatpush1.msra.mxu0 0.0
    %2084 = vmatprep.subr.mxu0 0.0
    %2085 = vmatpush1.msra.mxu0 0.0
    %2086 = vmatprep.subr.mxu0 0.0
    %2087 = vmatpush1.msra.mxu0 0.0
    %2088 = vmatprep.subr.mxu0 0.0
    %2089 = vmatpush1.msra.mxu0 0.0
    %2090 = vmatprep.subr.mxu0 0.0
    %2091 = vmatpush1.msra.mxu0 0.0
    %2092 = vmatprep.subr.mxu0 0.0
    %2093 = vmatpush1.msra.mxu0 0.0
    %2094 = vmatprep.subr.mxu0 0.0
    %2095 = vmatpush1.msra.mxu0 0.0
    %2096 = vmatprep.subr.mxu0 0.0
    %2097 = vmatpush1.msra.mxu0 0.0
    %2098 = vmatprep.subr.mxu0 0.0
    %2099 = vmatpush1.msra.mxu0 0.0
    %2100 = vmatprep.subr.mxu0 0.0
    %2101 = vmatpush1.msra.mxu0 0.0
    %2102 = vmatprep.subr.mxu0 0.0
    %2103 = vmatpush1.msra.mxu0 0.0
    %2104 = vmatprep.subr.mxu0 0.0
    %2105 = vmatpush1.msra.mxu0 0.0
    %2106 = vmatprep.subr.mxu0 0.0
    %2107 = vmatpush1.msra.mxu0 0.0
    %2108 = vmatprep.subr.mxu0 0.0
    %2109 = vmatpush1.msra.mxu0 0.0
    %2110 = vmatprep.subr.mxu0 0.0
    %2111 = vmatpush1.msra.mxu0 0.0
    %2112 = vmatprep.subr.mxu0 0.0
    %2113 = vmatpush1.msra.mxu0 0.0
    %2114 = vmatprep.subr.mxu0 0.0
    %2115 = vmatpush1.msra.mxu0 0.0
    %2116 = vmatprep.subr.mxu0 0.0
    %2117 = vmatpush1.msra.mxu0 0.0
    %2118 = vmatprep.subr.mxu0 0.0
    %2119 = vmatpush1.msra.mxu0 0.0
    %2120 = vmatprep.subr.mxu0 0.0
    %2121 = vmatpush1.msra.mxu0 0.0
    %2122 = vmatprep.subr.mxu0 0.0
    %2123 = vmatpush1.msra.mxu0 0.0
    %2124 = vmatprep.subr.mxu0 0.0
    %2125 = vmatpush1.msra.mxu0 0.0
    %2126 = vmatprep.subr.mxu0 0.0
    %2127 = vmatpush1.msra.mxu0 0.0
    %2128 = vmatprep.subr.mxu0 0.0
    %2129 = vmatpush1.msra.mxu0 0.0
    %2130 = vmatprep.subr.mxu0 0.0
    %2131 = vmatpush1.msra.mxu0 0.0
    %2132 = vmatprep.mubr.f32.mxu0 0.0
    %2133 = vmatmul.mubr.f32.gmra.mrb[0].mxu0 %v2066
    %v2134 = vpop.f32.mrb[0].mxu0
    %v2135 = vadd.f32 %v2064, %v2134
    %v2136 = vpop.f32.mrb[0].mxu0
    %2137 = vdwg.mxu0
    %v2138 = vadd.f32 %v1091, %v2135
    %v2139 = vld [vmem:[%s4 + $0x1] sm:$0x1]
    %v2140 = vld [vmem:[%s5 + $0x1] sm:$0x1]
    %v2141 = vsel %vm67, %v2138, 0.0
    %2142 = vadd.xlane.f32.xlu0 %v2141
    %v2143 = vpop.xlane.xlu0 %2142
    %v2144 = vmul.f32 %v2143, %v1071
    %v2145 = vsub.f32 %v2138, %v2144
    %v2146 = vmul.f32 %v2145, %v2145
    %v2147 = vsel %vm67, %v2146, 0.0
    %2148 = vadd.xlane.f32.xlu0 %v2147
    %v2149 = vpop.xlane.xlu0 %2148
    %v2150 = vmul.f32 %v2149, %v1071
    %v2151 = vadd.f32 %v2150, 1e-05
    %v2152 = vrsqrt.pop %v2151
    %v2153 = vmul.f32 %v2145, %v2152
    %v2154 = vlaneseq
    %v2155 = vshrl.u32 %v2154, 7
    %v2156 = vsub.s32 0, %v2155
    %v2157 = vrot.slane %v2139, %v2156
    %v2158 = vmul.f32 %v2153, %v2157
    %v2159 = vlaneseq
    %v2160 = vshrl.u32 %v2159, 7
    %v2161 = vsub.s32 0, %v2160
    %v2162 = vrot.slane %v2140, %v2161
    %v2163 = vadd.f32 %v2158, %v2162
    %v2164 = vld [vmem:[%s6] sm:$0xff]
    %v2165 = vld [vmem:[%s6 + $0x8] sm:$0xff]
    %v2166 = vld [vmem:[%s6 + $0x10] sm:$0xff]
    %v2167 = vld [vmem:[%s6 + $0x18] sm:$0xff]
    %v2168 = vld [vmem:[%s7] sm:$0x1]
    %v2170 = vlaneseq
    %v2171 = vshrl.u32 %v2170, 7
    %v2172 = vsub.s32 0, %v2171
    %v2173 = vrot.slane %v2168, %v2172
    %v2176 = vsel %vm67, %v2163, 0
    %2178 = vmatprep.subr.mxu0 0.0
    %2179 = vmatpush1.msra.mxu0 %v2164
    %2180 = vmatprep.subr.mxu0 0.0
    %2181 = vmatpush1.msra.mxu0 %v2165
    %2182 = vmatprep.subr.mxu0 0.0
    %2183 = vmatpush1.msra.mxu0 %v2166
    %2184 = vmatprep.subr.mxu0 0.0
    %2185 = vmatpush1.msra.mxu0 %v2167
    %2186 = vmatprep.subr.mxu0 0.0
    %2187 = vmatpush1.msra.mxu0 0.0
    %2188 = vmatprep.subr.mxu0 0.0
    %2189 = vmatpush1.msra.mxu0 0.0
    %2190 = vmatprep.subr.mxu0 0.0
    %2191 = vmatpush1.msra.mxu0 0.0
    %2192 = vmatprep.subr.mxu0 0.0
    %2193 = vmatpush1.msra.mxu0 0.0
    %2194 = vmatprep.subr.mxu0 0.0
    %2195 = vmatpush1.msra.mxu0 0.0
    %2196 = vmatprep.subr.mxu0 0.0
    %2197 = vmatpush1.msra.mxu0 0.0
    %2198 = vmatprep.subr.mxu0 0.0
    %2199 = vmatpush1.msra.mxu0 0.0
    %2200 = vmatprep.subr.mxu0 0.0
    %2201 = vmatpush1.msra.mxu0 0.0
    %2202 = vmatprep.subr.mxu0 0.0
    %2203 = vmatpush1.msra.mxu0 0.0
    %2204 = vmatprep.subr.mxu0 0.0
    %2205 = vmatpush1.msra.mxu0 0.0
    %2206 = vmatprep.subr.mxu0 0.0
    %2207 = vmatpush1.msra.mxu0 0.0
    %2208 = vmatprep.subr.mxu0 0.0
    %2209 = vmatpush1.msra.mxu0 0.0
    %2210 = vmatprep.subr.mxu0 0.0
    %2211 = vmatpush1.msra.mxu0 0.0
    %2212 = vmatprep.subr.mxu0 0.0
    %2213 = vmatpush1.msra.mxu0 0.0
    %2214 = vmatprep.subr.mxu0 0.0
    %2215 = vmatpush1.msra.mxu0 0.0
    %2216 = vmatprep.subr.mxu0 0.0
    %2217 = vmatpush1.msra.mxu0 0.0
    %2218 = vmatprep.subr.mxu0 0.0
    %2219 = vmatpush1.msra.mxu0 0.0
    %2220 = vmatprep.subr.mxu0 0.0
    %2221 = vmatpush1.msra.mxu0 0.0
    %2222 = vmatprep.subr.mxu0 0.0
    %2223 = vmatpush1.msra.mxu0 0.0
    %2224 = vmatprep.subr.mxu0 0.0
    %2225 = vmatpush1.msra.mxu0 0.0
    %2226 = vmatprep.subr.mxu0 0.0
    %2227 = vmatpush1.msra.mxu0 0.0
    %2228 = vmatprep.subr.mxu0 0.0
    %2229 = vmatpush1.msra.mxu0 0.0
    %2230 = vmatprep.subr.mxu0 0.0
    %2231 = vmatpush1.msra.mxu0 0.0
    %2232 = vmatprep.subr.mxu0 0.0
    %2233 = vmatpush1.msra.mxu0 0.0
    %2234 = vmatprep.subr.mxu0 0.0
    %2235 = vmatpush1.msra.mxu0 0.0
    %2236 = vmatprep.subr.mxu0 0.0
    %2237 = vmatpush1.msra.mxu0 0.0
    %2238 = vmatprep.subr.mxu0 0.0
    %2239 = vmatpush1.msra.mxu0 0.0
    %2240 = vmatprep.subr.mxu0 0.0
    %2241 = vmatpush1.msra.mxu0 0.0
    %2242 = vmatprep.mubr.f32.mxu0 0.0
    %2243 = vmatmul.mubr.f32.gmra.mrb[0].mxu0 %v2176
    %v2244 = vpop.f32.mrb[0].mxu0
    %v2245 = vadd.f32 %v2173, %v2244
    %v2246 = vpop.f32.mrb[0].mxu0
    %2247 = vdwg.mxu0
    %v2248 = vmax.f32 %v2245, 0.0
    %v2249 = vld [vmem:[%s8] sm:$0xff]
    %v2250 = vld [vmem:[%s8 + $0x8] sm:$0xff]
    %v2251 = vld [vmem:[%s8 + $0x10] sm:$0xff]
    %v2252 = vld [vmem:[%s8 + $0x18] sm:$0xff]
    %v2253 = vld [vmem:[%s8 + $0x20] sm:$0xff]
    %v2254 = vld [vmem:[%s8 + $0x28] sm:$0xff]
    %v2255 = vld [vmem:[%s8 + $0x30] sm:$0xff]
    %v2256 = vld [vmem:[%s8 + $0x38] sm:$0xff]
    %v2257 = vld [vmem:[%s9] sm:$0x1]
    %v2259 = vlaneseq
    %v2260 = vshrl.u32 %v2259, 7
    %v2261 = vsub.s32 0, %v2260
    %v2262 = vrot.slane %v2257, %v2261
    %vm2264 = vcmask 523264
    %v2266 = vsel %vm2264, %v2248, 0
    %2268 = vmatprep.subr.mxu0 0.0
    %2269 = vmatpush1.msra.mxu0 %v2249
    %2270 = vmatprep.subr.mxu0 0.0
    %2271 = vmatpush1.msra.mxu0 %v2250
    %2272 = vmatprep.subr.mxu0 0.0
    %2273 = vmatpush1.msra.mxu0 %v2251
    %2274 = vmatprep.subr.mxu0 0.0
    %2275 = vmatpush1.msra.mxu0 %v2252
    %2276 = vmatprep.subr.mxu0 0.0
    %2277 = vmatpush1.msra.mxu0 %v2253
    %2278 = vmatprep.subr.mxu0 0.0
    %2279 = vmatpush1.msra.mxu0 %v2254
    %2280 = vmatprep.subr.mxu0 0.0
    %2281 = vmatpush1.msra.mxu0 %v2255
    %2282 = vmatprep.subr.mxu0 0.0
    %2283 = vmatpush1.msra.mxu0 %v2256
    %2284 = vmatprep.subr.mxu0 0.0
    %2285 = vmatpush1.msra.mxu0 0.0
    %2286 = vmatprep.subr.mxu0 0.0
    %2287 = vmatpush1.msra.mxu0 0.0
    %2288 = vmatprep.subr.mxu0 0.0
    %2289 = vmatpush1.msra.mxu0 0.0
    %2290 = vmatprep.subr.mxu0 0.0
    %2291 = vmatpush1.msra.mxu0 0.0
    %2292 = vmatprep.subr.mxu0 0.0
    %2293 = vmatpush1.msra.mxu0 0.0
    %2294 = vmatprep.subr.mxu0 0.0
    %2295 = vmatpush1.msra.mxu0 0.0
    %2296 = vmatprep.subr.mxu0 0.0
    %2297 = vmatpush1.msra.mxu0 0.0
    %2298 = vmatprep.subr.mxu0 0.0
    %2299 = vmatpush1.msra.mxu0 0.0
    %2300 = vmatprep.subr.mxu0 0.0
    %2301 = vmatpush1.msra.mxu0 0.0
    %2302 = vmatprep.subr.mxu0 0.0
    %2303 = vmatpush1.msra.mxu0 0.0
    %2304 = vmatprep.subr.mxu0 0.0
    %2305 = vmatpush1.msra.mxu0 0.0
    %2306 = vmatprep.subr.mxu0 0.0
    %2307 = vmatpush1.msra.mxu0 0.0
    %2308 = vmatprep.subr.mxu0 0.0
    %2309 = vmatpush1.msra.mxu0 0.0
    %2310 = vmatprep.subr.mxu0 0.0
    %2311 = vmatpush1.msra.mxu0 0.0
    %2312 = vmatprep.subr.mxu0 0.0
    %2313 = vmatpush1.msra.mxu0 0.0
    %2314 = vmatprep.subr.mxu0 0.0
    %2315 = vmatpush1.msra.mxu0 0.0
    %2316 = vmatprep.subr.mxu0 0.0
    %2317 = vmatpush1.msra.mxu0 0.0
    %2318 = vmatprep.subr.mxu0 0.0
    %2319 = vmatpush1.msra.mxu0 0.0
    %2320 = vmatprep.subr.mxu0 0.0
    %2321 = vmatpush1.msra.mxu0 0.0
    %2322 = vmatprep.subr.mxu0 0.0
    %2323 = vmatpush1.msra.mxu0 0.0
    %2324 = vmatprep.subr.mxu0 0.0
    %2325 = vmatpush1.msra.mxu0 0.0
    %2326 = vmatprep.subr.mxu0 0.0
    %2327 = vmatpush1.msra.mxu0 0.0
    %2328 = vmatprep.subr.mxu0 0.0
    %2329 = vmatpush1.msra.mxu0 0.0
    %2330 = vmatprep.subr.mxu0 0.0
    %2331 = vmatpush1.msra.mxu0 0.0
    %2332 = vmatprep.mubr.f32.mxu0 0.0
    %2333 = vmatmul.mubr.f32.gmra.mrb[0].mxu0 %v2266
    %v2334 = vpop.f32.mrb[0].mxu0
    %v2335 = vadd.f32 %v2262, %v2334
    %v2336 = vpop.f32.mrb[0].mxu0
    %2337 = vdwg.mxu0
    %v2338 = vadd.f32 %v2163, %v2335
    %v2339 = vld [vmem:[%s4 + $0x2] sm:$0x1]
    %v2340 = vld [vmem:[%s5 + $0x2] sm:$0x1]
    %v2341 = vsel %vm67, %v2338, 0.0
    %2342 = vadd.xlane.f32.xlu0 %v2341
    %v2343 = vpop.xlane.xlu0 %2342
    %v2344 = vmul.f32 %v2343, %v1071
    %v2345 = vsub.f32 %v2338, %v2344
    %v2346 = vmul.f32 %v2345, %v2345
    %v2347 = vsel %vm67, %v2346, 0.0
    %2348 = vadd.xlane.f32.xlu0 %v2347
    %v2349 = vpop.xlane.xlu0 %2348
    %v2350 = vmul.f32 %v2349, %v1071
    %v2351 = vadd.f32 %v2350, 1e-05
    %v2352 = vrsqrt.pop %v2351
    %v2353 = vmul.f32 %v2345, %v2352
    %v2354 = vlaneseq
    %v2355 = vshrl.u32 %v2354, 7
    %v2356 = vsub.s32 0, %v2355
    %v2357 = vrot.slane %v2339, %v2356
    %v2358 = vmul.f32 %v2353, %v2357
    %v2359 = vlaneseq
    %v2360 = vshrl.u32 %v2359, 7
    %v2361 = vsub.s32 0, %v2360
    %v2362 = vrot.slane %v2340, %v2361
    %v2363 = vadd.f32 %v2358, %v2362
    %s2364 = scalar_lea.vmem [#allocation2], 256
    %v2365 = vld [vmem:[%s2364] sm:$0xff]
    %v2366 = vld [vmem:[%s2364 + $0x8] sm:$0xff]
    %v2367 = vld [vmem:[%s2364 + $0x10] sm:$0xff]
    %v2368 = vld [vmem:[%s2364 + $0x18] sm:$0xff]
    %s2369 = scalar_lea.vmem %s3, 8
    %v2370 = vld [vmem:[%s2369] sm:$0x1]
    %v2371 = vlaneseq
    %v2372 = vshrl.u32 %v2371, 7
    %v2373 = vsub.s32 0, %v2372
    %v2374 = vrot.slane %v2370, %v2373
    %v2376 = vsel %vm67, %v2363, 0
    %2378 = vmatprep.subr.mxu0 0.0
    %2379 = vmatpush1.msra.mxu0 %v2365
    %2380 = vmatprep.subr.mxu0 0.0
    %2381 = vmatpush1.msra.mxu0 %v2366
    %2382 = vmatprep.subr.mxu0 0.0
    %2383 = vmatpush1.msra.mxu0 %v2367
    %2384 = vmatprep.subr.mxu0 0.0
    %2385 = vmatpush1.msra.mxu0 %v2368
    %2386 = vmatprep.subr.mxu0 0.0
    %2387 = vmatpush1.msra.mxu0 0.0
    %2388 = vmatprep.subr.mxu0 0.0
    %2389 = vmatpush1.msra.mxu0 0.0
    %2390 = vmatprep.subr.mxu0 0.0
    %2391 = vmatpush1.msra.mxu0 0.0
    %2392 = vmatprep.subr.mxu0 0.0
    %2393 = vmatpush1.msra.mxu0 0.0
    %2394 = vmatprep.subr.mxu0 0.0
    %2395 = vmatpush1.msra.mxu0 0.0
    %2396 = vmatprep.subr.mxu0 0.0
    %2397 = vmatpush1.msra.mxu0 0.0
    %2398 = vmatprep.subr.mxu0 0.0
    %2399 = vmatpush1.msra.mxu0 0.0
    %2400 = vmatprep.subr.mxu0 0.0
    %2401 = vmatpush1.msra.mxu0 0.0
    %2402 = vmatprep.subr.mxu0 0.0
    %2403 = vmatpush1.msra.mxu0 0.0
    %2404 = vmatprep.subr.mxu0 0.0
    %2405 = vmatpush1.msra.mxu0 0.0
    %2406 = vmatprep.subr.mxu0 0.0
    %2407 = vmatpush1.msra.mxu0 0.0
    %2408 = vmatprep.subr.mxu0 0.0
    %2409 = vmatpush1.msra.mxu0 0.0
    %2410 = vmatprep.subr.mxu0 0.0
    %2411 = vmatpush1.msra.mxu0 0.0
    %2412 = vmatprep.subr.mxu0 0.0
    %2413 = vmatpush1.msra.mxu0 0.0
    %2414 = vmatprep.subr.mxu0 0.0
    %2415 = vmatpush1.msra.mxu0 0.0
    %2416 = vmatprep.subr.mxu0 0.0
    %2417 = vmatpush1.msra.mxu0 0.0
    %2418 = vmatprep.subr.mxu0 0.0
    %2419 = vmatpush1.msra.mxu0 0.0
    %2420 = vmatprep.subr.mxu0 0.0
    %2421 = vmatpush1.msra.mxu0 0.0
    %2422 = vmatprep.subr.mxu0 0.0
    %2423 = vmatpush1.msra.mxu0 0.0
    %2424 = vmatprep.subr.mxu0 0.0
    %2425 = vmatpush1.msra.mxu0 0.0
    %2426 = vmatprep.subr.mxu0 0.0
    %2427 = vmatpush1.msra.mxu0 0.0
    %2428 = vmatprep.subr.mxu0 0.0
    %2429 = vmatpush1.msra.mxu0 0.0
    %2430 = vmatprep.subr.mxu0 0.0
    %2431 = vmatpush1.msra.mxu0 0.0
    %2432 = vmatprep.subr.mxu0 0.0
    %2433 = vmatpush1.msra.mxu0 0.0
    %2434 = vmatprep.subr.mxu0 0.0
    %2435 = vmatpush1.msra.mxu0 0.0
    %2436 = vmatprep.subr.mxu0 0.0
    %2437 = vmatpush1.msra.mxu0 0.0
    %2438 = vmatprep.subr.mxu0 0.0
    %2439 = vmatpush1.msra.mxu0 0.0
    %2440 = vmatprep.subr.mxu0 0.0
    %2441 = vmatpush1.msra.mxu0 0.0
    %2442 = vmatprep.mubr.f32.mxu0 0.0
    %2443 = vmatmul.mubr.f32.gmra.mrb[0].mxu0 %v2376
    %v2444 = vpop.f32.mrb[0].mxu0
    %v2445 = vadd.f32 %v2374, %v2444
    %v2446 = vpop.f32.mrb[0].mxu0
    %2447 = vdwg.mxu0
    %v2448 = vmul.f32 %v2445, 0.35355338
    %s2449 = scalar_lea.vmem [#allocation2], 288
    %v2450 = vld [vmem:[%s2449] sm:$0xff]
    %v2451 = vld [vmem:[%s2449 + $0x8] sm:$0xff]
    %v2452 = vld [vmem:[%s2449 + $0x10] sm:$0xff]
    %v2453 = vld [vmem:[%s2449 + $0x18] sm:$0xff]
    %v2454 = vld [vmem:[%s2369 + $0x1] sm:$0x1]
    %v2455 = vlaneseq
    %v2456 = vshrl.u32 %v2455, 7
    %v2457 = vsub.s32 0, %v2456
    %v2458 = vrot.slane %v2454, %v2457
    %2459 = vmatprep.subr.mxu0 0.0
    %2460 = vmatpush1.msra.mxu0 %v2450
    %2461 = vmatprep.subr.mxu0 0.0
    %2462 = vmatpush1.msra.mxu0 %v2451
    %2463 = vmatprep.subr.mxu0 0.0
    %2464 = vmatpush1.msra.mxu0 %v2452
    %2465 = vmatprep.subr.mxu0 0.0
    %2466 = vmatpush1.msra.mxu0 %v2453
    %2467 = vmatprep.subr.mxu0 0.0
    %2468 = vmatpush1.msra.mxu0 0.0
    %2469 = vmatprep.subr.mxu0 0.0
    %2470 = vmatpush1.msra.mxu0 0.0
    %2471 = vmatprep.subr.mxu0 0.0
    %2472 = vmatpush1.msra.mxu0 0.0
    %2473 = vmatprep.subr.mxu0 0.0
    %2474 = vmatpush1.msra.mxu0 0.0
    %2475 = vmatprep.subr.mxu0 0.0
    %2476 = vmatpush1.msra.mxu0 0.0
    %2477 = vmatprep.subr.mxu0 0.0
    %2478 = vmatpush1.msra.mxu0 0.0
    %2479 = vmatprep.subr.mxu0 0.0
    %2480 = vmatpush1.msra.mxu0 0.0
    %2481 = vmatprep.subr.mxu0 0.0
    %2482 = vmatpush1.msra.mxu0 0.0
    %2483 = vmatprep.subr.mxu0 0.0
    %2484 = vmatpush1.msra.mxu0 0.0
    %2485 = vmatprep.subr.mxu0 0.0
    %2486 = vmatpush1.msra.mxu0 0.0
    %2487 = vmatprep.subr.mxu0 0.0
    %2488 = vmatpush1.msra.mxu0 0.0
    %2489 = vmatprep.subr.mxu0 0.0
    %2490 = vmatpush1.msra.mxu0 0.0
    %2491 = vmatprep.subr.mxu0 0.0
    %2492 = vmatpush1.msra.mxu0 0.0
    %2493 = vmatprep.subr.mxu0 0.0
    %2494 = vmatpush1.msra.mxu0 0.0
    %2495 = vmatprep.subr.mxu0 0.0
    %2496 = vmatpush1.msra.mxu0 0.0
    %2497 = vmatprep.subr.mxu0 0.0
    %2498 = vmatpush1.msra.mxu0 0.0
    %2499 = vmatprep.subr.mxu0 0.0
    %2500 = vmatpush1.msra.mxu0 0.0
    %2501 = vmatprep.subr.mxu0 0.0
    %2502 = vmatpush1.msra.mxu0 0.0
    %2503 = vmatprep.subr.mxu0 0.0
    %2504 = vmatpush1.msra.mxu0 0.0
    %2505 = vmatprep.subr.mxu0 0.0
    %2506 = vmatpush1.msra.mxu0 0.0
    %2507 = vmatprep.subr.mxu0 0.0
    %2508 = vmatpush1.msra.mxu0 0.0
    %2509 = vmatprep.subr.mxu0 0.0
    %2510 = vmatpush1.msra.mxu0 0.0
    %2511 = vmatprep.subr.mxu0 0.0
    %2512 = vmatpush1.msra.mxu0 0.0
    %2513 = vmatprep.subr.mxu0 0.0
    %2514 = vmatpush1.msra.mxu0 0.0
    %2515 = vmatprep.subr.mxu0 0.0
    %2516 = vmatpush1.msra.mxu0 0.0
    %2517 = vmatprep.subr.mxu0 0.0
    %2518 = vmatpush1.msra.mxu0 0.0
    %2519 = vmatprep.subr.mxu0 0.0
    %2520 = vmatpush1.msra.mxu0 0.0
    %2521 = vmatprep.subr.mxu0 0.0
    %2522 = vmatpush1.msra.mxu0 0.0
    %2523 = vmatprep.mubr.f32.mxu0 0.0
    %2524 = vmatmul.mubr.f32.gmra.mrb[0].mxu0 %v2376
    %v2525 = vpop.f32.mrb[0].mxu0
    %v2526 = vadd.f32 %v2458, %v2525
    %v2527 = vpop.f32.mrb[0].mxu0
    %2528 = vdwg.mxu0
    %s2529 = scalar_lea.vmem [#allocation2], 320
    %v2530 = vld [vmem:[%s2529] sm:$0xff]
    %v2531 = vld [vmem:[%s2529 + $0x8] sm:$0xff]
    %v2532 = vld [vmem:[%s2529 + $0x10] sm:$0xff]
    %v2533 = vld [vmem:[%s2529 + $0x18] sm:$0xff]
    %v2534 = vld [vmem:[%s2369 + $0x2] sm:$0x1]
    %v2535 = vlaneseq
    %v2536 = vshrl.u32 %v2535, 7
    %v2537 = vsub.s32 0, %v2536
    %v2538 = vrot.slane %v2534, %v2537
    %2539 = vmatprep.subr.mxu0 0.0
    %2540 = vmatpush1.msra.mxu0 %v2530
    %2541 = vmatprep.subr.mxu0 0.0
    %2542 = vmatpush1.msra.mxu0 %v2531
    %2543 = vmatprep.subr.mxu0 0.0
    %2544 = vmatpush1.msra.mxu0 %v2532
    %2545 = vmatprep.subr.mxu0 0.0
    %2546 = vmatpush1.msra.mxu0 %v2533
    %2547 = vmatprep.subr.mxu0 0.0
    %2548 = vmatpush1.msra.mxu0 0.0
    %2549 = vmatprep.subr.mxu0 0.0
    %2550 = vmatpush1.msra.mxu0 0.0
    %2551 = vmatprep.subr.mxu0 0.0
    %2552 = vmatpush1.msra.mxu0 0.0
    %2553 = vmatprep.subr.mxu0 0.0
    %2554 = vmatpush1.msra.mxu0 0.0
    %2555 = vmatprep.subr.mxu0 0.0
    %2556 = vmatpush1.msra.mxu0 0.0
    %2557 = vmatprep.subr.mxu0 0.0
    %2558 = vmatpush1.msra.mxu0 0.0
    %2559 = vmatprep.subr.mxu0 0.0
    %2560 = vmatpush1.msra.mxu0 0.0
    %2561 = vmatprep.subr.mxu0 0.0
    %2562 = vmatpush1.msra.mxu0 0.0
    %2563 = vmatprep.subr.mxu0 0.0
    %2564 = vmatpush1.msra.mxu0 0.0
    %2565 = vmatprep.subr.mxu0 0.0
    %2566 = vmatpush1.msra.mxu0 0.0
    %2567 = vmatprep.subr.mxu0 0.0
    %2568 = vmatpush1.msra.mxu0 0.0
    %2569 = vmatprep.subr.mxu0 0.0
    %2570 = vmatpush1.msra.mxu0 0.0
    %2571 = vmatprep.subr.mxu0 0.0
    %2572 = vmatpush1.msra.mxu0 0.0
    %2573 = vmatprep.subr.mxu0 0.0
    %2574 = vmatpush1.msra.mxu0 0.0
    %2575 = vmatprep.subr.mxu0 0.0
    %2576 = vmatpush1.msra.mxu0 0.0
    %2577 = vmatprep.subr.mxu0 0.0
    %2578 = vmatpush1.msra.mxu0 0.0
    %2579 = vmatprep.subr.mxu0 0.0
    %2580 = vmatpush1.msra.mxu0 0.0
    %2581 = vmatprep.subr.mxu0 0.0
    %2582 = vmatpush1.msra.mxu0 0.0
    %2583 = vmatprep.subr.mxu0 0.0
    %2584 = vmatpush1.msra.mxu0 0.0
    %2585 = vmatprep.subr.mxu0 0.0
    %2586 = vmatpush1.msra.mxu0 0.0
    %2587 = vmatprep.subr.mxu0 0.0
    %2588 = vmatpush1.msra.mxu0 0.0
    %2589 = vmatprep.subr.mxu0 0.0
    %2590 = vmatpush1.msra.mxu0 0.0
    %2591 = vmatprep.subr.mxu0 0.0
    %2592 = vmatpush1.msra.mxu0 0.0
    %2593 = vmatprep.subr.mxu0 0.0
    %2594 = vmatpush1.msra.mxu0 0.0
    %2595 = vmatprep.subr.mxu0 0.0
    %2596 = vmatpush1.msra.mxu0 0.0
    %2597 = vmatprep.subr.mxu0 0.0
    %2598 = vmatpush1.msra.mxu0 0.0
    %2599 = vmatprep.subr.mxu0 0.0
    %2600 = vmatpush1.msra.mxu0 0.0
    %2601 = vmatprep.subr.mxu0 0.0
    %2602 = vmatpush1.msra.mxu0 0.0
    %2603 = vmatprep.mubr.f32.mxu0 0.0
    %2604 = vmatmul.mubr.f32.gmra.mrb[0].mxu0 %v2376
    %v2605 = vpop.f32.mrb[0].mxu0
    %v2606 = vadd.f32 %v2538, %v2605
    %v2607 = vpop.f32.mrb[0].mxu0
    %2608 = vdwg.mxu0
    %2610 = vrot.lane.b32.xlu0 %v2448, 120
    %v2611 = vpop.permute.xlu0 %2610
    %2612 = vrot.lane.b32.xlu0 %v2448, 112
    %v2613 = vpop.permute.xlu0 %2612
    %2614 = vrot.lane.b32.xlu0 %v2448, 104
    %v2615 = vpop.permute.xlu0 %2614
    %2617 = vrot.lane.b32.xlu0 %v2526, 120
    %v2618 = vpop.permute.xlu0 %2617
    %2619 = vrot.lane.b32.xlu0 %v2526, 112
    %v2620 = vpop.permute.xlu0 %2619
    %2621 = vrot.lane.b32.xlu0 %v2526, 104
    %v2622 = vpop.permute.xlu0 %2621
    %2624 = vrot.lane.b32.xlu0 %v2606, 120
    %v2625 = vpop.permute.xlu0 %2624
    %2627 = vrot.lane.b32.xlu0 %v2606, 112
    %v2628 = vpop.permute.xlu0 %2627
    %2630 = vrot.lane.b32.xlu0 %v2606, 104
    %v2631 = vpop.permute.xlu0 %2630
    %v2633 = vsel %vm326, %v2448, 0
    %v2635 = vsel %vm326, %v2526, 0
    %2637 = vmatprep.subr.mxu0 0.0
    %2638 = vmatpush1.xpose.msra.mxu0 %v2635
    %2639 = vmatprep.subr.mxu0 0.0
    %2640 = vmatpush1.xpose.msra.mxu0 0.0
    %2641 = vmatprep.subr.mxu0 0.0
    %2642 = vmatpush1.xpose.msra.mxu0 0.0
    %2643 = vmatprep.subr.mxu0 0.0
    %2644 = vmatpush1.xpose.msra.mxu0 0.0
    %2645 = vmatprep.subr.mxu0 0.0
    %2646 = vmatpush1.xpose.msra.mxu0 0.0
    %2647 = vmatprep.subr.mxu0 0.0
    %2648 = vmatpush1.xpose.msra.mxu0 0.0
    %2649 = vmatprep.subr.mxu0 0.0
    %2650 = vmatpush1.xpose.msra.mxu0 0.0
    %2651 = vmatprep.subr.mxu0 0.0
    %2652 = vmatpush1.xpose.msra.mxu0 0.0
    %2653 = vmatprep.subr.mxu0 0.0
    %2654 = vmatpush1.xpose.msra.mxu0 0.0
    %2655 = vmatprep.subr.mxu0 0.0
    %2656 = vmatpush1.xpose.msra.mxu0 0.0
    %2657 = vmatprep.subr.mxu0 0.0
    %2658 = vmatpush1.xpose.msra.mxu0 0.0
    %2659 = vmatprep.subr.mxu0 0.0
    %2660 = vmatpush1.xpose.msra.mxu0 0.0
    %2661 = vmatprep.subr.mxu0 0.0
    %2662 = vmatpush1.xpose.msra.mxu0 0.0
    %2663 = vmatprep.subr.mxu0 0.0
    %2664 = vmatpush1.xpose.msra.mxu0 0.0
    %2665 = vmatprep.subr.mxu0 0.0
    %2666 = vmatpush1.xpose.msra.mxu0 0.0
    %2667 = vmatprep.subr.mxu0 0.0
    %2668 = vmatpush1.xpose.msra.mxu0 0.0
    %2669 = vmatprep.subr.mxu0 0.0
    %2670 = vmatpush1.xpose.msra.mxu0 0.0
    %2671 = vmatprep.subr.mxu0 0.0
    %2672 = vmatpush1.xpose.msra.mxu0 0.0
    %2673 = vmatprep.subr.mxu0 0.0
    %2674 = vmatpush1.xpose.msra.mxu0 0.0
    %2675 = vmatprep.subr.mxu0 0.0
    %2676 = vmatpush1.xpose.msra.mxu0 0.0
    %2677 = vmatprep.subr.mxu0 0.0
    %2678 = vmatpush1.xpose.msra.mxu0 0.0
    %2679 = vmatprep.subr.mxu0 0.0
    %2680 = vmatpush1.xpose.msra.mxu0 0.0
    %2681 = vmatprep.subr.mxu0 0.0
    %2682 = vmatpush1.xpose.msra.mxu0 0.0
    %2683 = vmatprep.subr.mxu0 0.0
    %2684 = vmatpush1.xpose.msra.mxu0 0.0
    %2685 = vmatprep.subr.mxu0 0.0
    %2686 = vmatpush1.xpose.msra.mxu0 0.0
    %2687 = vmatprep.subr.mxu0 0.0
    %2688 = vmatpush1.xpose.msra.mxu0 0.0
    %2689 = vmatprep.subr.mxu0 0.0
    %2690 = vmatpush1.xpose.msra.mxu0 0.0
    %2691 = vmatprep.subr.mxu0 0.0
    %2692 = vmatpush1.xpose.msra.mxu0 0.0
    %2693 = vmatprep.subr.mxu0 0.0
    %2694 = vmatpush1.xpose.msra.mxu0 0.0
    %2695 = vmatprep.subr.mxu0 0.0
    %2696 = vmatpush1.xpose.msra.mxu0 0.0
    %2697 = vmatprep.subr.mxu0 0.0
    %2698 = vmatpush1.xpose.msra.mxu0 0.0
    %2699 = vmatprep.subr.mxu0 0.0
    %2700 = vmatpush1.xpose.msra.mxu0 0.0
    %2701 = vmatprep.mubr.f32.mxu0 0.0
    %2702 = vmatmul.mubr.f32.gmra.mrb[0].mxu0 %v2633
    %v2703 = vpop.f32.mrb[0].mxu0
    %v2704 = vadd.f32 0.0, %v2703
    %v2705 = vpop.f32.mrb[0].mxu0
    %2706 = vdwg.mxu0
    %v2707 = vsel %vm326, %v2611, 0
    %v2709 = vsel %vm326, %v2618, 0
    %2711 = vmatprep.subr.mxu0 0.0
    %2712 = vmatpush1.xpose.msra.mxu0 %v2709
    %2713 = vmatprep.subr.mxu0 0.0
    %2714 = vmatpush1.xpose.msra.mxu0 0.0
    %2715 = vmatprep.subr.mxu0 0.0
    %2716 = vmatpush1.xpose.msra.mxu0 0.0
    %2717 = vmatprep.subr.mxu0 0.0
    %2718 = vmatpush1.xpose.msra.mxu0 0.0
    %2719 = vmatprep.subr.mxu0 0.0
    %2720 = vmatpush1.xpose.msra.mxu0 0.0
    %2721 = vmatprep.subr.mxu0 0.0
    %2722 = vmatpush1.xpose.msra.mxu0 0.0
    %2723 = vmatprep.subr.mxu0 0.0
    %2724 = vmatpush1.xpose.msra.mxu0 0.0
    %2725 = vmatprep.subr.mxu0 0.0
    %2726 = vmatpush1.xpose.msra.mxu0 0.0
    %2727 = vmatprep.subr.mxu0 0.0
    %2728 = vmatpush1.xpose.msra.mxu0 0.0
    %2729 = vmatprep.subr.mxu0 0.0
    %2730 = vmatpush1.xpose.msra.mxu0 0.0
    %2731 = vmatprep.subr.mxu0 0.0
    %2732 = vmatpush1.xpose.msra.mxu0 0.0
    %2733 = vmatprep.subr.mxu0 0.0
    %2734 = vmatpush1.xpose.msra.mxu0 0.0
    %2735 = vmatprep.subr.mxu0 0.0
    %2736 = vmatpush1.xpose.msra.mxu0 0.0
    %2737 = vmatprep.subr.mxu0 0.0
    %2738 = vmatpush1.xpose.msra.mxu0 0.0
    %2739 = vmatprep.subr.mxu0 0.0
    %2740 = vmatpush1.xpose.msra.mxu0 0.0
    %2741 = vmatprep.subr.mxu0 0.0
    %2742 = vmatpush1.xpose.msra.mxu0 0.0
    %2743 = vmatprep.subr.mxu0 0.0
    %2744 = vmatpush1.xpose.msra.mxu0 0.0
    %2745 = vmatprep.subr.mxu0 0.0
    %2746 = vmatpush1.xpose.msra.mxu0 0.0
    %2747 = vmatprep.subr.mxu0 0.0
    %2748 = vmatpush1.xpose.msra.mxu0 0.0
    %2749 = vmatprep.subr.mxu0 0.0
    %2750 = vmatpush1.xpose.msra.mxu0 0.0
    %2751 = vmatprep.subr.mxu0 0.0
    %2752 = vmatpush1.xpose.msra.mxu0 0.0
    %2753 = vmatprep.subr.mxu0 0.0
    %2754 = vmatpush1.xpose.msra.mxu0 0.0
    %2755 = vmatprep.subr.mxu0 0.0
    %2756 = vmatpush1.xpose.msra.mxu0 0.0
    %2757 = vmatprep.subr.mxu0 0.0
    %2758 = vmatpush1.xpose.msra.mxu0 0.0
    %2759 = vmatprep.subr.mxu0 0.0
    %2760 = vmatpush1.xpose.msra.mxu0 0.0
    %2761 = vmatprep.subr.mxu0 0.0
    %2762 = vmatpush1.xpose.msra.mxu0 0.0
    %2763 = vmatprep.subr.mxu0 0.0
    %2764 = vmatpush1.xpose.msra.mxu0 0.0
    %2765 = vmatprep.subr.mxu0 0.0
    %2766 = vmatpush1.xpose.msra.mxu0 0.0
    %2767 = vmatprep.subr.mxu0 0.0
    %2768 = vmatpush1.xpose.msra.mxu0 0.0
    %2769 = vmatprep.subr.mxu0 0.0
    %2770 = vmatpush1.xpose.msra.mxu0 0.0
    %2771 = vmatprep.subr.mxu0 0.0
    %2772 = vmatpush1.xpose.msra.mxu0 0.0
    %2773 = vmatprep.subr.mxu0 0.0
    %2774 = vmatpush1.xpose.msra.mxu0 0.0
    %2775 = vmatprep.mubr.f32.mxu0 0.0
    %2776 = vmatmul.mubr.f32.gmra.mrb[0].mxu0 %v2707
    %v2777 = vpop.f32.mrb[0].mxu0
    %v2778 = vadd.f32 0.0, %v2777
    %v2779 = vpop.f32.mrb[0].mxu0
    %2780 = vdwg.mxu0
    %v2781 = vsel %vm326, %v2613, 0
    %v2783 = vsel %vm326, %v2620, 0
    %2785 = vmatprep.subr.mxu0 0.0
    %2786 = vmatpush1.xpose.msra.mxu0 %v2783
    %2787 = vmatprep.subr.mxu0 0.0
    %2788 = vmatpush1.xpose.msra.mxu0 0.0
    %2789 = vmatprep.subr.mxu0 0.0
    %2790 = vmatpush1.xpose.msra.mxu0 0.0
    %2791 = vmatprep.subr.mxu0 0.0
    %2792 = vmatpush1.xpose.msra.mxu0 0.0
    %2793 = vmatprep.subr.mxu0 0.0
    %2794 = vmatpush1.xpose.msra.mxu0 0.0
    %2795 = vmatprep.subr.mxu0 0.0
    %2796 = vmatpush1.xpose.msra.mxu0 0.0
    %2797 = vmatprep.subr.mxu0 0.0
    %2798 = vmatpush1.xpose.msra.mxu0 0.0
    %2799 = vmatprep.subr.mxu0 0.0
    %2800 = vmatpush1.xpose.msra.mxu0 0.0
    %2801 = vmatprep.subr.mxu0 0.0
    %2802 = vmatpush1.xpose.msra.mxu0 0.0
    %2803 = vmatprep.subr.mxu0 0.0
    %2804 = vmatpush1.xpose.msra.mxu0 0.0
    %2805 = vmatprep.subr.mxu0 0.0
    %2806 = vmatpush1.xpose.msra.mxu0 0.0
    %2807 = vmatprep.subr.mxu0 0.0
    %2808 = vmatpush1.xpose.msra.mxu0 0.0
    %2809 = vmatprep.subr.mxu0 0.0
    %2810 = vmatpush1.xpose.msra.mxu0 0.0
    %2811 = vmatprep.subr.mxu0 0.0
    %2812 = vmatpush1.xpose.msra.mxu0 0.0
    %2813 = vmatprep.subr.mxu0 0.0
    %2814 = vmatpush1.xpose.msra.mxu0 0.0
    %2815 = vmatprep.subr.mxu0 0.0
    %2816 = vmatpush1.xpose.msra.mxu0 0.0
    %2817 = vmatprep.subr.mxu0 0.0
    %2818 = vmatpush1.xpose.msra.mxu0 0.0
    %2819 = vmatprep.subr.mxu0 0.0
    %2820 = vmatpush1.xpose.msra.mxu0 0.0
    %2821 = vmatprep.subr.mxu0 0.0
    %2822 = vmatpush1.xpose.msra.mxu0 0.0
    %2823 = vmatprep.subr.mxu0 0.0
    %2824 = vmatpush1.xpose.msra.mxu0 0.0
    %2825 = vmatprep.subr.mxu0 0.0
    %2826 = vmatpush1.xpose.msra.mxu0 0.0
    %2827 = vmatprep.subr.mxu0 0.0
    %2828 = vmatpush1.xpose.msra.mxu0 0.0
    %2829 = vmatprep.subr.mxu0 0.0
    %2830 = vmatpush1.xpose.msra.mxu0 0.0
    %2831 = vmatprep.subr.mxu0 0.0
    %2832 = vmatpush1.xpose.msra.mxu0 0.0
    %2833 = vmatprep.subr.mxu0 0.0
    %2834 = vmatpush1.xpose.msra.mxu0 0.0
    %2835 = vmatprep.subr.mxu0 0.0
    %2836 = vmatpush1.xpose.msra.mxu0 0.0
    %2837 = vmatprep.subr.mxu0 0.0
    %2838 = vmatpush1.xpose.msra.mxu0 0.0
    %2839 = vmatprep.subr.mxu0 0.0
    %2840 = vmatpush1.xpose.msra.mxu0 0.0
    %2841 = vmatprep.subr.mxu0 0.0
    %2842 = vmatpush1.xpose.msra.mxu0 0.0
    %2843 = vmatprep.subr.mxu0 0.0
    %2844 = vmatpush1.xpose.msra.mxu0 0.0
    %2845 = vmatprep.subr.mxu0 0.0
    %2846 = vmatpush1.xpose.msra.mxu0 0.0
    %2847 = vmatprep.subr.mxu0 0.0
    %2848 = vmatpush1.xpose.msra.mxu0 0.0
    %2849 = vmatprep.mubr.f32.mxu0 0.0
    %2850 = vmatmul.mubr.f32.gmra.mrb[0].mxu0 %v2781
    %v2851 = vpop.f32.mrb[0].mxu0
    %v2852 = vadd.f32 0.0, %v2851
    %v2853 = vpop.f32.mrb[0].mxu0
    %2854 = vdwg.mxu0
    %v2855 = vsel %vm326, %v2615, 0
    %v2857 = vsel %vm326, %v2622, 0
    %2859 = vmatprep.subr.mxu0 0.0
    %2860 = vmatpush1.xpose.msra.mxu0 %v2857
    %2861 = vmatprep.subr.mxu0 0.0
    %2862 = vmatpush1.xpose.msra.mxu0 0.0
    %2863 = vmatprep.subr.mxu0 0.0
    %2864 = vmatpush1.xpose.msra.mxu0 0.0
    %2865 = vmatprep.subr.mxu0 0.0
    %2866 = vmatpush1.xpose.msra.mxu0 0.0
    %2867 = vmatprep.subr.mxu0 0.0
    %2868 = vmatpush1.xpose.msra.mxu0 0.0
    %2869 = vmatprep.subr.mxu0 0.0
    %2870 = vmatpush1.xpose.msra.mxu0 0.0
    %2871 = vmatprep.subr.mxu0 0.0
    %2872 = vmatpush1.xpose.msra.mxu0 0.0
    %2873 = vmatprep.subr.mxu0 0.0
    %2874 = vmatpush1.xpose.msra.mxu0 0.0
    %2875 = vmatprep.subr.mxu0 0.0
    %2876 = vmatpush1.xpose.msra.mxu0 0.0
    %2877 = vmatprep.subr.mxu0 0.0
    %2878 = vmatpush1.xpose.msra.mxu0 0.0
    %2879 = vmatprep.subr.mxu0 0.0
    %2880 = vmatpush1.xpose.msra.mxu0 0.0
    %2881 = vmatprep.subr.mxu0 0.0
    %2882 = vmatpush1.xpose.msra.mxu0 0.0
    %2883 = vmatprep.subr.mxu0 0.0
    %2884 = vmatpush1.xpose.msra.mxu0 0.0
    %2885 = vmatprep.subr.mxu0 0.0
    %2886 = vmatpush1.xpose.msra.mxu0 0.0
    %2887 = vmatprep.subr.mxu0 0.0
    %2888 = vmatpush1.xpose.msra.mxu0 0.0
    %2889 = vmatprep.subr.mxu0 0.0
    %2890 = vmatpush1.xpose.msra.mxu0 0.0
    %2891 = vmatprep.subr.mxu0 0.0
    %2892 = vmatpush1.xpose.msra.mxu0 0.0
    %2893 = vmatprep.subr.mxu0 0.0
    %2894 = vmatpush1.xpose.msra.mxu0 0.0
    %2895 = vmatprep.subr.mxu0 0.0
    %2896 = vmatpush1.xpose.msra.mxu0 0.0
    %2897 = vmatprep.subr.mxu0 0.0
    %2898 = vmatpush1.xpose.msra.mxu0 0.0
    %2899 = vmatprep.subr.mxu0 0.0
    %2900 = vmatpush1.xpose.msra.mxu0 0.0
    %2901 = vmatprep.subr.mxu0 0.0
    %2902 = vmatpush1.xpose.msra.mxu0 0.0
    %2903 = vmatprep.subr.mxu0 0.0
    %2904 = vmatpush1.xpose.msra.mxu0 0.0
    %2905 = vmatprep.subr.mxu0 0.0
    %2906 = vmatpush1.xpose.msra.mxu0 0.0
    %2907 = vmatprep.subr.mxu0 0.0
    %2908 = vmatpush1.xpose.msra.mxu0 0.0
    %2909 = vmatprep.subr.mxu0 0.0
    %2910 = vmatpush1.xpose.msra.mxu0 0.0
    %2911 = vmatprep.subr.mxu0 0.0
    %2912 = vmatpush1.xpose.msra.mxu0 0.0
    %2913 = vmatprep.subr.mxu0 0.0
    %2914 = vmatpush1.xpose.msra.mxu0 0.0
    %2915 = vmatprep.subr.mxu0 0.0
    %2916 = vmatpush1.xpose.msra.mxu0 0.0
    %2917 = vmatprep.subr.mxu0 0.0
    %2918 = vmatpush1.xpose.msra.mxu0 0.0
    %2919 = vmatprep.subr.mxu0 0.0
    %2920 = vmatpush1.xpose.msra.mxu0 0.0
    %2921 = vmatprep.subr.mxu0 0.0
    %2922 = vmatpush1.xpose.msra.mxu0 0.0
    %2923 = vmatprep.mubr.f32.mxu0 0.0
    %2924 = vmatmul.mubr.f32.gmra.mrb[0].mxu0 %v2855
    %v2925 = vpop.f32.mrb[0].mxu0
    %v2926 = vadd.f32 0.0, %v2925
    %v2927 = vpop.f32.mrb[0].mxu0
    %2928 = vdwg.mxu0
    %v2929 = vsel %vm624, -1e+30, %v2704
    %v2930 = vsel %vm624, -1e+30, %v2778
    %v2931 = vsel %vm624, -1e+30, %v2852
    %v2932 = vsel %vm624, -1e+30, %v2926
    %v2933 = vsel %vm326, %v2929, -inf
    %2934 = vmax.xlane.f32.xlu0 %v2933
    %v2935 = vpop.xlane.xlu0 %2934
    %v2936 = vsel %vm326, %v2930, -inf
    %2937 = vmax.xlane.f32.xlu0 %v2936
    %v2938 = vpop.xlane.xlu0 %2937
    %v2939 = vsel %vm326, %v2931, -inf
    %2940 = vmax.xlane.f32.xlu0 %v2939
    %v2941 = vpop.xlane.xlu0 %2940
    %v2942 = vsel %vm326, %v2932, -inf
    %2943 = vmax.xlane.f32.xlu0 %v2942
    %v2944 = vpop.xlane.xlu0 %2943
    %v2945 = vsub.f32 %v2929, %v2935
    %v2946 = vsub.f32 %v2930, %v2938
    %v2947 = vsub.f32 %v2931, %v2941
    %v2948 = vsub.f32 %v2932, %v2944
    %v2949 = vmul.f32 %v2945, 1.442695
    %v2950 = vpow.pop %v2949
    %v2951 = vmul.f32 %v2946, 1.442695
    %v2952 = vpow.pop %v2951
    %v2953 = vmul.f32 %v2947, 1.442695
    %v2954 = vpow.pop %v2953
    %v2955 = vmul.f32 %v2948, 1.442695
    %v2956 = vpow.pop %v2955
    %v2957 = vsel %vm326, %v2950, 0.0
    %2958 = vadd.xlane.f32.xlu0 %v2957
    %v2959 = vpop.xlane.xlu0 %2958
    %v2960 = vsel %vm326, %v2952, 0.0
    %2961 = vadd.xlane.f32.xlu0 %v2960
    %v2962 = vpop.xlane.xlu0 %2961
    %v2963 = vsel %vm326, %v2954, 0.0
    %2964 = vadd.xlane.f32.xlu0 %v2963
    %v2965 = vpop.xlane.xlu0 %2964
    %v2966 = vsel %vm326, %v2956, 0.0
    %2967 = vadd.xlane.f32.xlu0 %v2966
    %v2968 = vpop.xlane.xlu0 %2967
    %v2969 = vrcp.pop %v2959
    %v2970 = vrcp.pop %v2962
    %v2971 = vrcp.pop %v2965
    %v2972 = vrcp.pop %v2968
    %v2973 = vmul.f32 %v2950, %v2969
    %v2974 = vmul.f32 %v2952, %v2970
    %v2975 = vmul.f32 %v2954, %v2971
    %v2976 = vmul.f32 %v2956, %v2972
    %v2978 = vsel %vm326, %v2973, 0
    %2980 = vmatprep.subr.mxu0 0.0
    %2981 = vmatpush1.msra.mxu0 %v2606
    %2982 = vmatprep.subr.mxu0 0.0
    %2983 = vmatpush1.msra.mxu0 0.0
    %2984 = vmatprep.subr.mxu0 0.0
    %2985 = vmatpush1.msra.mxu0 0.0
    %2986 = vmatprep.subr.mxu0 0.0
    %2987 = vmatpush1.msra.mxu0 0.0
    %2988 = vmatprep.subr.mxu0 0.0
    %2989 = vmatpush1.msra.mxu0 0.0
    %2990 = vmatprep.subr.mxu0 0.0
    %2991 = vmatpush1.msra.mxu0 0.0
    %2992 = vmatprep.subr.mxu0 0.0
    %2993 = vmatpush1.msra.mxu0 0.0
    %2994 = vmatprep.subr.mxu0 0.0
    %2995 = vmatpush1.msra.mxu0 0.0
    %2996 = vmatprep.subr.mxu0 0.0
    %2997 = vmatpush1.msra.mxu0 0.0
    %2998 = vmatprep.subr.mxu0 0.0
    %2999 = vmatpush1.msra.mxu0 0.0
    %3000 = vmatprep.subr.mxu0 0.0
    %3001 = vmatpush1.msra.mxu0 0.0
    %3002 = vmatprep.subr.mxu0 0.0
    %3003 = vmatpush1.msra.mxu0 0.0
    %3004 = vmatprep.subr.mxu0 0.0
    %3005 = vmatpush1.msra.mxu0 0.0
    %3006 = vmatprep.subr.mxu0 0.0
    %3007 = vmatpush1.msra.mxu0 0.0
    %3008 = vmatprep.subr.mxu0 0.0
    %3009 = vmatpush1.msra.mxu0 0.0
    %3010 = vmatprep.subr.mxu0 0.0
    %3011 = vmatpush1.msra.mxu0 0.0
    %3012 = vmatprep.subr.mxu0 0.0
    %3013 = vmatpush1.msra.mxu0 0.0
    %3014 = vmatprep.subr.mxu0 0.0
    %3015 = vmatpush1.msra.mxu0 0.0
    %3016 = vmatprep.subr.mxu0 0.0
    %3017 = vmatpush1.msra.mxu0 0.0
    %3018 = vmatprep.subr.mxu0 0.0
    %3019 = vmatpush1.msra.mxu0 0.0
    %3020 = vmatprep.subr.mxu0 0.0
    %3021 = vmatpush1.msra.mxu0 0.0
    %3022 = vmatprep.subr.mxu0 0.0
    %3023 = vmatpush1.msra.mxu0 0.0
    %3024 = vmatprep.subr.mxu0 0.0
    %3025 = vmatpush1.msra.mxu0 0.0
    %3026 = vmatprep.subr.mxu0 0.0
    %3027 = vmatpush1.msra.mxu0 0.0
    %3028 = vmatprep.subr.mxu0 0.0
    %3029 = vmatpush1.msra.mxu0 0.0
    %3030 = vmatprep.subr.mxu0 0.0
    %3031 = vmatpush1.msra.mxu0 0.0
    %3032 = vmatprep.subr.mxu0 0.0
    %3033 = vmatpush1.msra.mxu0 0.0
    %3034 = vmatprep.subr.mxu0 0.0
    %3035 = vmatpush1.msra.mxu0 0.0
    %3036 = vmatprep.subr.mxu0 0.0
    %3037 = vmatpush1.msra.mxu0 0.0
    %3038 = vmatprep.subr.mxu0 0.0
    %3039 = vmatpush1.msra.mxu0 0.0
    %3040 = vmatprep.subr.mxu0 0.0
    %3041 = vmatpush1.msra.mxu0 0.0
    %3042 = vmatprep.subr.mxu0 0.0
    %3043 = vmatpush1.msra.mxu0 0.0
    %3044 = vmatprep.mubr.f32.mxu0 0.0
    %3045 = vmatmul.mubr.f32.gmra.mrb[0].mxu0 %v2978
    %v3046 = vpop.f32.mrb[0].mxu0
    %v3047 = vadd.f32 0.0, %v3046
    %v3048 = vpop.f32.mrb[0].mxu0
    %3049 = vdwg.mxu0
    %v3051 = vsel %vm326, %v2974, 0
    %3053 = vmatprep.subr.mxu0 0.0
    %3054 = vmatpush1.msra.mxu0 %v2625
    %3055 = vmatprep.subr.mxu0 0.0
    %3056 = vmatpush1.msra.mxu0 0.0
    %3057 = vmatprep.subr.mxu0 0.0
    %3058 = vmatpush1.msra.mxu0 0.0
    %3059 = vmatprep.subr.mxu0 0.0
    %3060 = vmatpush1.msra.mxu0 0.0
    %3061 = vmatprep.subr.mxu0 0.0
    %3062 = vmatpush1.msra.mxu0 0.0
    %3063 = vmatprep.subr.mxu0 0.0
    %3064 = vmatpush1.msra.mxu0 0.0
    %3065 = vmatprep.subr.mxu0 0.0
    %3066 = vmatpush1.msra.mxu0 0.0
    %3067 = vmatprep.subr.mxu0 0.0
    %3068 = vmatpush1.msra.mxu0 0.0
    %3069 = vmatprep.subr.mxu0 0.0
    %3070 = vmatpush1.msra.mxu0 0.0
    %3071 = vmatprep.subr.mxu0 0.0
    %3072 = vmatpush1.msra.mxu0 0.0
    %3073 = vmatprep.subr.mxu0 0.0
    %3074 = vmatpush1.msra.mxu0 0.0
    %3075 = vmatprep.subr.mxu0 0.0
    %3076 = vmatpush1.msra.mxu0 0.0
    %3077 = vmatprep.subr.mxu0 0.0
    %3078 = vmatpush1.msra.mxu0 0.0
    %3079 = vmatprep.subr.mxu0 0.0
    %3080 = vmatpush1.msra.mxu0 0.0
    %3081 = vmatprep.subr.mxu0 0.0
    %3082 = vmatpush1.msra.mxu0 0.0
    %3083 = vmatprep.subr.mxu0 0.0
    %3084 = vmatpush1.msra.mxu0 0.0
    %3085 = vmatprep.subr.mxu0 0.0
    %3086 = vmatpush1.msra.mxu0 0.0
    %3087 = vmatprep.subr.mxu0 0.0
    %3088 = vmatpush1.msra.mxu0 0.0
    %3089 = vmatprep.subr.mxu0 0.0
    %3090 = vmatpush1.msra.mxu0 0.0
    %3091 = vmatprep.subr.mxu0 0.0
    %3092 = vmatpush1.msra.mxu0 0.0
    %3093 = vmatprep.subr.mxu0 0.0
    %3094 = vmatpush1.msra.mxu0 0.0
    %3095 = vmatprep.subr.mxu0 0.0
    %3096 = vmatpush1.msra.mxu0 0.0
    %3097 = vmatprep.subr.mxu0 0.0
    %3098 = vmatpush1.msra.mxu0 0.0
    %3099 = vmatprep.subr.mxu0 0.0
    %3100 = vmatpush1.msra.mxu0 0.0
    %3101 = vmatprep.subr.mxu0 0.0
    %3102 = vmatpush1.msra.mxu0 0.0
    %3103 = vmatprep.subr.mxu0 0.0
    %3104 = vmatpush1.msra.mxu0 0.0
    %3105 = vmatprep.subr.mxu0 0.0
    %3106 = vmatpush1.msra.mxu0 0.0
    %3107 = vmatprep.subr.mxu0 0.0
    %3108 = vmatpush1.msra.mxu0 0.0
    %3109 = vmatprep.subr.mxu0 0.0
    %3110 = vmatpush1.msra.mxu0 0.0
    %3111 = vmatprep.subr.mxu0 0.0
    %3112 = vmatpush1.msra.mxu0 0.0
    %3113 = vmatprep.subr.mxu0 0.0
    %3114 = vmatpush1.msra.mxu0 0.0
    %3115 = vmatprep.subr.mxu0 0.0
    %3116 = vmatpush1.msra.mxu0 0.0
    %3117 = vmatprep.mubr.f32.mxu0 0.0
    %3118 = vmatmul.mubr.f32.gmra.mrb[0].mxu0 %v3051
    %v3119 = vpop.f32.mrb[0].mxu0
    %v3120 = vadd.f32 0.0, %v3119
    %v3121 = vpop.f32.mrb[0].mxu0
    %3122 = vdwg.mxu0
    %v3124 = vsel %vm326, %v2975, 0
    %3126 = vmatprep.subr.mxu0 0.0
    %3127 = vmatpush1.msra.mxu0 %v2628
    %3128 = vmatprep.subr.mxu0 0.0
    %3129 = vmatpush1.msra.mxu0 0.0
    %3130 = vmatprep.subr.mxu0 0.0
    %3131 = vmatpush1.msra.mxu0 0.0
    %3132 = vmatprep.subr.mxu0 0.0
    %3133 = vmatpush1.msra.mxu0 0.0
    %3134 = vmatprep.subr.mxu0 0.0
    %3135 = vmatpush1.msra.mxu0 0.0
    %3136 = vmatprep.subr.mxu0 0.0
    %3137 = vmatpush1.msra.mxu0 0.0
    %3138 = vmatprep.subr.mxu0 0.0
    %3139 = vmatpush1.msra.mxu0 0.0
    %3140 = vmatprep.subr.mxu0 0.0
    %3141 = vmatpush1.msra.mxu0 0.0
    %3142 = vmatprep.subr.mxu0 0.0
    %3143 = vmatpush1.msra.mxu0 0.0
    %3144 = vmatprep.subr.mxu0 0.0
    %3145 = vmatpush1.msra.mxu0 0.0
    %3146 = vmatprep.subr.mxu0 0.0
    %3147 = vmatpush1.msra.mxu0 0.0
    %3148 = vmatprep.subr.mxu0 0.0
    %3149 = vmatpush1.msra.mxu0 0.0
    %3150 = vmatprep.subr.mxu0 0.0
    %3151 = vmatpush1.msra.mxu0 0.0
    %3152 = vmatprep.subr.mxu0 0.0
    %3153 = vmatpush1.msra.mxu0 0.0
    %3154 = vmatprep.subr.mxu0 0.0
    %3155 = vmatpush1.msra.mxu0 0.0
    %3156 = vmatprep.subr.mxu0 0.0
    %3157 = vmatpush1.msra.mxu0 0.0
    %3158 = vmatprep.subr.mxu0 0.0
    %3159 = vmatpush1.msra.mxu0 0.0
    %3160 = vmatprep.subr.mxu0 0.0
    %3161 = vmatpush1.msra.mxu0 0.0
    %3162 = vmatprep.subr.mxu0 0.0
    %3163 = vmatpush1.msra.mxu0 0.0
    %3164 = vmatprep.subr.mxu0 0.0
    %3165 = vmatpush1.msra.mxu0 0.0
    %3166 = vmatprep.subr.mxu0 0.0
    %3167 = vmatpush1.msra.mxu0 0.0
    %3168 = vmatprep.subr.mxu0 0.0
    %3169 = vmatpush1.msra.mxu0 0.0
    %3170 = vmatprep.subr.mxu0 0.0
    %3171 = vmatpush1.msra.mxu0 0.0
    %3172 = vmatprep.subr.mxu0 0.0
    %3173 = vmatpush1.msra.mxu0 0.0
    %3174 = vmatprep.subr.mxu0 0.0
    %3175 = vmatpush1.msra.mxu0 0.0
    %3176 = vmatprep.subr.mxu0 0.0
    %3177 = vmatpush1.msra.mxu0 0.0
    %3178 = vmatprep.subr.mxu0 0.0
    %3179 = vmatpush1.msra.mxu0 0.0
    %3180 = vmatprep.subr.mxu0 0.0
    %3181 = vmatpush1.msra.mxu0 0.0
    %3182 = vmatprep.subr.mxu0 0.0
    %3183 = vmatpush1.msra.mxu0 0.0
    %3184 = vmatprep.subr.mxu0 0.0
    %3185 = vmatpush1.msra.mxu0 0.0
    %3186 = vmatprep.subr.mxu0 0.0
    %3187 = vmatpush1.msra.mxu0 0.0
    %3188 = vmatprep.subr.mxu0 0.0
    %3189 = vmatpush1.msra.mxu0 0.0
    %3190 = vmatprep.mubr.f32.mxu0 0.0
    %3191 = vmatmul.mubr.f32.gmra.mrb[0].mxu0 %v3124
    %v3192 = vpop.f32.mrb[0].mxu0
    %v3193 = vadd.f32 0.0, %v3192
    %v3194 = vpop.f32.mrb[0].mxu0
    %3195 = vdwg.mxu0
    %v3197 = vsel %vm326, %v2976, 0
    %3199 = vmatprep.subr.mxu0 0.0
    %3200 = vmatpush1.msra.mxu0 %v2631
    %3201 = vmatprep.subr.mxu0 0.0
    %3202 = vmatpush1.msra.mxu0 0.0
    %3203 = vmatprep.subr.mxu0 0.0
    %3204 = vmatpush1.msra.mxu0 0.0
    %3205 = vmatprep.subr.mxu0 0.0
    %3206 = vmatpush1.msra.mxu0 0.0
    %3207 = vmatprep.subr.mxu0 0.0
    %3208 = vmatpush1.msra.mxu0 0.0
    %3209 = vmatprep.subr.mxu0 0.0
    %3210 = vmatpush1.msra.mxu0 0.0
    %3211 = vmatprep.subr.mxu0 0.0
    %3212 = vmatpush1.msra.mxu0 0.0
    %3213 = vmatprep.subr.mxu0 0.0
    %3214 = vmatpush1.msra.mxu0 0.0
    %3215 = vmatprep.subr.mxu0 0.0
    %3216 = vmatpush1.msra.mxu0 0.0
    %3217 = vmatprep.subr.mxu0 0.0
    %3218 = vmatpush1.msra.mxu0 0.0
    %3219 = vmatprep.subr.mxu0 0.0
    %3220 = vmatpush1.msra.mxu0 0.0
    %3221 = vmatprep.subr.mxu0 0.0
    %3222 = vmatpush1.msra.mxu0 0.0
    %3223 = vmatprep.subr.mxu0 0.0
    %3224 = vmatpush1.msra.mxu0 0.0
    %3225 = vmatprep.subr.mxu0 0.0
    %3226 = vmatpush1.msra.mxu0 0.0
    %3227 = vmatprep.subr.mxu0 0.0
    %3228 = vmatpush1.msra.mxu0 0.0
    %3229 = vmatprep.subr.mxu0 0.0
    %3230 = vmatpush1.msra.mxu0 0.0
    %3231 = vmatprep.subr.mxu0 0.0
    %3232 = vmatpush1.msra.mxu0 0.0
    %3233 = vmatprep.subr.mxu0 0.0
    %3234 = vmatpush1.msra.mxu0 0.0
    %3235 = vmatprep.subr.mxu0 0.0
    %3236 = vmatpush1.msra.mxu0 0.0
    %3237 = vmatprep.subr.mxu0 0.0
    %3238 = vmatpush1.msra.mxu0 0.0
    %3239 = vmatprep.subr.mxu0 0.0
    %3240 = vmatpush1.msra.mxu0 0.0
    %3241 = vmatprep.subr.mxu0 0.0
    %3242 = vmatpush1.msra.mxu0 0.0
    %3243 = vmatprep.subr.mxu0 0.0
    %3244 = vmatpush1.msra.mxu0 0.0
    %3245 = vmatprep.subr.mxu0 0.0
    %3246 = vmatpush1.msra.mxu0 0.0
    %3247 = vmatprep.subr.mxu0 0.0
    %3248 = vmatpush1.msra.mxu0 0.0
    %3249 = vmatprep.subr.mxu0 0.0
    %3250 = vmatpush1.msra.mxu0 0.0
    %3251 = vmatprep.subr.mxu0 0.0
    %3252 = vmatpush1.msra.mxu0 0.0
    %3253 = vmatprep.subr.mxu0 0.0
    %3254 = vmatpush1.msra.mxu0 0.0
    %3255 = vmatprep.subr.mxu0 0.0
    %3256 = vmatpush1.msra.mxu0 0.0
    %3257 = vmatprep.subr.mxu0 0.0
    %3258 = vmatpush1.msra.mxu0 0.0
    %3259 = vmatprep.subr.mxu0 0.0
    %3260 = vmatpush1.msra.mxu0 0.0
    %3261 = vmatprep.subr.mxu0 0.0
    %3262 = vmatpush1.msra.mxu0 0.0
    %3263 = vmatprep.mubr.f32.mxu0 0.0
    %3264 = vmatmul.mubr.f32.gmra.mrb[0].mxu0 %v3197
    %v3265 = vpop.f32.mrb[0].mxu0
    %v3266 = vadd.f32 0.0, %v3265
    %v3267 = vpop.f32.mrb[0].mxu0
    %3268 = vdwg.mxu0
    %3270 = vrot.lane.b32.xlu0 %v3120, 8
    %v3271 = vpop.permute.xlu0 %3270
    %3274 = vrot.lane.b32.xlu0 %v3193, 16
    %v3275 = vpop.permute.xlu0 %3274
    %3278 = vrot.lane.b32.xlu0 %v3266, 24
    %v3279 = vpop.permute.xlu0 %3278
    %v3281 = vsel %vm326, %v3047, %v3271
    %v3282 = vsel %vm978, %v3281, %v3275
    %v3283 = vsel %vm980, %v3282, %v3279
    %s3284 = scalar_lea.vmem [#allocation2], 352
    %v3285 = vld [vmem:[%s3284] sm:$0xff]
    %v3286 = vld [vmem:[%s3284 + $0x8] sm:$0xff]
    %v3287 = vld [vmem:[%s3284 + $0x10] sm:$0xff]
    %v3288 = vld [vmem:[%s3284 + $0x18] sm:$0xff]
    %v3289 = vld [vmem:[%s2369 + $0x3] sm:$0x1]
    %v3290 = vlaneseq
    %v3291 = vshrl.u32 %v3290, 7
    %v3292 = vsub.s32 0, %v3291
    %v3293 = vrot.slane %v3289, %v3292
    %v3295 = vsel %vm67, %v3283, 0
    %3297 = vmatprep.subr.mxu0 0.0
    %3298 = vmatpush1.msra.mxu0 %v3285
    %3299 = vmatprep.subr.mxu0 0.0
    %3300 = vmatpush1.msra.mxu0 %v3286
    %3301 = vmatprep.subr.mxu0 0.0
    %3302 = vmatpush1.msra.mxu0 %v3287
    %3303 = vmatprep.subr.mxu0 0.0
    %3304 = vmatpush1.msra.mxu0 %v3288
    %3305 = vmatprep.subr.mxu0 0.0
    %3306 = vmatpush1.msra.mxu0 0.0
    %3307 = vmatprep.subr.mxu0 0.0
    %3308 = vmatpush1.msra.mxu0 0.0
    %3309 = vmatprep.subr.mxu0 0.0
    %3310 = vmatpush1.msra.mxu0 0.0
    %3311 = vmatprep.subr.mxu0 0.0
    %3312 = vmatpush1.msra.mxu0 0.0
    %3313 = vmatprep.subr.mxu0 0.0
    %3314 = vmatpush1.msra.mxu0 0.0
    %3315 = vmatprep.subr.mxu0 0.0
    %3316 = vmatpush1.msra.mxu0 0.0
    %3317 = vmatprep.subr.mxu0 0.0
    %3318 = vmatpush1.msra.mxu0 0.0
    %3319 = vmatprep.subr.mxu0 0.0
    %3320 = vmatpush1.msra.mxu0 0.0
    %3321 = vmatprep.subr.mxu0 0.0
    %3322 = vmatpush1.msra.mxu0 0.0
    %3323 = vmatprep.subr.mxu0 0.0
    %3324 = vmatpush1.msra.mxu0 0.0
    %3325 = vmatprep.subr.mxu0 0.0
    %3326 = vmatpush1.msra.mxu0 0.0
    %3327 = vmatprep.subr.mxu0 0.0
    %3328 = vmatpush1.msra.mxu0 0.0
    %3329 = vmatprep.subr.mxu0 0.0
    %3330 = vmatpush1.msra.mxu0 0.0
    %3331 = vmatprep.subr.mxu0 0.0
    %3332 = vmatpush1.msra.mxu0 0.0
    %3333 = vmatprep.subr.mxu0 0.0
    %3334 = vmatpush1.msra.mxu0 0.0
    %3335 = vmatprep.subr.mxu0 0.0
    %3336 = vmatpush1.msra.mxu0 0.0
    %3337 = vmatprep.subr.mxu0 0.0
    %3338 = vmatpush1.msra.mxu0 0.0
    %3339 = vmatprep.subr.mxu0 0.0
    %3340 = vmatpush1.msra.mxu0 0.0
    %3341 = vmatprep.subr.mxu0 0.0
    %3342 = vmatpush1.msra.mxu0 0.0
    %3343 = vmatprep.subr.mxu0 0.0
    %3344 = vmatpush1.msra.mxu0 0.0
    %3345 = vmatprep.subr.mxu0 0.0
    %3346 = vmatpush1.msra.mxu0 0.0
    %3347 = vmatprep.subr.mxu0 0.0
    %3348 = vmatpush1.msra.mxu0 0.0
    %3349 = vmatprep.subr.mxu0 0.0
    %3350 = vmatpush1.msra.mxu0 0.0
    %3351 = vmatprep.subr.mxu0 0.0
    %3352 = vmatpush1.msra.mxu0 0.0
    %3353 = vmatprep.subr.mxu0 0.0
    %3354 = vmatpush1.msra.mxu0 0.0
    %3355 = vmatprep.subr.mxu0 0.0
    %3356 = vmatpush1.msra.mxu0 0.0
    %3357 = vmatprep.subr.mxu0 0.0
    %3358 = vmatpush1.msra.mxu0 0.0
    %3359 = vmatprep.subr.mxu0 0.0
    %3360 = vmatpush1.msra.mxu0 0.0
    %3361 = vmatprep.mubr.f32.mxu0 0.0
    %3362 = vmatmul.mubr.f32.gmra.mrb[0].mxu0 %v3295
    %v3363 = vpop.f32.mrb[0].mxu0
    %v3364 = vadd.f32 %v3293, %v3363
    %v3365 = vpop.f32.mrb[0].mxu0
    %3366 = vdwg.mxu0
    %v3367 = vadd.f32 %v2363, %v3364
    %v3368 = vld [vmem:[%s4 + $0x3] sm:$0x1]
    %v3369 = vld [vmem:[%s5 + $0x3] sm:$0x1]
    %v3370 = vsel %vm67, %v3367, 0.0
    %3371 = vadd.xlane.f32.xlu0 %v3370
    %v3372 = vpop.xlane.xlu0 %3371
    %v3373 = vmul.f32 %v3372, %v1071
    %v3374 = vsub.f32 %v3367, %v3373
    %v3375 = vmul.f32 %v3374, %v3374
    %v3376 = vsel %vm67, %v3375, 0.0
    %3377 = vadd.xlane.f32.xlu0 %v3376
    %v3378 = vpop.xlane.xlu0 %3377
    %v3379 = vmul.f32 %v3378, %v1071
    %v3380 = vadd.f32 %v3379, 1e-05
    %v3381 = vrsqrt.pop %v3380
    %v3382 = vmul.f32 %v3374, %v3381
    %v3383 = vlaneseq
    %v3384 = vshrl.u32 %v3383, 7
    %v3385 = vsub.s32 0, %v3384
    %v3386 = vrot.slane %v3368, %v3385
    %v3387 = vmul.f32 %v3382, %v3386
    %v3388 = vlaneseq
    %v3389 = vshrl.u32 %v3388, 7
    %v3390 = vsub.s32 0, %v3389
    %v3391 = vrot.slane %v3369, %v3390
    %v3392 = vadd.f32 %v3387, %v3391
    %s3393 = scalar_lea.vmem [#allocation2], 384
    %v3394 = vld [vmem:[%s3393] sm:$0xff]
    %v3395 = vld [vmem:[%s3393 + $0x8] sm:$0xff]
    %v3396 = vld [vmem:[%s3393 + $0x10] sm:$0xff]
    %v3397 = vld [vmem:[%s3393 + $0x18] sm:$0xff]
    %v3398 = vld [vmem:[%s2369 + $0x4] sm:$0x1]
    %v3399 = vlaneseq
    %v3400 = vshrl.u32 %v3399, 7
    %v3401 = vsub.s32 0, %v3400
    %v3402 = vrot.slane %v3398, %v3401
    %v3404 = vsel %vm67, %v3392, 0
    %3406 = vmatprep.subr.mxu0 0.0
    %3407 = vmatpush1.msra.mxu0 %v3394
    %3408 = vmatprep.subr.mxu0 0.0
    %3409 = vmatpush1.msra.mxu0 %v3395
    %3410 = vmatprep.subr.mxu0 0.0
    %3411 = vmatpush1.msra.mxu0 %v3396
    %3412 = vmatprep.subr.mxu0 0.0
    %3413 = vmatpush1.msra.mxu0 %v3397
    %3414 = vmatprep.subr.mxu0 0.0
    %3415 = vmatpush1.msra.mxu0 0.0
    %3416 = vmatprep.subr.mxu0 0.0
    %3417 = vmatpush1.msra.mxu0 0.0
    %3418 = vmatprep.subr.mxu0 0.0
    %3419 = vmatpush1.msra.mxu0 0.0
    %3420 = vmatprep.subr.mxu0 0.0
    %3421 = vmatpush1.msra.mxu0 0.0
    %3422 = vmatprep.subr.mxu0 0.0
    %3423 = vmatpush1.msra.mxu0 0.0
    %3424 = vmatprep.subr.mxu0 0.0
    %3425 = vmatpush1.msra.mxu0 0.0
    %3426 = vmatprep.subr.mxu0 0.0
    %3427 = vmatpush1.msra.mxu0 0.0
    %3428 = vmatprep.subr.mxu0 0.0
    %3429 = vmatpush1.msra.mxu0 0.0
    %3430 = vmatprep.subr.mxu0 0.0
    %3431 = vmatpush1.msra.mxu0 0.0
    %3432 = vmatprep.subr.mxu0 0.0
    %3433 = vmatpush1.msra.mxu0 0.0
    %3434 = vmatprep.subr.mxu0 0.0
    %3435 = vmatpush1.msra.mxu0 0.0
    %3436 = vmatprep.subr.mxu0 0.0
    %3437 = vmatpush1.msra.mxu0 0.0
    %3438 = vmatprep.subr.mxu0 0.0
    %3439 = vmatpush1.msra.mxu0 0.0
    %3440 = vmatprep.subr.mxu0 0.0
    %3441 = vmatpush1.msra.mxu0 0.0
    %3442 = vmatprep.subr.mxu0 0.0
    %3443 = vmatpush1.msra.mxu0 0.0
    %3444 = vmatprep.subr.mxu0 0.0
    %3445 = vmatpush1.msra.mxu0 0.0
    %3446 = vmatprep.subr.mxu0 0.0
    %3447 = vmatpush1.msra.mxu0 0.0
    %3448 = vmatprep.subr.mxu0 0.0
    %3449 = vmatpush1.msra.mxu0 0.0
    %3450 = vmatprep.subr.mxu0 0.0
    %3451 = vmatpush1.msra.mxu0 0.0
    %3452 = vmatprep.subr.mxu0 0.0
    %3453 = vmatpush1.msra.mxu0 0.0
    %3454 = vmatprep.subr.mxu0 0.0
    %3455 = vmatpush1.msra.mxu0 0.0
    %3456 = vmatprep.subr.mxu0 0.0
    %3457 = vmatpush1.msra.mxu0 0.0
    %3458 = vmatprep.subr.mxu0 0.0
    %3459 = vmatpush1.msra.mxu0 0.0
    %3460 = vmatprep.subr.mxu0 0.0
    %3461 = vmatpush1.msra.mxu0 0.0
    %3462 = vmatprep.subr.mxu0 0.0
    %3463 = vmatpush1.msra.mxu0 0.0
    %3464 = vmatprep.subr.mxu0 0.0
    %3465 = vmatpush1.msra.mxu0 0.0
    %3466 = vmatprep.subr.mxu0 0.0
    %3467 = vmatpush1.msra.mxu0 0.0
    %3468 = vmatprep.subr.mxu0 0.0
    %3469 = vmatpush1.msra.mxu0 0.0
    %3470 = vmatprep.mubr.f32.mxu0 0.0
    %3471 = vmatmul.mubr.f32.gmra.mrb[0].mxu0 %v3404
    %v3472 = vpop.f32.mrb[0].mxu0
    %v3473 = vadd.f32 %v3402, %v3472
    %v3474 = vpop.f32.mrb[0].mxu0
    %3475 = vdwg.mxu0
    %v3476 = vmul.f32 %v3473, 0.35355338
    %s3477 = scalar_lea.vmem [#allocation2], 416
    %v3478 = vld [vmem:[%s3477] sm:$0xff]
    %v3479 = vld [vmem:[%s3477 + $0x8] sm:$0xff]
    %v3480 = vld [vmem:[%s3477 + $0x10] sm:$0xff]
    %v3481 = vld [vmem:[%s3477 + $0x18] sm:$0xff]
    %v3482 = vld [vmem:[%s2369 + $0x5] sm:$0x1]
    %v3483 = vlaneseq
    %v3484 = vshrl.u32 %v3483, 7
    %v3485 = vsub.s32 0, %v3484
    %v3486 = vrot.slane %v3482, %v3485
    %3487 = vmatprep.subr.mxu0 0.0
    %3488 = vmatpush1.msra.mxu0 %v3478
    %3489 = vmatprep.subr.mxu0 0.0
    %3490 = vmatpush1.msra.mxu0 %v3479
    %3491 = vmatprep.subr.mxu0 0.0
    %3492 = vmatpush1.msra.mxu0 %v3480
    %3493 = vmatprep.subr.mxu0 0.0
    %3494 = vmatpush1.msra.mxu0 %v3481
    %3495 = vmatprep.subr.mxu0 0.0
    %3496 = vmatpush1.msra.mxu0 0.0
    %3497 = vmatprep.subr.mxu0 0.0
    %3498 = vmatpush1.msra.mxu0 0.0
    %3499 = vmatprep.subr.mxu0 0.0
    %3500 = vmatpush1.msra.mxu0 0.0
    %3501 = vmatprep.subr.mxu0 0.0
    %3502 = vmatpush1.msra.mxu0 0.0
    %3503 = vmatprep.subr.mxu0 0.0
    %3504 = vmatpush1.msra.mxu0 0.0
    %3505 = vmatprep.subr.mxu0 0.0
    %3506 = vmatpush1.msra.mxu0 0.0
    %3507 = vmatprep.subr.mxu0 0.0
    %3508 = vmatpush1.msra.mxu0 0.0
    %3509 = vmatprep.subr.mxu0 0.0
    %3510 = vmatpush1.msra.mxu0 0.0
    %3511 = vmatprep.subr.mxu0 0.0
    %3512 = vmatpush1.msra.mxu0 0.0
    %3513 = vmatprep.subr.mxu0 0.0
    %3514 = vmatpush1.msra.mxu0 0.0
    %3515 = vmatprep.subr.mxu0 0.0
    %3516 = vmatpush1.msra.mxu0 0.0
    %3517 = vmatprep.subr.mxu0 0.0
    %3518 = vmatpush1.msra.mxu0 0.0
    %3519 = vmatprep.subr.mxu0 0.0
    %3520 = vmatpush1.msra.mxu0 0.0
    %3521 = vmatprep.subr.mxu0 0.0
    %3522 = vmatpush1.msra.mxu0 0.0
    %3523 = vmatprep.subr.mxu0 0.0
    %3524 = vmatpush1.msra.mxu0 0.0
    %3525 = vmatprep.subr.mxu0 0.0
    %3526 = vmatpush1.msra.mxu0 0.0
    %3527 = vmatprep.subr.mxu0 0.0
    %3528 = vmatpush1.msra.mxu0 0.0
    %3529 = vmatprep.subr.mxu0 0.0
    %3530 = vmatpush1.msra.mxu0 0.0
    %3531 = vmatprep.subr.mxu0 0.0
    %3532 = vmatpush1.msra.mxu0 0.0
    %3533 = vmatprep.subr.mxu0 0.0
    %3534 = vmatpush1.msra.mxu0 0.0
    %3535 = vmatprep.subr.mxu0 0.0
    %3536 = vmatpush1.msra.mxu0 0.0
    %3537 = vmatprep.subr.mxu0 0.0
    %3538 = vmatpush1.msra.mxu0 0.0
    %3539 = vmatprep.subr.mxu0 0.0
    %3540 = vmatpush1.msra.mxu0 0.0
    %3541 = vmatprep.subr.mxu0 0.0
    %3542 = vmatpush1.msra.mxu0 0.0
    %3543 = vmatprep.subr.mxu0 0.0
    %3544 = vmatpush1.msra.mxu0 0.0
    %3545 = vmatprep.subr.mxu0 0.0
    %3546 = vmatpush1.msra.mxu0 0.0
    %3547 = vmatprep.subr.mxu0 0.0
    %3548 = vmatpush1.msra.mxu0 0.0
    %3549 = vmatprep.subr.mxu0 0.0
    %3550 = vmatpush1.msra.mxu0 0.0
    %3551 = vmatprep.mubr.f32.mxu0 0.0
    %3552 = vmatmul.mubr.f32.gmra.mrb[0].mxu0 %v1187
    %v3553 = vpop.f32.mrb[0].mxu0
    %v3554 = vadd.f32 %v3486, %v3553
    %v3555 = vpop.f32.mrb[0].mxu0
    %3556 = vmatprep.mubr.f32.mxu0 0.0
    %3557 = vmatmul.mubr.f32.gmra.mrb[0].mxu0 %v1190
    %v3558 = vpop.f32.mrb[0].mxu0
    %v3559 = vadd.f32 %v3486, %v3558
    %v3560 = vpop.f32.mrb[0].mxu0
    %3561 = vdwg.mxu0
    %s3562 = scalar_lea.vmem [#allocation2], 448
    %v3563 = vld [vmem:[%s3562] sm:$0xff]
    %v3564 = vld [vmem:[%s3562 + $0x8] sm:$0xff]
    %v3565 = vld [vmem:[%s3562 + $0x10] sm:$0xff]
    %v3566 = vld [vmem:[%s3562 + $0x18] sm:$0xff]
    %v3567 = vld [vmem:[%s2369 + $0x6] sm:$0x1]
    %v3568 = vlaneseq
    %v3569 = vshrl.u32 %v3568, 7
    %v3570 = vsub.s32 0, %v3569
    %v3571 = vrot.slane %v3567, %v3570
    %3572 = vmatprep.subr.mxu0 0.0
    %3573 = vmatpush1.msra.mxu0 %v3563
    %3574 = vmatprep.subr.mxu0 0.0
    %3575 = vmatpush1.msra.mxu0 %v3564
    %3576 = vmatprep.subr.mxu0 0.0
    %3577 = vmatpush1.msra.mxu0 %v3565
    %3578 = vmatprep.subr.mxu0 0.0
    %3579 = vmatpush1.msra.mxu0 %v3566
    %3580 = vmatprep.subr.mxu0 0.0
    %3581 = vmatpush1.msra.mxu0 0.0
    %3582 = vmatprep.subr.mxu0 0.0
    %3583 = vmatpush1.msra.mxu0 0.0
    %3584 = vmatprep.subr.mxu0 0.0
    %3585 = vmatpush1.msra.mxu0 0.0
    %3586 = vmatprep.subr.mxu0 0.0
    %3587 = vmatpush1.msra.mxu0 0.0
    %3588 = vmatprep.subr.mxu0 0.0
    %3589 = vmatpush1.msra.mxu0 0.0
    %3590 = vmatprep.subr.mxu0 0.0
    %3591 = vmatpush1.msra.mxu0 0.0
    %3592 = vmatprep.subr.mxu0 0.0
    %3593 = vmatpush1.msra.mxu0 0.0
    %3594 = vmatprep.subr.mxu0 0.0
    %3595 = vmatpush1.msra.mxu0 0.0
    %3596 = vmatprep.subr.mxu0 0.0
    %3597 = vmatpush1.msra.mxu0 0.0
    %3598 = vmatprep.subr.mxu0 0.0
    %3599 = vmatpush1.msra.mxu0 0.0
    %3600 = vmatprep.subr.mxu0 0.0
    %3601 = vmatpush1.msra.mxu0 0.0
    %3602 = vmatprep.subr.mxu0 0.0
    %3603 = vmatpush1.msra.mxu0 0.0
    %3604 = vmatprep.subr.mxu0 0.0
    %3605 = vmatpush1.msra.mxu0 0.0
    %3606 = vmatprep.subr.mxu0 0.0
    %3607 = vmatpush1.msra.mxu0 0.0
    %3608 = vmatprep.subr.mxu0 0.0
    %3609 = vmatpush1.msra.mxu0 0.0
    %3610 = vmatprep.subr.mxu0 0.0
    %3611 = vmatpush1.msra.mxu0 0.0
    %3612 = vmatprep.subr.mxu0 0.0
    %3613 = vmatpush1.msra.mxu0 0.0
    %3614 = vmatprep.subr.mxu0 0.0
    %3615 = vmatpush1.msra.mxu0 0.0
    %3616 = vmatprep.subr.mxu0 0.0
    %3617 = vmatpush1.msra.mxu0 0.0
    %3618 = vmatprep.subr.mxu0 0.0
    %3619 = vmatpush1.msra.mxu0 0.0
    %3620 = vmatprep.subr.mxu0 0.0
    %3621 = vmatpush1.msra.mxu0 0.0
    %3622 = vmatprep.subr.mxu0 0.0
    %3623 = vmatpush1.msra.mxu0 0.0
    %3624 = vmatprep.subr.mxu0 0.0
    %3625 = vmatpush1.msra.mxu0 0.0
    %3626 = vmatprep.subr.mxu0 0.0
    %3627 = vmatpush1.msra.mxu0 0.0
    %3628 = vmatprep.subr.mxu0 0.0
    %3629 = vmatpush1.msra.mxu0 0.0
    %3630 = vmatprep.subr.mxu0 0.0
    %3631 = vmatpush1.msra.mxu0 0.0
    %3632 = vmatprep.subr.mxu0 0.0
    %3633 = vmatpush1.msra.mxu0 0.0
    %3634 = vmatprep.subr.mxu0 0.0
    %3635 = vmatpush1.msra.mxu0 0.0
    %3636 = vmatprep.mubr.f32.mxu0 0.0
    %3637 = vmatmul.mubr.f32.gmra.mrb[0].mxu0 %v1187
    %v3638 = vpop.f32.mrb[0].mxu0
    %v3639 = vadd.f32 %v3571, %v3638
    %v3640 = vpop.f32.mrb[0].mxu0
    %3641 = vmatprep.mubr.f32.mxu0 0.0
    %3642 = vmatmul.mubr.f32.gmra.mrb[0].mxu0 %v1190
    %v3643 = vpop.f32.mrb[0].mxu0
    %v3644 = vadd.f32 %v3571, %v3643
    %v3645 = vpop.f32.mrb[0].mxu0
    %3646 = vdwg.mxu0
    %3648 = vrot.lane.b32.xlu0 %v3476, 120
    %v3649 = vpop.permute.xlu0 %3648
    %3650 = vrot.lane.b32.xlu0 %v3476, 112
    %v3651 = vpop.permute.xlu0 %3650
    %3652 = vrot.lane.b32.xlu0 %v3476, 104
    %v3653 = vpop.permute.xlu0 %3652
    %3656 = vrot.lane.b32.xlu0 %v3554, 120
    %v3657 = vpop.permute.xlu0 %3656
    %3658 = vrot.lane.b32.xlu0 %v3559, 120
    %v3659 = vpop.permute.xlu0 %3658
    %3660 = vrot.lane.b32.xlu0 %v3554, 112
    %v3661 = vpop.permute.xlu0 %3660
    %3662 = vrot.lane.b32.xlu0 %v3559, 112
    %v3663 = vpop.permute.xlu0 %3662
    %3664 = vrot.lane.b32.xlu0 %v3554, 104
    %v3665 = vpop.permute.xlu0 %3664
    %3666 = vrot.lane.b32.xlu0 %v3559, 104
    %v3667 = vpop.permute.xlu0 %3666
    %3670 = vrot.lane.b32.xlu0 %v3639, 120
    %v3671 = vpop.permute.xlu0 %3670
    %3672 = vrot.lane.b32.xlu0 %v3644, 120
    %v3673 = vpop.permute.xlu0 %3672
    %3675 = vrot.lane.b32.xlu0 %v3639, 112
    %v3676 = vpop.permute.xlu0 %3675
    %3677 = vrot.lane.b32.xlu0 %v3644, 112
    %v3678 = vpop.permute.xlu0 %3677
    %3680 = vrot.lane.b32.xlu0 %v3639, 104
    %v3681 = vpop.permute.xlu0 %3680
    %3682 = vrot.lane.b32.xlu0 %v3644, 104
    %v3683 = vpop.permute.xlu0 %3682
    %v3685 = vsel %vm326, %v3476, 0
    %v3687 = vsel %vm326, %v3554, 0
    %v3689 = vsel %vm326, %v3559, 0
    %3691 = vmatprep.subr.mxu0 0.0
    %3692 = vmatpush1.xpose.msra.mxu0 %v3687
    %3693 = vmatprep.subr.mxu0 0.0
    %3694 = vmatpush1.xpose.msra.mxu0 %v3689
    %3695 = vmatprep.subr.mxu0 0.0
    %3696 = vmatpush1.xpose.msra.mxu0 0.0
    %3697 = vmatprep.subr.mxu0 0.0
    %3698 = vmatpush1.xpose.msra.mxu0 0.0
    %3699 = vmatprep.subr.mxu0 0.0
    %3700 = vmatpush1.xpose.msra.mxu0 0.0
    %3701 = vmatprep.subr.mxu0 0.0
    %3702 = vmatpush1.xpose.msra.mxu0 0.0
    %3703 = vmatprep.subr.mxu0 0.0
    %3704 = vmatpush1.xpose.msra.mxu0 0.0
    %3705 = vmatprep.subr.mxu0 0.0
    %3706 = vmatpush1.xpose.msra.mxu0 0.0
    %3707 = vmatprep.subr.mxu0 0.0
    %3708 = vmatpush1.xpose.msra.mxu0 0.0
    %3709 = vmatprep.subr.mxu0 0.0
    %3710 = vmatpush1.xpose.msra.mxu0 0.0
    %3711 = vmatprep.subr.mxu0 0.0
    %3712 = vmatpush1.xpose.msra.mxu0 0.0
    %3713 = vmatprep.subr.mxu0 0.0
    %3714 = vmatpush1.xpose.msra.mxu0 0.0
    %3715 = vmatprep.subr.mxu0 0.0
    %3716 = vmatpush1.xpose.msra.mxu0 0.0
    %3717 = vmatprep.subr.mxu0 0.0
    %3718 = vmatpush1.xpose.msra.mxu0 0.0
    %3719 = vmatprep.subr.mxu0 0.0
    %3720 = vmatpush1.xpose.msra.mxu0 0.0
    %3721 = vmatprep.subr.mxu0 0.0
    %3722 = vmatpush1.xpose.msra.mxu0 0.0
    %3723 = vmatprep.subr.mxu0 0.0
    %3724 = vmatpush1.xpose.msra.mxu0 0.0
    %3725 = vmatprep.subr.mxu0 0.0
    %3726 = vmatpush1.xpose.msra.mxu0 0.0
    %3727 = vmatprep.subr.mxu0 0.0
    %3728 = vmatpush1.xpose.msra.mxu0 0.0
    %3729 = vmatprep.subr.mxu0 0.0
    %3730 = vmatpush1.xpose.msra.mxu0 0.0
    %3731 = vmatprep.subr.mxu0 0.0
    %3732 = vmatpush1.xpose.msra.mxu0 0.0
    %3733 = vmatprep.subr.mxu0 0.0
    %3734 = vmatpush1.xpose.msra.mxu0 0.0
    %3735 = vmatprep.subr.mxu0 0.0
    %3736 = vmatpush1.xpose.msra.mxu0 0.0
    %3737 = vmatprep.subr.mxu0 0.0
    %3738 = vmatpush1.xpose.msra.mxu0 0.0
    %3739 = vmatprep.subr.mxu0 0.0
    %3740 = vmatpush1.xpose.msra.mxu0 0.0
    %3741 = vmatprep.subr.mxu0 0.0
    %3742 = vmatpush1.xpose.msra.mxu0 0.0
    %3743 = vmatprep.subr.mxu0 0.0
    %3744 = vmatpush1.xpose.msra.mxu0 0.0
    %3745 = vmatprep.subr.mxu0 0.0
    %3746 = vmatpush1.xpose.msra.mxu0 0.0
    %3747 = vmatprep.subr.mxu0 0.0
    %3748 = vmatpush1.xpose.msra.mxu0 0.0
    %3749 = vmatprep.subr.mxu0 0.0
    %3750 = vmatpush1.xpose.msra.mxu0 0.0
    %3751 = vmatprep.subr.mxu0 0.0
    %3752 = vmatpush1.xpose.msra.mxu0 0.0
    %3753 = vmatprep.subr.mxu0 0.0
    %3754 = vmatpush1.xpose.msra.mxu0 0.0
    %3755 = vmatprep.mubr.f32.mxu0 0.0
    %3756 = vmatmul.mubr.f32.gmra.mrb[0].mxu0 %v3685
    %v3757 = vpop.f32.mrb[0].mxu0
    %v3758 = vadd.f32 0.0, %v3757
    %v3759 = vpop.f32.mrb[0].mxu0
    %3760 = vdwg.mxu0
    %v3761 = vsel %vm326, %v3649, 0
    %v3763 = vsel %vm326, %v3657, 0
    %v3765 = vsel %vm326, %v3659, 0
    %3767 = vmatprep.subr.mxu0 0.0
    %3768 = vmatpush1.xpose.msra.mxu0 %v3763
    %3769 = vmatprep.subr.mxu0 0.0
    %3770 = vmatpush1.xpose.msra.mxu0 %v3765
    %3771 = vmatprep.subr.mxu0 0.0
    %3772 = vmatpush1.xpose.msra.mxu0 0.0
    %3773 = vmatprep.subr.mxu0 0.0
    %3774 = vmatpush1.xpose.msra.mxu0 0.0
    %3775 = vmatprep.subr.mxu0 0.0
    %3776 = vmatpush1.xpose.msra.mxu0 0.0
    %3777 = vmatprep.subr.mxu0 0.0
    %3778 = vmatpush1.xpose.msra.mxu0 0.0
    %3779 = vmatprep.subr.mxu0 0.0
    %3780 = vmatpush1.xpose.msra.mxu0 0.0
    %3781 = vmatprep.subr.mxu0 0.0
    %3782 = vmatpush1.xpose.msra.mxu0 0.0
    %3783 = vmatprep.subr.mxu0 0.0
    %3784 = vmatpush1.xpose.msra.mxu0 0.0
    %3785 = vmatprep.subr.mxu0 0.0
    %3786 = vmatpush1.xpose.msra.mxu0 0.0
    %3787 = vmatprep.subr.mxu0 0.0
    %3788 = vmatpush1.xpose.msra.mxu0 0.0
    %3789 = vmatprep.subr.mxu0 0.0
    %3790 = vmatpush1.xpose.msra.mxu0 0.0
    %3791 = vmatprep.subr.mxu0 0.0
    %3792 = vmatpush1.xpose.msra.mxu0 0.0
    %3793 = vmatprep.subr.mxu0 0.0
    %3794 = vmatpush1.xpose.msra.mxu0 0.0
    %3795 = vmatprep.subr.mxu0 0.0
    %3796 = vmatpush1.xpose.msra.mxu0 0.0
    %3797 = vmatprep.subr.mxu0 0.0
    %3798 = vmatpush1.xpose.msra.mxu0 0.0
    %3799 = vmatprep.subr.mxu0 0.0
    %3800 = vmatpush1.xpose.msra.mxu0 0.0
    %3801 = vmatprep.subr.mxu0 0.0
    %3802 = vmatpush1.xpose.msra.mxu0 0.0
    %3803 = vmatprep.subr.mxu0 0.0
    %3804 = vmatpush1.xpose.msra.mxu0 0.0
    %3805 = vmatprep.subr.mxu0 0.0
    %3806 = vmatpush1.xpose.msra.mxu0 0.0
    %3807 = vmatprep.subr.mxu0 0.0
    %3808 = vmatpush1.xpose.msra.mxu0 0.0
    %3809 = vmatprep.subr.mxu0 0.0
    %3810 = vmatpush1.xpose.msra.mxu0 0.0
    %3811 = vmatprep.subr.mxu0 0.0
    %3812 = vmatpush1.xpose.msra.mxu0 0.0
    %3813 = vmatprep.subr.mxu0 0.0
    %3814 = vmatpush1.xpose.msra.mxu0 0.0
    %3815 = vmatprep.subr.mxu0 0.0
    %3816 = vmatpush1.xpose.msra.mxu0 0.0
    %3817 = vmatprep.subr.mxu0 0.0
    %3818 = vmatpush1.xpose.msra.mxu0 0.0
    %3819 = vmatprep.subr.mxu0 0.0
    %3820 = vmatpush1.xpose.msra.mxu0 0.0
    %3821 = vmatprep.subr.mxu0 0.0
    %3822 = vmatpush1.xpose.msra.mxu0 0.0
    %3823 = vmatprep.subr.mxu0 0.0
    %3824 = vmatpush1.xpose.msra.mxu0 0.0
    %3825 = vmatprep.subr.mxu0 0.0
    %3826 = vmatpush1.xpose.msra.mxu0 0.0
    %3827 = vmatprep.subr.mxu0 0.0
    %3828 = vmatpush1.xpose.msra.mxu0 0.0
    %3829 = vmatprep.subr.mxu0 0.0
    %3830 = vmatpush1.xpose.msra.mxu0 0.0
    %3831 = vmatprep.mubr.f32.mxu0 0.0
    %3832 = vmatmul.mubr.f32.gmra.mrb[0].mxu0 %v3761
    %v3833 = vpop.f32.mrb[0].mxu0
    %v3834 = vadd.f32 0.0, %v3833
    %v3835 = vpop.f32.mrb[0].mxu0
    %3836 = vdwg.mxu0
    %v3837 = vsel %vm326, %v3651, 0
    %v3839 = vsel %vm326, %v3661, 0
    %v3841 = vsel %vm326, %v3663, 0
    %3843 = vmatprep.subr.mxu0 0.0
    %3844 = vmatpush1.xpose.msra.mxu0 %v3839
    %3845 = vmatprep.subr.mxu0 0.0
    %3846 = vmatpush1.xpose.msra.mxu0 %v3841
    %3847 = vmatprep.subr.mxu0 0.0
    %3848 = vmatpush1.xpose.msra.mxu0 0.0
    %3849 = vmatprep.subr.mxu0 0.0
    %3850 = vmatpush1.xpose.msra.mxu0 0.0
    %3851 = vmatprep.subr.mxu0 0.0
    %3852 = vmatpush1.xpose.msra.mxu0 0.0
    %3853 = vmatprep.subr.mxu0 0.0
    %3854 = vmatpush1.xpose.msra.mxu0 0.0
    %3855 = vmatprep.subr.mxu0 0.0
    %3856 = vmatpush1.xpose.msra.mxu0 0.0
    %3857 = vmatprep.subr.mxu0 0.0
    %3858 = vmatpush1.xpose.msra.mxu0 0.0
    %3859 = vmatprep.subr.mxu0 0.0
    %3860 = vmatpush1.xpose.msra.mxu0 0.0
    %3861 = vmatprep.subr.mxu0 0.0
    %3862 = vmatpush1.xpose.msra.mxu0 0.0
    %3863 = vmatprep.subr.mxu0 0.0
    %3864 = vmatpush1.xpose.msra.mxu0 0.0
    %3865 = vmatprep.subr.mxu0 0.0
    %3866 = vmatpush1.xpose.msra.mxu0 0.0
    %3867 = vmatprep.subr.mxu0 0.0
    %3868 = vmatpush1.xpose.msra.mxu0 0.0
    %3869 = vmatprep.subr.mxu0 0.0
    %3870 = vmatpush1.xpose.msra.mxu0 0.0
    %3871 = vmatprep.subr.mxu0 0.0
    %3872 = vmatpush1.xpose.msra.mxu0 0.0
    %3873 = vmatprep.subr.mxu0 0.0
    %3874 = vmatpush1.xpose.msra.mxu0 0.0
    %3875 = vmatprep.subr.mxu0 0.0
    %3876 = vmatpush1.xpose.msra.mxu0 0.0
    %3877 = vmatprep.subr.mxu0 0.0
    %3878 = vmatpush1.xpose.msra.mxu0 0.0
    %3879 = vmatprep.subr.mxu0 0.0
    %3880 = vmatpush1.xpose.msra.mxu0 0.0
    %3881 = vmatprep.subr.mxu0 0.0
    %3882 = vmatpush1.xpose.msra.mxu0 0.0
    %3883 = vmatprep.subr.mxu0 0.0
    %3884 = vmatpush1.xpose.msra.mxu0 0.0
    %3885 = vmatprep.subr.mxu0 0.0
    %3886 = vmatpush1.xpose.msra.mxu0 0.0
    %3887 = vmatprep.subr.mxu0 0.0
    %3888 = vmatpush1.xpose.msra.mxu0 0.0
    %3889 = vmatprep.subr.mxu0 0.0
    %3890 = vmatpush1.xpose.msra.mxu0 0.0
    %3891 = vmatprep.subr.mxu0 0.0
    %3892 = vmatpush1.xpose.msra.mxu0 0.0
    %3893 = vmatprep.subr.mxu0 0.0
    %3894 = vmatpush1.xpose.msra.mxu0 0.0
    %3895 = vmatprep.subr.mxu0 0.0
    %3896 = vmatpush1.xpose.msra.mxu0 0.0
    %3897 = vmatprep.subr.mxu0 0.0
    %3898 = vmatpush1.xpose.msra.mxu0 0.0
    %3899 = vmatprep.subr.mxu0 0.0
    %3900 = vmatpush1.xpose.msra.mxu0 0.0
    %3901 = vmatprep.subr.mxu0 0.0
    %3902 = vmatpush1.xpose.msra.mxu0 0.0
    %3903 = vmatprep.subr.mxu0 0.0
    %3904 = vmatpush1.xpose.msra.mxu0 0.0
    %3905 = vmatprep.subr.mxu0 0.0
    %3906 = vmatpush1.xpose.msra.mxu0 0.0
    %3907 = vmatprep.mubr.f32.mxu0 0.0
    %3908 = vmatmul.mubr.f32.gmra.mrb[0].mxu0 %v3837
    %v3909 = vpop.f32.mrb[0].mxu0
    %v3910 = vadd.f32 0.0, %v3909
    %v3911 = vpop.f32.mrb[0].mxu0
    %3912 = vdwg.mxu0
    %v3913 = vsel %vm326, %v3653, 0
    %v3915 = vsel %vm326, %v3665, 0
    %v3917 = vsel %vm326, %v3667, 0
    %3919 = vmatprep.subr.mxu0 0.0
    %3920 = vmatpush1.xpose.msra.mxu0 %v3915
    %3921 = vmatprep.subr.mxu0 0.0
    %3922 = vmatpush1.xpose.msra.mxu0 %v3917
    %3923 = vmatprep.subr.mxu0 0.0
    %3924 = vmatpush1.xpose.msra.mxu0 0.0
    %3925 = vmatprep.subr.mxu0 0.0
    %3926 = vmatpush1.xpose.msra.mxu0 0.0
    %3927 = vmatprep.subr.mxu0 0.0
    %3928 = vmatpush1.xpose.msra.mxu0 0.0
    %3929 = vmatprep.subr.mxu0 0.0
    %3930 = vmatpush1.xpose.msra.mxu0 0.0
    %3931 = vmatprep.subr.mxu0 0.0
    %3932 = vmatpush1.xpose.msra.mxu0 0.0
    %3933 = vmatprep.subr.mxu0 0.0
    %3934 = vmatpush1.xpose.msra.mxu0 0.0
    %3935 = vmatprep.subr.mxu0 0.0
    %3936 = vmatpush1.xpose.msra.mxu0 0.0
    %3937 = vmatprep.subr.mxu0 0.0
    %3938 = vmatpush1.xpose.msra.mxu0 0.0
    %3939 = vmatprep.subr.mxu0 0.0
    %3940 = vmatpush1.xpose.msra.mxu0 0.0
    %3941 = vmatprep.subr.mxu0 0.0
    %3942 = vmatpush1.xpose.msra.mxu0 0.0
    %3943 = vmatprep.subr.mxu0 0.0
    %3944 = vmatpush1.xpose.msra.mxu0 0.0
    %3945 = vmatprep.subr.mxu0 0.0
    %3946 = vmatpush1.xpose.msra.mxu0 0.0
    %3947 = vmatprep.subr.mxu0 0.0
    %3948 = vmatpush1.xpose.msra.mxu0 0.0
    %3949 = vmatprep.subr.mxu0 0.0
    %3950 = vmatpush1.xpose.msra.mxu0 0.0
    %3951 = vmatprep.subr.mxu0 0.0
    %3952 = vmatpush1.xpose.msra.mxu0 0.0
    %3953 = vmatprep.subr.mxu0 0.0
    %3954 = vmatpush1.xpose.msra.mxu0 0.0
    %3955 = vmatprep.subr.mxu0 0.0
    %3956 = vmatpush1.xpose.msra.mxu0 0.0
    %3957 = vmatprep.subr.mxu0 0.0
    %3958 = vmatpush1.xpose.msra.mxu0 0.0
    %3959 = vmatprep.subr.mxu0 0.0
    %3960 = vmatpush1.xpose.msra.mxu0 0.0
    %3961 = vmatprep.subr.mxu0 0.0
    %3962 = vmatpush1.xpose.msra.mxu0 0.0
    %3963 = vmatprep.subr.mxu0 0.0
    %3964 = vmatpush1.xpose.msra.mxu0 0.0
    %3965 = vmatprep.subr.mxu0 0.0
    %3966 = vmatpush1.xpose.msra.mxu0 0.0
    %3967 = vmatprep.subr.mxu0 0.0
    %3968 = vmatpush1.xpose.msra.mxu0 0.0
    %3969 = vmatprep.subr.mxu0 0.0
    %3970 = vmatpush1.xpose.msra.mxu0 0.0
    %3971 = vmatprep.subr.mxu0 0.0
    %3972 = vmatpush1.xpose.msra.mxu0 0.0
    %3973 = vmatprep.subr.mxu0 0.0
    %3974 = vmatpush1.xpose.msra.mxu0 0.0
    %3975 = vmatprep.subr.mxu0 0.0
    %3976 = vmatpush1.xpose.msra.mxu0 0.0
    %3977 = vmatprep.subr.mxu0 0.0
    %3978 = vmatpush1.xpose.msra.mxu0 0.0
    %3979 = vmatprep.subr.mxu0 0.0
    %3980 = vmatpush1.xpose.msra.mxu0 0.0
    %3981 = vmatprep.subr.mxu0 0.0
    %3982 = vmatpush1.xpose.msra.mxu0 0.0
    %3983 = vmatprep.mubr.f32.mxu0 0.0
    %3984 = vmatmul.mubr.f32.gmra.mrb[0].mxu0 %v3913
    %v3985 = vpop.f32.mrb[0].mxu0
    %v3986 = vadd.f32 0.0, %v3985
    %v3987 = vpop.f32.mrb[0].mxu0
    %3988 = vdwg.mxu0
    %v3989 = vsel %vm1694, %v3758, -inf
    %3990 = vmax.xlane.f32.xlu0 %v3989
    %v3991 = vpop.xlane.xlu0 %3990
    %v3992 = vsel %vm1694, %v3834, -inf
    %3993 = vmax.xlane.f32.xlu0 %v3992
    %v3994 = vpop.xlane.xlu0 %3993
    %v3995 = vsel %vm1694, %v3910, -inf
    %3996 = vmax.xlane.f32.xlu0 %v3995
    %v3997 = vpop.xlane.xlu0 %3996
    %v3998 = vsel %vm1694, %v3986, -inf
    %3999 = vmax.xlane.f32.xlu0 %v3998
    %v4000 = vpop.xlane.xlu0 %3999
    %v4001 = vsub.f32 %v3758, %v3991
    %v4002 = vsub.f32 %v3834, %v3994
    %v4003 = vsub.f32 %v3910, %v3997
    %v4004 = vsub.f32 %v3986, %v4000
    %v4005 = vmul.f32 %v4001, 1.442695
    %v4006 = vpow.pop %v4005
    %v4007 = vmul.f32 %v4002, 1.442695
    %v4008 = vpow.pop %v4007
    %v4009 = vmul.f32 %v4003, 1.442695
    %v4010 = vpow.pop %v4009
    %v4011 = vmul.f32 %v4004, 1.442695
    %v4012 = vpow.pop %v4011
    %v4013 = vsel %vm1694, %v4006, 0.0
    %4014 = vadd.xlane.f32.xlu0 %v4013
    %v4015 = vpop.xlane.xlu0 %4014
    %v4016 = vsel %vm1694, %v4008, 0.0
    %4017 = vadd.xlane.f32.xlu0 %v4016
    %v4018 = vpop.xlane.xlu0 %4017
    %v4019 = vsel %vm1694, %v4010, 0.0
    %4020 = vadd.xlane.f32.xlu0 %v4019
    %v4021 = vpop.xlane.xlu0 %4020
    %v4022 = vsel %vm1694, %v4012, 0.0
    %4023 = vadd.xlane.f32.xlu0 %v4022
    %v4024 = vpop.xlane.xlu0 %4023
    %v4025 = vrcp.pop %v4015
    %v4026 = vrcp.pop %v4018
    %v4027 = vrcp.pop %v4021
    %v4028 = vrcp.pop %v4024
    %v4029 = vmul.f32 %v4006, %v4025
    %v4030 = vmul.f32 %v4008, %v4026
    %v4031 = vmul.f32 %v4010, %v4027
    %v4032 = vmul.f32 %v4012, %v4028
    %v4034 = vsel %vm1694, %v4029, 0
    %v4036 = vsel %vm1742, %v3644, 0
    %4038 = vmatprep.subr.mxu0 0.0
    %4039 = vmatpush1.msra.mxu0 %v3639
    %4040 = vmatprep.subr.mxu0 0.0
    %4041 = vmatpush1.msra.mxu0 %v4036
    %4042 = vmatprep.subr.mxu0 0.0
    %4043 = vmatpush1.msra.mxu0 0.0
    %4044 = vmatprep.subr.mxu0 0.0
    %4045 = vmatpush1.msra.mxu0 0.0
    %4046 = vmatprep.subr.mxu0 0.0
    %4047 = vmatpush1.msra.mxu0 0.0
    %4048 = vmatprep.subr.mxu0 0.0
    %4049 = vmatpush1.msra.mxu0 0.0
    %4050 = vmatprep.subr.mxu0 0.0
    %4051 = vmatpush1.msra.mxu0 0.0
    %4052 = vmatprep.subr.mxu0 0.0
    %4053 = vmatpush1.msra.mxu0 0.0
    %4054 = vmatprep.subr.mxu0 0.0
    %4055 = vmatpush1.msra.mxu0 0.0
    %4056 = vmatprep.subr.mxu0 0.0
    %4057 = vmatpush1.msra.mxu0 0.0
    %4058 = vmatprep.subr.mxu0 0.0
    %4059 = vmatpush1.msra.mxu0 0.0
    %4060 = vmatprep.subr.mxu0 0.0
    %4061 = vmatpush1.msra.mxu0 0.0
    %4062 = vmatprep.subr.mxu0 0.0
    %4063 = vmatpush1.msra.mxu0 0.0
    %4064 = vmatprep.subr.mxu0 0.0
    %4065 = vmatpush1.msra.mxu0 0.0
    %4066 = vmatprep.subr.mxu0 0.0
    %4067 = vmatpush1.msra.mxu0 0.0
    %4068 = vmatprep.subr.mxu0 0.0
    %4069 = vmatpush1.msra.mxu0 0.0
    %4070 = vmatprep.subr.mxu0 0.0
    %4071 = vmatpush1.msra.mxu0 0.0
    %4072 = vmatprep.subr.mxu0 0.0
    %4073 = vmatpush1.msra.mxu0 0.0
    %4074 = vmatprep.subr.mxu0 0.0
    %4075 = vmatpush1.msra.mxu0 0.0
    %4076 = vmatprep.subr.mxu0 0.0
    %4077 = vmatpush1.msra.mxu0 0.0
    %4078 = vmatprep.subr.mxu0 0.0
    %4079 = vmatpush1.msra.mxu0 0.0
    %4080 = vmatprep.subr.mxu0 0.0
    %4081 = vmatpush1.msra.mxu0 0.0
    %4082 = vmatprep.subr.mxu0 0.0
    %4083 = vmatpush1.msra.mxu0 0.0
    %4084 = vmatprep.subr.mxu0 0.0
    %4085 = vmatpush1.msra.mxu0 0.0
    %4086 = vmatprep.subr.mxu0 0.0
    %4087 = vmatpush1.msra.mxu0 0.0
    %4088 = vmatprep.subr.mxu0 0.0
    %4089 = vmatpush1.msra.mxu0 0.0
    %4090 = vmatprep.subr.mxu0 0.0
    %4091 = vmatpush1.msra.mxu0 0.0
    %4092 = vmatprep.subr.mxu0 0.0
    %4093 = vmatpush1.msra.mxu0 0.0
    %4094 = vmatprep.subr.mxu0 0.0
    %4095 = vmatpush1.msra.mxu0 0.0
    %4096 = vmatprep.subr.mxu0 0.0
    %4097 = vmatpush1.msra.mxu0 0.0
    %4098 = vmatprep.subr.mxu0 0.0
    %4099 = vmatpush1.msra.mxu0 0.0
    %4100 = vmatprep.subr.mxu0 0.0
    %4101 = vmatpush1.msra.mxu0 0.0
    %4102 = vmatprep.mubr.f32.mxu0 0.0
    %4103 = vmatmul.mubr.f32.gmra.mrb[0].mxu0 %v4034
    %v4104 = vpop.f32.mrb[0].mxu0
    %v4105 = vadd.f32 0.0, %v4104
    %v4106 = vpop.f32.mrb[0].mxu0
    %4107 = vdwg.mxu0
    %v4109 = vsel %vm1694, %v4030, 0
    %v4111 = vsel %vm1742, %v3673, 0
    %4113 = vmatprep.subr.mxu0 0.0
    %4114 = vmatpush1.msra.mxu0 %v3671
    %4115 = vmatprep.subr.mxu0 0.0
    %4116 = vmatpush1.msra.mxu0 %v4111
    %4117 = vmatprep.subr.mxu0 0.0
    %4118 = vmatpush1.msra.mxu0 0.0
    %4119 = vmatprep.subr.mxu0 0.0
    %4120 = vmatpush1.msra.mxu0 0.0
    %4121 = vmatprep.subr.mxu0 0.0
    %4122 = vmatpush1.msra.mxu0 0.0
    %4123 = vmatprep.subr.mxu0 0.0
    %4124 = vmatpush1.msra.mxu0 0.0
    %4125 = vmatprep.subr.mxu0 0.0
    %4126 = vmatpush1.msra.mxu0 0.0
    %4127 = vmatprep.subr.mxu0 0.0
    %4128 = vmatpush1.msra.mxu0 0.0
    %4129 = vmatprep.subr.mxu0 0.0
    %4130 = vmatpush1.msra.mxu0 0.0
    %4131 = vmatprep.subr.mxu0 0.0
    %4132 = vmatpush1.msra.mxu0 0.0
    %4133 = vmatprep.subr.mxu0 0.0
    %4134 = vmatpush1.msra.mxu0 0.0
    %4135 = vmatprep.subr.mxu0 0.0
    %4136 = vmatpush1.msra.mxu0 0.0
    %4137 = vmatprep.subr.mxu0 0.0
    %4138 = vmatpush1.msra.mxu0 0.0
    %4139 = vmatprep.subr.mxu0 0.0
    %4140 = vmatpush1.msra.mxu0 0.0
    %4141 = vmatprep.subr.mxu0 0.0
    %4142 = vmatpush1.msra.mxu0 0.0
    %4143 = vmatprep.subr.mxu0 0.0
    %4144 = vmatpush1.msra.mxu0 0.0
    %4145 = vmatprep.subr.mxu0 0.0
    %4146 = vmatpush1.msra.mxu0 0.0
    %4147 = vmatprep.subr.mxu0 0.0
    %4148 = vmatpush1.msra.mxu0 0.0
    %4149 = vmatprep.subr.mxu0 0.0
    %4150 = vmatpush1.msra.mxu0 0.0
    %4151 = vmatprep.subr.mxu0 0.0
    %4152 = vmatpush1.msra.mxu0 0.0
    %4153 = vmatprep.subr.mxu0 0.0
    %4154 = vmatpush1.msra.mxu0 0.0
    %4155 = vmatprep.subr.mxu0 0.0
    %4156 = vmatpush1.msra.mxu0 0.0
    %4157 = vmatprep.subr.mxu0 0.0
    %4158 = vmatpush1.msra.mxu0 0.0
    %4159 = vmatprep.subr.mxu0 0.0
    %4160 = vmatpush1.msra.mxu0 0.0
    %4161 = vmatprep.subr.mxu0 0.0
    %4162 = vmatpush1.msra.mxu0 0.0
    %4163 = vmatprep.subr.mxu0 0.0
    %4164 = vmatpush1.msra.mxu0 0.0
    %4165 = vmatprep.subr.mxu0 0.0
    %4166 = vmatpush1.msra.mxu0 0.0
    %4167 = vmatprep.subr.mxu0 0.0
    %4168 = vmatpush1.msra.mxu0 0.0
    %4169 = vmatprep.subr.mxu0 0.0
    %4170 = vmatpush1.msra.mxu0 0.0
    %4171 = vmatprep.subr.mxu0 0.0
    %4172 = vmatpush1.msra.mxu0 0.0
    %4173 = vmatprep.subr.mxu0 0.0
    %4174 = vmatpush1.msra.mxu0 0.0
    %4175 = vmatprep.subr.mxu0 0.0
    %4176 = vmatpush1.msra.mxu0 0.0
    %4177 = vmatprep.mubr.f32.mxu0 0.0
    %4178 = vmatmul.mubr.f32.gmra.mrb[0].mxu0 %v4109
    %v4179 = vpop.f32.mrb[0].mxu0
    %v4180 = vadd.f32 0.0, %v4179
    %v4181 = vpop.f32.mrb[0].mxu0
    %4182 = vdwg.mxu0
    %v4184 = vsel %vm1694, %v4031, 0
    %v4186 = vsel %vm1742, %v3678, 0
    %4188 = vmatprep.subr.mxu0 0.0
    %4189 = vmatpush1.msra.mxu0 %v3676
    %4190 = vmatprep.subr.mxu0 0.0
    %4191 = vmatpush1.msra.mxu0 %v4186
    %4192 = vmatprep.subr.mxu0 0.0
    %4193 = vmatpush1.msra.mxu0 0.0
    %4194 = vmatprep.subr.mxu0 0.0
    %4195 = vmatpush1.msra.mxu0 0.0
    %4196 = vmatprep.subr.mxu0 0.0
    %4197 = vmatpush1.msra.mxu0 0.0
    %4198 = vmatprep.subr.mxu0 0.0
    %4199 = vmatpush1.msra.mxu0 0.0
    %4200 = vmatprep.subr.mxu0 0.0
    %4201 = vmatpush1.msra.mxu0 0.0
    %4202 = vmatprep.subr.mxu0 0.0
    %4203 = vmatpush1.msra.mxu0 0.0
    %4204 = vmatprep.subr.mxu0 0.0
    %4205 = vmatpush1.msra.mxu0 0.0
    %4206 = vmatprep.subr.mxu0 0.0
    %4207 = vmatpush1.msra.mxu0 0.0
    %4208 = vmatprep.subr.mxu0 0.0
    %4209 = vmatpush1.msra.mxu0 0.0
    %4210 = vmatprep.subr.mxu0 0.0
    %4211 = vmatpush1.msra.mxu0 0.0
    %4212 = vmatprep.subr.mxu0 0.0
    %4213 = vmatpush1.msra.mxu0 0.0
    %4214 = vmatprep.subr.mxu0 0.0
    %4215 = vmatpush1.msra.mxu0 0.0
    %4216 = vmatprep.subr.mxu0 0.0
    %4217 = vmatpush1.msra.mxu0 0.0
    %4218 = vmatprep.subr.mxu0 0.0
    %4219 = vmatpush1.msra.mxu0 0.0
    %4220 = vmatprep.subr.mxu0 0.0
    %4221 = vmatpush1.msra.mxu0 0.0
    %4222 = vmatprep.subr.mxu0 0.0
    %4223 = vmatpush1.msra.mxu0 0.0
    %4224 = vmatprep.subr.mxu0 0.0
    %4225 = vmatpush1.msra.mxu0 0.0
    %4226 = vmatprep.subr.mxu0 0.0
    %4227 = vmatpush1.msra.mxu0 0.0
    %4228 = vmatprep.subr.mxu0 0.0
    %4229 = vmatpush1.msra.mxu0 0.0
    %4230 = vmatprep.subr.mxu0 0.0
    %4231 = vmatpush1.msra.mxu0 0.0
    %4232 = vmatprep.subr.mxu0 0.0
    %4233 = vmatpush1.msra.mxu0 0.0
    %4234 = vmatprep.subr.mxu0 0.0
    %4235 = vmatpush1.msra.mxu0 0.0
    %4236 = vmatprep.subr.mxu0 0.0
    %4237 = vmatpush1.msra.mxu0 0.0
    %4238 = vmatprep.subr.mxu0 0.0
    %4239 = vmatpush1.msra.mxu0 0.0
    %4240 = vmatprep.subr.mxu0 0.0
    %4241 = vmatpush1.msra.mxu0 0.0
    %4242 = vmatprep.subr.mxu0 0.0
    %4243 = vmatpush1.msra.mxu0 0.0
    %4244 = vmatprep.subr.mxu0 0.0
    %4245 = vmatpush1.msra.mxu0 0.0
    %4246 = vmatprep.subr.mxu0 0.0
    %4247 = vmatpush1.msra.mxu0 0.0
    %4248 = vmatprep.subr.mxu0 0.0
    %4249 = vmatpush1.msra.mxu0 0.0
    %4250 = vmatprep.subr.mxu0 0.0
    %4251 = vmatpush1.msra.mxu0 0.0
    %4252 = vmatprep.mubr.f32.mxu0 0.0
    %4253 = vmatmul.mubr.f32.gmra.mrb[0].mxu0 %v4184
    %v4254 = vpop.f32.mrb[0].mxu0
    %v4255 = vadd.f32 0.0, %v4254
    %v4256 = vpop.f32.mrb[0].mxu0
    %4257 = vdwg.mxu0
    %v4259 = vsel %vm1694, %v4032, 0
    %v4261 = vsel %vm1742, %v3683, 0
    %4263 = vmatprep.subr.mxu0 0.0
    %4264 = vmatpush1.msra.mxu0 %v3681
    %4265 = vmatprep.subr.mxu0 0.0
    %4266 = vmatpush1.msra.mxu0 %v4261
    %4267 = vmatprep.subr.mxu0 0.0
    %4268 = vmatpush1.msra.mxu0 0.0
    %4269 = vmatprep.subr.mxu0 0.0
    %4270 = vmatpush1.msra.mxu0 0.0
    %4271 = vmatprep.subr.mxu0 0.0
    %4272 = vmatpush1.msra.mxu0 0.0
    %4273 = vmatprep.subr.mxu0 0.0
    %4274 = vmatpush1.msra.mxu0 0.0
    %4275 = vmatprep.subr.mxu0 0.0
    %4276 = vmatpush1.msra.mxu0 0.0
    %4277 = vmatprep.subr.mxu0 0.0
    %4278 = vmatpush1.msra.mxu0 0.0
    %4279 = vmatprep.subr.mxu0 0.0
    %4280 = vmatpush1.msra.mxu0 0.0
    %4281 = vmatprep.subr.mxu0 0.0
    %4282 = vmatpush1.msra.mxu0 0.0
    %4283 = vmatprep.subr.mxu0 0.0
    %4284 = vmatpush1.msra.mxu0 0.0
    %4285 = vmatprep.subr.mxu0 0.0
    %4286 = vmatpush1.msra.mxu0 0.0
    %4287 = vmatprep.subr.mxu0 0.0
    %4288 = vmatpush1.msra.mxu0 0.0
    %4289 = vmatprep.subr.mxu0 0.0
    %4290 = vmatpush1.msra.mxu0 0.0
    %4291 = vmatprep.subr.mxu0 0.0
    %4292 = vmatpush1.msra.mxu0 0.0
    %4293 = vmatprep.subr.mxu0 0.0
    %4294 = vmatpush1.msra.mxu0 0.0
    %4295 = vmatprep.subr.mxu0 0.0
    %4296 = vmatpush1.msra.mxu0 0.0
    %4297 = vmatprep.subr.mxu0 0.0
    %4298 = vmatpush1.msra.mxu0 0.0
    %4299 = vmatprep.subr.mxu0 0.0
    %4300 = vmatpush1.msra.mxu0 0.0
    %4301 = vmatprep.subr.mxu0 0.0
    %4302 = vmatpush1.msra.mxu0 0.0
    %4303 = vmatprep.subr.mxu0 0.0
    %4304 = vmatpush1.msra.mxu0 0.0
    %4305 = vmatprep.subr.mxu0 0.0
    %4306 = vmatpush1.msra.mxu0 0.0
    %4307 = vmatprep.subr.mxu0 0.0
    %4308 = vmatpush1.msra.mxu0 0.0
    %4309 = vmatprep.subr.mxu0 0.0
    %4310 = vmatpush1.msra.mxu0 0.0
    %4311 = vmatprep.subr.mxu0 0.0
    %4312 = vmatpush1.msra.mxu0 0.0
    %4313 = vmatprep.subr.mxu0 0.0
    %4314 = vmatpush1.msra.mxu0 0.0
    %4315 = vmatprep.subr.mxu0 0.0
    %4316 = vmatpush1.msra.mxu0 0.0
    %4317 = vmatprep.subr.mxu0 0.0
    %4318 = vmatpush1.msra.mxu0 0.0
    %4319 = vmatprep.subr.mxu0 0.0
    %4320 = vmatpush1.msra.mxu0 0.0
    %4321 = vmatprep.subr.mxu0 0.0
    %4322 = vmatpush1.msra.mxu0 0.0
    %4323 = vmatprep.subr.mxu0 0.0
    %4324 = vmatpush1.msra.mxu0 0.0
    %4325 = vmatprep.subr.mxu0 0.0
    %4326 = vmatpush1.msra.mxu0 0.0
    %4327 = vmatprep.mubr.f32.mxu0 0.0
    %4328 = vmatmul.mubr.f32.gmra.mrb[0].mxu0 %v4259
    %v4329 = vpop.f32.mrb[0].mxu0
    %v4330 = vadd.f32 0.0, %v4329
    %v4331 = vpop.f32.mrb[0].mxu0
    %4332 = vdwg.mxu0
    %4334 = vrot.lane.b32.xlu0 %v4180, 8
    %v4335 = vpop.permute.xlu0 %4334
    %4338 = vrot.lane.b32.xlu0 %v4255, 16
    %v4339 = vpop.permute.xlu0 %4338
    %4342 = vrot.lane.b32.xlu0 %v4330, 24
    %v4343 = vpop.permute.xlu0 %4342
    %v4345 = vsel %vm326, %v4105, %v4335
    %v4346 = vsel %vm978, %v4345, %v4339
    %v4347 = vsel %vm980, %v4346, %v4343
    %s4348 = scalar_lea.vmem [#allocation2], 480
    %v4349 = vld [vmem:[%s4348] sm:$0xff]
    %v4350 = vld [vmem:[%s4348 + $0x8] sm:$0xff]
    %v4351 = vld [vmem:[%s4348 + $0x10] sm:$0xff]
    %v4352 = vld [vmem:[%s4348 + $0x18] sm:$0xff]
    %v4353 = vld [vmem:[%s2369 + $0x7] sm:$0x1]
    %v4354 = vlaneseq
    %v4355 = vshrl.u32 %v4354, 7
    %v4356 = vsub.s32 0, %v4355
    %v4357 = vrot.slane %v4353, %v4356
    %v4359 = vsel %vm67, %v4347, 0
    %4361 = vmatprep.subr.mxu0 0.0
    %4362 = vmatpush1.msra.mxu0 %v4349
    %4363 = vmatprep.subr.mxu0 0.0
    %4364 = vmatpush1.msra.mxu0 %v4350
    %4365 = vmatprep.subr.mxu0 0.0
    %4366 = vmatpush1.msra.mxu0 %v4351
    %4367 = vmatprep.subr.mxu0 0.0
    %4368 = vmatpush1.msra.mxu0 %v4352
    %4369 = vmatprep.subr.mxu0 0.0
    %4370 = vmatpush1.msra.mxu0 0.0
    %4371 = vmatprep.subr.mxu0 0.0
    %4372 = vmatpush1.msra.mxu0 0.0
    %4373 = vmatprep.subr.mxu0 0.0
    %4374 = vmatpush1.msra.mxu0 0.0
    %4375 = vmatprep.subr.mxu0 0.0
    %4376 = vmatpush1.msra.mxu0 0.0
    %4377 = vmatprep.subr.mxu0 0.0
    %4378 = vmatpush1.msra.mxu0 0.0
    %4379 = vmatprep.subr.mxu0 0.0
    %4380 = vmatpush1.msra.mxu0 0.0
    %4381 = vmatprep.subr.mxu0 0.0
    %4382 = vmatpush1.msra.mxu0 0.0
    %4383 = vmatprep.subr.mxu0 0.0
    %4384 = vmatpush1.msra.mxu0 0.0
    %4385 = vmatprep.subr.mxu0 0.0
    %4386 = vmatpush1.msra.mxu0 0.0
    %4387 = vmatprep.subr.mxu0 0.0
    %4388 = vmatpush1.msra.mxu0 0.0
    %4389 = vmatprep.subr.mxu0 0.0
    %4390 = vmatpush1.msra.mxu0 0.0
    %4391 = vmatprep.subr.mxu0 0.0
    %4392 = vmatpush1.msra.mxu0 0.0
    %4393 = vmatprep.subr.mxu0 0.0
    %4394 = vmatpush1.msra.mxu0 0.0
    %4395 = vmatprep.subr.mxu0 0.0
    %4396 = vmatpush1.msra.mxu0 0.0
    %4397 = vmatprep.subr.mxu0 0.0
    %4398 = vmatpush1.msra.mxu0 0.0
    %4399 = vmatprep.subr.mxu0 0.0
    %4400 = vmatpush1.msra.mxu0 0.0
    %4401 = vmatprep.subr.mxu0 0.0
    %4402 = vmatpush1.msra.mxu0 0.0
    %4403 = vmatprep.subr.mxu0 0.0
    %4404 = vmatpush1.msra.mxu0 0.0
    %4405 = vmatprep.subr.mxu0 0.0
    %4406 = vmatpush1.msra.mxu0 0.0
    %4407 = vmatprep.subr.mxu0 0.0
    %4408 = vmatpush1.msra.mxu0 0.0
    %4409 = vmatprep.subr.mxu0 0.0
    %4410 = vmatpush1.msra.mxu0 0.0
    %4411 = vmatprep.subr.mxu0 0.0
    %4412 = vmatpush1.msra.mxu0 0.0
    %4413 = vmatprep.subr.mxu0 0.0
    %4414 = vmatpush1.msra.mxu0 0.0
    %4415 = vmatprep.subr.mxu0 0.0
    %4416 = vmatpush1.msra.mxu0 0.0
    %4417 = vmatprep.subr.mxu0 0.0
    %4418 = vmatpush1.msra.mxu0 0.0
    %4419 = vmatprep.subr.mxu0 0.0
    %4420 = vmatpush1.msra.mxu0 0.0
    %4421 = vmatprep.subr.mxu0 0.0
    %4422 = vmatpush1.msra.mxu0 0.0
    %4423 = vmatprep.subr.mxu0 0.0
    %4424 = vmatpush1.msra.mxu0 0.0
    %4425 = vmatprep.mubr.f32.mxu0 0.0
    %4426 = vmatmul.mubr.f32.gmra.mrb[0].mxu0 %v4359
    %v4427 = vpop.f32.mrb[0].mxu0
    %v4428 = vadd.f32 %v4357, %v4427
    %v4429 = vpop.f32.mrb[0].mxu0
    %4430 = vdwg.mxu0
    %v4431 = vadd.f32 %v3392, %v4428
    %v4432 = vld [vmem:[%s4 + $0x4] sm:$0x1]
    %v4433 = vld [vmem:[%s5 + $0x4] sm:$0x1]
    %v4434 = vsel %vm67, %v4431, 0.0
    %4435 = vadd.xlane.f32.xlu0 %v4434
    %v4436 = vpop.xlane.xlu0 %4435
    %v4437 = vmul.f32 %v4436, %v1071
    %v4438 = vsub.f32 %v4431, %v4437
    %v4439 = vmul.f32 %v4438, %v4438
    %v4440 = vsel %vm67, %v4439, 0.0
    %4441 = vadd.xlane.f32.xlu0 %v4440
    %v4442 = vpop.xlane.xlu0 %4441
    %v4443 = vmul.f32 %v4442, %v1071
    %v4444 = vadd.f32 %v4443, 1e-05
    %v4445 = vrsqrt.pop %v4444
    %v4446 = vmul.f32 %v4438, %v4445
    %v4447 = vlaneseq
    %v4448 = vshrl.u32 %v4447, 7
    %v4449 = vsub.s32 0, %v4448
    %v4450 = vrot.slane %v4432, %v4449
    %v4451 = vmul.f32 %v4446, %v4450
    %v4452 = vlaneseq
    %v4453 = vshrl.u32 %v4452, 7
    %v4454 = vsub.s32 0, %v4453
    %v4455 = vrot.slane %v4433, %v4454
    %v4456 = vadd.f32 %v4451, %v4455
    %s4457 = scalar_lea.vmem %s6, 32
    %v4458 = vld [vmem:[%s4457] sm:$0xff]
    %v4459 = vld [vmem:[%s4457 + $0x8] sm:$0xff]
    %v4460 = vld [vmem:[%s4457 + $0x10] sm:$0xff]
    %v4461 = vld [vmem:[%s4457 + $0x18] sm:$0xff]
    %s4462 = scalar_lea.vmem %s7, 1
    %v4463 = vld [vmem:[%s4462] sm:$0x1]
    %v4465 = vlaneseq
    %v4466 = vshrl.u32 %v4465, 7
    %v4467 = vsub.s32 0, %v4466
    %v4468 = vrot.slane %v4463, %v4467
    %v4471 = vsel %vm67, %v4456, 0
    %4473 = vmatprep.subr.mxu0 0.0
    %4474 = vmatpush1.msra.mxu0 %v4458
    %4475 = vmatprep.subr.mxu0 0.0
    %4476 = vmatpush1.msra.mxu0 %v4459
    %4477 = vmatprep.subr.mxu0 0.0
    %4478 = vmatpush1.msra.mxu0 %v4460
    %4479 = vmatprep.subr.mxu0 0.0
    %4480 = vmatpush1.msra.mxu0 %v4461
    %4481 = vmatprep.subr.mxu0 0.0
    %4482 = vmatpush1.msra.mxu0 0.0
    %4483 = vmatprep.subr.mxu0 0.0
    %4484 = vmatpush1.msra.mxu0 0.0
    %4485 = vmatprep.subr.mxu0 0.0
    %4486 = vmatpush1.msra.mxu0 0.0
    %4487 = vmatprep.subr.mxu0 0.0
    %4488 = vmatpush1.msra.mxu0 0.0
    %4489 = vmatprep.subr.mxu0 0.0
    %4490 = vmatpush1.msra.mxu0 0.0
    %4491 = vmatprep.subr.mxu0 0.0
    %4492 = vmatpush1.msra.mxu0 0.0
    %4493 = vmatprep.subr.mxu0 0.0
    %4494 = vmatpush1.msra.mxu0 0.0
    %4495 = vmatprep.subr.mxu0 0.0
    %4496 = vmatpush1.msra.mxu0 0.0
    %4497 = vmatprep.subr.mxu0 0.0
    %4498 = vmatpush1.msra.mxu0 0.0
    %4499 = vmatprep.subr.mxu0 0.0
    %4500 = vmatpush1.msra.mxu0 0.0
    %4501 = vmatprep.subr.mxu0 0.0
    %4502 = vmatpush1.msra.mxu0 0.0
    %4503 = vmatprep.subr.mxu0 0.0
    %4504 = vmatpush1.msra.mxu0 0.0
    %4505 = vmatprep.subr.mxu0 0.0
    %4506 = vmatpush1.msra.mxu0 0.0
    %4507 = vmatprep.subr.mxu0 0.0
    %4508 = vmatpush1.msra.mxu0 0.0
    %4509 = vmatprep.subr.mxu0 0.0
    %4510 = vmatpush1.msra.mxu0 0.0
    %4511 = vmatprep.subr.mxu0 0.0
    %4512 = vmatpush1.msra.mxu0 0.0
    %4513 = vmatprep.subr.mxu0 0.0
    %4514 = vmatpush1.msra.mxu0 0.0
    %4515 = vmatprep.subr.mxu0 0.0
    %4516 = vmatpush1.msra.mxu0 0.0
    %4517 = vmatprep.subr.mxu0 0.0
    %4518 = vmatpush1.msra.mxu0 0.0
    %4519 = vmatprep.subr.mxu0 0.0
    %4520 = vmatpush1.msra.mxu0 0.0
    %4521 = vmatprep.subr.mxu0 0.0
    %4522 = vmatpush1.msra.mxu0 0.0
    %4523 = vmatprep.subr.mxu0 0.0
    %4524 = vmatpush1.msra.mxu0 0.0
    %4525 = vmatprep.subr.mxu0 0.0
    %4526 = vmatpush1.msra.mxu0 0.0
    %4527 = vmatprep.subr.mxu0 0.0
    %4528 = vmatpush1.msra.mxu0 0.0
    %4529 = vmatprep.subr.mxu0 0.0
    %4530 = vmatpush1.msra.mxu0 0.0
    %4531 = vmatprep.subr.mxu0 0.0
    %4532 = vmatpush1.msra.mxu0 0.0
    %4533 = vmatprep.subr.mxu0 0.0
    %4534 = vmatpush1.msra.mxu0 0.0
    %4535 = vmatprep.subr.mxu0 0.0
    %4536 = vmatpush1.msra.mxu0 0.0
    %4537 = vmatprep.mubr.f32.mxu0 0.0
    %4538 = vmatmul.mubr.f32.gmra.mrb[0].mxu0 %v4471
    %v4539 = vpop.f32.mrb[0].mxu0
    %v4540 = vadd.f32 %v4468, %v4539
    %v4541 = vpop.f32.mrb[0].mxu0
    %4542 = vdwg.mxu0
    %v4543 = vmax.f32 %v4540, 0.0
    %s4544 = scalar_lea.vmem %s8, 64
    %v4545 = vld [vmem:[%s4544] sm:$0xff]
    %v4546 = vld [vmem:[%s4544 + $0x8] sm:$0xff]
    %v4547 = vld [vmem:[%s4544 + $0x10] sm:$0xff]
    %v4548 = vld [vmem:[%s4544 + $0x18] sm:$0xff]
    %v4549 = vld [vmem:[%s4544 + $0x20] sm:$0xff]
    %v4550 = vld [vmem:[%s4544 + $0x28] sm:$0xff]
    %v4551 = vld [vmem:[%s4544 + $0x30] sm:$0xff]
    %v4552 = vld [vmem:[%s4544 + $0x38] sm:$0xff]
    %s4553 = scalar_lea.vmem %s9, 1
    %v4554 = vld [vmem:[%s4553] sm:$0x1]
    %v4556 = vlaneseq
    %v4557 = vshrl.u32 %v4556, 7
    %v4558 = vsub.s32 0, %v4557
    %v4559 = vrot.slane %v4554, %v4558
    %v4562 = vsel %vm2264, %v4543, 0
    %4564 = vmatprep.subr.mxu0 0.0
    %4565 = vmatpush1.msra.mxu0 %v4545
    %4566 = vmatprep.subr.mxu0 0.0
    %4567 = vmatpush1.msra.mxu0 %v4546
    %4568 = vmatprep.subr.mxu0 0.0
    %4569 = vmatpush1.msra.mxu0 %v4547
    %4570 = vmatprep.subr.mxu0 0.0
    %4571 = vmatpush1.msra.mxu0 %v4548
    %4572 = vmatprep.subr.mxu0 0.0
    %4573 = vmatpush1.msra.mxu0 %v4549
    %4574 = vmatprep.subr.mxu0 0.0
    %4575 = vmatpush1.msra.mxu0 %v4550
    %4576 = vmatprep.subr.mxu0 0.0
    %4577 = vmatpush1.msra.mxu0 %v4551
    %4578 = vmatprep.subr.mxu0 0.0
    %4579 = vmatpush1.msra.mxu0 %v4552
    %4580 = vmatprep.subr.mxu0 0.0
    %4581 = vmatpush1.msra.mxu0 0.0
    %4582 = vmatprep.subr.mxu0 0.0
    %4583 = vmatpush1.msra.mxu0 0.0
    %4584 = vmatprep.subr.mxu0 0.0
    %4585 = vmatpush1.msra.mxu0 0.0
    %4586 = vmatprep.subr.mxu0 0.0
    %4587 = vmatpush1.msra.mxu0 0.0
    %4588 = vmatprep.subr.mxu0 0.0
    %4589 = vmatpush1.msra.mxu0 0.0
    %4590 = vmatprep.subr.mxu0 0.0
    %4591 = vmatpush1.msra.mxu0 0.0
    %4592 = vmatprep.subr.mxu0 0.0
    %4593 = vmatpush1.msra.mxu0 0.0
    %4594 = vmatprep.subr.mxu0 0.0
    %4595 = vmatpush1.msra.mxu0 0.0
    %4596 = vmatprep.subr.mxu0 0.0
    %4597 = vmatpush1.msra.mxu0 0.0
    %4598 = vmatprep.subr.mxu0 0.0
    %4599 = vmatpush1.msra.mxu0 0.0
    %4600 = vmatprep.subr.mxu0 0.0
    %4601 = vmatpush1.msra.mxu0 0.0
    %4602 = vmatprep.subr.mxu0 0.0
    %4603 = vmatpush1.msra.mxu0 0.0
    %4604 = vmatprep.subr.mxu0 0.0
    %4605 = vmatpush1.msra.mxu0 0.0
    %4606 = vmatprep.subr.mxu0 0.0
    %4607 = vmatpush1.msra.mxu0 0.0
    %4608 = vmatprep.subr.mxu0 0.0
    %4609 = vmatpush1.msra.mxu0 0.0
    %4610 = vmatprep.subr.mxu0 0.0
    %4611 = vmatpush1.msra.mxu0 0.0
    %4612 = vmatprep.subr.mxu0 0.0
    %4613 = vmatpush1.msra.mxu0 0.0
    %4614 = vmatprep.subr.mxu0 0.0
    %4615 = vmatpush1.msra.mxu0 0.0
    %4616 = vmatprep.subr.mxu0 0.0
    %4617 = vmatpush1.msra.mxu0 0.0
    %4618 = vmatprep.subr.mxu0 0.0
    %4619 = vmatpush1.msra.mxu0 0.0
    %4620 = vmatprep.subr.mxu0 0.0
    %4621 = vmatpush1.msra.mxu0 0.0
    %4622 = vmatprep.subr.mxu0 0.0
    %4623 = vmatpush1.msra.mxu0 0.0
    %4624 = vmatprep.subr.mxu0 0.0
    %4625 = vmatpush1.msra.mxu0 0.0
    %4626 = vmatprep.subr.mxu0 0.0
    %4627 = vmatpush1.msra.mxu0 0.0
    %4628 = vmatprep.mubr.f32.mxu0 0.0
    %4629 = vmatmul.mubr.f32.gmra.mrb[0].mxu0 %v4562
    %v4630 = vpop.f32.mrb[0].mxu0
    %v4631 = vadd.f32 %v4559, %v4630
    %v4632 = vpop.f32.mrb[0].mxu0
    %4633 = vdwg.mxu0
    %v4634 = vadd.f32 %v4456, %v4631
    %v4635 = vld [vmem:[%s4 + $0x5] sm:$0x1]
    %v4636 = vld [vmem:[%s5 + $0x5] sm:$0x1]
    %v4637 = vsel %vm67, %v4634, 0.0
    %4638 = vadd.xlane.f32.xlu0 %v4637
    %v4639 = vpop.xlane.xlu0 %4638
    %v4640 = vmul.f32 %v4639, %v1071
    %v4641 = vsub.f32 %v4634, %v4640
    %v4642 = vmul.f32 %v4641, %v4641
    %v4643 = vsel %vm67, %v4642, 0.0
    %4644 = vadd.xlane.f32.xlu0 %v4643
    %v4645 = vpop.xlane.xlu0 %4644
    %v4646 = vmul.f32 %v4645, %v1071
    %v4647 = vadd.f32 %v4646, 1e-05
    %v4648 = vrsqrt.pop %v4647
    %v4649 = vmul.f32 %v4641, %v4648
    %v4650 = vlaneseq
    %v4651 = vshrl.u32 %v4650, 7
    %v4652 = vsub.s32 0, %v4651
    %v4653 = vrot.slane %v4635, %v4652
    %v4654 = vmul.f32 %v4649, %v4653
    %v4655 = vlaneseq
    %v4656 = vshrl.u32 %v4655, 7
    %v4657 = vsub.s32 0, %v4656
    %v4658 = vrot.slane %v4636, %v4657
    %v4659 = vadd.f32 %v4654, %v4658
    %v4660 = vld [vmem:[%s4 + $0x6] sm:$0x1]
    %v4661 = vld [vmem:[%s5 + $0x6] sm:$0x1]
    %v4662 = vsel %vm67, %v4659, 0.0
    %4663 = vadd.xlane.f32.xlu0 %v4662
    %v4664 = vpop.xlane.xlu0 %4663
    %v4665 = vmul.f32 %v4664, %v1071
    %v4666 = vsub.f32 %v4659, %v4665
    %v4667 = vmul.f32 %v4666, %v4666
    %v4668 = vsel %vm67, %v4667, 0.0
    %4669 = vadd.xlane.f32.xlu0 %v4668
    %v4670 = vpop.xlane.xlu0 %4669
    %v4671 = vmul.f32 %v4670, %v1071
    %v4672 = vadd.f32 %v4671, 1e-05
    %v4673 = vrsqrt.pop %v4672
    %v4674 = vmul.f32 %v4666, %v4673
    %v4675 = vlaneseq
    %v4676 = vshrl.u32 %v4675, 7
    %v4677 = vsub.s32 0, %v4676
    %v4678 = vrot.slane %v4660, %v4677
    %v4679 = vmul.f32 %v4674, %v4678
    %v4680 = vlaneseq
    %v4681 = vshrl.u32 %v4680, 7
    %v4682 = vsub.s32 0, %v4681
    %v4683 = vrot.slane %v4661, %v4682
    %v4684 = vadd.f32 %v4679, %v4683
    %4685 = vst.msk [vmem:[#allocation5] sm:$0xff] %vm67, %v4684
    %s4686 = scalar_lea.vmem %s0, 8
    %v4687 = vld [vmem:[%s4686] sm:$0xff]
    %s4688 = scalar_lea.vmem %s1, 16
    %v4689 = vld [vmem:[%s4688] sm:$0xff]
    %v4690 = vld [vmem:[%s4688 + $0x8] sm:$0xf]
    %v4691 = vld [vmem:[#allocation2] sm:$0xff]
    %v4692 = vld [vmem:[#allocation2 + $0x8] sm:$0xff]
    %v4693 = vld [vmem:[#allocation2 + $0x10] sm:$0xff]
    %v4694 = vld [vmem:[#allocation2 + $0x18] sm:$0xff]
    %v4695 = vld [vmem:[%s3] sm:$0x1]
    %v4696 = vlaneseq
    %v4697 = vshrl.u32 %v4696, 7
    %v4698 = vsub.s32 0, %v4697
    %v4699 = vrot.slane %v4695, %v4698
    %v4701 = vsel %vm67, %v4687, 0
    %4703 = vmatprep.subr.mxu0 0.0
    %4704 = vmatpush1.msra.mxu0 %v4691
    %4705 = vmatprep.subr.mxu0 0.0
    %4706 = vmatpush1.msra.mxu0 %v4692
    %4707 = vmatprep.subr.mxu0 0.0
    %4708 = vmatpush1.msra.mxu0 %v4693
    %4709 = vmatprep.subr.mxu0 0.0
    %4710 = vmatpush1.msra.mxu0 %v4694
    %4711 = vmatprep.subr.mxu0 0.0
    %4712 = vmatpush1.msra.mxu0 0.0
    %4713 = vmatprep.subr.mxu0 0.0
    %4714 = vmatpush1.msra.mxu0 0.0
    %4715 = vmatprep.subr.mxu0 0.0
    %4716 = vmatpush1.msra.mxu0 0.0
    %4717 = vmatprep.subr.mxu0 0.0
    %4718 = vmatpush1.msra.mxu0 0.0
    %4719 = vmatprep.subr.mxu0 0.0
    %4720 = vmatpush1.msra.mxu0 0.0
    %4721 = vmatprep.subr.mxu0 0.0
    %4722 = vmatpush1.msra.mxu0 0.0
    %4723 = vmatprep.subr.mxu0 0.0
    %4724 = vmatpush1.msra.mxu0 0.0
    %4725 = vmatprep.subr.mxu0 0.0
    %4726 = vmatpush1.msra.mxu0 0.0
    %4727 = vmatprep.subr.mxu0 0.0
    %4728 = vmatpush1.msra.mxu0 0.0
    %4729 = vmatprep.subr.mxu0 0.0
    %4730 = vmatpush1.msra.mxu0 0.0
    %4731 = vmatprep.subr.mxu0 0.0
    %4732 = vmatpush1.msra.mxu0 0.0
    %4733 = vmatprep.subr.mxu0 0.0
    %4734 = vmatpush1.msra.mxu0 0.0
    %4735 = vmatprep.subr.mxu0 0.0
    %4736 = vmatpush1.msra.mxu0 0.0
    %4737 = vmatprep.subr.mxu0 0.0
    %4738 = vmatpush1.msra.mxu0 0.0
    %4739 = vmatprep.subr.mxu0 0.0
    %4740 = vmatpush1.msra.mxu0 0.0
    %4741 = vmatprep.subr.mxu0 0.0
    %4742 = vmatpush1.msra.mxu0 0.0
    %4743 = vmatprep.subr.mxu0 0.0
    %4744 = vmatpush1.msra.mxu0 0.0
    %4745 = vmatprep.subr.mxu0 0.0
    %4746 = vmatpush1.msra.mxu0 0.0
    %4747 = vmatprep.subr.mxu0 0.0
    %4748 = vmatpush1.msra.mxu0 0.0
    %4749 = vmatprep.subr.mxu0 0.0
    %4750 = vmatpush1.msra.mxu0 0.0
    %4751 = vmatprep.subr.mxu0 0.0
    %4752 = vmatpush1.msra.mxu0 0.0
    %4753 = vmatprep.subr.mxu0 0.0
    %4754 = vmatpush1.msra.mxu0 0.0
    %4755 = vmatprep.subr.mxu0 0.0
    %4756 = vmatpush1.msra.mxu0 0.0
    %4757 = vmatprep.subr.mxu0 0.0
    %4758 = vmatpush1.msra.mxu0 0.0
    %4759 = vmatprep.subr.mxu0 0.0
    %4760 = vmatpush1.msra.mxu0 0.0
    %4761 = vmatprep.subr.mxu0 0.0
    %4762 = vmatpush1.msra.mxu0 0.0
    %4763 = vmatprep.subr.mxu0 0.0
    %4764 = vmatpush1.msra.mxu0 0.0
    %4765 = vmatprep.subr.mxu0 0.0
    %4766 = vmatpush1.msra.mxu0 0.0
    %4767 = vmatprep.mubr.f32.mxu0 0.0
    %4768 = vmatmul.mubr.f32.gmra.mrb[0].mxu0 %v4701
    %v4769 = vpop.f32.mrb[0].mxu0
    %v4770 = vadd.f32 %v4699, %v4769
    %v4771 = vpop.f32.mrb[0].mxu0
    %4772 = vdwg.mxu0
    %v4773 = vmul.f32 %v4770, 0.35355338
    %v4774 = vld [vmem:[%s142] sm:$0xff]
    %v4775 = vld [vmem:[%s142 + $0x8] sm:$0xff]
    %v4776 = vld [vmem:[%s142 + $0x10] sm:$0xff]
    %v4777 = vld [vmem:[%s142 + $0x18] sm:$0xff]
    %v4778 = vld [vmem:[%s3 + $0x1] sm:$0x1]
    %v4779 = vlaneseq
    %v4780 = vshrl.u32 %v4779, 7
    %v4781 = vsub.s32 0, %v4780
    %v4782 = vrot.slane %v4778, %v4781
    %4783 = vmatprep.subr.mxu0 0.0
    %4784 = vmatpush1.msra.mxu0 %v4774
    %4785 = vmatprep.subr.mxu0 0.0
    %4786 = vmatpush1.msra.mxu0 %v4775
    %4787 = vmatprep.subr.mxu0 0.0
    %4788 = vmatpush1.msra.mxu0 %v4776
    %4789 = vmatprep.subr.mxu0 0.0
    %4790 = vmatpush1.msra.mxu0 %v4777
    %4791 = vmatprep.subr.mxu0 0.0
    %4792 = vmatpush1.msra.mxu0 0.0
    %4793 = vmatprep.subr.mxu0 0.0
    %4794 = vmatpush1.msra.mxu0 0.0
    %4795 = vmatprep.subr.mxu0 0.0
    %4796 = vmatpush1.msra.mxu0 0.0
    %4797 = vmatprep.subr.mxu0 0.0
    %4798 = vmatpush1.msra.mxu0 0.0
    %4799 = vmatprep.subr.mxu0 0.0
    %4800 = vmatpush1.msra.mxu0 0.0
    %4801 = vmatprep.subr.mxu0 0.0
    %4802 = vmatpush1.msra.mxu0 0.0
    %4803 = vmatprep.subr.mxu0 0.0
    %4804 = vmatpush1.msra.mxu0 0.0
    %4805 = vmatprep.subr.mxu0 0.0
    %4806 = vmatpush1.msra.mxu0 0.0
    %4807 = vmatprep.subr.mxu0 0.0
    %4808 = vmatpush1.msra.mxu0 0.0
    %4809 = vmatprep.subr.mxu0 0.0
    %4810 = vmatpush1.msra.mxu0 0.0
    %4811 = vmatprep.subr.mxu0 0.0
    %4812 = vmatpush1.msra.mxu0 0.0
    %4813 = vmatprep.subr.mxu0 0.0
    %4814 = vmatpush1.msra.mxu0 0.0
    %4815 = vmatprep.subr.mxu0 0.0
    %4816 = vmatpush1.msra.mxu0 0.0
    %4817 = vmatprep.subr.mxu0 0.0
    %4818 = vmatpush1.msra.mxu0 0.0
    %4819 = vmatprep.subr.mxu0 0.0
    %4820 = vmatpush1.msra.mxu0 0.0
    %4821 = vmatprep.subr.mxu0 0.0
    %4822 = vmatpush1.msra.mxu0 0.0
    %4823 = vmatprep.subr.mxu0 0.0
    %4824 = vmatpush1.msra.mxu0 0.0
    %4825 = vmatprep.subr.mxu0 0.0
    %4826 = vmatpush1.msra.mxu0 0.0
    %4827 = vmatprep.subr.mxu0 0.0
    %4828 = vmatpush1.msra.mxu0 0.0
    %4829 = vmatprep.subr.mxu0 0.0
    %4830 = vmatpush1.msra.mxu0 0.0
    %4831 = vmatprep.subr.mxu0 0.0
    %4832 = vmatpush1.msra.mxu0 0.0
    %4833 = vmatprep.subr.mxu0 0.0
    %4834 = vmatpush1.msra.mxu0 0.0
    %4835 = vmatprep.subr.mxu0 0.0
    %4836 = vmatpush1.msra.mxu0 0.0
    %4837 = vmatprep.subr.mxu0 0.0
    %4838 = vmatpush1.msra.mxu0 0.0
    %4839 = vmatprep.subr.mxu0 0.0
    %4840 = vmatpush1.msra.mxu0 0.0
    %4841 = vmatprep.subr.mxu0 0.0
    %4842 = vmatpush1.msra.mxu0 0.0
    %4843 = vmatprep.subr.mxu0 0.0
    %4844 = vmatpush1.msra.mxu0 0.0
    %4845 = vmatprep.subr.mxu0 0.0
    %4846 = vmatpush1.msra.mxu0 0.0
    %4847 = vmatprep.mubr.f32.mxu0 0.0
    %4848 = vmatmul.mubr.f32.gmra.mrb[0].mxu0 %v4701
    %v4849 = vpop.f32.mrb[0].mxu0
    %v4850 = vadd.f32 %v4782, %v4849
    %v4851 = vpop.f32.mrb[0].mxu0
    %4852 = vdwg.mxu0
    %v4853 = vld [vmem:[%s222] sm:$0xff]
    %v4854 = vld [vmem:[%s222 + $0x8] sm:$0xff]
    %v4855 = vld [vmem:[%s222 + $0x10] sm:$0xff]
    %v4856 = vld [vmem:[%s222 + $0x18] sm:$0xff]
    %v4857 = vld [vmem:[%s3 + $0x2] sm:$0x1]
    %v4858 = vlaneseq
    %v4859 = vshrl.u32 %v4858, 7
    %v4860 = vsub.s32 0, %v4859
    %v4861 = vrot.slane %v4857, %v4860
    %4862 = vmatprep.subr.mxu0 0.0
    %4863 = vmatpush1.msra.mxu0 %v4853
    %4864 = vmatprep.subr.mxu0 0.0
    %4865 = vmatpush1.msra.mxu0 %v4854
    %4866 = vmatprep.subr.mxu0 0.0
    %4867 = vmatpush1.msra.mxu0 %v4855
    %4868 = vmatprep.subr.mxu0 0.0
    %4869 = vmatpush1.msra.mxu0 %v4856
    %4870 = vmatprep.subr.mxu0 0.0
    %4871 = vmatpush1.msra.mxu0 0.0
    %4872 = vmatprep.subr.mxu0 0.0
    %4873 = vmatpush1.msra.mxu0 0.0
    %4874 = vmatprep.subr.mxu0 0.0
    %4875 = vmatpush1.msra.mxu0 0.0
    %4876 = vmatprep.subr.mxu0 0.0
    %4877 = vmatpush1.msra.mxu0 0.0
    %4878 = vmatprep.subr.mxu0 0.0
    %4879 = vmatpush1.msra.mxu0 0.0
    %4880 = vmatprep.subr.mxu0 0.0
    %4881 = vmatpush1.msra.mxu0 0.0
    %4882 = vmatprep.subr.mxu0 0.0
    %4883 = vmatpush1.msra.mxu0 0.0
    %4884 = vmatprep.subr.mxu0 0.0
    %4885 = vmatpush1.msra.mxu0 0.0
    %4886 = vmatprep.subr.mxu0 0.0
    %4887 = vmatpush1.msra.mxu0 0.0
    %4888 = vmatprep.subr.mxu0 0.0
    %4889 = vmatpush1.msra.mxu0 0.0
    %4890 = vmatprep.subr.mxu0 0.0
    %4891 = vmatpush1.msra.mxu0 0.0
    %4892 = vmatprep.subr.mxu0 0.0
    %4893 = vmatpush1.msra.mxu0 0.0
    %4894 = vmatprep.subr.mxu0 0.0
    %4895 = vmatpush1.msra.mxu0 0.0
    %4896 = vmatprep.subr.mxu0 0.0
    %4897 = vmatpush1.msra.mxu0 0.0
    %4898 = vmatprep.subr.mxu0 0.0
    %4899 = vmatpush1.msra.mxu0 0.0
    %4900 = vmatprep.subr.mxu0 0.0
    %4901 = vmatpush1.msra.mxu0 0.0
    %4902 = vmatprep.subr.mxu0 0.0
    %4903 = vmatpush1.msra.mxu0 0.0
    %4904 = vmatprep.subr.mxu0 0.0
    %4905 = vmatpush1.msra.mxu0 0.0
    %4906 = vmatprep.subr.mxu0 0.0
    %4907 = vmatpush1.msra.mxu0 0.0
    %4908 = vmatprep.subr.mxu0 0.0
    %4909 = vmatpush1.msra.mxu0 0.0
    %4910 = vmatprep.subr.mxu0 0.0
    %4911 = vmatpush1.msra.mxu0 0.0
    %4912 = vmatprep.subr.mxu0 0.0
    %4913 = vmatpush1.msra.mxu0 0.0
    %4914 = vmatprep.subr.mxu0 0.0
    %4915 = vmatpush1.msra.mxu0 0.0
    %4916 = vmatprep.subr.mxu0 0.0
    %4917 = vmatpush1.msra.mxu0 0.0
    %4918 = vmatprep.subr.mxu0 0.0
    %4919 = vmatpush1.msra.mxu0 0.0
    %4920 = vmatprep.subr.mxu0 0.0
    %4921 = vmatpush1.msra.mxu0 0.0
    %4922 = vmatprep.subr.mxu0 0.0
    %4923 = vmatpush1.msra.mxu0 0.0
    %4924 = vmatprep.subr.mxu0 0.0
    %4925 = vmatpush1.msra.mxu0 0.0
    %4926 = vmatprep.mubr.f32.mxu0 0.0
    %4927 = vmatmul.mubr.f32.gmra.mrb[0].mxu0 %v4701
    %v4928 = vpop.f32.mrb[0].mxu0
    %v4929 = vadd.f32 %v4861, %v4928
    %v4930 = vpop.f32.mrb[0].mxu0
    %4931 = vdwg.mxu0
    %4933 = vrot.lane.b32.xlu0 %v4773, 120
    %v4934 = vpop.permute.xlu0 %4933
    %4935 = vrot.lane.b32.xlu0 %v4773, 112
    %v4936 = vpop.permute.xlu0 %4935
    %4937 = vrot.lane.b32.xlu0 %v4773, 104
    %v4938 = vpop.permute.xlu0 %4937
    %4940 = vrot.lane.b32.xlu0 %v4850, 120
    %v4941 = vpop.permute.xlu0 %4940
    %4942 = vrot.lane.b32.xlu0 %v4850, 112
    %v4943 = vpop.permute.xlu0 %4942
    %4944 = vrot.lane.b32.xlu0 %v4850, 104
    %v4945 = vpop.permute.xlu0 %4944
    %4947 = vrot.lane.b32.xlu0 %v4929, 120
    %v4948 = vpop.permute.xlu0 %4947
    %4950 = vrot.lane.b32.xlu0 %v4929, 112
    %v4951 = vpop.permute.xlu0 %4950
    %4953 = vrot.lane.b32.xlu0 %v4929, 104
    %v4954 = vpop.permute.xlu0 %4953
    %v4956 = vsel %vm326, %v4773, 0
    %v4958 = vsel %vm326, %v4850, 0
    %4960 = vmatprep.subr.mxu0 0.0
    %4961 = vmatpush1.xpose.msra.mxu0 %v4958
    %4962 = vmatprep.subr.mxu0 0.0
    %4963 = vmatpush1.xpose.msra.mxu0 0.0
    %4964 = vmatprep.subr.mxu0 0.0
    %4965 = vmatpush1.xpose.msra.mxu0 0.0
    %4966 = vmatprep.subr.mxu0 0.0
    %4967 = vmatpush1.xpose.msra.mxu0 0.0
    %4968 = vmatprep.subr.mxu0 0.0
    %4969 = vmatpush1.xpose.msra.mxu0 0.0
    %4970 = vmatprep.subr.mxu0 0.0
    %4971 = vmatpush1.xpose.msra.mxu0 0.0
    %4972 = vmatprep.subr.mxu0 0.0
    %4973 = vmatpush1.xpose.msra.mxu0 0.0
    %4974 = vmatprep.subr.mxu0 0.0
    %4975 = vmatpush1.xpose.msra.mxu0 0.0
    %4976 = vmatprep.subr.mxu0 0.0
    %4977 = vmatpush1.xpose.msra.mxu0 0.0
    %4978 = vmatprep.subr.mxu0 0.0
    %4979 = vmatpush1.xpose.msra.mxu0 0.0
    %4980 = vmatprep.subr.mxu0 0.0
    %4981 = vmatpush1.xpose.msra.mxu0 0.0
    %4982 = vmatprep.subr.mxu0 0.0
    %4983 = vmatpush1.xpose.msra.mxu0 0.0
    %4984 = vmatprep.subr.mxu0 0.0
    %4985 = vmatpush1.xpose.msra.mxu0 0.0
    %4986 = vmatprep.subr.mxu0 0.0
    %4987 = vmatpush1.xpose.msra.mxu0 0.0
    %4988 = vmatprep.subr.mxu0 0.0
    %4989 = vmatpush1.xpose.msra.mxu0 0.0
    %4990 = vmatprep.subr.mxu0 0.0
    %4991 = vmatpush1.xpose.msra.mxu0 0.0
    %4992 = vmatprep.subr.mxu0 0.0
    %4993 = vmatpush1.xpose.msra.mxu0 0.0
    %4994 = vmatprep.subr.mxu0 0.0
    %4995 = vmatpush1.xpose.msra.mxu0 0.0
    %4996 = vmatprep.subr.mxu0 0.0
    %4997 = vmatpush1.xpose.msra.mxu0 0.0
    %4998 = vmatprep.subr.mxu0 0.0
    %4999 = vmatpush1.xpose.msra.mxu0 0.0
    %5000 = vmatprep.subr.mxu0 0.0
    %5001 = vmatpush1.xpose.msra.mxu0 0.0
    %5002 = vmatprep.subr.mxu0 0.0
    %5003 = vmatpush1.xpose.msra.mxu0 0.0
    %5004 = vmatprep.subr.mxu0 0.0
    %5005 = vmatpush1.xpose.msra.mxu0 0.0
    %5006 = vmatprep.subr.mxu0 0.0
    %5007 = vmatpush1.xpose.msra.mxu0 0.0
    %5008 = vmatprep.subr.mxu0 0.0
    %5009 = vmatpush1.xpose.msra.mxu0 0.0
    %5010 = vmatprep.subr.mxu0 0.0
    %5011 = vmatpush1.xpose.msra.mxu0 0.0
    %5012 = vmatprep.subr.mxu0 0.0
    %5013 = vmatpush1.xpose.msra.mxu0 0.0
    %5014 = vmatprep.subr.mxu0 0.0
    %5015 = vmatpush1.xpose.msra.mxu0 0.0
    %5016 = vmatprep.subr.mxu0 0.0
    %5017 = vmatpush1.xpose.msra.mxu0 0.0
    %5018 = vmatprep.subr.mxu0 0.0
    %5019 = vmatpush1.xpose.msra.mxu0 0.0
    %5020 = vmatprep.subr.mxu0 0.0
    %5021 = vmatpush1.xpose.msra.mxu0 0.0
    %5022 = vmatprep.subr.mxu0 0.0
    %5023 = vmatpush1.xpose.msra.mxu0 0.0
    %5024 = vmatprep.mubr.f32.mxu0 0.0
    %5025 = vmatmul.mubr.f32.gmra.mrb[0].mxu0 %v4956
    %v5026 = vpop.f32.mrb[0].mxu0
    %v5027 = vadd.f32 0.0, %v5026
    %v5028 = vpop.f32.mrb[0].mxu0
    %5029 = vdwg.mxu0
    %v5030 = vsel %vm326, %v4934, 0
    %v5032 = vsel %vm326, %v4941, 0
    %5034 = vmatprep.subr.mxu0 0.0
    %5035 = vmatpush1.xpose.msra.mxu0 %v5032
    %5036 = vmatprep.subr.mxu0 0.0
    %5037 = vmatpush1.xpose.msra.mxu0 0.0
    %5038 = vmatprep.subr.mxu0 0.0
    %5039 = vmatpush1.xpose.msra.mxu0 0.0
    %5040 = vmatprep.subr.mxu0 0.0
    %5041 = vmatpush1.xpose.msra.mxu0 0.0
    %5042 = vmatprep.subr.mxu0 0.0
    %5043 = vmatpush1.xpose.msra.mxu0 0.0
    %5044 = vmatprep.subr.mxu0 0.0
    %5045 = vmatpush1.xpose.msra.mxu0 0.0
    %5046 = vmatprep.subr.mxu0 0.0
    %5047 = vmatpush1.xpose.msra.mxu0 0.0
    %5048 = vmatprep.subr.mxu0 0.0
    %5049 = vmatpush1.xpose.msra.mxu0 0.0
    %5050 = vmatprep.subr.mxu0 0.0
    %5051 = vmatpush1.xpose.msra.mxu0 0.0
    %5052 = vmatprep.subr.mxu0 0.0
    %5053 = vmatpush1.xpose.msra.mxu0 0.0
    %5054 = vmatprep.subr.mxu0 0.0
    %5055 = vmatpush1.xpose.msra.mxu0 0.0
    %5056 = vmatprep.subr.mxu0 0.0
    %5057 = vmatpush1.xpose.msra.mxu0 0.0
    %5058 = vmatprep.subr.mxu0 0.0
    %5059 = vmatpush1.xpose.msra.mxu0 0.0
    %5060 = vmatprep.subr.mxu0 0.0
    %5061 = vmatpush1.xpose.msra.mxu0 0.0
    %5062 = vmatprep.subr.mxu0 0.0
    %5063 = vmatpush1.xpose.msra.mxu0 0.0
    %5064 = vmatprep.subr.mxu0 0.0
    %5065 = vmatpush1.xpose.msra.mxu0 0.0
    %5066 = vmatprep.subr.mxu0 0.0
    %5067 = vmatpush1.xpose.msra.mxu0 0.0
    %5068 = vmatprep.subr.mxu0 0.0
    %5069 = vmatpush1.xpose.msra.mxu0 0.0
    %5070 = vmatprep.subr.mxu0 0.0
    %5071 = vmatpush1.xpose.msra.mxu0 0.0
    %5072 = vmatprep.subr.mxu0 0.0
    %5073 = vmatpush1.xpose.msra.mxu0 0.0
    %5074 = vmatprep.subr.mxu0 0.0
    %5075 = vmatpush1.xpose.msra.mxu0 0.0
    %5076 = vmatprep.subr.mxu0 0.0
    %5077 = vmatpush1.xpose.msra.mxu0 0.0
    %5078 = vmatprep.subr.mxu0 0.0
    %5079 = vmatpush1.xpose.msra.mxu0 0.0
    %5080 = vmatprep.subr.mxu0 0.0
    %5081 = vmatpush1.xpose.msra.mxu0 0.0
    %5082 = vmatprep.subr.mxu0 0.0
    %5083 = vmatpush1.xpose.msra.mxu0 0.0
    %5084 = vmatprep.subr.mxu0 0.0
    %5085 = vmatpush1.xpose.msra.mxu0 0.0
    %5086 = vmatprep.subr.mxu0 0.0
    %5087 = vmatpush1.xpose.msra.mxu0 0.0
    %5088 = vmatprep.subr.mxu0 0.0
    %5089 = vmatpush1.xpose.msra.mxu0 0.0
    %5090 = vmatprep.subr.mxu0 0.0
    %5091 = vmatpush1.xpose.msra.mxu0 0.0
    %5092 = vmatprep.subr.mxu0 0.0
    %5093 = vmatpush1.xpose.msra.mxu0 0.0
    %5094 = vmatprep.subr.mxu0 0.0
    %5095 = vmatpush1.xpose.msra.mxu0 0.0
    %5096 = vmatprep.subr.mxu0 0.0
    %5097 = vmatpush1.xpose.msra.mxu0 0.0
    %5098 = vmatprep.mubr.f32.mxu0 0.0
    %5099 = vmatmul.mubr.f32.gmra.mrb[0].mxu0 %v5030
    %v5100 = vpop.f32.mrb[0].mxu0
    %v5101 = vadd.f32 0.0, %v5100
    %v5102 = vpop.f32.mrb[0].mxu0
    %5103 = vdwg.mxu0
    %v5104 = vsel %vm326, %v4936, 0
    %v5106 = vsel %vm326, %v4943, 0
    %5108 = vmatprep.subr.mxu0 0.0
    %5109 = vmatpush1.xpose.msra.mxu0 %v5106
    %5110 = vmatprep.subr.mxu0 0.0
    %5111 = vmatpush1.xpose.msra.mxu0 0.0
    %5112 = vmatprep.subr.mxu0 0.0
    %5113 = vmatpush1.xpose.msra.mxu0 0.0
    %5114 = vmatprep.subr.mxu0 0.0
    %5115 = vmatpush1.xpose.msra.mxu0 0.0
    %5116 = vmatprep.subr.mxu0 0.0
    %5117 = vmatpush1.xpose.msra.mxu0 0.0
    %5118 = vmatprep.subr.mxu0 0.0
    %5119 = vmatpush1.xpose.msra.mxu0 0.0
    %5120 = vmatprep.subr.mxu0 0.0
    %5121 = vmatpush1.xpose.msra.mxu0 0.0
    %5122 = vmatprep.subr.mxu0 0.0
    %5123 = vmatpush1.xpose.msra.mxu0 0.0
    %5124 = vmatprep.subr.mxu0 0.0
    %5125 = vmatpush1.xpose.msra.mxu0 0.0
    %5126 = vmatprep.subr.mxu0 0.0
    %5127 = vmatpush1.xpose.msra.mxu0 0.0
    %5128 = vmatprep.subr.mxu0 0.0
    %5129 = vmatpush1.xpose.msra.mxu0 0.0
    %5130 = vmatprep.subr.mxu0 0.0
    %5131 = vmatpush1.xpose.msra.mxu0 0.0
    %5132 = vmatprep.subr.mxu0 0.0
    %5133 = vmatpush1.xpose.msra.mxu0 0.0
    %5134 = vmatprep.subr.mxu0 0.0
    %5135 = vmatpush1.xpose.msra.mxu0 0.0
    %5136 = vmatprep.subr.mxu0 0.0
    %5137 = vmatpush1.xpose.msra.mxu0 0.0
    %5138 = vmatprep.subr.mxu0 0.0
    %5139 = vmatpush1.xpose.msra.mxu0 0.0
    %5140 = vmatprep.subr.mxu0 0.0
    %5141 = vmatpush1.xpose.msra.mxu0 0.0
    %5142 = vmatprep.subr.mxu0 0.0
    %5143 = vmatpush1.xpose.msra.mxu0 0.0
    %5144 = vmatprep.subr.mxu0 0.0
    %5145 = vmatpush1.xpose.msra.mxu0 0.0
    %5146 = vmatprep.subr.mxu0 0.0
    %5147 = vmatpush1.xpose.msra.mxu0 0.0
    %5148 = vmatprep.subr.mxu0 0.0
    %5149 = vmatpush1.xpose.msra.mxu0 0.0
    %5150 = vmatprep.subr.mxu0 0.0
    %5151 = vmatpush1.xpose.msra.mxu0 0.0
    %5152 = vmatprep.subr.mxu0 0.0
    %5153 = vmatpush1.xpose.msra.mxu0 0.0
    %5154 = vmatprep.subr.mxu0 0.0
    %5155 = vmatpush1.xpose.msra.mxu0 0.0
    %5156 = vmatprep.subr.mxu0 0.0
    %5157 = vmatpush1.xpose.msra.mxu0 0.0
    %5158 = vmatprep.subr.mxu0 0.0
    %5159 = vmatpush1.xpose.msra.mxu0 0.0
    %5160 = vmatprep.subr.mxu0 0.0
    %5161 = vmatpush1.xpose.msra.mxu0 0.0
    %5162 = vmatprep.subr.mxu0 0.0
    %5163 = vmatpush1.xpose.msra.mxu0 0.0
    %5164 = vmatprep.subr.mxu0 0.0
    %5165 = vmatpush1.xpose.msra.mxu0 0.0
    %5166 = vmatprep.subr.mxu0 0.0
    %5167 = vmatpush1.xpose.msra.mxu0 0.0
    %5168 = vmatprep.subr.mxu0 0.0
    %5169 = vmatpush1.xpose.msra.mxu0 0.0
    %5170 = vmatprep.subr.mxu0 0.0
    %5171 = vmatpush1.xpose.msra.mxu0 0.0
    %5172 = vmatprep.mubr.f32.mxu0 0.0
    %5173 = vmatmul.mubr.f32.gmra.mrb[0].mxu0 %v5104
    %v5174 = vpop.f32.mrb[0].mxu0
    %v5175 = vadd.f32 0.0, %v5174
    %v5176 = vpop.f32.mrb[0].mxu0
    %5177 = vdwg.mxu0
    %v5178 = vsel %vm326, %v4938, 0
    %v5180 = vsel %vm326, %v4945, 0
    %5182 = vmatprep.subr.mxu0 0.0
    %5183 = vmatpush1.xpose.msra.mxu0 %v5180
    %5184 = vmatprep.subr.mxu0 0.0
    %5185 = vmatpush1.xpose.msra.mxu0 0.0
    %5186 = vmatprep.subr.mxu0 0.0
    %5187 = vmatpush1.xpose.msra.mxu0 0.0
    %5188 = vmatprep.subr.mxu0 0.0
    %5189 = vmatpush1.xpose.msra.mxu0 0.0
    %5190 = vmatprep.subr.mxu0 0.0
    %5191 = vmatpush1.xpose.msra.mxu0 0.0
    %5192 = vmatprep.subr.mxu0 0.0
    %5193 = vmatpush1.xpose.msra.mxu0 0.0
    %5194 = vmatprep.subr.mxu0 0.0
    %5195 = vmatpush1.xpose.msra.mxu0 0.0
    %5196 = vmatprep.subr.mxu0 0.0
    %5197 = vmatpush1.xpose.msra.mxu0 0.0
    %5198 = vmatprep.subr.mxu0 0.0
    %5199 = vmatpush1.xpose.msra.mxu0 0.0
    %5200 = vmatprep.subr.mxu0 0.0
    %5201 = vmatpush1.xpose.msra.mxu0 0.0
    %5202 = vmatprep.subr.mxu0 0.0
    %5203 = vmatpush1.xpose.msra.mxu0 0.0
    %5204 = vmatprep.subr.mxu0 0.0
    %5205 = vmatpush1.xpose.msra.mxu0 0.0
    %5206 = vmatprep.subr.mxu0 0.0
    %5207 = vmatpush1.xpose.msra.mxu0 0.0
    %5208 = vmatprep.subr.mxu0 0.0
    %5209 = vmatpush1.xpose.msra.mxu0 0.0
    %5210 = vmatprep.subr.mxu0 0.0
    %5211 = vmatpush1.xpose.msra.mxu0 0.0
    %5212 = vmatprep.subr.mxu0 0.0
    %5213 = vmatpush1.xpose.msra.mxu0 0.0
    %5214 = vmatprep.subr.mxu0 0.0
    %5215 = vmatpush1.xpose.msra.mxu0 0.0
    %5216 = vmatprep.subr.mxu0 0.0
    %5217 = vmatpush1.xpose.msra.mxu0 0.0
    %5218 = vmatprep.subr.mxu0 0.0
    %5219 = vmatpush1.xpose.msra.mxu0 0.0
    %5220 = vmatprep.subr.mxu0 0.0
    %5221 = vmatpush1.xpose.msra.mxu0 0.0
    %5222 = vmatprep.subr.mxu0 0.0
    %5223 = vmatpush1.xpose.msra.mxu0 0.0
    %5224 = vmatprep.subr.mxu0 0.0
    %5225 = vmatpush1.xpose.msra.mxu0 0.0
    %5226 = vmatprep.subr.mxu0 0.0
    %5227 = vmatpush1.xpose.msra.mxu0 0.0
    %5228 = vmatprep.subr.mxu0 0.0
    %5229 = vmatpush1.xpose.msra.mxu0 0.0
    %5230 = vmatprep.subr.mxu0 0.0
    %5231 = vmatpush1.xpose.msra.mxu0 0.0
    %5232 = vmatprep.subr.mxu0 0.0
    %5233 = vmatpush1.xpose.msra.mxu0 0.0
    %5234 = vmatprep.subr.mxu0 0.0
    %5235 = vmatpush1.xpose.msra.mxu0 0.0
    %5236 = vmatprep.subr.mxu0 0.0
    %5237 = vmatpush1.xpose.msra.mxu0 0.0
    %5238 = vmatprep.subr.mxu0 0.0
    %5239 = vmatpush1.xpose.msra.mxu0 0.0
    %5240 = vmatprep.subr.mxu0 0.0
    %5241 = vmatpush1.xpose.msra.mxu0 0.0
    %5242 = vmatprep.subr.mxu0 0.0
    %5243 = vmatpush1.xpose.msra.mxu0 0.0
    %5244 = vmatprep.subr.mxu0 0.0
    %5245 = vmatpush1.xpose.msra.mxu0 0.0
    %5246 = vmatprep.mubr.f32.mxu0 0.0
    %5247 = vmatmul.mubr.f32.gmra.mrb[0].mxu0 %v5178
    %v5248 = vpop.f32.mrb[0].mxu0
    %v5249 = vadd.f32 0.0, %v5248
    %v5250 = vpop.f32.mrb[0].mxu0
    %5251 = vdwg.mxu0
    %v5252 = vsel %vm624, -1e+30, %v5027
    %v5253 = vsel %vm624, -1e+30, %v5101
    %v5254 = vsel %vm624, -1e+30, %v5175
    %v5255 = vsel %vm624, -1e+30, %v5249
    %v5256 = vsel %vm326, %v5252, -inf
    %5257 = vmax.xlane.f32.xlu0 %v5256
    %v5258 = vpop.xlane.xlu0 %5257
    %v5259 = vsel %vm326, %v5253, -inf
    %5260 = vmax.xlane.f32.xlu0 %v5259
    %v5261 = vpop.xlane.xlu0 %5260
    %v5262 = vsel %vm326, %v5254, -inf
    %5263 = vmax.xlane.f32.xlu0 %v5262
    %v5264 = vpop.xlane.xlu0 %5263
    %v5265 = vsel %vm326, %v5255, -inf
    %5266 = vmax.xlane.f32.xlu0 %v5265
    %v5267 = vpop.xlane.xlu0 %5266
    %v5268 = vsub.f32 %v5252, %v5258
    %v5269 = vsub.f32 %v5253, %v5261
    %v5270 = vsub.f32 %v5254, %v5264
    %v5271 = vsub.f32 %v5255, %v5267
    %v5272 = vmul.f32 %v5268, 1.442695
    %v5273 = vpow.pop %v5272
    %v5274 = vmul.f32 %v5269, 1.442695
    %v5275 = vpow.pop %v5274
    %v5276 = vmul.f32 %v5270, 1.442695
    %v5277 = vpow.pop %v5276
    %v5278 = vmul.f32 %v5271, 1.442695
    %v5279 = vpow.pop %v5278
    %v5280 = vsel %vm326, %v5273, 0.0
    %5281 = vadd.xlane.f32.xlu0 %v5280
    %v5282 = vpop.xlane.xlu0 %5281
    %v5283 = vsel %vm326, %v5275, 0.0
    %5284 = vadd.xlane.f32.xlu0 %v5283
    %v5285 = vpop.xlane.xlu0 %5284
    %v5286 = vsel %vm326, %v5277, 0.0
    %5287 = vadd.xlane.f32.xlu0 %v5286
    %v5288 = vpop.xlane.xlu0 %5287
    %v5289 = vsel %vm326, %v5279, 0.0
    %5290 = vadd.xlane.f32.xlu0 %v5289
    %v5291 = vpop.xlane.xlu0 %5290
    %v5292 = vrcp.pop %v5282
    %v5293 = vrcp.pop %v5285
    %v5294 = vrcp.pop %v5288
    %v5295 = vrcp.pop %v5291
    %v5296 = vmul.f32 %v5273, %v5292
    %v5297 = vmul.f32 %v5275, %v5293
    %v5298 = vmul.f32 %v5277, %v5294
    %v5299 = vmul.f32 %v5279, %v5295
    %v5301 = vsel %vm326, %v5296, 0
    %5303 = vmatprep.subr.mxu0 0.0
    %5304 = vmatpush1.msra.mxu0 %v4929
    %5305 = vmatprep.subr.mxu0 0.0
    %5306 = vmatpush1.msra.mxu0 0.0
    %5307 = vmatprep.subr.mxu0 0.0
    %5308 = vmatpush1.msra.mxu0 0.0
    %5309 = vmatprep.subr.mxu0 0.0
    %5310 = vmatpush1.msra.mxu0 0.0
    %5311 = vmatprep.subr.mxu0 0.0
    %5312 = vmatpush1.msra.mxu0 0.0
    %5313 = vmatprep.subr.mxu0 0.0
    %5314 = vmatpush1.msra.mxu0 0.0
    %5315 = vmatprep.subr.mxu0 0.0
    %5316 = vmatpush1.msra.mxu0 0.0
    %5317 = vmatprep.subr.mxu0 0.0
    %5318 = vmatpush1.msra.mxu0 0.0
    %5319 = vmatprep.subr.mxu0 0.0
    %5320 = vmatpush1.msra.mxu0 0.0
    %5321 = vmatprep.subr.mxu0 0.0
    %5322 = vmatpush1.msra.mxu0 0.0
    %5323 = vmatprep.subr.mxu0 0.0
    %5324 = vmatpush1.msra.mxu0 0.0
    %5325 = vmatprep.subr.mxu0 0.0
    %5326 = vmatpush1.msra.mxu0 0.0
    %5327 = vmatprep.subr.mxu0 0.0
    %5328 = vmatpush1.msra.mxu0 0.0
    %5329 = vmatprep.subr.mxu0 0.0
    %5330 = vmatpush1.msra.mxu0 0.0
    %5331 = vmatprep.subr.mxu0 0.0
    %5332 = vmatpush1.msra.mxu0 0.0
    %5333 = vmatprep.subr.mxu0 0.0
    %5334 = vmatpush1.msra.mxu0 0.0
    %5335 = vmatprep.subr.mxu0 0.0
    %5336 = vmatpush1.msra.mxu0 0.0
    %5337 = vmatprep.subr.mxu0 0.0
    %5338 = vmatpush1.msra.mxu0 0.0
    %5339 = vmatprep.subr.mxu0 0.0
    %5340 = vmatpush1.msra.mxu0 0.0
    %5341 = vmatprep.subr.mxu0 0.0
    %5342 = vmatpush1.msra.mxu0 0.0
    %5343 = vmatprep.subr.mxu0 0.0
    %5344 = vmatpush1.msra.mxu0 0.0
    %5345 = vmatprep.subr.mxu0 0.0
    %5346 = vmatpush1.msra.mxu0 0.0
    %5347 = vmatprep.subr.mxu0 0.0
    %5348 = vmatpush1.msra.mxu0 0.0
    %5349 = vmatprep.subr.mxu0 0.0
    %5350 = vmatpush1.msra.mxu0 0.0
    %5351 = vmatprep.subr.mxu0 0.0
    %5352 = vmatpush1.msra.mxu0 0.0
    %5353 = vmatprep.subr.mxu0 0.0
    %5354 = vmatpush1.msra.mxu0 0.0
    %5355 = vmatprep.subr.mxu0 0.0
    %5356 = vmatpush1.msra.mxu0 0.0
    %5357 = vmatprep.subr.mxu0 0.0
    %5358 = vmatpush1.msra.mxu0 0.0
    %5359 = vmatprep.subr.mxu0 0.0
    %5360 = vmatpush1.msra.mxu0 0.0
    %5361 = vmatprep.subr.mxu0 0.0
    %5362 = vmatpush1.msra.mxu0 0.0
    %5363 = vmatprep.subr.mxu0 0.0
    %5364 = vmatpush1.msra.mxu0 0.0
    %5365 = vmatprep.subr.mxu0 0.0
    %5366 = vmatpush1.msra.mxu0 0.0
    %5367 = vmatprep.mubr.f32.mxu0 0.0
    %5368 = vmatmul.mubr.f32.gmra.mrb[0].mxu0 %v5301
    %v5369 = vpop.f32.mrb[0].mxu0
    %v5370 = vadd.f32 0.0, %v5369
    %v5371 = vpop.f32.mrb[0].mxu0
    %5372 = vdwg.mxu0
    %v5374 = vsel %vm326, %v5297, 0
    %5376 = vmatprep.subr.mxu0 0.0
    %5377 = vmatpush1.msra.mxu0 %v4948
    %5378 = vmatprep.subr.mxu0 0.0
    %5379 = vmatpush1.msra.mxu0 0.0
    %5380 = vmatprep.subr.mxu0 0.0
    %5381 = vmatpush1.msra.mxu0 0.0
    %5382 = vmatprep.subr.mxu0 0.0
    %5383 = vmatpush1.msra.mxu0 0.0
    %5384 = vmatprep.subr.mxu0 0.0
    %5385 = vmatpush1.msra.mxu0 0.0
    %5386 = vmatprep.subr.mxu0 0.0
    %5387 = vmatpush1.msra.mxu0 0.0
    %5388 = vmatprep.subr.mxu0 0.0
    %5389 = vmatpush1.msra.mxu0 0.0
    %5390 = vmatprep.subr.mxu0 0.0
    %5391 = vmatpush1.msra.mxu0 0.0
    %5392 = vmatprep.subr.mxu0 0.0
    %5393 = vmatpush1.msra.mxu0 0.0
    %5394 = vmatprep.subr.mxu0 0.0
    %5395 = vmatpush1.msra.mxu0 0.0
    %5396 = vmatprep.subr.mxu0 0.0
    %5397 = vmatpush1.msra.mxu0 0.0
    %5398 = vmatprep.subr.mxu0 0.0
    %5399 = vmatpush1.msra.mxu0 0.0
    %5400 = vmatprep.subr.mxu0 0.0
    %5401 = vmatpush1.msra.mxu0 0.0
    %5402 = vmatprep.subr.mxu0 0.0
    %5403 = vmatpush1.msra.mxu0 0.0
    %5404 = vmatprep.subr.mxu0 0.0
    %5405 = vmatpush1.msra.mxu0 0.0
    %5406 = vmatprep.subr.mxu0 0.0
    %5407 = vmatpush1.msra.mxu0 0.0
    %5408 = vmatprep.subr.mxu0 0.0
    %5409 = vmatpush1.msra.mxu0 0.0
    %5410 = vmatprep.subr.mxu0 0.0
    %5411 = vmatpush1.msra.mxu0 0.0
    %5412 = vmatprep.subr.mxu0 0.0
    %5413 = vmatpush1.msra.mxu0 0.0
    %5414 = vmatprep.subr.mxu0 0.0
    %5415 = vmatpush1.msra.mxu0 0.0
    %5416 = vmatprep.subr.mxu0 0.0
    %5417 = vmatpush1.msra.mxu0 0.0
    %5418 = vmatprep.subr.mxu0 0.0
    %5419 = vmatpush1.msra.mxu0 0.0
    %5420 = vmatprep.subr.mxu0 0.0
    %5421 = vmatpush1.msra.mxu0 0.0
    %5422 = vmatprep.subr.mxu0 0.0
    %5423 = vmatpush1.msra.mxu0 0.0
    %5424 = vmatprep.subr.mxu0 0.0
    %5425 = vmatpush1.msra.mxu0 0.0
    %5426 = vmatprep.subr.mxu0 0.0
    %5427 = vmatpush1.msra.mxu0 0.0
    %5428 = vmatprep.subr.mxu0 0.0
    %5429 = vmatpush1.msra.mxu0 0.0
    %5430 = vmatprep.subr.mxu0 0.0
    %5431 = vmatpush1.msra.mxu0 0.0
    %5432 = vmatprep.subr.mxu0 0.0
    %5433 = vmatpush1.msra.mxu0 0.0
    %5434 = vmatprep.subr.mxu0 0.0
    %5435 = vmatpush1.msra.mxu0 0.0
    %5436 = vmatprep.subr.mxu0 0.0
    %5437 = vmatpush1.msra.mxu0 0.0
    %5438 = vmatprep.subr.mxu0 0.0
    %5439 = vmatpush1.msra.mxu0 0.0
    %5440 = vmatprep.mubr.f32.mxu0 0.0
    %5441 = vmatmul.mubr.f32.gmra.mrb[0].mxu0 %v5374
    %v5442 = vpop.f32.mrb[0].mxu0
    %v5443 = vadd.f32 0.0, %v5442
    %v5444 = vpop.f32.mrb[0].mxu0
    %5445 = vdwg.mxu0
    %v5447 = vsel %vm326, %v5298, 0
    %5449 = vmatprep.subr.mxu0 0.0
    %5450 = vmatpush1.msra.mxu0 %v4951
    %5451 = vmatprep.subr.mxu0 0.0
    %5452 = vmatpush1.msra.mxu0 0.0
    %5453 = vmatprep.subr.mxu0 0.0
    %5454 = vmatpush1.msra.mxu0 0.0
    %5455 = vmatprep.subr.mxu0 0.0
    %5456 = vmatpush1.msra.mxu0 0.0
    %5457 = vmatprep.subr.mxu0 0.0
    %5458 = vmatpush1.msra.mxu0 0.0
    %5459 = vmatprep.subr.mxu0 0.0
    %5460 = vmatpush1.msra.mxu0 0.0
    %5461 = vmatprep.subr.mxu0 0.0
    %5462 = vmatpush1.msra.mxu0 0.0
    %5463 = vmatprep.subr.mxu0 0.0
    %5464 = vmatpush1.msra.mxu0 0.0
    %5465 = vmatprep.subr.mxu0 0.0
    %5466 = vmatpush1.msra.mxu0 0.0
    %5467 = vmatprep.subr.mxu0 0.0
    %5468 = vmatpush1.msra.mxu0 0.0
    %5469 = vmatprep.subr.mxu0 0.0
    %5470 = vmatpush1.msra.mxu0 0.0
    %5471 = vmatprep.subr.mxu0 0.0
    %5472 = vmatpush1.msra.mxu0 0.0
    %5473 = vmatprep.subr.mxu0 0.0
    %5474 = vmatpush1.msra.mxu0 0.0
    %5475 = vmatprep.subr.mxu0 0.0
    %5476 = vmatpush1.msra.mxu0 0.0
    %5477 = vmatprep.subr.mxu0 0.0
    %5478 = vmatpush1.msra.mxu0 0.0
    %5479 = vmatprep.subr.mxu0 0.0
    %5480 = vmatpush1.msra.mxu0 0.0
    %5481 = vmatprep.subr.mxu0 0.0
    %5482 = vmatpush1.msra.mxu0 0.0
    %5483 = vmatprep.subr.mxu0 0.0
    %5484 = vmatpush1.msra.mxu0 0.0
    %5485 = vmatprep.subr.mxu0 0.0
    %5486 = vmatpush1.msra.mxu0 0.0
    %5487 = vmatprep.subr.mxu0 0.0
    %5488 = vmatpush1.msra.mxu0 0.0
    %5489 = vmatprep.subr.mxu0 0.0
    %5490 = vmatpush1.msra.mxu0 0.0
    %5491 = vmatprep.subr.mxu0 0.0
    %5492 = vmatpush1.msra.mxu0 0.0
    %5493 = vmatprep.subr.mxu0 0.0
    %5494 = vmatpush1.msra.mxu0 0.0
    %5495 = vmatprep.subr.mxu0 0.0
    %5496 = vmatpush1.msra.mxu0 0.0
    %5497 = vmatprep.subr.mxu0 0.0
    %5498 = vmatpush1.msra.mxu0 0.0
    %5499 = vmatprep.subr.mxu0 0.0
    %5500 = vmatpush1.msra.mxu0 0.0
    %5501 = vmatprep.subr.mxu0 0.0
    %5502 = vmatpush1.msra.mxu0 0.0
    %5503 = vmatprep.subr.mxu0 0.0
    %5504 = vmatpush1.msra.mxu0 0.0
    %5505 = vmatprep.subr.mxu0 0.0
    %5506 = vmatpush1.msra.mxu0 0.0
    %5507 = vmatprep.subr.mxu0 0.0
    %5508 = vmatpush1.msra.mxu0 0.0
    %5509 = vmatprep.subr.mxu0 0.0
    %5510 = vmatpush1.msra.mxu0 0.0
    %5511 = vmatprep.subr.mxu0 0.0
    %5512 = vmatpush1.msra.mxu0 0.0
    %5513 = vmatprep.mubr.f32.mxu0 0.0
    %5514 = vmatmul.mubr.f32.gmra.mrb[0].mxu0 %v5447
    %v5515 = vpop.f32.mrb[0].mxu0
    %v5516 = vadd.f32 0.0, %v5515
    %v5517 = vpop.f32.mrb[0].mxu0
    %5518 = vdwg.mxu0
    %v5520 = vsel %vm326, %v5299, 0
    %5522 = vmatprep.subr.mxu0 0.0
    %5523 = vmatpush1.msra.mxu0 %v4954
    %5524 = vmatprep.subr.mxu0 0.0
    %5525 = vmatpush1.msra.mxu0 0.0
    %5526 = vmatprep.subr.mxu0 0.0
    %5527 = vmatpush1.msra.mxu0 0.0
    %5528 = vmatprep.subr.mxu0 0.0
    %5529 = vmatpush1.msra.mxu0 0.0
    %5530 = vmatprep.subr.mxu0 0.0
    %5531 = vmatpush1.msra.mxu0 0.0
    %5532 = vmatprep.subr.mxu0 0.0
    %5533 = vmatpush1.msra.mxu0 0.0
    %5534 = vmatprep.subr.mxu0 0.0
    %5535 = vmatpush1.msra.mxu0 0.0
    %5536 = vmatprep.subr.mxu0 0.0
    %5537 = vmatpush1.msra.mxu0 0.0
    %5538 = vmatprep.subr.mxu0 0.0
    %5539 = vmatpush1.msra.mxu0 0.0
    %5540 = vmatprep.subr.mxu0 0.0
    %5541 = vmatpush1.msra.mxu0 0.0
    %5542 = vmatprep.subr.mxu0 0.0
    %5543 = vmatpush1.msra.mxu0 0.0
    %5544 = vmatprep.subr.mxu0 0.0
    %5545 = vmatpush1.msra.mxu0 0.0
    %5546 = vmatprep.subr.mxu0 0.0
    %5547 = vmatpush1.msra.mxu0 0.0
    %5548 = vmatprep.subr.mxu0 0.0
    %5549 = vmatpush1.msra.mxu0 0.0
    %5550 = vmatprep.subr.mxu0 0.0
    %5551 = vmatpush1.msra.mxu0 0.0
    %5552 = vmatprep.subr.mxu0 0.0
    %5553 = vmatpush1.msra.mxu0 0.0
    %5554 = vmatprep.subr.mxu0 0.0
    %5555 = vmatpush1.msra.mxu0 0.0
    %5556 = vmatprep.subr.mxu0 0.0
    %5557 = vmatpush1.msra.mxu0 0.0
    %5558 = vmatprep.subr.mxu0 0.0
    %5559 = vmatpush1.msra.mxu0 0.0
    %5560 = vmatprep.subr.mxu0 0.0
    %5561 = vmatpush1.msra.mxu0 0.0
    %5562 = vmatprep.subr.mxu0 0.0
    %5563 = vmatpush1.msra.mxu0 0.0
    %5564 = vmatprep.subr.mxu0 0.0
    %5565 = vmatpush1.msra.mxu0 0.0
    %5566 = vmatprep.subr.mxu0 0.0
    %5567 = vmatpush1.msra.mxu0 0.0
    %5568 = vmatprep.subr.mxu0 0.0
    %5569 = vmatpush1.msra.mxu0 0.0
    %5570 = vmatprep.subr.mxu0 0.0
    %5571 = vmatpush1.msra.mxu0 0.0
    %5572 = vmatprep.subr.mxu0 0.0
    %5573 = vmatpush1.msra.mxu0 0.0
    %5574 = vmatprep.subr.mxu0 0.0
    %5575 = vmatpush1.msra.mxu0 0.0
    %5576 = vmatprep.subr.mxu0 0.0
    %5577 = vmatpush1.msra.mxu0 0.0
    %5578 = vmatprep.subr.mxu0 0.0
    %5579 = vmatpush1.msra.mxu0 0.0
    %5580 = vmatprep.subr.mxu0 0.0
    %5581 = vmatpush1.msra.mxu0 0.0
    %5582 = vmatprep.subr.mxu0 0.0
    %5583 = vmatpush1.msra.mxu0 0.0
    %5584 = vmatprep.subr.mxu0 0.0
    %5585 = vmatpush1.msra.mxu0 0.0
    %5586 = vmatprep.mubr.f32.mxu0 0.0
    %5587 = vmatmul.mubr.f32.gmra.mrb[0].mxu0 %v5520
    %v5588 = vpop.f32.mrb[0].mxu0
    %v5589 = vadd.f32 0.0, %v5588
    %v5590 = vpop.f32.mrb[0].mxu0
    %5591 = vdwg.mxu0
    %5593 = vrot.lane.b32.xlu0 %v5443, 8
    %v5594 = vpop.permute.xlu0 %5593
    %5597 = vrot.lane.b32.xlu0 %v5516, 16
    %v5598 = vpop.permute.xlu0 %5597
    %5601 = vrot.lane.b32.xlu0 %v5589, 24
    %v5602 = vpop.permute.xlu0 %5601
    %v5604 = vsel %vm326, %v5370, %v5594
    %v5605 = vsel %vm978, %v5604, %v5598
    %v5606 = vsel %vm980, %v5605, %v5602
    %v5607 = vld [vmem:[%s982] sm:$0xff]
    %v5608 = vld [vmem:[%s982 + $0x8] sm:$0xff]
    %v5609 = vld [vmem:[%s982 + $0x10] sm:$0xff]
    %v5610 = vld [vmem:[%s982 + $0x18] sm:$0xff]
    %v5611 = vld [vmem:[%s3 + $0x3] sm:$0x1]
    %v5612 = vlaneseq
    %v5613 = vshrl.u32 %v5612, 7
    %v5614 = vsub.s32 0, %v5613
    %v5615 = vrot.slane %v5611, %v5614
    %v5617 = vsel %vm67, %v5606, 0
    %5619 = vmatprep.subr.mxu0 0.0
    %5620 = vmatpush1.msra.mxu0 %v5607
    %5621 = vmatprep.subr.mxu0 0.0
    %5622 = vmatpush1.msra.mxu0 %v5608
    %5623 = vmatprep.subr.mxu0 0.0
    %5624 = vmatpush1.msra.mxu0 %v5609
    %5625 = vmatprep.subr.mxu0 0.0
    %5626 = vmatpush1.msra.mxu0 %v5610
    %5627 = vmatprep.subr.mxu0 0.0
    %5628 = vmatpush1.msra.mxu0 0.0
    %5629 = vmatprep.subr.mxu0 0.0
    %5630 = vmatpush1.msra.mxu0 0.0
    %5631 = vmatprep.subr.mxu0 0.0
    %5632 = vmatpush1.msra.mxu0 0.0
    %5633 = vmatprep.subr.mxu0 0.0
    %5634 = vmatpush1.msra.mxu0 0.0
    %5635 = vmatprep.subr.mxu0 0.0
    %5636 = vmatpush1.msra.mxu0 0.0
    %5637 = vmatprep.subr.mxu0 0.0
    %5638 = vmatpush1.msra.mxu0 0.0
    %5639 = vmatprep.subr.mxu0 0.0
    %5640 = vmatpush1.msra.mxu0 0.0
    %5641 = vmatprep.subr.mxu0 0.0
    %5642 = vmatpush1.msra.mxu0 0.0
    %5643 = vmatprep.subr.mxu0 0.0
    %5644 = vmatpush1.msra.mxu0 0.0
    %5645 = vmatprep.subr.mxu0 0.0
    %5646 = vmatpush1.msra.mxu0 0.0
    %5647 = vmatprep.subr.mxu0 0.0
    %5648 = vmatpush1.msra.mxu0 0.0
    %5649 = vmatprep.subr.mxu0 0.0
    %5650 = vmatpush1.msra.mxu0 0.0
    %5651 = vmatprep.subr.mxu0 0.0
    %5652 = vmatpush1.msra.mxu0 0.0
    %5653 = vmatprep.subr.mxu0 0.0
    %5654 = vmatpush1.msra.mxu0 0.0
    %5655 = vmatprep.subr.mxu0 0.0
    %5656 = vmatpush1.msra.mxu0 0.0
    %5657 = vmatprep.subr.mxu0 0.0
    %5658 = vmatpush1.msra.mxu0 0.0
    %5659 = vmatprep.subr.mxu0 0.0
    %5660 = vmatpush1.msra.mxu0 0.0
    %5661 = vmatprep.subr.mxu0 0.0
    %5662 = vmatpush1.msra.mxu0 0.0
    %5663 = vmatprep.subr.mxu0 0.0
    %5664 = vmatpush1.msra.mxu0 0.0
    %5665 = vmatprep.subr.mxu0 0.0
    %5666 = vmatpush1.msra.mxu0 0.0
    %5667 = vmatprep.subr.mxu0 0.0
    %5668 = vmatpush1.msra.mxu0 0.0
    %5669 = vmatprep.subr.mxu0 0.0
    %5670 = vmatpush1.msra.mxu0 0.0
    %5671 = vmatprep.subr.mxu0 0.0
    %5672 = vmatpush1.msra.mxu0 0.0
    %5673 = vmatprep.subr.mxu0 0.0
    %5674 = vmatpush1.msra.mxu0 0.0
    %5675 = vmatprep.subr.mxu0 0.0
    %5676 = vmatpush1.msra.mxu0 0.0
    %5677 = vmatprep.subr.mxu0 0.0
    %5678 = vmatpush1.msra.mxu0 0.0
    %5679 = vmatprep.subr.mxu0 0.0
    %5680 = vmatpush1.msra.mxu0 0.0
    %5681 = vmatprep.subr.mxu0 0.0
    %5682 = vmatpush1.msra.mxu0 0.0
    %5683 = vmatprep.mubr.f32.mxu0 0.0
    %5684 = vmatmul.mubr.f32.gmra.mrb[0].mxu0 %v5617
    %v5685 = vpop.f32.mrb[0].mxu0
    %v5686 = vadd.f32 %v5615, %v5685
    %v5687 = vpop.f32.mrb[0].mxu0
    %5688 = vdwg.mxu0
    %v5689 = vadd.f32 %v4687, %v5686
    %v5690 = vld [vmem:[%s4] sm:$0x1]
    %v5691 = vld [vmem:[%s5] sm:$0x1]
    %v5692 = vsel %vm67, %v5689, 0.0
    %5693 = vadd.xlane.f32.xlu0 %v5692
    %v5694 = vpop.xlane.xlu0 %5693
    %v5695 = vmul.f32 %v5694, %v1071
    %v5696 = vsub.f32 %v5689, %v5695
    %v5697 = vmul.f32 %v5696, %v5696
    %v5698 = vsel %vm67, %v5697, 0.0
    %5699 = vadd.xlane.f32.xlu0 %v5698
    %v5700 = vpop.xlane.xlu0 %5699
    %v5701 = vmul.f32 %v5700, %v1071
    %v5702 = vadd.f32 %v5701, 1e-05
    %v5703 = vrsqrt.pop %v5702
    %v5704 = vmul.f32 %v5696, %v5703
    %v5705 = vlaneseq
    %v5706 = vshrl.u32 %v5705, 7
    %v5707 = vsub.s32 0, %v5706
    %v5708 = vrot.slane %v5690, %v5707
    %v5709 = vmul.f32 %v5704, %v5708
    %v5710 = vlaneseq
    %v5711 = vshrl.u32 %v5710, 7
    %v5712 = vsub.s32 0, %v5711
    %v5713 = vrot.slane %v5691, %v5712
    %v5714 = vadd.f32 %v5709, %v5713
    %v5715 = vld [vmem:[%s1092] sm:$0xff]
    %v5716 = vld [vmem:[%s1092 + $0x8] sm:$0xff]
    %v5717 = vld [vmem:[%s1092 + $0x10] sm:$0xff]
    %v5718 = vld [vmem:[%s1092 + $0x18] sm:$0xff]
    %v5719 = vld [vmem:[%s3 + $0x4] sm:$0x1]
    %v5720 = vlaneseq
    %v5721 = vshrl.u32 %v5720, 7
    %v5722 = vsub.s32 0, %v5721
    %v5723 = vrot.slane %v5719, %v5722
    %v5725 = vsel %vm67, %v5714, 0
    %5727 = vmatprep.subr.mxu0 0.0
    %5728 = vmatpush1.msra.mxu0 %v5715
    %5729 = vmatprep.subr.mxu0 0.0
    %5730 = vmatpush1.msra.mxu0 %v5716
    %5731 = vmatprep.subr.mxu0 0.0
    %5732 = vmatpush1.msra.mxu0 %v5717
    %5733 = vmatprep.subr.mxu0 0.0
    %5734 = vmatpush1.msra.mxu0 %v5718
    %5735 = vmatprep.subr.mxu0 0.0
    %5736 = vmatpush1.msra.mxu0 0.0
    %5737 = vmatprep.subr.mxu0 0.0
    %5738 = vmatpush1.msra.mxu0 0.0
    %5739 = vmatprep.subr.mxu0 0.0
    %5740 = vmatpush1.msra.mxu0 0.0
    %5741 = vmatprep.subr.mxu0 0.0
    %5742 = vmatpush1.msra.mxu0 0.0
    %5743 = vmatprep.subr.mxu0 0.0
    %5744 = vmatpush1.msra.mxu0 0.0
    %5745 = vmatprep.subr.mxu0 0.0
    %5746 = vmatpush1.msra.mxu0 0.0
    %5747 = vmatprep.subr.mxu0 0.0
    %5748 = vmatpush1.msra.mxu0 0.0
    %5749 = vmatprep.subr.mxu0 0.0
    %5750 = vmatpush1.msra.mxu0 0.0
    %5751 = vmatprep.subr.mxu0 0.0
    %5752 = vmatpush1.msra.mxu0 0.0
    %5753 = vmatprep.subr.mxu0 0.0
    %5754 = vmatpush1.msra.mxu0 0.0
    %5755 = vmatprep.subr.mxu0 0.0
    %5756 = vmatpush1.msra.mxu0 0.0
    %5757 = vmatprep.subr.mxu0 0.0
    %5758 = vmatpush1.msra.mxu0 0.0
    %5759 = vmatprep.subr.mxu0 0.0
    %5760 = vmatpush1.msra.mxu0 0.0
    %5761 = vmatprep.subr.mxu0 0.0
    %5762 = vmatpush1.msra.mxu0 0.0
    %5763 = vmatprep.subr.mxu0 0.0
    %5764 = vmatpush1.msra.mxu0 0.0
    %5765 = vmatprep.subr.mxu0 0.0
    %5766 = vmatpush1.msra.mxu0 0.0
    %5767 = vmatprep.subr.mxu0 0.0
    %5768 = vmatpush1.msra.mxu0 0.0
    %5769 = vmatprep.subr.mxu0 0.0
    %5770 = vmatpush1.msra.mxu0 0.0
    %5771 = vmatprep.subr.mxu0 0.0
    %5772 = vmatpush1.msra.mxu0 0.0
    %5773 = vmatprep.subr.mxu0 0.0
    %5774 = vmatpush1.msra.mxu0 0.0
    %5775 = vmatprep.subr.mxu0 0.0
    %5776 = vmatpush1.msra.mxu0 0.0
    %5777 = vmatprep.subr.mxu0 0.0
    %5778 = vmatpush1.msra.mxu0 0.0
    %5779 = vmatprep.subr.mxu0 0.0
    %5780 = vmatpush1.msra.mxu0 0.0
    %5781 = vmatprep.subr.mxu0 0.0
    %5782 = vmatpush1.msra.mxu0 0.0
    %5783 = vmatprep.subr.mxu0 0.0
    %5784 = vmatpush1.msra.mxu0 0.0
    %5785 = vmatprep.subr.mxu0 0.0
    %5786 = vmatpush1.msra.mxu0 0.0
    %5787 = vmatprep.subr.mxu0 0.0
    %5788 = vmatpush1.msra.mxu0 0.0
    %5789 = vmatprep.subr.mxu0 0.0
    %5790 = vmatpush1.msra.mxu0 0.0
    %5791 = vmatprep.mubr.f32.mxu0 0.0
    %5792 = vmatmul.mubr.f32.gmra.mrb[0].mxu0 %v5725
    %v5793 = vpop.f32.mrb[0].mxu0
    %v5794 = vadd.f32 %v5723, %v5793
    %v5795 = vpop.f32.mrb[0].mxu0
    %5796 = vdwg.mxu0
    %v5797 = vmul.f32 %v5794, 0.35355338
    %v5798 = vld [vmem:[%s1176] sm:$0xff]
    %v5799 = vld [vmem:[%s1176 + $0x8] sm:$0xff]
    %v5800 = vld [vmem:[%s1176 + $0x10] sm:$0xff]
    %v5801 = vld [vmem:[%s1176 + $0x18] sm:$0xff]
    %v5802 = vld [vmem:[%s3 + $0x5] sm:$0x1]
    %v5803 = vlaneseq
    %v5804 = vshrl.u32 %v5803, 7
    %v5805 = vsub.s32 0, %v5804
    %v5806 = vrot.slane %v5802, %v5805
    %v5808 = vsel %vm67, %v4689, 0
    %v5811 = vsel %vm67, %v4690, 0
    %5813 = vmatprep.subr.mxu0 0.0
    %5814 = vmatpush1.msra.mxu0 %v5798
    %5815 = vmatprep.subr.mxu0 0.0
    %5816 = vmatpush1.msra.mxu0 %v5799
    %5817 = vmatprep.subr.mxu0 0.0
    %5818 = vmatpush1.msra.mxu0 %v5800
    %5819 = vmatprep.subr.mxu0 0.0
    %5820 = vmatpush1.msra.mxu0 %v5801
    %5821 = vmatprep.subr.mxu0 0.0
    %5822 = vmatpush1.msra.mxu0 0.0
    %5823 = vmatprep.subr.mxu0 0.0
    %5824 = vmatpush1.msra.mxu0 0.0
    %5825 = vmatprep.subr.mxu0 0.0
    %5826 = vmatpush1.msra.mxu0 0.0
    %5827 = vmatprep.subr.mxu0 0.0
    %5828 = vmatpush1.msra.mxu0 0.0
    %5829 = vmatprep.subr.mxu0 0.0
    %5830 = vmatpush1.msra.mxu0 0.0
    %5831 = vmatprep.subr.mxu0 0.0
    %5832 = vmatpush1.msra.mxu0 0.0
    %5833 = vmatprep.subr.mxu0 0.0
    %5834 = vmatpush1.msra.mxu0 0.0
    %5835 = vmatprep.subr.mxu0 0.0
    %5836 = vmatpush1.msra.mxu0 0.0
    %5837 = vmatprep.subr.mxu0 0.0
    %5838 = vmatpush1.msra.mxu0 0.0
    %5839 = vmatprep.subr.mxu0 0.0
    %5840 = vmatpush1.msra.mxu0 0.0
    %5841 = vmatprep.subr.mxu0 0.0
    %5842 = vmatpush1.msra.mxu0 0.0
    %5843 = vmatprep.subr.mxu0 0.0
    %5844 = vmatpush1.msra.mxu0 0.0
    %5845 = vmatprep.subr.mxu0 0.0
    %5846 = vmatpush1.msra.mxu0 0.0
    %5847 = vmatprep.subr.mxu0 0.0
    %5848 = vmatpush1.msra.mxu0 0.0
    %5849 = vmatprep.subr.mxu0 0.0
    %5850 = vmatpush1.msra.mxu0 0.0
    %5851 = vmatprep.subr.mxu0 0.0
    %5852 = vmatpush1.msra.mxu0 0.0
    %5853 = vmatprep.subr.mxu0 0.0
    %5854 = vmatpush1.msra.mxu0 0.0
    %5855 = vmatprep.subr.mxu0 0.0
    %5856 = vmatpush1.msra.mxu0 0.0
    %5857 = vmatprep.subr.mxu0 0.0
    %5858 = vmatpush1.msra.mxu0 0.0
    %5859 = vmatprep.subr.mxu0 0.0
    %5860 = vmatpush1.msra.mxu0 0.0
    %5861 = vmatprep.subr.mxu0 0.0
    %5862 = vmatpush1.msra.mxu0 0.0
    %5863 = vmatprep.subr.mxu0 0.0
    %5864 = vmatpush1.msra.mxu0 0.0
    %5865 = vmatprep.subr.mxu0 0.0
    %5866 = vmatpush1.msra.mxu0 0.0
    %5867 = vmatprep.subr.mxu0 0.0
    %5868 = vmatpush1.msra.mxu0 0.0
    %5869 = vmatprep.subr.mxu0 0.0
    %5870 = vmatpush1.msra.mxu0 0.0
    %5871 = vmatprep.subr.mxu0 0.0
    %5872 = vmatpush1.msra.mxu0 0.0
    %5873 = vmatprep.subr.mxu0 0.0
    %5874 = vmatpush1.msra.mxu0 0.0
    %5875 = vmatprep.subr.mxu0 0.0
    %5876 = vmatpush1.msra.mxu0 0.0
    %5877 = vmatprep.mubr.f32.mxu0 0.0
    %5878 = vmatmul.mubr.f32.gmra.mrb[0].mxu0 %v5808
    %v5879 = vpop.f32.mrb[0].mxu0
    %v5880 = vadd.f32 %v5806, %v5879
    %v5881 = vpop.f32.mrb[0].mxu0
    %5882 = vmatprep.mubr.f32.mxu0 0.0
    %5883 = vmatmul.mubr.f32.gmra.mrb[0].mxu0 %v5811
    %v5884 = vpop.f32.mrb[0].mxu0
    %v5885 = vadd.f32 %v5806, %v5884
    %v5886 = vpop.f32.mrb[0].mxu0
    %5887 = vdwg.mxu0
    %v5888 = vld [vmem:[%s1267] sm:$0xff]
    %v5889 = vld [vmem:[%s1267 + $0x8] sm:$0xff]
    %v5890 = vld [vmem:[%s1267 + $0x10] sm:$0xff]
    %v5891 = vld [vmem:[%s1267 + $0x18] sm:$0xff]
    %v5892 = vld [vmem:[%s3 + $0x6] sm:$0x1]
    %v5893 = vlaneseq
    %v5894 = vshrl.u32 %v5893, 7
    %v5895 = vsub.s32 0, %v5894
    %v5896 = vrot.slane %v5892, %v5895
    %5897 = vmatprep.subr.mxu0 0.0
    %5898 = vmatpush1.msra.mxu0 %v5888
    %5899 = vmatprep.subr.mxu0 0.0
    %5900 = vmatpush1.msra.mxu0 %v5889
    %5901 = vmatprep.subr.mxu0 0.0
    %5902 = vmatpush1.msra.mxu0 %v5890
    %5903 = vmatprep.subr.mxu0 0.0
    %5904 = vmatpush1.msra.mxu0 %v5891
    %5905 = vmatprep.subr.mxu0 0.0
    %5906 = vmatpush1.msra.mxu0 0.0
    %5907 = vmatprep.subr.mxu0 0.0
    %5908 = vmatpush1.msra.mxu0 0.0
    %5909 = vmatprep.subr.mxu0 0.0
    %5910 = vmatpush1.msra.mxu0 0.0
    %5911 = vmatprep.subr.mxu0 0.0
    %5912 = vmatpush1.msra.mxu0 0.0
    %5913 = vmatprep.subr.mxu0 0.0
    %5914 = vmatpush1.msra.mxu0 0.0
    %5915 = vmatprep.subr.mxu0 0.0
    %5916 = vmatpush1.msra.mxu0 0.0
    %5917 = vmatprep.subr.mxu0 0.0
    %5918 = vmatpush1.msra.mxu0 0.0
    %5919 = vmatprep.subr.mxu0 0.0
    %5920 = vmatpush1.msra.mxu0 0.0
    %5921 = vmatprep.subr.mxu0 0.0
    %5922 = vmatpush1.msra.mxu0 0.0
    %5923 = vmatprep.subr.mxu0 0.0
    %5924 = vmatpush1.msra.mxu0 0.0
    %5925 = vmatprep.subr.mxu0 0.0
    %5926 = vmatpush1.msra.mxu0 0.0
    %5927 = vmatprep.subr.mxu0 0.0
    %5928 = vmatpush1.msra.mxu0 0.0
    %5929 = vmatprep.subr.mxu0 0.0
    %5930 = vmatpush1.msra.mxu0 0.0
    %5931 = vmatprep.subr.mxu0 0.0
    %5932 = vmatpush1.msra.mxu0 0.0
    %5933 = vmatprep.subr.mxu0 0.0
    %5934 = vmatpush1.msra.mxu0 0.0
    %5935 = vmatprep.subr.mxu0 0.0
    %5936 = vmatpush1.msra.mxu0 0.0
    %5937 = vmatprep.subr.mxu0 0.0
    %5938 = vmatpush1.msra.mxu0 0.0
    %5939 = vmatprep.subr.mxu0 0.0
    %5940 = vmatpush1.msra.mxu0 0.0
    %5941 = vmatprep.subr.mxu0 0.0
    %5942 = vmatpush1.msra.mxu0 0.0
    %5943 = vmatprep.subr.mxu0 0.0
    %5944 = vmatpush1.msra.mxu0 0.0
    %5945 = vmatprep.subr.mxu0 0.0
    %5946 = vmatpush1.msra.mxu0 0.0
    %5947 = vmatprep.subr.mxu0 0.0
    %5948 = vmatpush1.msra.mxu0 0.0
    %5949 = vmatprep.subr.mxu0 0.0
    %5950 = vmatpush1.msra.mxu0 0.0
    %5951 = vmatprep.subr.mxu0 0.0
    %5952 = vmatpush1.msra.mxu0 0.0
    %5953 = vmatprep.subr.mxu0 0.0
    %5954 = vmatpush1.msra.mxu0 0.0
    %5955 = vmatprep.subr.mxu0 0.0
    %5956 = vmatpush1.msra.mxu0 0.0
    %5957 = vmatprep.subr.mxu0 0.0
    %5958 = vmatpush1.msra.mxu0 0.0
    %5959 = vmatprep.subr.mxu0 0.0
    %5960 = vmatpush1.msra.mxu0 0.0
    %5961 = vmatprep.mubr.f32.mxu0 0.0
    %5962 = vmatmul.mubr.f32.gmra.mrb[0].mxu0 %v5808
    %v5963 = vpop.f32.mrb[0].mxu0
    %v5964 = vadd.f32 %v5896, %v5963
    %v5965 = vpop.f32.mrb[0].mxu0
    %5966 = vmatprep.mubr.f32.mxu0 0.0
    %5967 = vmatmul.mubr.f32.gmra.mrb[0].mxu0 %v5811
    %v5968 = vpop.f32.mrb[0].mxu0
    %v5969 = vadd.f32 %v5896, %v5968
    %v5970 = vpop.f32.mrb[0].mxu0
    %5971 = vdwg.mxu0
    %5973 = vrot.lane.b32.xlu0 %v5797, 120
    %v5974 = vpop.permute.xlu0 %5973
    %5975 = vrot.lane.b32.xlu0 %v5797, 112
    %v5976 = vpop.permute.xlu0 %5975
    %5977 = vrot.lane.b32.xlu0 %v5797, 104
    %v5978 = vpop.permute.xlu0 %5977
    %5981 = vrot.lane.b32.xlu0 %v5880, 120
    %v5982 = vpop.permute.xlu0 %5981
    %5983 = vrot.lane.b32.xlu0 %v5885, 120
    %v5984 = vpop.permute.xlu0 %5983
    %5985 = vrot.lane.b32.xlu0 %v5880, 112
    %v5986 = vpop.permute.xlu0 %5985
    %5987 = vrot.lane.b32.xlu0 %v5885, 112
    %v5988 = vpop.permute.xlu0 %5987
    %5989 = vrot.lane.b32.xlu0 %v5880, 104
    %v5990 = vpop.permute.xlu0 %5989
    %5991 = vrot.lane.b32.xlu0 %v5885, 104
    %v5992 = vpop.permute.xlu0 %5991
    %5995 = vrot.lane.b32.xlu0 %v5964, 120
    %v5996 = vpop.permute.xlu0 %5995
    %5997 = vrot.lane.b32.xlu0 %v5969, 120
    %v5998 = vpop.permute.xlu0 %5997
    %6000 = vrot.lane.b32.xlu0 %v5964, 112
    %v6001 = vpop.permute.xlu0 %6000
    %6002 = vrot.lane.b32.xlu0 %v5969, 112
    %v6003 = vpop.permute.xlu0 %6002
    %6005 = vrot.lane.b32.xlu0 %v5964, 104
    %v6006 = vpop.permute.xlu0 %6005
    %6007 = vrot.lane.b32.xlu0 %v5969, 104
    %v6008 = vpop.permute.xlu0 %6007
    %v6010 = vsel %vm326, %v5797, 0
    %v6012 = vsel %vm326, %v5880, 0
    %v6014 = vsel %vm326, %v5885, 0
    %6016 = vmatprep.subr.mxu0 0.0
    %6017 = vmatpush1.xpose.msra.mxu0 %v6012
    %6018 = vmatprep.subr.mxu0 0.0
    %6019 = vmatpush1.xpose.msra.mxu0 %v6014
    %6020 = vmatprep.subr.mxu0 0.0
    %6021 = vmatpush1.xpose.msra.mxu0 0.0
    %6022 = vmatprep.subr.mxu0 0.0
    %6023 = vmatpush1.xpose.msra.mxu0 0.0
    %6024 = vmatprep.subr.mxu0 0.0
    %6025 = vmatpush1.xpose.msra.mxu0 0.0
    %6026 = vmatprep.subr.mxu0 0.0
    %6027 = vmatpush1.xpose.msra.mxu0 0.0
    %6028 = vmatprep.subr.mxu0 0.0
    %6029 = vmatpush1.xpose.msra.mxu0 0.0
    %6030 = vmatprep.subr.mxu0 0.0
    %6031 = vmatpush1.xpose.msra.mxu0 0.0
    %6032 = vmatprep.subr.mxu0 0.0
    %6033 = vmatpush1.xpose.msra.mxu0 0.0
    %6034 = vmatprep.subr.mxu0 0.0
    %6035 = vmatpush1.xpose.msra.mxu0 0.0
    %6036 = vmatprep.subr.mxu0 0.0
    %6037 = vmatpush1.xpose.msra.mxu0 0.0
    %6038 = vmatprep.subr.mxu0 0.0
    %6039 = vmatpush1.xpose.msra.mxu0 0.0
    %6040 = vmatprep.subr.mxu0 0.0
    %6041 = vmatpush1.xpose.msra.mxu0 0.0
    %6042 = vmatprep.subr.mxu0 0.0
    %6043 = vmatpush1.xpose.msra.mxu0 0.0
    %6044 = vmatprep.subr.mxu0 0.0
    %6045 = vmatpush1.xpose.msra.mxu0 0.0
    %6046 = vmatprep.subr.mxu0 0.0
    %6047 = vmatpush1.xpose.msra.mxu0 0.0
    %6048 = vmatprep.subr.mxu0 0.0
    %6049 = vmatpush1.xpose.msra.mxu0 0.0
    %6050 = vmatprep.subr.mxu0 0.0
    %6051 = vmatpush1.xpose.msra.mxu0 0.0
    %6052 = vmatprep.subr.mxu0 0.0
    %6053 = vmatpush1.xpose.msra.mxu0 0.0
    %6054 = vmatprep.subr.mxu0 0.0
    %6055 = vmatpush1.xpose.msra.mxu0 0.0
    %6056 = vmatprep.subr.mxu0 0.0
    %6057 = vmatpush1.xpose.msra.mxu0 0.0
    %6058 = vmatprep.subr.mxu0 0.0
    %6059 = vmatpush1.xpose.msra.mxu0 0.0
    %6060 = vmatprep.subr.mxu0 0.0
    %6061 = vmatpush1.xpose.msra.mxu0 0.0
    %6062 = vmatprep.subr.mxu0 0.0
    %6063 = vmatpush1.xpose.msra.mxu0 0.0
    %6064 = vmatprep.subr.mxu0 0.0
    %6065 = vmatpush1.xpose.msra.mxu0 0.0
    %6066 = vmatprep.subr.mxu0 0.0
    %6067 = vmatpush1.xpose.msra.mxu0 0.0
    %6068 = vmatprep.subr.mxu0 0.0
    %6069 = vmatpush1.xpose.msra.mxu0 0.0
    %6070 = vmatprep.subr.mxu0 0.0
    %6071 = vmatpush1.xpose.msra.mxu0 0.0
    %6072 = vmatprep.subr.mxu0 0.0
    %6073 = vmatpush1.xpose.msra.mxu0 0.0
    %6074 = vmatprep.subr.mxu0 0.0
    %6075 = vmatpush1.xpose.msra.mxu0 0.0
    %6076 = vmatprep.subr.mxu0 0.0
    %6077 = vmatpush1.xpose.msra.mxu0 0.0
    %6078 = vmatprep.subr.mxu0 0.0
    %6079 = vmatpush1.xpose.msra.mxu0 0.0
    %6080 = vmatprep.mubr.f32.mxu0 0.0
    %6081 = vmatmul.mubr.f32.gmra.mrb[0].mxu0 %v6010
    %v6082 = vpop.f32.mrb[0].mxu0
    %v6083 = vadd.f32 0.0, %v6082
    %v6084 = vpop.f32.mrb[0].mxu0
    %6085 = vdwg.mxu0
    %v6086 = vsel %vm326, %v5974, 0
    %v6088 = vsel %vm326, %v5982, 0
    %v6090 = vsel %vm326, %v5984, 0
    %6092 = vmatprep.subr.mxu0 0.0
    %6093 = vmatpush1.xpose.msra.mxu0 %v6088
    %6094 = vmatprep.subr.mxu0 0.0
    %6095 = vmatpush1.xpose.msra.mxu0 %v6090
    %6096 = vmatprep.subr.mxu0 0.0
    %6097 = vmatpush1.xpose.msra.mxu0 0.0
    %6098 = vmatprep.subr.mxu0 0.0
    %6099 = vmatpush1.xpose.msra.mxu0 0.0
    %6100 = vmatprep.subr.mxu0 0.0
    %6101 = vmatpush1.xpose.msra.mxu0 0.0
    %6102 = vmatprep.subr.mxu0 0.0
    %6103 = vmatpush1.xpose.msra.mxu0 0.0
    %6104 = vmatprep.subr.mxu0 0.0
    %6105 = vmatpush1.xpose.msra.mxu0 0.0
    %6106 = vmatprep.subr.mxu0 0.0
    %6107 = vmatpush1.xpose.msra.mxu0 0.0
    %6108 = vmatprep.subr.mxu0 0.0
    %6109 = vmatpush1.xpose.msra.mxu0 0.0
    %6110 = vmatprep.subr.mxu0 0.0
    %6111 = vmatpush1.xpose.msra.mxu0 0.0
    %6112 = vmatprep.subr.mxu0 0.0
    %6113 = vmatpush1.xpose.msra.mxu0 0.0
    %6114 = vmatprep.subr.mxu0 0.0
    %6115 = vmatpush1.xpose.msra.mxu0 0.0
    %6116 = vmatprep.subr.mxu0 0.0
    %6117 = vmatpush1.xpose.msra.mxu0 0.0
    %6118 = vmatprep.subr.mxu0 0.0
    %6119 = vmatpush1.xpose.msra.mxu0 0.0
    %6120 = vmatprep.subr.mxu0 0.0
    %6121 = vmatpush1.xpose.msra.mxu0 0.0
    %6122 = vmatprep.subr.mxu0 0.0
    %6123 = vmatpush1.xpose.msra.mxu0 0.0
    %6124 = vmatprep.subr.mxu0 0.0
    %6125 = vmatpush1.xpose.msra.mxu0 0.0
    %6126 = vmatprep.subr.mxu0 0.0
    %6127 = vmatpush1.xpose.msra.mxu0 0.0
    %6128 = vmatprep.subr.mxu0 0.0
    %6129 = vmatpush1.xpose.msra.mxu0 0.0
    %6130 = vmatprep.subr.mxu0 0.0
    %6131 = vmatpush1.xpose.msra.mxu0 0.0
    %6132 = vmatprep.subr.mxu0 0.0
    %6133 = vmatpush1.xpose.msra.mxu0 0.0
    %6134 = vmatprep.subr.mxu0 0.0
    %6135 = vmatpush1.xpose.msra.mxu0 0.0
    %6136 = vmatprep.subr.mxu0 0.0
    %6137 = vmatpush1.xpose.msra.mxu0 0.0
    %6138 = vmatprep.subr.mxu0 0.0
    %6139 = vmatpush1.xpose.msra.mxu0 0.0
    %6140 = vmatprep.subr.mxu0 0.0
    %6141 = vmatpush1.xpose.msra.mxu0 0.0
    %6142 = vmatprep.subr.mxu0 0.0
    %6143 = vmatpush1.xpose.msra.mxu0 0.0
    %6144 = vmatprep.subr.mxu0 0.0
    %6145 = vmatpush1.xpose.msra.mxu0 0.0
    %6146 = vmatprep.subr.mxu0 0.0
    %6147 = vmatpush1.xpose.msra.mxu0 0.0
    %6148 = vmatprep.subr.mxu0 0.0
    %6149 = vmatpush1.xpose.msra.mxu0 0.0
    %6150 = vmatprep.subr.mxu0 0.0
    %6151 = vmatpush1.xpose.msra.mxu0 0.0
    %6152 = vmatprep.subr.mxu0 0.0
    %6153 = vmatpush1.xpose.msra.mxu0 0.0
    %6154 = vmatprep.subr.mxu0 0.0
    %6155 = vmatpush1.xpose.msra.mxu0 0.0
    %6156 = vmatprep.mubr.f32.mxu0 0.0
    %6157 = vmatmul.mubr.f32.gmra.mrb[0].mxu0 %v6086
    %v6158 = vpop.f32.mrb[0].mxu0
    %v6159 = vadd.f32 0.0, %v6158
    %v6160 = vpop.f32.mrb[0].mxu0
    %6161 = vdwg.mxu0
    %v6162 = vsel %vm326, %v5976, 0
    %v6164 = vsel %vm326, %v5986, 0
    %v6166 = vsel %vm326, %v5988, 0
    %6168 = vmatprep.subr.mxu0 0.0
    %6169 = vmatpush1.xpose.msra.mxu0 %v6164
    %6170 = vmatprep.subr.mxu0 0.0
    %6171 = vmatpush1.xpose.msra.mxu0 %v6166
    %6172 = vmatprep.subr.mxu0 0.0
    %6173 = vmatpush1.xpose.msra.mxu0 0.0
    %6174 = vmatprep.subr.mxu0 0.0
    %6175 = vmatpush1.xpose.msra.mxu0 0.0
    %6176 = vmatprep.subr.mxu0 0.0
    %6177 = vmatpush1.xpose.msra.mxu0 0.0
    %6178 = vmatprep.subr.mxu0 0.0
    %6179 = vmatpush1.xpose.msra.mxu0 0.0
    %6180 = vmatprep.subr.mxu0 0.0
    %6181 = vmatpush1.xpose.msra.mxu0 0.0
    %6182 = vmatprep.subr.mxu0 0.0
    %6183 = vmatpush1.xpose.msra.mxu0 0.0
    %6184 = vmatprep.subr.mxu0 0.0
    %6185 = vmatpush1.xpose.msra.mxu0 0.0
    %6186 = vmatprep.subr.mxu0 0.0
    %6187 = vmatpush1.xpose.msra.mxu0 0.0
    %6188 = vmatprep.subr.mxu0 0.0
    %6189 = vmatpush1.xpose.msra.mxu0 0.0
    %6190 = vmatprep.subr.mxu0 0.0
    %6191 = vmatpush1.xpose.msra.mxu0 0.0
    %6192 = vmatprep.subr.mxu0 0.0
    %6193 = vmatpush1.xpose.msra.mxu0 0.0
    %6194 = vmatprep.subr.mxu0 0.0
    %6195 = vmatpush1.xpose.msra.mxu0 0.0
    %6196 = vmatprep.subr.mxu0 0.0
    %6197 = vmatpush1.xpose.msra.mxu0 0.0
    %6198 = vmatprep.subr.mxu0 0.0
    %6199 = vmatpush1.xpose.msra.mxu0 0.0
    %6200 = vmatprep.subr.mxu0 0.0
    %6201 = vmatpush1.xpose.msra.mxu0 0.0
    %6202 = vmatprep.subr.mxu0 0.0
    %6203 = vmatpush1.xpose.msra.mxu0 0.0
    %6204 = vmatprep.subr.mxu0 0.0
    %6205 = vmatpush1.xpose.msra.mxu0 0.0
    %6206 = vmatprep.subr.mxu0 0.0
    %6207 = vmatpush1.xpose.msra.mxu0 0.0
    %6208 = vmatprep.subr.mxu0 0.0
    %6209 = vmatpush1.xpose.msra.mxu0 0.0
    %6210 = vmatprep.subr.mxu0 0.0
    %6211 = vmatpush1.xpose.msra.mxu0 0.0
    %6212 = vmatprep.subr.mxu0 0.0
    %6213 = vmatpush1.xpose.msra.mxu0 0.0
    %6214 = vmatprep.subr.mxu0 0.0
    %6215 = vmatpush1.xpose.msra.mxu0 0.0
    %6216 = vmatprep.subr.mxu0 0.0
    %6217 = vmatpush1.xpose.msra.mxu0 0.0
    %6218 = vmatprep.subr.mxu0 0.0
    %6219 = vmatpush1.xpose.msra.mxu0 0.0
    %6220 = vmatprep.subr.mxu0 0.0
    %6221 = vmatpush1.xpose.msra.mxu0 0.0
    %6222 = vmatprep.subr.mxu0 0.0
    %6223 = vmatpush1.xpose.msra.mxu0 0.0
    %6224 = vmatprep.subr.mxu0 0.0
    %6225 = vmatpush1.xpose.msra.mxu0 0.0
    %6226 = vmatprep.subr.mxu0 0.0
    %6227 = vmatpush1.xpose.msra.mxu0 0.0
    %6228 = vmatprep.subr.mxu0 0.0
    %6229 = vmatpush1.xpose.msra.mxu0 0.0
    %6230 = vmatprep.subr.mxu0 0.0
    %6231 = vmatpush1.xpose.msra.mxu0 0.0
    %6232 = vmatprep.mubr.f32.mxu0 0.0
    %6233 = vmatmul.mubr.f32.gmra.mrb[0].mxu0 %v6162
    %v6234 = vpop.f32.mrb[0].mxu0
    %v6235 = vadd.f32 0.0, %v6234
    %v6236 = vpop.f32.mrb[0].mxu0
    %6237 = vdwg.mxu0
    %v6238 = vsel %vm326, %v5978, 0
    %v6240 = vsel %vm326, %v5990, 0
    %v6242 = vsel %vm326, %v5992, 0
    %6244 = vmatprep.subr.mxu0 0.0
    %6245 = vmatpush1.xpose.msra.mxu0 %v6240
    %6246 = vmatprep.subr.mxu0 0.0
    %6247 = vmatpush1.xpose.msra.mxu0 %v6242
    %6248 = vmatprep.subr.mxu0 0.0
    %6249 = vmatpush1.xpose.msra.mxu0 0.0
    %6250 = vmatprep.subr.mxu0 0.0
    %6251 = vmatpush1.xpose.msra.mxu0 0.0
    %6252 = vmatprep.subr.mxu0 0.0
    %6253 = vmatpush1.xpose.msra.mxu0 0.0
    %6254 = vmatprep.subr.mxu0 0.0
    %6255 = vmatpush1.xpose.msra.mxu0 0.0
    %6256 = vmatprep.subr.mxu0 0.0
    %6257 = vmatpush1.xpose.msra.mxu0 0.0
    %6258 = vmatprep.subr.mxu0 0.0
    %6259 = vmatpush1.xpose.msra.mxu0 0.0
    %6260 = vmatprep.subr.mxu0 0.0
    %6261 = vmatpush1.xpose.msra.mxu0 0.0
    %6262 = vmatprep.subr.mxu0 0.0
    %6263 = vmatpush1.xpose.msra.mxu0 0.0
    %6264 = vmatprep.subr.mxu0 0.0
    %6265 = vmatpush1.xpose.msra.mxu0 0.0
    %6266 = vmatprep.subr.mxu0 0.0
    %6267 = vmatpush1.xpose.msra.mxu0 0.0
    %6268 = vmatprep.subr.mxu0 0.0
    %6269 = vmatpush1.xpose.msra.mxu0 0.0
    %6270 = vmatprep.subr.mxu0 0.0
    %6271 = vmatpush1.xpose.msra.mxu0 0.0
    %6272 = vmatprep.subr.mxu0 0.0
    %6273 = vmatpush1.xpose.msra.mxu0 0.0
    %6274 = vmatprep.subr.mxu0 0.0
    %6275 = vmatpush1.xpose.msra.mxu0 0.0
    %6276 = vmatprep.subr.mxu0 0.0
    %6277 = vmatpush1.xpose.msra.mxu0 0.0
    %6278 = vmatprep.subr.mxu0 0.0
    %6279 = vmatpush1.xpose.msra.mxu0 0.0
    %6280 = vmatprep.subr.mxu0 0.0
    %6281 = vmatpush1.xpose.msra.mxu0 0.0
    %6282 = vmatprep.subr.mxu0 0.0
    %6283 = vmatpush1.xpose.msra.mxu0 0.0
    %6284 = vmatprep.subr.mxu0 0.0
    %6285 = vmatpush1.xpose.msra.mxu0 0.0
    %6286 = vmatprep.subr.mxu0 0.0
    %6287 = vmatpush1.xpose.msra.mxu0 0.0
    %6288 = vmatprep.subr.mxu0 0.0
    %6289 = vmatpush1.xpose.msra.mxu0 0.0
    %6290 = vmatprep.subr.mxu0 0.0
    %6291 = vmatpush1.xpose.msra.mxu0 0.0
    %6292 = vmatprep.subr.mxu0 0.0
    %6293 = vmatpush1.xpose.msra.mxu0 0.0
    %6294 = vmatprep.subr.mxu0 0.0
    %6295 = vmatpush1.xpose.msra.mxu0 0.0
    %6296 = vmatprep.subr.mxu0 0.0
    %6297 = vmatpush1.xpose.msra.mxu0 0.0
    %6298 = vmatprep.subr.mxu0 0.0
    %6299 = vmatpush1.xpose.msra.mxu0 0.0
    %6300 = vmatprep.subr.mxu0 0.0
    %6301 = vmatpush1.xpose.msra.mxu0 0.0
    %6302 = vmatprep.subr.mxu0 0.0
    %6303 = vmatpush1.xpose.msra.mxu0 0.0
    %6304 = vmatprep.subr.mxu0 0.0
    %6305 = vmatpush1.xpose.msra.mxu0 0.0
    %6306 = vmatprep.subr.mxu0 0.0
    %6307 = vmatpush1.xpose.msra.mxu0 0.0
    %6308 = vmatprep.mubr.f32.mxu0 0.0
    %6309 = vmatmul.mubr.f32.gmra.mrb[0].mxu0 %v6238
    %v6310 = vpop.f32.mrb[0].mxu0
    %v6311 = vadd.f32 0.0, %v6310
    %v6312 = vpop.f32.mrb[0].mxu0
    %6313 = vdwg.mxu0
    %v6314 = vsel %vm1694, %v6083, -inf
    %6315 = vmax.xlane.f32.xlu0 %v6314
    %v6316 = vpop.xlane.xlu0 %6315
    %v6317 = vsel %vm1694, %v6159, -inf
    %6318 = vmax.xlane.f32.xlu0 %v6317
    %v6319 = vpop.xlane.xlu0 %6318
    %v6320 = vsel %vm1694, %v6235, -inf
    %6321 = vmax.xlane.f32.xlu0 %v6320
    %v6322 = vpop.xlane.xlu0 %6321
    %v6323 = vsel %vm1694, %v6311, -inf
    %6324 = vmax.xlane.f32.xlu0 %v6323
    %v6325 = vpop.xlane.xlu0 %6324
    %v6326 = vsub.f32 %v6083, %v6316
    %v6327 = vsub.f32 %v6159, %v6319
    %v6328 = vsub.f32 %v6235, %v6322
    %v6329 = vsub.f32 %v6311, %v6325
    %v6330 = vmul.f32 %v6326, 1.442695
    %v6331 = vpow.pop %v6330
    %v6332 = vmul.f32 %v6327, 1.442695
    %v6333 = vpow.pop %v6332
    %v6334 = vmul.f32 %v6328, 1.442695
    %v6335 = vpow.pop %v6334
    %v6336 = vmul.f32 %v6329, 1.442695
    %v6337 = vpow.pop %v6336
    %v6338 = vsel %vm1694, %v6331, 0.0
    %6339 = vadd.xlane.f32.xlu0 %v6338
    %v6340 = vpop.xlane.xlu0 %6339
    %v6341 = vsel %vm1694, %v6333, 0.0
    %6342 = vadd.xlane.f32.xlu0 %v6341
    %v6343 = vpop.xlane.xlu0 %6342
    %v6344 = vsel %vm1694, %v6335, 0.0
    %6345 = vadd.xlane.f32.xlu0 %v6344
    %v6346 = vpop.xlane.xlu0 %6345
    %v6347 = vsel %vm1694, %v6337, 0.0
    %6348 = vadd.xlane.f32.xlu0 %v6347
    %v6349 = vpop.xlane.xlu0 %6348
    %v6350 = vrcp.pop %v6340
    %v6351 = vrcp.pop %v6343
    %v6352 = vrcp.pop %v6346
    %v6353 = vrcp.pop %v6349
    %v6354 = vmul.f32 %v6331, %v6350
    %v6355 = vmul.f32 %v6333, %v6351
    %v6356 = vmul.f32 %v6335, %v6352
    %v6357 = vmul.f32 %v6337, %v6353
    %v6359 = vsel %vm1694, %v6354, 0
    %v6361 = vsel %vm1742, %v5969, 0
    %6363 = vmatprep.subr.mxu0 0.0
    %6364 = vmatpush1.msra.mxu0 %v5964
    %6365 = vmatprep.subr.mxu0 0.0
    %6366 = vmatpush1.msra.mxu0 %v6361
    %6367 = vmatprep.subr.mxu0 0.0
    %6368 = vmatpush1.msra.mxu0 0.0
    %6369 = vmatprep.subr.mxu0 0.0
    %6370 = vmatpush1.msra.mxu0 0.0
    %6371 = vmatprep.subr.mxu0 0.0
    %6372 = vmatpush1.msra.mxu0 0.0
    %6373 = vmatprep.subr.mxu0 0.0
    %6374 = vmatpush1.msra.mxu0 0.0
    %6375 = vmatprep.subr.mxu0 0.0
    %6376 = vmatpush1.msra.mxu0 0.0
    %6377 = vmatprep.subr.mxu0 0.0
    %6378 = vmatpush1.msra.mxu0 0.0
    %6379 = vmatprep.subr.mxu0 0.0
    %6380 = vmatpush1.msra.mxu0 0.0
    %6381 = vmatprep.subr.mxu0 0.0
    %6382 = vmatpush1.msra.mxu0 0.0
    %6383 = vmatprep.subr.mxu0 0.0
    %6384 = vmatpush1.msra.mxu0 0.0
    %6385 = vmatprep.subr.mxu0 0.0
    %6386 = vmatpush1.msra.mxu0 0.0
    %6387 = vmatprep.subr.mxu0 0.0
    %6388 = vmatpush1.msra.mxu0 0.0
    %6389 = vmatprep.subr.mxu0 0.0
    %6390 = vmatpush1.msra.mxu0 0.0
    %6391 = vmatprep.subr.mxu0 0.0
    %6392 = vmatpush1.msra.mxu0 0.0
    %6393 = vmatprep.subr.mxu0 0.0
    %6394 = vmatpush1.msra.mxu0 0.0
    %6395 = vmatprep.subr.mxu0 0.0
    %6396 = vmatpush1.msra.mxu0 0.0
    %6397 = vmatprep.subr.mxu0 0.0
    %6398 = vmatpush1.msra.mxu0 0.0
    %6399 = vmatprep.subr.mxu0 0.0
    %6400 = vmatpush1.msra.mxu0 0.0
    %6401 = vmatprep.subr.mxu0 0.0
    %6402 = vmatpush1.msra.mxu0 0.0
    %6403 = vmatprep.subr.mxu0 0.0
    %6404 = vmatpush1.msra.mxu0 0.0
    %6405 = vmatprep.subr.mxu0 0.0
    %6406 = vmatpush1.msra.mxu0 0.0
    %6407 = vmatprep.subr.mxu0 0.0
    %6408 = vmatpush1.msra.mxu0 0.0
    %6409 = vmatprep.subr.mxu0 0.0
    %6410 = vmatpush1.msra.mxu0 0.0
    %6411 = vmatprep.subr.mxu0 0.0
    %6412 = vmatpush1.msra.mxu0 0.0
    %6413 = vmatprep.subr.mxu0 0.0
    %6414 = vmatpush1.msra.mxu0 0.0
    %6415 = vmatprep.subr.mxu0 0.0
    %6416 = vmatpush1.msra.mxu0 0.0
    %6417 = vmatprep.subr.mxu0 0.0
    %6418 = vmatpush1.msra.mxu0 0.0
    %6419 = vmatprep.subr.mxu0 0.0
    %6420 = vmatpush1.msra.mxu0 0.0
    %6421 = vmatprep.subr.mxu0 0.0
    %6422 = vmatpush1.msra.mxu0 0.0
    %6423 = vmatprep.subr.mxu0 0.0
    %6424 = vmatpush1.msra.mxu0 0.0
    %6425 = vmatprep.subr.mxu0 0.0
    %6426 = vmatpush1.msra.mxu0 0.0
    %6427 = vmatprep.mubr.f32.mxu0 0.0
    %6428 = vmatmul.mubr.f32.gmra.mrb[0].mxu0 %v6359
    %v6429 = vpop.f32.mrb[0].mxu0
    %v6430 = vadd.f32 0.0, %v6429
    %v6431 = vpop.f32.mrb[0].mxu0
    %6432 = vdwg.mxu0
    %v6434 = vsel %vm1694, %v6355, 0
    %v6436 = vsel %vm1742, %v5998, 0
    %6438 = vmatprep.subr.mxu0 0.0
    %6439 = vmatpush1.msra.mxu0 %v5996
    %6440 = vmatprep.subr.mxu0 0.0
    %6441 = vmatpush1.msra.mxu0 %v6436
    %6442 = vmatprep.subr.mxu0 0.0
    %6443 = vmatpush1.msra.mxu0 0.0
    %6444 = vmatprep.subr.mxu0 0.0
    %6445 = vmatpush1.msra.mxu0 0.0
    %6446 = vmatprep.subr.mxu0 0.0
    %6447 = vmatpush1.msra.mxu0 0.0
    %6448 = vmatprep.subr.mxu0 0.0
    %6449 = vmatpush1.msra.mxu0 0.0
    %6450 = vmatprep.subr.mxu0 0.0
    %6451 = vmatpush1.msra.mxu0 0.0
    %6452 = vmatprep.subr.mxu0 0.0
    %6453 = vmatpush1.msra.mxu0 0.0
    %6454 = vmatprep.subr.mxu0 0.0
    %6455 = vmatpush1.msra.mxu0 0.0
    %6456 = vmatprep.subr.mxu0 0.0
    %6457 = vmatpush1.msra.mxu0 0.0
    %6458 = vmatprep.subr.mxu0 0.0
    %6459 = vmatpush1.msra.mxu0 0.0
    %6460 = vmatprep.subr.mxu0 0.0
    %6461 = vmatpush1.msra.mxu0 0.0
    %6462 = vmatprep.subr.mxu0 0.0
    %6463 = vmatpush1.msra.mxu0 0.0
    %6464 = vmatprep.subr.mxu0 0.0
    %6465 = vmatpush1.msra.mxu0 0.0
    %6466 = vmatprep.subr.mxu0 0.0
    %6467 = vmatpush1.msra.mxu0 0.0
    %6468 = vmatprep.subr.mxu0 0.0
    %6469 = vmatpush1.msra.mxu0 0.0
    %6470 = vmatprep.subr.mxu0 0.0
    %6471 = vmatpush1.msra.mxu0 0.0
    %6472 = vmatprep.subr.mxu0 0.0
    %6473 = vmatpush1.msra.mxu0 0.0
    %6474 = vmatprep.subr.mxu0 0.0
    %6475 = vmatpush1.msra.mxu0 0.0
    %6476 = vmatprep.subr.mxu0 0.0
    %6477 = vmatpush1.msra.mxu0 0.0
    %6478 = vmatprep.subr.mxu0 0.0
    %6479 = vmatpush1.msra.mxu0 0.0
    %6480 = vmatprep.subr.mxu0 0.0
    %6481 = vmatpush1.msra.mxu0 0.0
    %6482 = vmatprep.subr.mxu0 0.0
    %6483 = vmatpush1.msra.mxu0 0.0
    %6484 = vmatprep.subr.mxu0 0.0
    %6485 = vmatpush1.msra.mxu0 0.0
    %6486 = vmatprep.subr.mxu0 0.0
    %6487 = vmatpush1.msra.mxu0 0.0
    %6488 = vmatprep.subr.mxu0 0.0
    %6489 = vmatpush1.msra.mxu0 0.0
    %6490 = vmatprep.subr.mxu0 0.0
    %6491 = vmatpush1.msra.mxu0 0.0
    %6492 = vmatprep.subr.mxu0 0.0
    %6493 = vmatpush1.msra.mxu0 0.0
    %6494 = vmatprep.subr.mxu0 0.0
    %6495 = vmatpush1.msra.mxu0 0.0
    %6496 = vmatprep.subr.mxu0 0.0
    %6497 = vmatpush1.msra.mxu0 0.0
    %6498 = vmatprep.subr.mxu0 0.0
    %6499 = vmatpush1.msra.mxu0 0.0
    %6500 = vmatprep.subr.mxu0 0.0
    %6501 = vmatpush1.msra.mxu0 0.0
    %6502 = vmatprep.mubr.f32.mxu0 0.0
    %6503 = vmatmul.mubr.f32.gmra.mrb[0].mxu0 %v6434
    %v6504 = vpop.f32.mrb[0].mxu0
    %v6505 = vadd.f32 0.0, %v6504
    %v6506 = vpop.f32.mrb[0].mxu0
    %6507 = vdwg.mxu0
    %v6509 = vsel %vm1694, %v6356, 0
    %v6511 = vsel %vm1742, %v6003, 0
    %6513 = vmatprep.subr.mxu0 0.0
    %6514 = vmatpush1.msra.mxu0 %v6001
    %6515 = vmatprep.subr.mxu0 0.0
    %6516 = vmatpush1.msra.mxu0 %v6511
    %6517 = vmatprep.subr.mxu0 0.0
    %6518 = vmatpush1.msra.mxu0 0.0
    %6519 = vmatprep.subr.mxu0 0.0
    %6520 = vmatpush1.msra.mxu0 0.0
    %6521 = vmatprep.subr.mxu0 0.0
    %6522 = vmatpush1.msra.mxu0 0.0
    %6523 = vmatprep.subr.mxu0 0.0
    %6524 = vmatpush1.msra.mxu0 0.0
    %6525 = vmatprep.subr.mxu0 0.0
    %6526 = vmatpush1.msra.mxu0 0.0
    %6527 = vmatprep.subr.mxu0 0.0
    %6528 = vmatpush1.msra.mxu0 0.0
    %6529 = vmatprep.subr.mxu0 0.0
    %6530 = vmatpush1.msra.mxu0 0.0
    %6531 = vmatprep.subr.mxu0 0.0
    %6532 = vmatpush1.msra.mxu0 0.0
    %6533 = vmatprep.subr.mxu0 0.0
    %6534 = vmatpush1.msra.mxu0 0.0
    %6535 = vmatprep.subr.mxu0 0.0
    %6536 = vmatpush1.msra.mxu0 0.0
    %6537 = vmatprep.subr.mxu0 0.0
    %6538 = vmatpush1.msra.mxu0 0.0
    %6539 = vmatprep.subr.mxu0 0.0
    %6540 = vmatpush1.msra.mxu0 0.0
    %6541 = vmatprep.subr.mxu0 0.0
    %6542 = vmatpush1.msra.mxu0 0.0
    %6543 = vmatprep.subr.mxu0 0.0
    %6544 = vmatpush1.msra.mxu0 0.0
    %6545 = vmatprep.subr.mxu0 0.0
    %6546 = vmatpush1.msra.mxu0 0.0
    %6547 = vmatprep.subr.mxu0 0.0
    %6548 = vmatpush1.msra.mxu0 0.0
    %6549 = vmatprep.subr.mxu0 0.0
    %6550 = vmatpush1.msra.mxu0 0.0
    %6551 = vmatprep.subr.mxu0 0.0
    %6552 = vmatpush1.msra.mxu0 0.0
    %6553 = vmatprep.subr.mxu0 0.0
    %6554 = vmatpush1.msra.mxu0 0.0
    %6555 = vmatprep.subr.mxu0 0.0
    %6556 = vmatpush1.msra.mxu0 0.0
    %6557 = vmatprep.subr.mxu0 0.0
    %6558 = vmatpush1.msra.mxu0 0.0
    %6559 = vmatprep.subr.mxu0 0.0
    %6560 = vmatpush1.msra.mxu0 0.0
    %6561 = vmatprep.subr.mxu0 0.0
    %6562 = vmatpush1.msra.mxu0 0.0
    %6563 = vmatprep.subr.mxu0 0.0
    %6564 = vmatpush1.msra.mxu0 0.0
    %6565 = vmatprep.subr.mxu0 0.0
    %6566 = vmatpush1.msra.mxu0 0.0
    %6567 = vmatprep.subr.mxu0 0.0
    %6568 = vmatpush1.msra.mxu0 0.0
    %6569 = vmatprep.subr.mxu0 0.0
    %6570 = vmatpush1.msra.mxu0 0.0
    %6571 = vmatprep.subr.mxu0 0.0
    %6572 = vmatpush1.msra.mxu0 0.0
    %6573 = vmatprep.subr.mxu0 0.0
    %6574 = vmatpush1.msra.mxu0 0.0
    %6575 = vmatprep.subr.mxu0 0.0
    %6576 = vmatpush1.msra.mxu0 0.0
    %6577 = vmatprep.mubr.f32.mxu0 0.0
    %6578 = vmatmul.mubr.f32.gmra.mrb[0].mxu0 %v6509
    %v6579 = vpop.f32.mrb[0].mxu0
    %v6580 = vadd.f32 0.0, %v6579
    %v6581 = vpop.f32.mrb[0].mxu0
    %6582 = vdwg.mxu0
    %v6584 = vsel %vm1694, %v6357, 0
    %v6586 = vsel %vm1742, %v6008, 0
    %6588 = vmatprep.subr.mxu0 0.0
    %6589 = vmatpush1.msra.mxu0 %v6006
    %6590 = vmatprep.subr.mxu0 0.0
    %6591 = vmatpush1.msra.mxu0 %v6586
    %6592 = vmatprep.subr.mxu0 0.0
    %6593 = vmatpush1.msra.mxu0 0.0
    %6594 = vmatprep.subr.mxu0 0.0
    %6595 = vmatpush1.msra.mxu0 0.0
    %6596 = vmatprep.subr.mxu0 0.0
    %6597 = vmatpush1.msra.mxu0 0.0
    %6598 = vmatprep.subr.mxu0 0.0
    %6599 = vmatpush1.msra.mxu0 0.0
    %6600 = vmatprep.subr.mxu0 0.0
    %6601 = vmatpush1.msra.mxu0 0.0
    %6602 = vmatprep.subr.mxu0 0.0
    %6603 = vmatpush1.msra.mxu0 0.0
    %6604 = vmatprep.subr.mxu0 0.0
    %6605 = vmatpush1.msra.mxu0 0.0
    %6606 = vmatprep.subr.mxu0 0.0
    %6607 = vmatpush1.msra.mxu0 0.0
    %6608 = vmatprep.subr.mxu0 0.0
    %6609 = vmatpush1.msra.mxu0 0.0
    %6610 = vmatprep.subr.mxu0 0.0
    %6611 = vmatpush1.msra.mxu0 0.0
    %6612 = vmatprep.subr.mxu0 0.0
    %6613 = vmatpush1.msra.mxu0 0.0
    %6614 = vmatprep.subr.mxu0 0.0
    %6615 = vmatpush1.msra.mxu0 0.0
    %6616 = vmatprep.subr.mxu0 0.0
    %6617 = vmatpush1.msra.mxu0 0.0
    %6618 = vmatprep.subr.mxu0 0.0
    %6619 = vmatpush1.msra.mxu0 0.0
    %6620 = vmatprep.subr.mxu0 0.0
    %6621 = vmatpush1.msra.mxu0 0.0
    %6622 = vmatprep.subr.mxu0 0.0
    %6623 = vmatpush1.msra.mxu0 0.0
    %6624 = vmatprep.subr.mxu0 0.0
    %6625 = vmatpush1.msra.mxu0 0.0
    %6626 = vmatprep.subr.mxu0 0.0
    %6627 = vmatpush1.msra.mxu0 0.0
    %6628 = vmatprep.subr.mxu0 0.0
    %6629 = vmatpush1.msra.mxu0 0.0
    %6630 = vmatprep.subr.mxu0 0.0
    %6631 = vmatpush1.msra.mxu0 0.0
    %6632 = vmatprep.subr.mxu0 0.0
    %6633 = vmatpush1.msra.mxu0 0.0
    %6634 = vmatprep.subr.mxu0 0.0
    %6635 = vmatpush1.msra.mxu0 0.0
    %6636 = vmatprep.subr.mxu0 0.0
    %6637 = vmatpush1.msra.mxu0 0.0
    %6638 = vmatprep.subr.mxu0 0.0
    %6639 = vmatpush1.msra.mxu0 0.0
    %6640 = vmatprep.subr.mxu0 0.0
    %6641 = vmatpush1.msra.mxu0 0.0
    %6642 = vmatprep.subr.mxu0 0.0
    %6643 = vmatpush1.msra.mxu0 0.0
    %6644 = vmatprep.subr.mxu0 0.0
    %6645 = vmatpush1.msra.mxu0 0.0
    %6646 = vmatprep.subr.mxu0 0.0
    %6647 = vmatpush1.msra.mxu0 0.0
    %6648 = vmatprep.subr.mxu0 0.0
    %6649 = vmatpush1.msra.mxu0 0.0
    %6650 = vmatprep.subr.mxu0 0.0
    %6651 = vmatpush1.msra.mxu0 0.0
    %6652 = vmatprep.mubr.f32.mxu0 0.0
    %6653 = vmatmul.mubr.f32.gmra.mrb[0].mxu0 %v6584
    %v6654 = vpop.f32.mrb[0].mxu0
    %v6655 = vadd.f32 0.0, %v6654
    %v6656 = vpop.f32.mrb[0].mxu0
    %6657 = vdwg.mxu0
    %6659 = vrot.lane.b32.xlu0 %v6505, 8
    %v6660 = vpop.permute.xlu0 %6659
    %6663 = vrot.lane.b32.xlu0 %v6580, 16
    %v6664 = vpop.permute.xlu0 %6663
    %6667 = vrot.lane.b32.xlu0 %v6655, 24
    %v6668 = vpop.permute.xlu0 %6667
    %v6670 = vsel %vm326, %v6430, %v6660
    %v6671 = vsel %vm978, %v6670, %v6664
    %v6672 = vsel %vm980, %v6671, %v6668
    %v6673 = vld [vmem:[%s2055] sm:$0xff]
    %v6674 = vld [vmem:[%s2055 + $0x8] sm:$0xff]
    %v6675 = vld [vmem:[%s2055 + $0x10] sm:$0xff]
    %v6676 = vld [vmem:[%s2055 + $0x18] sm:$0xff]
    %v6677 = vld [vmem:[%s3 + $0x7] sm:$0x1]
    %v6678 = vlaneseq
    %v6679 = vshrl.u32 %v6678, 7
    %v6680 = vsub.s32 0, %v6679
    %v6681 = vrot.slane %v6677, %v6680
    %v6683 = vsel %vm67, %v6672, 0
    %6685 = vmatprep.subr.mxu0 0.0
    %6686 = vmatpush1.msra.mxu0 %v6673
    %6687 = vmatprep.subr.mxu0 0.0
    %6688 = vmatpush1.msra.mxu0 %v6674
    %6689 = vmatprep.subr.mxu0 0.0
    %6690 = vmatpush1.msra.mxu0 %v6675
    %6691 = vmatprep.subr.mxu0 0.0
    %6692 = vmatpush1.msra.mxu0 %v6676
    %6693 = vmatprep.subr.mxu0 0.0
    %6694 = vmatpush1.msra.mxu0 0.0
    %6695 = vmatprep.subr.mxu0 0.0
    %6696 = vmatpush1.msra.mxu0 0.0
    %6697 = vmatprep.subr.mxu0 0.0
    %6698 = vmatpush1.msra.mxu0 0.0
    %6699 = vmatprep.subr.mxu0 0.0
    %6700 = vmatpush1.msra.mxu0 0.0
    %6701 = vmatprep.subr.mxu0 0.0
    %6702 = vmatpush1.msra.mxu0 0.0
    %6703 = vmatprep.subr.mxu0 0.0
    %6704 = vmatpush1.msra.mxu0 0.0
    %6705 = vmatprep.subr.mxu0 0.0
    %6706 = vmatpush1.msra.mxu0 0.0
    %6707 = vmatprep.subr.mxu0 0.0
    %6708 = vmatpush1.msra.mxu0 0.0
    %6709 = vmatprep.subr.mxu0 0.0
    %6710 = vmatpush1.msra.mxu0 0.0
    %6711 = vmatprep.subr.mxu0 0.0
    %6712 = vmatpush1.msra.mxu0 0.0
    %6713 = vmatprep.subr.mxu0 0.0
    %6714 = vmatpush1.msra.mxu0 0.0
    %6715 = vmatprep.subr.mxu0 0.0
    %6716 = vmatpush1.msra.mxu0 0.0
    %6717 = vmatprep.subr.mxu0 0.0
    %6718 = vmatpush1.msra.mxu0 0.0
    %6719 = vmatprep.subr.mxu0 0.0
    %6720 = vmatpush1.msra.mxu0 0.0
    %6721 = vmatprep.subr.mxu0 0.0
    %6722 = vmatpush1.msra.mxu0 0.0
    %6723 = vmatprep.subr.mxu0 0.0
    %6724 = vmatpush1.msra.mxu0 0.0
    %6725 = vmatprep.subr.mxu0 0.0
    %6726 = vmatpush1.msra.mxu0 0.0
    %6727 = vmatprep.subr.mxu0 0.0
    %6728 = vmatpush1.msra.mxu0 0.0
    %6729 = vmatprep.subr.mxu0 0.0
    %6730 = vmatpush1.msra.mxu0 0.0
    %6731 = vmatprep.subr.mxu0 0.0
    %6732 = vmatpush1.msra.mxu0 0.0
    %6733 = vmatprep.subr.mxu0 0.0
    %6734 = vmatpush1.msra.mxu0 0.0
    %6735 = vmatprep.subr.mxu0 0.0
    %6736 = vmatpush1.msra.mxu0 0.0
    %6737 = vmatprep.subr.mxu0 0.0
    %6738 = vmatpush1.msra.mxu0 0.0
    %6739 = vmatprep.subr.mxu0 0.0
    %6740 = vmatpush1.msra.mxu0 0.0
    %6741 = vmatprep.subr.mxu0 0.0
    %6742 = vmatpush1.msra.mxu0 0.0
    %6743 = vmatprep.subr.mxu0 0.0
    %6744 = vmatpush1.msra.mxu0 0.0
    %6745 = vmatprep.subr.mxu0 0.0
    %6746 = vmatpush1.msra.mxu0 0.0
    %6747 = vmatprep.subr.mxu0 0.0
    %6748 = vmatpush1.msra.mxu0 0.0
    %6749 = vmatprep.mubr.f32.mxu0 0.0
    %6750 = vmatmul.mubr.f32.gmra.mrb[0].mxu0 %v6683
    %v6751 = vpop.f32.mrb[0].mxu0
    %v6752 = vadd.f32 %v6681, %v6751
    %v6753 = vpop.f32.mrb[0].mxu0
    %6754 = vdwg.mxu0
    %v6755 = vadd.f32 %v5714, %v6752
    %v6756 = vld [vmem:[%s4 + $0x1] sm:$0x1]
    %v6757 = vld [vmem:[%s5 + $0x1] sm:$0x1]
    %v6758 = vsel %vm67, %v6755, 0.0
    %6759 = vadd.xlane.f32.xlu0 %v6758
    %v6760 = vpop.xlane.xlu0 %6759
    %v6761 = vmul.f32 %v6760, %v1071
    %v6762 = vsub.f32 %v6755, %v6761
    %v6763 = vmul.f32 %v6762, %v6762
    %v6764 = vsel %vm67, %v6763, 0.0
    %6765 = vadd.xlane.f32.xlu0 %v6764
    %v6766 = vpop.xlane.xlu0 %6765
    %v6767 = vmul.f32 %v6766, %v1071
    %v6768 = vadd.f32 %v6767, 1e-05
    %v6769 = vrsqrt.pop %v6768
    %v6770 = vmul.f32 %v6762, %v6769
    %v6771 = vlaneseq
    %v6772 = vshrl.u32 %v6771, 7
    %v6773 = vsub.s32 0, %v6772
    %v6774 = vrot.slane %v6756, %v6773
    %v6775 = vmul.f32 %v6770, %v6774
    %v6776 = vlaneseq
    %v6777 = vshrl.u32 %v6776, 7
    %v6778 = vsub.s32 0, %v6777
    %v6779 = vrot.slane %v6757, %v6778
    %v6780 = vadd.f32 %v6775, %v6779
    %v6781 = vld [vmem:[%s6] sm:$0xff]
    %v6782 = vld [vmem:[%s6 + $0x8] sm:$0xff]
    %v6783 = vld [vmem:[%s6 + $0x10] sm:$0xff]
    %v6784 = vld [vmem:[%s6 + $0x18] sm:$0xff]
    %v6785 = vld [vmem:[%s7] sm:$0x1]
    %v6787 = vlaneseq
    %v6788 = vshrl.u32 %v6787, 7
    %v6789 = vsub.s32 0, %v6788
    %v6790 = vrot.slane %v6785, %v6789
    %v6793 = vsel %vm67, %v6780, 0
    %6795 = vmatprep.subr.mxu0 0.0
    %6796 = vmatpush1.msra.mxu0 %v6781
    %6797 = vmatprep.subr.mxu0 0.0
    %6798 = vmatpush1.msra.mxu0 %v6782
    %6799 = vmatprep.subr.mxu0 0.0
    %6800 = vmatpush1.msra.mxu0 %v6783
    %6801 = vmatprep.subr.mxu0 0.0
    %6802 = vmatpush1.msra.mxu0 %v6784
    %6803 = vmatprep.subr.mxu0 0.0
    %6804 = vmatpush1.msra.mxu0 0.0
    %6805 = vmatprep.subr.mxu0 0.0
    %6806 = vmatpush1.msra.mxu0 0.0
    %6807 = vmatprep.subr.mxu0 0.0
    %6808 = vmatpush1.msra.mxu0 0.0
    %6809 = vmatprep.subr.mxu0 0.0
    %6810 = vmatpush1.msra.mxu0 0.0
    %6811 = vmatprep.subr.mxu0 0.0
    %6812 = vmatpush1.msra.mxu0 0.0
    %6813 = vmatprep.subr.mxu0 0.0
    %6814 = vmatpush1.msra.mxu0 0.0
    %6815 = vmatprep.subr.mxu0 0.0
    %6816 = vmatpush1.msra.mxu0 0.0
    %6817 = vmatprep.subr.mxu0 0.0
    %6818 = vmatpush1.msra.mxu0 0.0
    %6819 = vmatprep.subr.mxu0 0.0
    %6820 = vmatpush1.msra.mxu0 0.0
    %6821 = vmatprep.subr.mxu0 0.0
    %6822 = vmatpush1.msra.mxu0 0.0
    %6823 = vmatprep.subr.mxu0 0.0
    %6824 = vmatpush1.msra.mxu0 0.0
    %6825 = vmatprep.subr.mxu0 0.0
    %6826 = vmatpush1.msra.mxu0 0.0
    %6827 = vmatprep.subr.mxu0 0.0
    %6828 = vmatpush1.msra.mxu0 0.0
    %6829 = vmatprep.subr.mxu0 0.0
    %6830 = vmatpush1.msra.mxu0 0.0
    %6831 = vmatprep.subr.mxu0 0.0
    %6832 = vmatpush1.msra.mxu0 0.0
    %6833 = vmatprep.subr.mxu0 0.0
    %6834 = vmatpush1.msra.mxu0 0.0
    %6835 = vmatprep.subr.mxu0 0.0
    %6836 = vmatpush1.msra.mxu0 0.0
    %6837 = vmatprep.subr.mxu0 0.0
    %6838 = vmatpush1.msra.mxu0 0.0
    %6839 = vmatprep.subr.mxu0 0.0
    %6840 = vmatpush1.msra.mxu0 0.0
    %6841 = vmatprep.subr.mxu0 0.0
    %6842 = vmatpush1.msra.mxu0 0.0
    %6843 = vmatprep.subr.mxu0 0.0
    %6844 = vmatpush1.msra.mxu0 0.0
    %6845 = vmatprep.subr.mxu0 0.0
    %6846 = vmatpush1.msra.mxu0 0.0
    %6847 = vmatprep.subr.mxu0 0.0
    %6848 = vmatpush1.msra.mxu0 0.0
    %6849 = vmatprep.subr.mxu0 0.0
    %6850 = vmatpush1.msra.mxu0 0.0
    %6851 = vmatprep.subr.mxu0 0.0
    %6852 = vmatpush1.msra.mxu0 0.0
    %6853 = vmatprep.subr.mxu0 0.0
    %6854 = vmatpush1.msra.mxu0 0.0
    %6855 = vmatprep.subr.mxu0 0.0
    %6856 = vmatpush1.msra.mxu0 0.0
    %6857 = vmatprep.subr.mxu0 0.0
    %6858 = vmatpush1.msra.mxu0 0.0
    %6859 = vmatprep.mubr.f32.mxu0 0.0
    %6860 = vmatmul.mubr.f32.gmra.mrb[0].mxu0 %v6793
    %v6861 = vpop.f32.mrb[0].mxu0
    %v6862 = vadd.f32 %v6790, %v6861
    %v6863 = vpop.f32.mrb[0].mxu0
    %6864 = vdwg.mxu0
    %v6865 = vmax.f32 %v6862, 0.0
    %v6866 = vld [vmem:[%s8] sm:$0xff]
    %v6867 = vld [vmem:[%s8 + $0x8] sm:$0xff]
    %v6868 = vld [vmem:[%s8 + $0x10] sm:$0xff]
    %v6869 = vld [vmem:[%s8 + $0x18] sm:$0xff]
    %v6870 = vld [vmem:[%s8 + $0x20] sm:$0xff]
    %v6871 = vld [vmem:[%s8 + $0x28] sm:$0xff]
    %v6872 = vld [vmem:[%s8 + $0x30] sm:$0xff]
    %v6873 = vld [vmem:[%s8 + $0x38] sm:$0xff]
    %v6874 = vld [vmem:[%s9] sm:$0x1]
    %v6876 = vlaneseq
    %v6877 = vshrl.u32 %v6876, 7
    %v6878 = vsub.s32 0, %v6877
    %v6879 = vrot.slane %v6874, %v6878
    %v6882 = vsel %vm2264, %v6865, 0
    %6884 = vmatprep.subr.mxu0 0.0
    %6885 = vmatpush1.msra.mxu0 %v6866
    %6886 = vmatprep.subr.mxu0 0.0
    %6887 = vmatpush1.msra.mxu0 %v6867
    %6888 = vmatprep.subr.mxu0 0.0
    %6889 = vmatpush1.msra.mxu0 %v6868
    %6890 = vmatprep.subr.mxu0 0.0
    %6891 = vmatpush1.msra.mxu0 %v6869
    %6892 = vmatprep.subr.mxu0 0.0
    %6893 = vmatpush1.msra.mxu0 %v6870
    %6894 = vmatprep.subr.mxu0 0.0
    %6895 = vmatpush1.msra.mxu0 %v6871
    %6896 = vmatprep.subr.mxu0 0.0
    %6897 = vmatpush1.msra.mxu0 %v6872
    %6898 = vmatprep.subr.mxu0 0.0
    %6899 = vmatpush1.msra.mxu0 %v6873
    %6900 = vmatprep.subr.mxu0 0.0
    %6901 = vmatpush1.msra.mxu0 0.0
    %6902 = vmatprep.subr.mxu0 0.0
    %6903 = vmatpush1.msra.mxu0 0.0
    %6904 = vmatprep.subr.mxu0 0.0
    %6905 = vmatpush1.msra.mxu0 0.0
    %6906 = vmatprep.subr.mxu0 0.0
    %6907 = vmatpush1.msra.mxu0 0.0
    %6908 = vmatprep.subr.mxu0 0.0
    %6909 = vmatpush1.msra.mxu0 0.0
    %6910 = vmatprep.subr.mxu0 0.0
    %6911 = vmatpush1.msra.mxu0 0.0
    %6912 = vmatprep.subr.mxu0 0.0
    %6913 = vmatpush1.msra.mxu0 0.0
    %6914 = vmatprep.subr.mxu0 0.0
    %6915 = vmatpush1.msra.mxu0 0.0
    %6916 = vmatprep.subr.mxu0 0.0
    %6917 = vmatpush1.msra.mxu0 0.0
    %6918 = vmatprep.subr.mxu0 0.0
    %6919 = vmatpush1.msra.mxu0 0.0
    %6920 = vmatprep.subr.mxu0 0.0
    %6921 = vmatpush1.msra.mxu0 0.0
    %6922 = vmatprep.subr.mxu0 0.0
    %6923 = vmatpush1.msra.mxu0 0.0
    %6924 = vmatprep.subr.mxu0 0.0
    %6925 = vmatpush1.msra.mxu0 0.0
    %6926 = vmatprep.subr.mxu0 0.0
    %6927 = vmatpush1.msra.mxu0 0.0
    %6928 = vmatprep.subr.mxu0 0.0
    %6929 = vmatpush1.msra.mxu0 0.0
    %6930 = vmatprep.subr.mxu0 0.0
    %6931 = vmatpush1.msra.mxu0 0.0
    %6932 = vmatprep.subr.mxu0 0.0
    %6933 = vmatpush1.msra.mxu0 0.0
    %6934 = vmatprep.subr.mxu0 0.0
    %6935 = vmatpush1.msra.mxu0 0.0
    %6936 = vmatprep.subr.mxu0 0.0
    %6937 = vmatpush1.msra.mxu0 0.0
    %6938 = vmatprep.subr.mxu0 0.0
    %6939 = vmatpush1.msra.mxu0 0.0
    %6940 = vmatprep.subr.mxu0 0.0
    %6941 = vmatpush1.msra.mxu0 0.0
    %6942 = vmatprep.subr.mxu0 0.0
    %6943 = vmatpush1.msra.mxu0 0.0
    %6944 = vmatprep.subr.mxu0 0.0
    %6945 = vmatpush1.msra.mxu0 0.0
    %6946 = vmatprep.subr.mxu0 0.0
    %6947 = vmatpush1.msra.mxu0 0.0
    %6948 = vmatprep.mubr.f32.mxu0 0.0
    %6949 = vmatmul.mubr.f32.gmra.mrb[0].mxu0 %v6882
    %v6950 = vpop.f32.mrb[0].mxu0
    %v6951 = vadd.f32 %v6879, %v6950
    %v6952 = vpop.f32.mrb[0].mxu0
    %6953 = vdwg.mxu0
    %v6954 = vadd.f32 %v6780, %v6951
    %v6955 = vld [vmem:[%s4 + $0x2] sm:$0x1]
    %v6956 = vld [vmem:[%s5 + $0x2] sm:$0x1]
    %v6957 = vsel %vm67, %v6954, 0.0
    %6958 = vadd.xlane.f32.xlu0 %v6957
    %v6959 = vpop.xlane.xlu0 %6958
    %v6960 = vmul.f32 %v6959, %v1071
    %v6961 = vsub.f32 %v6954, %v6960
    %v6962 = vmul.f32 %v6961, %v6961
    %v6963 = vsel %vm67, %v6962, 0.0
    %6964 = vadd.xlane.f32.xlu0 %v6963
    %v6965 = vpop.xlane.xlu0 %6964
    %v6966 = vmul.f32 %v6965, %v1071
    %v6967 = vadd.f32 %v6966, 1e-05
    %v6968 = vrsqrt.pop %v6967
    %v6969 = vmul.f32 %v6961, %v6968
    %v6970 = vlaneseq
    %v6971 = vshrl.u32 %v6970, 7
    %v6972 = vsub.s32 0, %v6971
    %v6973 = vrot.slane %v6955, %v6972
    %v6974 = vmul.f32 %v6969, %v6973
    %v6975 = vlaneseq
    %v6976 = vshrl.u32 %v6975, 7
    %v6977 = vsub.s32 0, %v6976
    %v6978 = vrot.slane %v6956, %v6977
    %v6979 = vadd.f32 %v6974, %v6978
    %v6980 = vld [vmem:[%s2364] sm:$0xff]
    %v6981 = vld [vmem:[%s2364 + $0x8] sm:$0xff]
    %v6982 = vld [vmem:[%s2364 + $0x10] sm:$0xff]
    %v6983 = vld [vmem:[%s2364 + $0x18] sm:$0xff]
    %v6984 = vld [vmem:[%s2369] sm:$0x1]
    %v6985 = vlaneseq
    %v6986 = vshrl.u32 %v6985, 7
    %v6987 = vsub.s32 0, %v6986
    %v6988 = vrot.slane %v6984, %v6987
    %v6990 = vsel %vm67, %v6979, 0
    %6992 = vmatprep.subr.mxu0 0.0
    %6993 = vmatpush1.msra.mxu0 %v6980
    %6994 = vmatprep.subr.mxu0 0.0
    %6995 = vmatpush1.msra.mxu0 %v6981
    %6996 = vmatprep.subr.mxu0 0.0
    %6997 = vmatpush1.msra.mxu0 %v6982
    %6998 = vmatprep.subr.mxu0 0.0
    %6999 = vmatpush1.msra.mxu0 %v6983
    %7000 = vmatprep.subr.mxu0 0.0
    %7001 = vmatpush1.msra.mxu0 0.0
    %7002 = vmatprep.subr.mxu0 0.0
    %7003 = vmatpush1.msra.mxu0 0.0
    %7004 = vmatprep.subr.mxu0 0.0
    %7005 = vmatpush1.msra.mxu0 0.0
    %7006 = vmatprep.subr.mxu0 0.0
    %7007 = vmatpush1.msra.mxu0 0.0
    %7008 = vmatprep.subr.mxu0 0.0
    %7009 = vmatpush1.msra.mxu0 0.0
    %7010 = vmatprep.subr.mxu0 0.0
    %7011 = vmatpush1.msra.mxu0 0.0
    %7012 = vmatprep.subr.mxu0 0.0
    %7013 = vmatpush1.msra.mxu0 0.0
    %7014 = vmatprep.subr.mxu0 0.0
    %7015 = vmatpush1.msra.mxu0 0.0
    %7016 = vmatprep.subr.mxu0 0.0
    %7017 = vmatpush1.msra.mxu0 0.0
    %7018 = vmatprep.subr.mxu0 0.0
    %7019 = vmatpush1.msra.mxu0 0.0
    %7020 = vmatprep.subr.mxu0 0.0
    %7021 = vmatpush1.msra.mxu0 0.0
    %7022 = vmatprep.subr.mxu0 0.0
    %7023 = vmatpush1.msra.mxu0 0.0
    %7024 = vmatprep.subr.mxu0 0.0
    %7025 = vmatpush1.msra.mxu0 0.0
    %7026 = vmatprep.subr.mxu0 0.0
    %7027 = vmatpush1.msra.mxu0 0.0
    %7028 = vmatprep.subr.mxu0 0.0
    %7029 = vmatpush1.msra.mxu0 0.0
    %7030 = vmatprep.subr.mxu0 0.0
    %7031 = vmatpush1.msra.mxu0 0.0
    %7032 = vmatprep.subr.mxu0 0.0
    %7033 = vmatpush1.msra.mxu0 0.0
    %7034 = vmatprep.subr.mxu0 0.0
    %7035 = vmatpush1.msra.mxu0 0.0
    %7036 = vmatprep.subr.mxu0 0.0
    %7037 = vmatpush1.msra.mxu0 0.0
    %7038 = vmatprep.subr.mxu0 0.0
    %7039 = vmatpush1.msra.mxu0 0.0
    %7040 = vmatprep.subr.mxu0 0.0
    %7041 = vmatpush1.msra.mxu0 0.0
    %7042 = vmatprep.subr.mxu0 0.0
    %7043 = vmatpush1.msra.mxu0 0.0
    %7044 = vmatprep.subr.mxu0 0.0
    %7045 = vmatpush1.msra.mxu0 0.0
    %7046 = vmatprep.subr.mxu0 0.0
    %7047 = vmatpush1.msra.mxu0 0.0
    %7048 = vmatprep.subr.mxu0 0.0
    %7049 = vmatpush1.msra.mxu0 0.0
    %7050 = vmatprep.subr.mxu0 0.0
    %7051 = vmatpush1.msra.mxu0 0.0
    %7052 = vmatprep.subr.mxu0 0.0
    %7053 = vmatpush1.msra.mxu0 0.0
    %7054 = vmatprep.subr.mxu0 0.0
    %7055 = vmatpush1.msra.mxu0 0.0
    %7056 = vmatprep.mubr.f32.mxu0 0.0
    %7057 = vmatmul.mubr.f32.gmra.mrb[0].mxu0 %v6990
    %v7058 = vpop.f32.mrb[0].mxu0
    %v7059 = vadd.f32 %v6988, %v7058
    %v7060 = vpop.f32.mrb[0].mxu0
    %7061 = vdwg.mxu0
    %v7062 = vmul.f32 %v7059, 0.35355338
    %v7063 = vld [vmem:[%s2449] sm:$0xff]
    %v7064 = vld [vmem:[%s2449 + $0x8] sm:$0xff]
    %v7065 = vld [vmem:[%s2449 + $0x10] sm:$0xff]
    %v7066 = vld [vmem:[%s2449 + $0x18] sm:$0xff]
    %v7067 = vld [vmem:[%s2369 + $0x1] sm:$0x1]
    %v7068 = vlaneseq
    %v7069 = vshrl.u32 %v7068, 7
    %v7070 = vsub.s32 0, %v7069
    %v7071 = vrot.slane %v7067, %v7070
    %7072 = vmatprep.subr.mxu0 0.0
    %7073 = vmatpush1.msra.mxu0 %v7063
    %7074 = vmatprep.subr.mxu0 0.0
    %7075 = vmatpush1.msra.mxu0 %v7064
    %7076 = vmatprep.subr.mxu0 0.0
    %7077 = vmatpush1.msra.mxu0 %v7065
    %7078 = vmatprep.subr.mxu0 0.0
    %7079 = vmatpush1.msra.mxu0 %v7066
    %7080 = vmatprep.subr.mxu0 0.0
    %7081 = vmatpush1.msra.mxu0 0.0
    %7082 = vmatprep.subr.mxu0 0.0
    %7083 = vmatpush1.msra.mxu0 0.0
    %7084 = vmatprep.subr.mxu0 0.0
    %7085 = vmatpush1.msra.mxu0 0.0
    %7086 = vmatprep.subr.mxu0 0.0
    %7087 = vmatpush1.msra.mxu0 0.0
    %7088 = vmatprep.subr.mxu0 0.0
    %7089 = vmatpush1.msra.mxu0 0.0
    %7090 = vmatprep.subr.mxu0 0.0
    %7091 = vmatpush1.msra.mxu0 0.0
    %7092 = vmatprep.subr.mxu0 0.0
    %7093 = vmatpush1.msra.mxu0 0.0
    %7094 = vmatprep.subr.mxu0 0.0
    %7095 = vmatpush1.msra.mxu0 0.0
    %7096 = vmatprep.subr.mxu0 0.0
    %7097 = vmatpush1.msra.mxu0 0.0
    %7098 = vmatprep.subr.mxu0 0.0
    %7099 = vmatpush1.msra.mxu0 0.0
    %7100 = vmatprep.subr.mxu0 0.0
    %7101 = vmatpush1.msra.mxu0 0.0
    %7102 = vmatprep.subr.mxu0 0.0
    %7103 = vmatpush1.msra.mxu0 0.0
    %7104 = vmatprep.subr.mxu0 0.0
    %7105 = vmatpush1.msra.mxu0 0.0
    %7106 = vmatprep.subr.mxu0 0.0
    %7107 = vmatpush1.msra.mxu0 0.0
    %7108 = vmatprep.subr.mxu0 0.0
    %7109 = vmatpush1.msra.mxu0 0.0
    %7110 = vmatprep.subr.mxu0 0.0
    %7111 = vmatpush1.msra.mxu0 0.0
    %7112 = vmatprep.subr.mxu0 0.0
    %7113 = vmatpush1.msra.mxu0 0.0
    %7114 = vmatprep.subr.mxu0 0.0
    %7115 = vmatpush1.msra.mxu0 0.0
    %7116 = vmatprep.subr.mxu0 0.0
    %7117 = vmatpush1.msra.mxu0 0.0
    %7118 = vmatprep.subr.mxu0 0.0
    %7119 = vmatpush1.msra.mxu0 0.0
    %7120 = vmatprep.subr.mxu0 0.0
    %7121 = vmatpush1.msra.mxu0 0.0
    %7122 = vmatprep.subr.mxu0 0.0
    %7123 = vmatpush1.msra.mxu0 0.0
    %7124 = vmatprep.subr.mxu0 0.0
    %7125 = vmatpush1.msra.mxu0 0.0
    %7126 = vmatprep.subr.mxu0 0.0
    %7127 = vmatpush1.msra.mxu0 0.0
    %7128 = vmatprep.subr.mxu0 0.0
    %7129 = vmatpush1.msra.mxu0 0.0
    %7130 = vmatprep.subr.mxu0 0.0
    %7131 = vmatpush1.msra.mxu0 0.0
    %7132 = vmatprep.subr.mxu0 0.0
    %7133 = vmatpush1.msra.mxu0 0.0
    %7134 = vmatprep.subr.mxu0 0.0
    %7135 = vmatpush1.msra.mxu0 0.0
    %7136 = vmatprep.mubr.f32.mxu0 0.0
    %7137 = vmatmul.mubr.f32.gmra.mrb[0].mxu0 %v6990
    %v7138 = vpop.f32.mrb[0].mxu0
    %v7139 = vadd.f32 %v7071, %v7138
    %v7140 = vpop.f32.mrb[0].mxu0
    %7141 = vdwg.mxu0
    %v7142 = vld [vmem:[%s2529] sm:$0xff]
    %v7143 = vld [vmem:[%s2529 + $0x8] sm:$0xff]
    %v7144 = vld [vmem:[%s2529 + $0x10] sm:$0xff]
    %v7145 = vld [vmem:[%s2529 + $0x18] sm:$0xff]
    %v7146 = vld [vmem:[%s2369 + $0x2] sm:$0x1]
    %v7147 = vlaneseq
    %v7148 = vshrl.u32 %v7147, 7
    %v7149 = vsub.s32 0, %v7148
    %v7150 = vrot.slane %v7146, %v7149
    %7151 = vmatprep.subr.mxu0 0.0
    %7152 = vmatpush1.msra.mxu0 %v7142
    %7153 = vmatprep.subr.mxu0 0.0
    %7154 = vmatpush1.msra.mxu0 %v7143
    %7155 = vmatprep.subr.mxu0 0.0
    %7156 = vmatpush1.msra.mxu0 %v7144
    %7157 = vmatprep.subr.mxu0 0.0
    %7158 = vmatpush1.msra.mxu0 %v7145
    %7159 = vmatprep.subr.mxu0 0.0
    %7160 = vmatpush1.msra.mxu0 0.0
    %7161 = vmatprep.subr.mxu0 0.0
    %7162 = vmatpush1.msra.mxu0 0.0
    %7163 = vmatprep.subr.mxu0 0.0
    %7164 = vmatpush1.msra.mxu0 0.0
    %7165 = vmatprep.subr.mxu0 0.0
    %7166 = vmatpush1.msra.mxu0 0.0
    %7167 = vmatprep.subr.mxu0 0.0
    %7168 = vmatpush1.msra.mxu0 0.0
    %7169 = vmatprep.subr.mxu0 0.0
    %7170 = vmatpush1.msra.mxu0 0.0
    %7171 = vmatprep.subr.mxu0 0.0
    %7172 = vmatpush1.msra.mxu0 0.0
    %7173 = vmatprep.subr.mxu0 0.0
    %7174 = vmatpush1.msra.mxu0 0.0
    %7175 = vmatprep.subr.mxu0 0.0
    %7176 = vmatpush1.msra.mxu0 0.0
    %7177 = vmatprep.subr.mxu0 0.0
    %7178 = vmatpush1.msra.mxu0 0.0
    %7179 = vmatprep.subr.mxu0 0.0
    %7180 = vmatpush1.msra.mxu0 0.0
    %7181 = vmatprep.subr.mxu0 0.0
    %7182 = vmatpush1.msra.mxu0 0.0
    %7183 = vmatprep.subr.mxu0 0.0
    %7184 = vmatpush1.msra.mxu0 0.0
    %7185 = vmatprep.subr.mxu0 0.0
    %7186 = vmatpush1.msra.mxu0 0.0
    %7187 = vmatprep.subr.mxu0 0.0
    %7188 = vmatpush1.msra.mxu0 0.0
    %7189 = vmatprep.subr.mxu0 0.0
    %7190 = vmatpush1.msra.mxu0 0.0
    %7191 = vmatprep.subr.mxu0 0.0
    %7192 = vmatpush1.msra.mxu0 0.0
    %7193 = vmatprep.subr.mxu0 0.0
    %7194 = vmatpush1.msra.mxu0 0.0
    %7195 = vmatprep.subr.mxu0 0.0
    %7196 = vmatpush1.msra.mxu0 0.0
    %7197 = vmatprep.subr.mxu0 0.0
    %7198 = vmatpush1.msra.mxu0 0.0
    %7199 = vmatprep.subr.mxu0 0.0
    %7200 = vmatpush1.msra.mxu0 0.0
    %7201 = vmatprep.subr.mxu0 0.0
    %7202 = vmatpush1.msra.mxu0 0.0
    %7203 = vmatprep.subr.mxu0 0.0
    %7204 = vmatpush1.msra.mxu0 0.0
    %7205 = vmatprep.subr.mxu0 0.0
    %7206 = vmatpush1.msra.mxu0 0.0
    %7207 = vmatprep.subr.mxu0 0.0
    %7208 = vmatpush1.msra.mxu0 0.0
    %7209 = vmatprep.subr.mxu0 0.0
    %7210 = vmatpush1.msra.mxu0 0.0
    %7211 = vmatprep.subr.mxu0 0.0
    %7212 = vmatpush1.msra.mxu0 0.0
    %7213 = vmatprep.subr.mxu0 0.0
    %7214 = vmatpush1.msra.mxu0 0.0
    %7215 = vmatprep.mubr.f32.mxu0 0.0
    %7216 = vmatmul.mubr.f32.gmra.mrb[0].mxu0 %v6990
    %v7217 = vpop.f32.mrb[0].mxu0
    %v7218 = vadd.f32 %v7150, %v7217
    %v7219 = vpop.f32.mrb[0].mxu0
    %7220 = vdwg.mxu0
    %7222 = vrot.lane.b32.xlu0 %v7062, 120
    %v7223 = vpop.permute.xlu0 %7222
    %7224 = vrot.lane.b32.xlu0 %v7062, 112
    %v7225 = vpop.permute.xlu0 %7224
    %7226 = vrot.lane.b32.xlu0 %v7062, 104
    %v7227 = vpop.permute.xlu0 %7226
    %7229 = vrot.lane.b32.xlu0 %v7139, 120
    %v7230 = vpop.permute.xlu0 %7229
    %7231 = vrot.lane.b32.xlu0 %v7139, 112
    %v7232 = vpop.permute.xlu0 %7231
    %7233 = vrot.lane.b32.xlu0 %v7139, 104
    %v7234 = vpop.permute.xlu0 %7233
    %7236 = vrot.lane.b32.xlu0 %v7218, 120
    %v7237 = vpop.permute.xlu0 %7236
    %7239 = vrot.lane.b32.xlu0 %v7218, 112
    %v7240 = vpop.permute.xlu0 %7239
    %7242 = vrot.lane.b32.xlu0 %v7218, 104
    %v7243 = vpop.permute.xlu0 %7242
    %v7245 = vsel %vm326, %v7062, 0
    %v7247 = vsel %vm326, %v7139, 0
    %7249 = vmatprep.subr.mxu0 0.0
    %7250 = vmatpush1.xpose.msra.mxu0 %v7247
    %7251 = vmatprep.subr.mxu0 0.0
    %7252 = vmatpush1.xpose.msra.mxu0 0.0
    %7253 = vmatprep.subr.mxu0 0.0
    %7254 = vmatpush1.xpose.msra.mxu0 0.0
    %7255 = vmatprep.subr.mxu0 0.0
    %7256 = vmatpush1.xpose.msra.mxu0 0.0
    %7257 = vmatprep.subr.mxu0 0.0
    %7258 = vmatpush1.xpose.msra.mxu0 0.0
    %7259 = vmatprep.subr.mxu0 0.0
    %7260 = vmatpush1.xpose.msra.mxu0 0.0
    %7261 = vmatprep.subr.mxu0 0.0
    %7262 = vmatpush1.xpose.msra.mxu0 0.0
    %7263 = vmatprep.subr.mxu0 0.0
    %7264 = vmatpush1.xpose.msra.mxu0 0.0
    %7265 = vmatprep.subr.mxu0 0.0
    %7266 = vmatpush1.xpose.msra.mxu0 0.0
    %7267 = vmatprep.subr.mxu0 0.0
    %7268 = vmatpush1.xpose.msra.mxu0 0.0
    %7269 = vmatprep.subr.mxu0 0.0
    %7270 = vmatpush1.xpose.msra.mxu0 0.0
    %7271 = vmatprep.subr.mxu0 0.0
    %7272 = vmatpush1.xpose.msra.mxu0 0.0
    %7273 = vmatprep.subr.mxu0 0.0
    %7274 = vmatpush1.xpose.msra.mxu0 0.0
    %7275 = vmatprep.subr.mxu0 0.0
    %7276 = vmatpush1.xpose.msra.mxu0 0.0
    %7277 = vmatprep.subr.mxu0 0.0
    %7278 = vmatpush1.xpose.msra.mxu0 0.0
    %7279 = vmatprep.subr.mxu0 0.0
    %7280 = vmatpush1.xpose.msra.mxu0 0.0
    %7281 = vmatprep.subr.mxu0 0.0
    %7282 = vmatpush1.xpose.msra.mxu0 0.0
    %7283 = vmatprep.subr.mxu0 0.0
    %7284 = vmatpush1.xpose.msra.mxu0 0.0
    %7285 = vmatprep.subr.mxu0 0.0
    %7286 = vmatpush1.xpose.msra.mxu0 0.0
    %7287 = vmatprep.subr.mxu0 0.0
    %7288 = vmatpush1.xpose.msra.mxu0 0.0
    %7289 = vmatprep.subr.mxu0 0.0
    %7290 = vmatpush1.xpose.msra.mxu0 0.0
    %7291 = vmatprep.subr.mxu0 0.0
    %7292 = vmatpush1.xpose.msra.mxu0 0.0
    %7293 = vmatprep.subr.mxu0 0.0
    %7294 = vmatpush1.xpose.msra.mxu0 0.0
    %7295 = vmatprep.subr.mxu0 0.0
    %7296 = vmatpush1.xpose.msra.mxu0 0.0
    %7297 = vmatprep.subr.mxu0 0.0
    %7298 = vmatpush1.xpose.msra.mxu0 0.0
    %7299 = vmatprep.subr.mxu0 0.0
    %7300 = vmatpush1.xpose.msra.mxu0 0.0
    %7301 = vmatprep.subr.mxu0 0.0
    %7302 = vmatpush1.xpose.msra.mxu0 0.0
    %7303 = vmatprep.subr.mxu0 0.0
    %7304 = vmatpush1.xpose.msra.mxu0 0.0
    %7305 = vmatprep.subr.mxu0 0.0
    %7306 = vmatpush1.xpose.msra.mxu0 0.0
    %7307 = vmatprep.subr.mxu0 0.0
    %7308 = vmatpush1.xpose.msra.mxu0 0.0
    %7309 = vmatprep.subr.mxu0 0.0
    %7310 = vmatpush1.xpose.msra.mxu0 0.0
    %7311 = vmatprep.subr.mxu0 0.0
    %7312 = vmatpush1.xpose.msra.mxu0 0.0
    %7313 = vmatprep.mubr.f32.mxu0 0.0
    %7314 = vmatmul.mubr.f32.gmra.mrb[0].mxu0 %v7245
    %v7315 = vpop.f32.mrb[0].mxu0
    %v7316 = vadd.f32 0.0, %v7315
    %v7317 = vpop.f32.mrb[0].mxu0
    %7318 = vdwg.mxu0
    %v7319 = vsel %vm326, %v7223, 0
    %v7321 = vsel %vm326, %v7230, 0
    %7323 = vmatprep.subr.mxu0 0.0
    %7324 = vmatpush1.xpose.msra.mxu0 %v7321
    %7325 = vmatprep.subr.mxu0 0.0
    %7326 = vmatpush1.xpose.msra.mxu0 0.0
    %7327 = vmatprep.subr.mxu0 0.0
    %7328 = vmatpush1.xpose.msra.mxu0 0.0
    %7329 = vmatprep.subr.mxu0 0.0
    %7330 = vmatpush1.xpose.msra.mxu0 0.0
    %7331 = vmatprep.subr.mxu0 0.0
    %7332 = vmatpush1.xpose.msra.mxu0 0.0
    %7333 = vmatprep.subr.mxu0 0.0
    %7334 = vmatpush1.xpose.msra.mxu0 0.0
    %7335 = vmatprep.subr.mxu0 0.0
    %7336 = vmatpush1.xpose.msra.mxu0 0.0
    %7337 = vmatprep.subr.mxu0 0.0
    %7338 = vmatpush1.xpose.msra.mxu0 0.0
    %7339 = vmatprep.subr.mxu0 0.0
    %7340 = vmatpush1.xpose.msra.mxu0 0.0
    %7341 = vmatprep.subr.mxu0 0.0
    %7342 = vmatpush1.xpose.msra.mxu0 0.0
    %7343 = vmatprep.subr.mxu0 0.0
    %7344 = vmatpush1.xpose.msra.mxu0 0.0
    %7345 = vmatprep.subr.mxu0 0.0
    %7346 = vmatpush1.xpose.msra.mxu0 0.0
    %7347 = vmatprep.subr.mxu0 0.0
    %7348 = vmatpush1.xpose.msra.mxu0 0.0
    %7349 = vmatprep.subr.mxu0 0.0
    %7350 = vmatpush1.xpose.msra.mxu0 0.0
    %7351 = vmatprep.subr.mxu0 0.0
    %7352 = vmatpush1.xpose.msra.mxu0 0.0
    %7353 = vmatprep.subr.mxu0 0.0
    %7354 = vmatpush1.xpose.msra.mxu0 0.0
    %7355 = vmatprep.subr.mxu0 0.0
    %7356 = vmatpush1.xpose.msra.mxu0 0.0
    %7357 = vmatprep.subr.mxu0 0.0
    %7358 = vmatpush1.xpose.msra.mxu0 0.0
    %7359 = vmatprep.subr.mxu0 0.0
    %7360 = vmatpush1.xpose.msra.mxu0 0.0
    %7361 = vmatprep.subr.mxu0 0.0
    %7362 = vmatpush1.xpose.msra.mxu0 0.0
    %7363 = vmatprep.subr.mxu0 0.0
    %7364 = vmatpush1.xpose.msra.mxu0 0.0
    %7365 = vmatprep.subr.mxu0 0.0
    %7366 = vmatpush1.xpose.msra.mxu0 0.0
    %7367 = vmatprep.subr.mxu0 0.0
    %7368 = vmatpush1.xpose.msra.mxu0 0.0
    %7369 = vmatprep.subr.mxu0 0.0
    %7370 = vmatpush1.xpose.msra.mxu0 0.0
    %7371 = vmatprep.subr.mxu0 0.0
    %7372 = vmatpush1.xpose.msra.mxu0 0.0
    %7373 = vmatprep.subr.mxu0 0.0
    %7374 = vmatpush1.xpose.msra.mxu0 0.0
    %7375 = vmatprep.subr.mxu0 0.0
    %7376 = vmatpush1.xpose.msra.mxu0 0.0
    %7377 = vmatprep.subr.mxu0 0.0
    %7378 = vmatpush1.xpose.msra.mxu0 0.0
    %7379 = vmatprep.subr.mxu0 0.0
    %7380 = vmatpush1.xpose.msra.mxu0 0.0
    %7381 = vmatprep.subr.mxu0 0.0
    %7382 = vmatpush1.xpose.msra.mxu0 0.0
    %7383 = vmatprep.subr.mxu0 0.0
    %7384 = vmatpush1.xpose.msra.mxu0 0.0
    %7385 = vmatprep.subr.mxu0 0.0
    %7386 = vmatpush1.xpose.msra.mxu0 0.0
    %7387 = vmatprep.mubr.f32.mxu0 0.0
    %7388 = vmatmul.mubr.f32.gmra.mrb[0].mxu0 %v7319
    %v7389 = vpop.f32.mrb[0].mxu0
    %v7390 = vadd.f32 0.0, %v7389
    %v7391 = vpop.f32.mrb[0].mxu0
    %7392 = vdwg.mxu0
    %v7393 = vsel %vm326, %v7225, 0
    %v7395 = vsel %vm326, %v7232, 0
    %7397 = vmatprep.subr.mxu0 0.0
    %7398 = vmatpush1.xpose.msra.mxu0 %v7395
    %7399 = vmatprep.subr.mxu0 0.0
    %7400 = vmatpush1.xpose.msra.mxu0 0.0
    %7401 = vmatprep.subr.mxu0 0.0
    %7402 = vmatpush1.xpose.msra.mxu0 0.0
    %7403 = vmatprep.subr.mxu0 0.0
    %7404 = vmatpush1.xpose.msra.mxu0 0.0
    %7405 = vmatprep.subr.mxu0 0.0
    %7406 = vmatpush1.xpose.msra.mxu0 0.0
    %7407 = vmatprep.subr.mxu0 0.0
    %7408 = vmatpush1.xpose.msra.mxu0 0.0
    %7409 = vmatprep.subr.mxu0 0.0
    %7410 = vmatpush1.xpose.msra.mxu0 0.0
    %7411 = vmatprep.subr.mxu0 0.0
    %7412 = vmatpush1.xpose.msra.mxu0 0.0
    %7413 = vmatprep.subr.mxu0 0.0
    %7414 = vmatpush1.xpose.msra.mxu0 0.0
    %7415 = vmatprep.subr.mxu0 0.0
    %7416 = vmatpush1.xpose.msra.mxu0 0.0
    %7417 = vmatprep.subr.mxu0 0.0
    %7418 = vmatpush1.xpose.msra.mxu0 0.0
    %7419 = vmatprep.subr.mxu0 0.0
    %7420 = vmatpush1.xpose.msra.mxu0 0.0
    %7421 = vmatprep.subr.mxu0 0.0
    %7422 = vmatpush1.xpose.msra.mxu0 0.0
    %7423 = vmatprep.subr.mxu0 0.0
    %7424 = vmatpush1.xpose.msra.mxu0 0.0
    %7425 = vmatprep.subr.mxu0 0.0
    %7426 = vmatpush1.xpose.msra.mxu0 0.0
    %7427 = vmatprep.subr.mxu0 0.0
    %7428 = vmatpush1.xpose.msra.mxu0 0.0
    %7429 = vmatprep.subr.mxu0 0.0
    %7430 = vmatpush1.xpose.msra.mxu0 0.0
    %7431 = vmatprep.subr.mxu0 0.0
    %7432 = vmatpush1.xpose.msra.mxu0 0.0
    %7433 = vmatprep.subr.mxu0 0.0
    %7434 = vmatpush1.xpose.msra.mxu0 0.0
    %7435 = vmatprep.subr.mxu0 0.0
    %7436 = vmatpush1.xpose.msra.mxu0 0.0
    %7437 = vmatprep.subr.mxu0 0.0
    %7438 = vmatpush1.xpose.msra.mxu0 0.0
    %7439 = vmatprep.subr.mxu0 0.0
    %7440 = vmatpush1.xpose.msra.mxu0 0.0
    %7441 = vmatprep.subr.mxu0 0.0
    %7442 = vmatpush1.xpose.msra.mxu0 0.0
    %7443 = vmatprep.subr.mxu0 0.0
    %7444 = vmatpush1.xpose.msra.mxu0 0.0
    %7445 = vmatprep.subr.mxu0 0.0
    %7446 = vmatpush1.xpose.msra.mxu0 0.0
    %7447 = vmatprep.subr.mxu0 0.0
    %7448 = vmatpush1.xpose.msra.mxu0 0.0
    %7449 = vmatprep.subr.mxu0 0.0
    %7450 = vmatpush1.xpose.msra.mxu0 0.0
    %7451 = vmatprep.subr.mxu0 0.0
    %7452 = vmatpush1.xpose.msra.mxu0 0.0
    %7453 = vmatprep.subr.mxu0 0.0
    %7454 = vmatpush1.xpose.msra.mxu0 0.0
    %7455 = vmatprep.subr.mxu0 0.0
    %7456 = vmatpush1.xpose.msra.mxu0 0.0
    %7457 = vmatprep.subr.mxu0 0.0
    %7458 = vmatpush1.xpose.msra.mxu0 0.0
    %7459 = vmatprep.subr.mxu0 0.0
    %7460 = vmatpush1.xpose.msra.mxu0 0.0
    %7461 = vmatprep.mubr.f32.mxu0 0.0
    %7462 = vmatmul.mubr.f32.gmra.mrb[0].mxu0 %v7393
    %v7463 = vpop.f32.mrb[0].mxu0
    %v7464 = vadd.f32 0.0, %v7463
    %v7465 = vpop.f32.mrb[0].mxu0
    %7466 = vdwg.mxu0
    %v7467 = vsel %vm326, %v7227, 0
    %v7469 = vsel %vm326, %v7234, 0
    %7471 = vmatprep.subr.mxu0 0.0
    %7472 = vmatpush1.xpose.msra.mxu0 %v7469
    %7473 = vmatprep.subr.mxu0 0.0
    %7474 = vmatpush1.xpose.msra.mxu0 0.0
    %7475 = vmatprep.subr.mxu0 0.0
    %7476 = vmatpush1.xpose.msra.mxu0 0.0
    %7477 = vmatprep.subr.mxu0 0.0
    %7478 = vmatpush1.xpose.msra.mxu0 0.0
    %7479 = vmatprep.subr.mxu0 0.0
    %7480 = vmatpush1.xpose.msra.mxu0 0.0
    %7481 = vmatprep.subr.mxu0 0.0
    %7482 = vmatpush1.xpose.msra.mxu0 0.0
    %7483 = vmatprep.subr.mxu0 0.0
    %7484 = vmatpush1.xpose.msra.mxu0 0.0
    %7485 = vmatprep.subr.mxu0 0.0
    %7486 = vmatpush1.xpose.msra.mxu0 0.0
    %7487 = vmatprep.subr.mxu0 0.0
    %7488 = vmatpush1.xpose.msra.mxu0 0.0
    %7489 = vmatprep.subr.mxu0 0.0
    %7490 = vmatpush1.xpose.msra.mxu0 0.0
    %7491 = vmatprep.subr.mxu0 0.0
    %7492 = vmatpush1.xpose.msra.mxu0 0.0
    %7493 = vmatprep.subr.mxu0 0.0
    %7494 = vmatpush1.xpose.msra.mxu0 0.0
    %7495 = vmatprep.subr.mxu0 0.0
    %7496 = vmatpush1.xpose.msra.mxu0 0.0
    %7497 = vmatprep.subr.mxu0 0.0
    %7498 = vmatpush1.xpose.msra.mxu0 0.0
    %7499 = vmatprep.subr.mxu0 0.0
    %7500 = vmatpush1.xpose.msra.mxu0 0.0
    %7501 = vmatprep.subr.mxu0 0.0
    %7502 = vmatpush1.xpose.msra.mxu0 0.0
    %7503 = vmatprep.subr.mxu0 0.0
    %7504 = vmatpush1.xpose.msra.mxu0 0.0
    %7505 = vmatprep.subr.mxu0 0.0
    %7506 = vmatpush1.xpose.msra.mxu0 0.0
    %7507 = vmatprep.subr.mxu0 0.0
    %7508 = vmatpush1.xpose.msra.mxu0 0.0
    %7509 = vmatprep.subr.mxu0 0.0
    %7510 = vmatpush1.xpose.msra.mxu0 0.0
    %7511 = vmatprep.subr.mxu0 0.0
    %7512 = vmatpush1.xpose.msra.mxu0 0.0
    %7513 = vmatprep.subr.mxu0 0.0
    %7514 = vmatpush1.xpose.msra.mxu0 0.0
    %7515 = vmatprep.subr.mxu0 0.0
    %7516 = vmatpush1.xpose.msra.mxu0 0.0
    %7517 = vmatprep.subr.mxu0 0.0
    %7518 = vmatpush1.xpose.msra.mxu0 0.0
    %7519 = vmatprep.subr.mxu0 0.0
    %7520 = vmatpush1.xpose.msra.mxu0 0.0
    %7521 = vmatprep.subr.mxu0 0.0
    %7522 = vmatpush1.xpose.msra.mxu0 0.0
    %7523 = vmatprep.subr.mxu0 0.0
    %7524 = vmatpush1.xpose.msra.mxu0 0.0
    %7525 = vmatprep.subr.mxu0 0.0
    %7526 = vmatpush1.xpose.msra.mxu0 0.0
    %7527 = vmatprep.subr.mxu0 0.0
    %7528 = vmatpush1.xpose.msra.mxu0 0.0
    %7529 = vmatprep.subr.mxu0 0.0
    %7530 = vmatpush1.xpose.msra.mxu0 0.0
    %7531 = vmatprep.subr.mxu0 0.0
    %7532 = vmatpush1.xpose.msra.mxu0 0.0
    %7533 = vmatprep.subr.mxu0 0.0
    %7534 = vmatpush1.xpose.msra.mxu0 0.0
    %7535 = vmatprep.mubr.f32.mxu0 0.0
    %7536 = vmatmul.mubr.f32.gmra.mrb[0].mxu0 %v7467
    %v7537 = vpop.f32.mrb[0].mxu0
    %v7538 = vadd.f32 0.0, %v7537
    %v7539 = vpop.f32.mrb[0].mxu0
    %7540 = vdwg.mxu0
    %v7541 = vsel %vm624, -1e+30, %v7316
    %v7542 = vsel %vm624, -1e+30, %v7390
    %v7543 = vsel %vm624, -1e+30, %v7464
    %v7544 = vsel %vm624, -1e+30, %v7538
    %v7545 = vsel %vm326, %v7541, -inf
    %7546 = vmax.xlane.f32.xlu0 %v7545
    %v7547 = vpop.xlane.xlu0 %7546
    %v7548 = vsel %vm326, %v7542, -inf
    %7549 = vmax.xlane.f32.xlu0 %v7548
    %v7550 = vpop.xlane.xlu0 %7549
    %v7551 = vsel %vm326, %v7543, -inf
    %7552 = vmax.xlane.f32.xlu0 %v7551
    %v7553 = vpop.xlane.xlu0 %7552
    %v7554 = vsel %vm326, %v7544, -inf
    %7555 = vmax.xlane.f32.xlu0 %v7554
    %v7556 = vpop.xlane.xlu0 %7555
    %v7557 = vsub.f32 %v7541, %v7547
    %v7558 = vsub.f32 %v7542, %v7550
    %v7559 = vsub.f32 %v7543, %v7553
    %v7560 = vsub.f32 %v7544, %v7556
    %v7561 = vmul.f32 %v7557, 1.442695
    %v7562 = vpow.pop %v7561
    %v7563 = vmul.f32 %v7558, 1.442695
    %v7564 = vpow.pop %v7563
    %v7565 = vmul.f32 %v7559, 1.442695
    %v7566 = vpow.pop %v7565
    %v7567 = vmul.f32 %v7560, 1.442695
    %v7568 = vpow.pop %v7567
    %v7569 = vsel %vm326, %v7562, 0.0
    %7570 = vadd.xlane.f32.xlu0 %v7569
    %v7571 = vpop.xlane.xlu0 %7570
    %v7572 = vsel %vm326, %v7564, 0.0
    %7573 = vadd.xlane.f32.xlu0 %v7572
    %v7574 = vpop.xlane.xlu0 %7573
    %v7575 = vsel %vm326, %v7566, 0.0
    %7576 = vadd.xlane.f32.xlu0 %v7575
    %v7577 = vpop.xlane.xlu0 %7576
    %v7578 = vsel %vm326, %v7568, 0.0
    %7579 = vadd.xlane.f32.xlu0 %v7578
    %v7580 = vpop.xlane.xlu0 %7579
    %v7581 = vrcp.pop %v7571
    %v7582 = vrcp.pop %v7574
    %v7583 = vrcp.pop %v7577
    %v7584 = vrcp.pop %v7580
    %v7585 = vmul.f32 %v7562, %v7581
    %v7586 = vmul.f32 %v7564, %v7582
    %v7587 = vmul.f32 %v7566, %v7583
    %v7588 = vmul.f32 %v7568, %v7584
    %v7590 = vsel %vm326, %v7585, 0
    %7592 = vmatprep.subr.mxu0 0.0
    %7593 = vmatpush1.msra.mxu0 %v7218
    %7594 = vmatprep.subr.mxu0 0.0
    %7595 = vmatpush1.msra.mxu0 0.0
    %7596 = vmatprep.subr.mxu0 0.0
    %7597 = vmatpush1.msra.mxu0 0.0
    %7598 = vmatprep.subr.mxu0 0.0
    %7599 = vmatpush1.msra.mxu0 0.0
    %7600 = vmatprep.subr.mxu0 0.0
    %7601 = vmatpush1.msra.mxu0 0.0
    %7602 = vmatprep.subr.mxu0 0.0
    %7603 = vmatpush1.msra.mxu0 0.0
    %7604 = vmatprep.subr.mxu0 0.0
    %7605 = vmatpush1.msra.mxu0 0.0
    %7606 = vmatprep.subr.mxu0 0.0
    %7607 = vmatpush1.msra.mxu0 0.0
    %7608 = vmatprep.subr.mxu0 0.0
    %7609 = vmatpush1.msra.mxu0 0.0
    %7610 = vmatprep.subr.mxu0 0.0
    %7611 = vmatpush1.msra.mxu0 0.0
    %7612 = vmatprep.subr.mxu0 0.0
    %7613 = vmatpush1.msra.mxu0 0.0
    %7614 = vmatprep.subr.mxu0 0.0
    %7615 = vmatpush1.msra.mxu0 0.0
    %7616 = vmatprep.subr.mxu0 0.0
    %7617 = vmatpush1.msra.mxu0 0.0
    %7618 = vmatprep.subr.mxu0 0.0
    %7619 = vmatpush1.msra.mxu0 0.0
    %7620 = vmatprep.subr.mxu0 0.0
    %7621 = vmatpush1.msra.mxu0 0.0
    %7622 = vmatprep.subr.mxu0 0.0
    %7623 = vmatpush1.msra.mxu0 0.0
    %7624 = vmatprep.subr.mxu0 0.0
    %7625 = vmatpush1.msra.mxu0 0.0
    %7626 = vmatprep.subr.mxu0 0.0
    %7627 = vmatpush1.msra.mxu0 0.0
    %7628 = vmatprep.subr.mxu0 0.0
    %7629 = vmatpush1.msra.mxu0 0.0
    %7630 = vmatprep.subr.mxu0 0.0
    %7631 = vmatpush1.msra.mxu0 0.0
    %7632 = vmatprep.subr.mxu0 0.0
    %7633 = vmatpush1.msra.mxu0 0.0
    %7634 = vmatprep.subr.mxu0 0.0
    %7635 = vmatpush1.msra.mxu0 0.0
    %7636 = vmatprep.subr.mxu0 0.0
    %7637 = vmatpush1.msra.mxu0 0.0
    %7638 = vmatprep.subr.mxu0 0.0
    %7639 = vmatpush1.msra.mxu0 0.0
    %7640 = vmatprep.subr.mxu0 0.0
    %7641 = vmatpush1.msra.mxu0 0.0
    %7642 = vmatprep.subr.mxu0 0.0
    %7643 = vmatpush1.msra.mxu0 0.0
    %7644 = vmatprep.subr.mxu0 0.0
    %7645 = vmatpush1.msra.mxu0 0.0
    %7646 = vmatprep.subr.mxu0 0.0
    %7647 = vmatpush1.msra.mxu0 0.0
    %7648 = vmatprep.subr.mxu0 0.0
    %7649 = vmatpush1.msra.mxu0 0.0
    %7650 = vmatprep.subr.mxu0 0.0
    %7651 = vmatpush1.msra.mxu0 0.0
    %7652 = vmatprep.subr.mxu0 0.0
    %7653 = vmatpush1.msra.mxu0 0.0
    %7654 = vmatprep.subr.mxu0 0.0
    %7655 = vmatpush1.msra.mxu0 0.0
    %7656 = vmatprep.mubr.f32.mxu0 0.0
    %7657 = vmatmul.mubr.f32.gmra.mrb[0].mxu0 %v7590
    %v7658 = vpop.f32.mrb[0].mxu0
    %v7659 = vadd.f32 0.0, %v7658
    %v7660 = vpop.f32.mrb[0].mxu0
    %7661 = vdwg.mxu0
    %v7663 = vsel %vm326, %v7586, 0
    %7665 = vmatprep.subr.mxu0 0.0
    %7666 = vmatpush1.msra.mxu0 %v7237
    %7667 = vmatprep.subr.mxu0 0.0
    %7668 = vmatpush1.msra.mxu0 0.0
    %7669 = vmatprep.subr.mxu0 0.0
    %7670 = vmatpush1.msra.mxu0 0.0
    %7671 = vmatprep.subr.mxu0 0.0
    %7672 = vmatpush1.msra.mxu0 0.0
    %7673 = vmatprep.subr.mxu0 0.0
    %7674 = vmatpush1.msra.mxu0 0.0
    %7675 = vmatprep.subr.mxu0 0.0
    %7676 = vmatpush1.msra.mxu0 0.0
    %7677 = vmatprep.subr.mxu0 0.0
    %7678 = vmatpush1.msra.mxu0 0.0
    %7679 = vmatprep.subr.mxu0 0.0
    %7680 = vmatpush1.msra.mxu0 0.0
    %7681 = vmatprep.subr.mxu0 0.0
    %7682 = vmatpush1.msra.mxu0 0.0
    %7683 = vmatprep.subr.mxu0 0.0
    %7684 = vmatpush1.msra.mxu0 0.0
    %7685 = vmatprep.subr.mxu0 0.0
    %7686 = vmatpush1.msra.mxu0 0.0
    %7687 = vmatprep.subr.mxu0 0.0
    %7688 = vmatpush1.msra.mxu0 0.0
    %7689 = vmatprep.subr.mxu0 0.0
    %7690 = vmatpush1.msra.mxu0 0.0
    %7691 = vmatprep.subr.mxu0 0.0
    %7692 = vmatpush1.msra.mxu0 0.0
    %7693 = vmatprep.subr.mxu0 0.0
    %7694 = vmatpush1.msra.mxu0 0.0
    %7695 = vmatprep.subr.mxu0 0.0
    %7696 = vmatpush1.msra.mxu0 0.0
    %7697 = vmatprep.subr.mxu0 0.0
    %7698 = vmatpush1.msra.mxu0 0.0
    %7699 = vmatprep.subr.mxu0 0.0
    %7700 = vmatpush1.msra.mxu0 0.0
    %7701 = vmatprep.subr.mxu0 0.0
    %7702 = vmatpush1.msra.mxu0 0.0
    %7703 = vmatprep.subr.mxu0 0.0
    %7704 = vmatpush1.msra.mxu0 0.0
    %7705 = vmatprep.subr.mxu0 0.0
    %7706 = vmatpush1.msra.mxu0 0.0
    %7707 = vmatprep.subr.mxu0 0.0
    %7708 = vmatpush1.msra.mxu0 0.0
    %7709 = vmatprep.subr.mxu0 0.0
    %7710 = vmatpush1.msra.mxu0 0.0
    %7711 = vmatprep.subr.mxu0 0.0
    %7712 = vmatpush1.msra.mxu0 0.0
    %7713 = vmatprep.subr.mxu0 0.0
    %7714 = vmatpush1.msra.mxu0 0.0
    %7715 = vmatprep.subr.mxu0 0.0
    %7716 = vmatpush1.msra.mxu0 0.0
    %7717 = vmatprep.subr.mxu0 0.0
    %7718 = vmatpush1.msra.mxu0 0.0
    %7719 = vmatprep.subr.mxu0 0.0
    %7720 = vmatpush1.msra.mxu0 0.0
    %7721 = vmatprep.subr.mxu0 0.0
    %7722 = vmatpush1.msra.mxu0 0.0
    %7723 = vmatprep.subr.mxu0 0.0
    %7724 = vmatpush1.msra.mxu0 0.0
    %7725 = vmatprep.subr.mxu0 0.0
    %7726 = vmatpush1.msra.mxu0 0.0
    %7727 = vmatprep.subr.mxu0 0.0
    %7728 = vmatpush1.msra.mxu0 0.0
    %7729 = vmatprep.mubr.f32.mxu0 0.0
    %7730 = vmatmul.mubr.f32.gmra.mrb[0].mxu0 %v7663
    %v7731 = vpop.f32.mrb[0].mxu0
    %v7732 = vadd.f32 0.0, %v7731
    %v7733 = vpop.f32.mrb[0].mxu0
    %7734 = vdwg.mxu0
    %v7736 = vsel %vm326, %v7587, 0
    %7738 = vmatprep.subr.mxu0 0.0
    %7739 = vmatpush1.msra.mxu0 %v7240
    %7740 = vmatprep.subr.mxu0 0.0
    %7741 = vmatpush1.msra.mxu0 0.0
    %7742 = vmatprep.subr.mxu0 0.0
    %7743 = vmatpush1.msra.mxu0 0.0
    %7744 = vmatprep.subr.mxu0 0.0
    %7745 = vmatpush1.msra.mxu0 0.0
    %7746 = vmatprep.subr.mxu0 0.0
    %7747 = vmatpush1.msra.mxu0 0.0
    %7748 = vmatprep.subr.mxu0 0.0
    %7749 = vmatpush1.msra.mxu0 0.0
    %7750 = vmatprep.subr.mxu0 0.0
    %7751 = vmatpush1.msra.mxu0 0.0
    %7752 = vmatprep.subr.mxu0 0.0
    %7753 = vmatpush1.msra.mxu0 0.0
    %7754 = vmatprep.subr.mxu0 0.0
    %7755 = vmatpush1.msra.mxu0 0.0
    %7756 = vmatprep.subr.mxu0 0.0
    %7757 = vmatpush1.msra.mxu0 0.0
    %7758 = vmatprep.subr.mxu0 0.0
    %7759 = vmatpush1.msra.mxu0 0.0
    %7760 = vmatprep.subr.mxu0 0.0
    %7761 = vmatpush1.msra.mxu0 0.0
    %7762 = vmatprep.subr.mxu0 0.0
    %7763 = vmatpush1.msra.mxu0 0.0
    %7764 = vmatprep.subr.mxu0 0.0
    %7765 = vmatpush1.msra.mxu0 0.0
    %7766 = vmatprep.subr.mxu0 0.0
    %7767 = vmatpush1.msra.mxu0 0.0
    %7768 = vmatprep.subr.mxu0 0.0
    %7769 = vmatpush1.msra.mxu0 0.0
    %7770 = vmatprep.subr.mxu0 0.0
    %7771 = vmatpush1.msra.mxu0 0.0
    %7772 = vmatprep.subr.mxu0 0.0
    %7773 = vmatpush1.msra.mxu0 0.0
    %7774 = vmatprep.subr.mxu0 0.0
    %7775 = vmatpush1.msra.mxu0 0.0
    %7776 = vmatprep.subr.mxu0 0.0
    %7777 = vmatpush1.msra.mxu0 0.0
    %7778 = vmatprep.subr.mxu0 0.0
    %7779 = vmatpush1.msra.mxu0 0.0
    %7780 = vmatprep.subr.mxu0 0.0
    %7781 = vmatpush1.msra.mxu0 0.0
    %7782 = vmatprep.subr.mxu0 0.0
    %7783 = vmatpush1.msra.mxu0 0.0
    %7784 = vmatprep.subr.mxu0 0.0
    %7785 = vmatpush1.msra.mxu0 0.0
    %7786 = vmatprep.subr.mxu0 0.0
    %7787 = vmatpush1.msra.mxu0 0.0
    %7788 = vmatprep.subr.mxu0 0.0
    %7789 = vmatpush1.msra.mxu0 0.0
    %7790 = vmatprep.subr.mxu0 0.0
    %7791 = vmatpush1.msra.mxu0 0.0
    %7792 = vmatprep.subr.mxu0 0.0
    %7793 = vmatpush1.msra.mxu0 0.0
    %7794 = vmatprep.subr.mxu0 0.0
    %7795 = vmatpush1.msra.mxu0 0.0
    %7796 = vmatprep.subr.mxu0 0.0
    %7797 = vmatpush1.msra.mxu0 0.0
    %7798 = vmatprep.subr.mxu0 0.0
    %7799 = vmatpush1.msra.mxu0 0.0
    %7800 = vmatprep.subr.mxu0 0.0
    %7801 = vmatpush1.msra.mxu0 0.0
    %7802 = vmatprep.mubr.f32.mxu0 0.0
    %7803 = vmatmul.mubr.f32.gmra.mrb[0].mxu0 %v7736
    %v7804 = vpop.f32.mrb[0].mxu0
    %v7805 = vadd.f32 0.0, %v7804
    %v7806 = vpop.f32.mrb[0].mxu0
    %7807 = vdwg.mxu0
    %v7809 = vsel %vm326, %v7588, 0
    %7811 = vmatprep.subr.mxu0 0.0
    %7812 = vmatpush1.msra.mxu0 %v7243
    %7813 = vmatprep.subr.mxu0 0.0
    %7814 = vmatpush1.msra.mxu0 0.0
    %7815 = vmatprep.subr.mxu0 0.0
    %7816 = vmatpush1.msra.mxu0 0.0
    %7817 = vmatprep.subr.mxu0 0.0
    %7818 = vmatpush1.msra.mxu0 0.0
    %7819 = vmatprep.subr.mxu0 0.0
    %7820 = vmatpush1.msra.mxu0 0.0
    %7821 = vmatprep.subr.mxu0 0.0
    %7822 = vmatpush1.msra.mxu0 0.0
    %7823 = vmatprep.subr.mxu0 0.0
    %7824 = vmatpush1.msra.mxu0 0.0
    %7825 = vmatprep.subr.mxu0 0.0
    %7826 = vmatpush1.msra.mxu0 0.0
    %7827 = vmatprep.subr.mxu0 0.0
    %7828 = vmatpush1.msra.mxu0 0.0
    %7829 = vmatprep.subr.mxu0 0.0
    %7830 = vmatpush1.msra.mxu0 0.0
    %7831 = vmatprep.subr.mxu0 0.0
    %7832 = vmatpush1.msra.mxu0 0.0
    %7833 = vmatprep.subr.mxu0 0.0
    %7834 = vmatpush1.msra.mxu0 0.0
    %7835 = vmatprep.subr.mxu0 0.0
    %7836 = vmatpush1.msra.mxu0 0.0
    %7837 = vmatprep.subr.mxu0 0.0
    %7838 = vmatpush1.msra.mxu0 0.0
    %7839 = vmatprep.subr.mxu0 0.0
    %7840 = vmatpush1.msra.mxu0 0.0
    %7841 = vmatprep.subr.mxu0 0.0
    %7842 = vmatpush1.msra.mxu0 0.0
    %7843 = vmatprep.subr.mxu0 0.0
    %7844 = vmatpush1.msra.mxu0 0.0
    %7845 = vmatprep.subr.mxu0 0.0
    %7846 = vmatpush1.msra.mxu0 0.0
    %7847 = vmatprep.subr.mxu0 0.0
    %7848 = vmatpush1.msra.mxu0 0.0
    %7849 = vmatprep.subr.mxu0 0.0
    %7850 = vmatpush1.msra.mxu0 0.0
    %7851 = vmatprep.subr.mxu0 0.0
    %7852 = vmatpush1.msra.mxu0 0.0
    %7853 = vmatprep.subr.mxu0 0.0
    %7854 = vmatpush1.msra.mxu0 0.0
    %7855 = vmatprep.subr.mxu0 0.0
    %7856 = vmatpush1.msra.mxu0 0.0
    %7857 = vmatprep.subr.mxu0 0.0
    %7858 = vmatpush1.msra.mxu0 0.0
    %7859 = vmatprep.subr.mxu0 0.0
    %7860 = vmatpush1.msra.mxu0 0.0
    %7861 = vmatprep.subr.mxu0 0.0
    %7862 = vmatpush1.msra.mxu0 0.0
    %7863 = vmatprep.subr.mxu0 0.0
    %7864 = vmatpush1.msra.mxu0 0.0
    %7865 = vmatprep.subr.mxu0 0.0
    %7866 = vmatpush1.msra.mxu0 0.0
    %7867 = vmatprep.subr.mxu0 0.0
    %7868 = vmatpush1.msra.mxu0 0.0
    %7869 = vmatprep.subr.mxu0 0.0
    %7870 = vmatpush1.msra.mxu0 0.0
    %7871 = vmatprep.subr.mxu0 0.0
    %7872 = vmatpush1.msra.mxu0 0.0
    %7873 = vmatprep.subr.mxu0 0.0
    %7874 = vmatpush1.msra.mxu0 0.0
    %7875 = vmatprep.mubr.f32.mxu0 0.0
    %7876 = vmatmul.mubr.f32.gmra.mrb[0].mxu0 %v7809
    %v7877 = vpop.f32.mrb[0].mxu0
    %v7878 = vadd.f32 0.0, %v7877
    %v7879 = vpop.f32.mrb[0].mxu0
    %7880 = vdwg.mxu0
    %7882 = vrot.lane.b32.xlu0 %v7732, 8
    %v7883 = vpop.permute.xlu0 %7882
    %7886 = vrot.lane.b32.xlu0 %v7805, 16
    %v7887 = vpop.permute.xlu0 %7886
    %7890 = vrot.lane.b32.xlu0 %v7878, 24
    %v7891 = vpop.permute.xlu0 %7890
    %v7893 = vsel %vm326, %v7659, %v7883
    %v7894 = vsel %vm978, %v7893, %v7887
    %v7895 = vsel %vm980, %v7894, %v7891
    %v7896 = vld [vmem:[%s3284] sm:$0xff]
    %v7897 = vld [vmem:[%s3284 + $0x8] sm:$0xff]
    %v7898 = vld [vmem:[%s3284 + $0x10] sm:$0xff]
    %v7899 = vld [vmem:[%s3284 + $0x18] sm:$0xff]
    %v7900 = vld [vmem:[%s2369 + $0x3] sm:$0x1]
    %v7901 = vlaneseq
    %v7902 = vshrl.u32 %v7901, 7
    %v7903 = vsub.s32 0, %v7902
    %v7904 = vrot.slane %v7900, %v7903
    %v7906 = vsel %vm67, %v7895, 0
    %7908 = vmatprep.subr.mxu0 0.0
    %7909 = vmatpush1.msra.mxu0 %v7896
    %7910 = vmatprep.subr.mxu0 0.0
    %7911 = vmatpush1.msra.mxu0 %v7897
    %7912 = vmatprep.subr.mxu0 0.0
    %7913 = vmatpush1.msra.mxu0 %v7898
    %7914 = vmatprep.subr.mxu0 0.0
    %7915 = vmatpush1.msra.mxu0 %v7899
    %7916 = vmatprep.subr.mxu0 0.0
    %7917 = vmatpush1.msra.mxu0 0.0
    %7918 = vmatprep.subr.mxu0 0.0
    %7919 = vmatpush1.msra.mxu0 0.0
    %7920 = vmatprep.subr.mxu0 0.0
    %7921 = vmatpush1.msra.mxu0 0.0
    %7922 = vmatprep.subr.mxu0 0.0
    %7923 = vmatpush1.msra.mxu0 0.0
    %7924 = vmatprep.subr.mxu0 0.0
    %7925 = vmatpush1.msra.mxu0 0.0
    %7926 = vmatprep.subr.mxu0 0.0
    %7927 = vmatpush1.msra.mxu0 0.0
    %7928 = vmatprep.subr.mxu0 0.0
    %7929 = vmatpush1.msra.mxu0 0.0
    %7930 = vmatprep.subr.mxu0 0.0
    %7931 = vmatpush1.msra.mxu0 0.0
    %7932 = vmatprep.subr.mxu0 0.0
    %7933 = vmatpush1.msra.mxu0 0.0
    %7934 = vmatprep.subr.mxu0 0.0
    %7935 = vmatpush1.msra.mxu0 0.0
    %7936 = vmatprep.subr.mxu0 0.0
    %7937 = vmatpush1.msra.mxu0 0.0
    %7938 = vmatprep.subr.mxu0 0.0
    %7939 = vmatpush1.msra.mxu0 0.0
    %7940 = vmatprep.subr.mxu0 0.0
    %7941 = vmatpush1.msra.mxu0 0.0
    %7942 = vmatprep.subr.mxu0 0.0
    %7943 = vmatpush1.msra.mxu0 0.0
    %7944 = vmatprep.subr.mxu0 0.0
    %7945 = vmatpush1.msra.mxu0 0.0
    %7946 = vmatprep.subr.mxu0 0.0
    %7947 = vmatpush1.msra.mxu0 0.0
    %7948 = vmatprep.subr.mxu0 0.0
    %7949 = vmatpush1.msra.mxu0 0.0
    %7950 = vmatprep.subr.mxu0 0.0
    %7951 = vmatpush1.msra.mxu0 0.0
    %7952 = vmatprep.subr.mxu0 0.0
    %7953 = vmatpush1.msra.mxu0 0.0
    %7954 = vmatprep.subr.mxu0 0.0
    %7955 = vmatpush1.msra.mxu0 0.0
    %7956 = vmatprep.subr.mxu0 0.0
    %7957 = vmatpush1.msra.mxu0 0.0
    %7958 = vmatprep.subr.mxu0 0.0
    %7959 = vmatpush1.msra.mxu0 0.0
    %7960 = vmatprep.subr.mxu0 0.0
    %7961 = vmatpush1.msra.mxu0 0.0
    %7962 = vmatprep.subr.mxu0 0.0
    %7963 = vmatpush1.msra.mxu0 0.0
    %7964 = vmatprep.subr.mxu0 0.0
    %7965 = vmatpush1.msra.mxu0 0.0
    %7966 = vmatprep.subr.mxu0 0.0
    %7967 = vmatpush1.msra.mxu0 0.0
    %7968 = vmatprep.subr.mxu0 0.0
    %7969 = vmatpush1.msra.mxu0 0.0
    %7970 = vmatprep.subr.mxu0 0.0
    %7971 = vmatpush1.msra.mxu0 0.0
    %7972 = vmatprep.mubr.f32.mxu0 0.0
    %7973 = vmatmul.mubr.f32.gmra.mrb[0].mxu0 %v7906
    %v7974 = vpop.f32.mrb[0].mxu0
    %v7975 = vadd.f32 %v7904, %v7974
    %v7976 = vpop.f32.mrb[0].mxu0
    %7977 = vdwg.mxu0
    %v7978 = vadd.f32 %v6979, %v7975
    %v7979 = vld [vmem:[%s4 + $0x3] sm:$0x1]
    %v7980 = vld [vmem:[%s5 + $0x3] sm:$0x1]
    %v7981 = vsel %vm67, %v7978, 0.0
    %7982 = vadd.xlane.f32.xlu0 %v7981
    %v7983 = vpop.xlane.xlu0 %7982
    %v7984 = vmul.f32 %v7983, %v1071
    %v7985 = vsub.f32 %v7978, %v7984
    %v7986 = vmul.f32 %v7985, %v7985
    %v7987 = vsel %vm67, %v7986, 0.0
    %7988 = vadd.xlane.f32.xlu0 %v7987
    %v7989 = vpop.xlane.xlu0 %7988
    %v7990 = vmul.f32 %v7989, %v1071
    %v7991 = vadd.f32 %v7990, 1e-05
    %v7992 = vrsqrt.pop %v7991
    %v7993 = vmul.f32 %v7985, %v7992
    %v7994 = vlaneseq
    %v7995 = vshrl.u32 %v7994, 7
    %v7996 = vsub.s32 0, %v7995
    %v7997 = vrot.slane %v7979, %v7996
    %v7998 = vmul.f32 %v7993, %v7997
    %v7999 = vlaneseq
    %v8000 = vshrl.u32 %v7999, 7
    %v8001 = vsub.s32 0, %v8000
    %v8002 = vrot.slane %v7980, %v8001
    %v8003 = vadd.f32 %v7998, %v8002
    %v8004 = vld [vmem:[%s3393] sm:$0xff]
    %v8005 = vld [vmem:[%s3393 + $0x8] sm:$0xff]
    %v8006 = vld [vmem:[%s3393 + $0x10] sm:$0xff]
    %v8007 = vld [vmem:[%s3393 + $0x18] sm:$0xff]
    %v8008 = vld [vmem:[%s2369 + $0x4] sm:$0x1]
    %v8009 = vlaneseq
    %v8010 = vshrl.u32 %v8009, 7
    %v8011 = vsub.s32 0, %v8010
    %v8012 = vrot.slane %v8008, %v8011
    %v8014 = vsel %vm67, %v8003, 0
    %8016 = vmatprep.subr.mxu0 0.0
    %8017 = vmatpush1.msra.mxu0 %v8004
    %8018 = vmatprep.subr.mxu0 0.0
    %8019 = vmatpush1.msra.mxu0 %v8005
    %8020 = vmatprep.subr.mxu0 0.0
    %8021 = vmatpush1.msra.mxu0 %v8006
    %8022 = vmatprep.subr.mxu0 0.0
    %8023 = vmatpush1.msra.mxu0 %v8007
    %8024 = vmatprep.subr.mxu0 0.0
    %8025 = vmatpush1.msra.mxu0 0.0
    %8026 = vmatprep.subr.mxu0 0.0
    %8027 = vmatpush1.msra.mxu0 0.0
    %8028 = vmatprep.subr.mxu0 0.0
    %8029 = vmatpush1.msra.mxu0 0.0
    %8030 = vmatprep.subr.mxu0 0.0
    %8031 = vmatpush1.msra.mxu0 0.0
    %8032 = vmatprep.subr.mxu0 0.0
    %8033 = vmatpush1.msra.mxu0 0.0
    %8034 = vmatprep.subr.mxu0 0.0
    %8035 = vmatpush1.msra.mxu0 0.0
    %8036 = vmatprep.subr.mxu0 0.0
    %8037 = vmatpush1.msra.mxu0 0.0
    %8038 = vmatprep.subr.mxu0 0.0
    %8039 = vmatpush1.msra.mxu0 0.0
    %8040 = vmatprep.subr.mxu0 0.0
    %8041 = vmatpush1.msra.mxu0 0.0
    %8042 = vmatprep.subr.mxu0 0.0
    %8043 = vmatpush1.msra.mxu0 0.0
    %8044 = vmatprep.subr.mxu0 0.0
    %8045 = vmatpush1.msra.mxu0 0.0
    %8046 = vmatprep.subr.mxu0 0.0
    %8047 = vmatpush1.msra.mxu0 0.0
    %8048 = vmatprep.subr.mxu0 0.0
    %8049 = vmatpush1.msra.mxu0 0.0
    %8050 = vmatprep.subr.mxu0 0.0
    %8051 = vmatpush1.msra.mxu0 0.0
    %8052 = vmatprep.subr.mxu0 0.0
    %8053 = vmatpush1.msra.mxu0 0.0
    %8054 = vmatprep.subr.mxu0 0.0
    %8055 = vmatpush1.msra.mxu0 0.0
    %8056 = vmatprep.subr.mxu0 0.0
    %8057 = vmatpush1.msra.mxu0 0.0
    %8058 = vmatprep.subr.mxu0 0.0
    %8059 = vmatpush1.msra.mxu0 0.0
    %8060 = vmatprep.subr.mxu0 0.0
    %8061 = vmatpush1.msra.mxu0 0.0
    %8062 = vmatprep.subr.mxu0 0.0
    %8063 = vmatpush1.msra.mxu0 0.0
    %8064 = vmatprep.subr.mxu0 0.0
    %8065 = vmatpush1.msra.mxu0 0.0
    %8066 = vmatprep.subr.mxu0 0.0
    %8067 = vmatpush1.msra.mxu0 0.0
    %8068 = vmatprep.subr.mxu0 0.0
    %8069 = vmatpush1.msra.mxu0 0.0
    %8070 = vmatprep.subr.mxu0 0.0
    %8071 = vmatpush1.msra.mxu0 0.0
    %8072 = vmatprep.subr.mxu0 0.0
    %8073 = vmatpush1.msra.mxu0 0.0
    %8074 = vmatprep.subr.mxu0 0.0
    %8075 = vmatpush1.msra.mxu0 0.0
    %8076 = vmatprep.subr.mxu0 0.0
    %8077 = vmatpush1.msra.mxu0 0.0
    %8078 = vmatprep.subr.mxu0 0.0
    %8079 = vmatpush1.msra.mxu0 0.0
    %8080 = vmatprep.mubr.f32.mxu0 0.0
    %8081 = vmatmul.mubr.f32.gmra.mrb[0].mxu0 %v8014
    %v8082 = vpop.f32.mrb[0].mxu0
    %v8083 = vadd.f32 %v8012, %v8082
    %v8084 = vpop.f32.mrb[0].mxu0
    %8085 = vdwg.mxu0
    %v8086 = vmul.f32 %v8083, 0.35355338
    %v8087 = vld [vmem:[%s3477] sm:$0xff]
    %v8088 = vld [vmem:[%s3477 + $0x8] sm:$0xff]
    %v8089 = vld [vmem:[%s3477 + $0x10] sm:$0xff]
    %v8090 = vld [vmem:[%s3477 + $0x18] sm:$0xff]
    %v8091 = vld [vmem:[%s2369 + $0x5] sm:$0x1]
    %v8092 = vlaneseq
    %v8093 = vshrl.u32 %v8092, 7
    %v8094 = vsub.s32 0, %v8093
    %v8095 = vrot.slane %v8091, %v8094
    %8096 = vmatprep.subr.mxu0 0.0
    %8097 = vmatpush1.msra.mxu0 %v8087
    %8098 = vmatprep.subr.mxu0 0.0
    %8099 = vmatpush1.msra.mxu0 %v8088
    %8100 = vmatprep.subr.mxu0 0.0
    %8101 = vmatpush1.msra.mxu0 %v8089
    %8102 = vmatprep.subr.mxu0 0.0
    %8103 = vmatpush1.msra.mxu0 %v8090
    %8104 = vmatprep.subr.mxu0 0.0
    %8105 = vmatpush1.msra.mxu0 0.0
    %8106 = vmatprep.subr.mxu0 0.0
    %8107 = vmatpush1.msra.mxu0 0.0
    %8108 = vmatprep.subr.mxu0 0.0
    %8109 = vmatpush1.msra.mxu0 0.0
    %8110 = vmatprep.subr.mxu0 0.0
    %8111 = vmatpush1.msra.mxu0 0.0
    %8112 = vmatprep.subr.mxu0 0.0
    %8113 = vmatpush1.msra.mxu0 0.0
    %8114 = vmatprep.subr.mxu0 0.0
    %8115 = vmatpush1.msra.mxu0 0.0
    %8116 = vmatprep.subr.mxu0 0.0
    %8117 = vmatpush1.msra.mxu0 0.0
    %8118 = vmatprep.subr.mxu0 0.0
    %8119 = vmatpush1.msra.mxu0 0.0
    %8120 = vmatprep.subr.mxu0 0.0
    %8121 = vmatpush1.msra.mxu0 0.0
    %8122 = vmatprep.subr.mxu0 0.0
    %8123 = vmatpush1.msra.mxu0 0.0
    %8124 = vmatprep.subr.mxu0 0.0
    %8125 = vmatpush1.msra.mxu0 0.0
    %8126 = vmatprep.subr.mxu0 0.0
    %8127 = vmatpush1.msra.mxu0 0.0
    %8128 = vmatprep.subr.mxu0 0.0
    %8129 = vmatpush1.msra.mxu0 0.0
    %8130 = vmatprep.subr.mxu0 0.0
    %8131 = vmatpush1.msra.mxu0 0.0
    %8132 = vmatprep.subr.mxu0 0.0
    %8133 = vmatpush1.msra.mxu0 0.0
    %8134 = vmatprep.subr.mxu0 0.0
    %8135 = vmatpush1.msra.mxu0 0.0
    %8136 = vmatprep.subr.mxu0 0.0
    %8137 = vmatpush1.msra.mxu0 0.0
    %8138 = vmatprep.subr.mxu0 0.0
    %8139 = vmatpush1.msra.mxu0 0.0
    %8140 = vmatprep.subr.mxu0 0.0
    %8141 = vmatpush1.msra.mxu0 0.0
    %8142 = vmatprep.subr.mxu0 0.0
    %8143 = vmatpush1.msra.mxu0 0.0
    %8144 = vmatprep.subr.mxu0 0.0
    %8145 = vmatpush1.msra.mxu0 0.0
    %8146 = vmatprep.subr.mxu0 0.0
    %8147 = vmatpush1.msra.mxu0 0.0
    %8148 = vmatprep.subr.mxu0 0.0
    %8149 = vmatpush1.msra.mxu0 0.0
    %8150 = vmatprep.subr.mxu0 0.0
    %8151 = vmatpush1.msra.mxu0 0.0
    %8152 = vmatprep.subr.mxu0 0.0
    %8153 = vmatpush1.msra.mxu0 0.0
    %8154 = vmatprep.subr.mxu0 0.0
    %8155 = vmatpush1.msra.mxu0 0.0
    %8156 = vmatprep.subr.mxu0 0.0
    %8157 = vmatpush1.msra.mxu0 0.0
    %8158 = vmatprep.subr.mxu0 0.0
    %8159 = vmatpush1.msra.mxu0 0.0
    %8160 = vmatprep.mubr.f32.mxu0 0.0
    %8161 = vmatmul.mubr.f32.gmra.mrb[0].mxu0 %v5808
    %v8162 = vpop.f32.mrb[0].mxu0
    %v8163 = vadd.f32 %v8095, %v8162
    %v8164 = vpop.f32.mrb[0].mxu0
    %8165 = vmatprep.mubr.f32.mxu0 0.0
    %8166 = vmatmul.mubr.f32.gmra.mrb[0].mxu0 %v5811
    %v8167 = vpop.f32.mrb[0].mxu0
    %v8168 = vadd.f32 %v8095, %v8167
    %v8169 = vpop.f32.mrb[0].mxu0
    %8170 = vdwg.mxu0
    %v8171 = vld [vmem:[%s3562] sm:$0xff]
    %v8172 = vld [vmem:[%s3562 + $0x8] sm:$0xff]
    %v8173 = vld [vmem:[%s3562 + $0x10] sm:$0xff]
    %v8174 = vld [vmem:[%s3562 + $0x18] sm:$0xff]
    %v8175 = vld [vmem:[%s2369 + $0x6] sm:$0x1]
    %v8176 = vlaneseq
    %v8177 = vshrl.u32 %v8176, 7
    %v8178 = vsub.s32 0, %v8177
    %v8179 = vrot.slane %v8175, %v8178
    %8180 = vmatprep.subr.mxu0 0.0
    %8181 = vmatpush1.msra.mxu0 %v8171
    %8182 = vmatprep.subr.mxu0 0.0
    %8183 = vmatpush1.msra.mxu0 %v8172
    %8184 = vmatprep.subr.mxu0 0.0
    %8185 = vmatpush1.msra.mxu0 %v8173
    %8186 = vmatprep.subr.mxu0 0.0
    %8187 = vmatpush1.msra.mxu0 %v8174
    %8188 = vmatprep.subr.mxu0 0.0
    %8189 = vmatpush1.msra.mxu0 0.0
    %8190 = vmatprep.subr.mxu0 0.0
    %8191 = vmatpush1.msra.mxu0 0.0
    %8192 = vmatprep.subr.mxu0 0.0
    %8193 = vmatpush1.msra.mxu0 0.0
    %8194 = vmatprep.subr.mxu0 0.0
    %8195 = vmatpush1.msra.mxu0 0.0
    %8196 = vmatprep.subr.mxu0 0.0
    %8197 = vmatpush1.msra.mxu0 0.0
    %8198 = vmatprep.subr.mxu0 0.0
    %8199 = vmatpush1.msra.mxu0 0.0
    %8200 = vmatprep.subr.mxu0 0.0
    %8201 = vmatpush1.msra.mxu0 0.0
    %8202 = vmatprep.subr.mxu0 0.0
    %8203 = vmatpush1.msra.mxu0 0.0
    %8204 = vmatprep.subr.mxu0 0.0
    %8205 = vmatpush1.msra.mxu0 0.0
    %8206 = vmatprep.subr.mxu0 0.0
    %8207 = vmatpush1.msra.mxu0 0.0
    %8208 = vmatprep.subr.mxu0 0.0
    %8209 = vmatpush1.msra.mxu0 0.0
    %8210 = vmatprep.subr.mxu0 0.0
    %8211 = vmatpush1.msra.mxu0 0.0
    %8212 = vmatprep.subr.mxu0 0.0
    %8213 = vmatpush1.msra.mxu0 0.0
    %8214 = vmatprep.subr.mxu0 0.0
    %8215 = vmatpush1.msra.mxu0 0.0
    %8216 = vmatprep.subr.mxu0 0.0
    %8217 = vmatpush1.msra.mxu0 0.0
    %8218 = vmatprep.subr.mxu0 0.0
    %8219 = vmatpush1.msra.mxu0 0.0
    %8220 = vmatprep.subr.mxu0 0.0
    %8221 = vmatpush1.msra.mxu0 0.0
    %8222 = vmatprep.subr.mxu0 0.0
    %8223 = vmatpush1.msra.mxu0 0.0
    %8224 = vmatprep.subr.mxu0 0.0
    %8225 = vmatpush1.msra.mxu0 0.0
    %8226 = vmatprep.subr.mxu0 0.0
    %8227 = vmatpush1.msra.mxu0 0.0
    %8228 = vmatprep.subr.mxu0 0.0
    %8229 = vmatpush1.msra.mxu0 0.0
    %8230 = vmatprep.subr.mxu0 0.0
    %8231 = vmatpush1.msra.mxu0 0.0
    %8232 = vmatprep.subr.mxu0 0.0
    %8233 = vmatpush1.msra.mxu0 0.0
    %8234 = vmatprep.subr.mxu0 0.0
    %8235 = vmatpush1.msra.mxu0 0.0
    %8236 = vmatprep.subr.mxu0 0.0
    %8237 = vmatpush1.msra.mxu0 0.0
    %8238 = vmatprep.subr.mxu0 0.0
    %8239 = vmatpush1.msra.mxu0 0.0
    %8240 = vmatprep.subr.mxu0 0.0
    %8241 = vmatpush1.msra.mxu0 0.0
    %8242 = vmatprep.subr.mxu0 0.0
    %8243 = vmatpush1.msra.mxu0 0.0
    %8244 = vmatprep.mubr.f32.mxu0 0.0
    %8245 = vmatmul.mubr.f32.gmra.mrb[0].mxu0 %v5808
    %v8246 = vpop.f32.mrb[0].mxu0
    %v8247 = vadd.f32 %v8179, %v8246
    %v8248 = vpop.f32.mrb[0].mxu0
    %8249 = vmatprep.mubr.f32.mxu0 0.0
    %8250 = vmatmul.mubr.f32.gmra.mrb[0].mxu0 %v5811
    %v8251 = vpop.f32.mrb[0].mxu0
    %v8252 = vadd.f32 %v8179, %v8251
    %v8253 = vpop.f32.mrb[0].mxu0
    %8254 = vdwg.mxu0
    %8256 = vrot.lane.b32.xlu0 %v8086, 120
    %v8257 = vpop.permute.xlu0 %8256
    %8258 = vrot.lane.b32.xlu0 %v8086, 112
    %v8259 = vpop.permute.xlu0 %8258
    %8260 = vrot.lane.b32.xlu0 %v8086, 104
    %v8261 = vpop.permute.xlu0 %8260
    %8264 = vrot.lane.b32.xlu0 %v8163, 120
    %v8265 = vpop.permute.xlu0 %8264
    %8266 = vrot.lane.b32.xlu0 %v8168, 120
    %v8267 = vpop.permute.xlu0 %8266
    %8268 = vrot.lane.b32.xlu0 %v8163, 112
    %v8269 = vpop.permute.xlu0 %8268
    %8270 = vrot.lane.b32.xlu0 %v8168, 112
    %v8271 = vpop.permute.xlu0 %8270
    %8272 = vrot.lane.b32.xlu0 %v8163, 104
    %v8273 = vpop.permute.xlu0 %8272
    %8274 = vrot.lane.b32.xlu0 %v8168, 104
    %v8275 = vpop.permute.xlu0 %8274
    %8278 = vrot.lane.b32.xlu0 %v8247, 120
    %v8279 = vpop.permute.xlu0 %8278
    %8280 = vrot.lane.b32.xlu0 %v8252, 120
    %v8281 = vpop.permute.xlu0 %8280
    %8283 = vrot.lane.b32.xlu0 %v8247, 112
    %v8284 = vpop.permute.xlu0 %8283
    %8285 = vrot.lane.b32.xlu0 %v8252, 112
    %v8286 = vpop.permute.xlu0 %8285
    %8288 = vrot.lane.b32.xlu0 %v8247, 104
    %v8289 = vpop.permute.xlu0 %8288
    %8290 = vrot.lane.b32.xlu0 %v8252, 104
    %v8291 = vpop.permute.xlu0 %8290
    %v8293 = vsel %vm326, %v8086, 0
    %v8295 = vsel %vm326, %v8163, 0
    %v8297 = vsel %vm326, %v8168, 0
    %8299 = vmatprep.subr.mxu0 0.0
    %8300 = vmatpush1.xpose.msra.mxu0 %v8295
    %8301 = vmatprep.subr.mxu0 0.0
    %8302 = vmatpush1.xpose.msra.mxu0 %v8297
    %8303 = vmatprep.subr.mxu0 0.0
    %8304 = vmatpush1.xpose.msra.mxu0 0.0
    %8305 = vmatprep.subr.mxu0 0.0
    %8306 = vmatpush1.xpose.msra.mxu0 0.0
    %8307 = vmatprep.subr.mxu0 0.0
    %8308 = vmatpush1.xpose.msra.mxu0 0.0
    %8309 = vmatprep.subr.mxu0 0.0
    %8310 = vmatpush1.xpose.msra.mxu0 0.0
    %8311 = vmatprep.subr.mxu0 0.0
    %8312 = vmatpush1.xpose.msra.mxu0 0.0
    %8313 = vmatprep.subr.mxu0 0.0
    %8314 = vmatpush1.xpose.msra.mxu0 0.0
    %8315 = vmatprep.subr.mxu0 0.0
    %8316 = vmatpush1.xpose.msra.mxu0 0.0
    %8317 = vmatprep.subr.mxu0 0.0
    %8318 = vmatpush1.xpose.msra.mxu0 0.0
    %8319 = vmatprep.subr.mxu0 0.0
    %8320 = vmatpush1.xpose.msra.mxu0 0.0
    %8321 = vmatprep.subr.mxu0 0.0
    %8322 = vmatpush1.xpose.msra.mxu0 0.0
    %8323 = vmatprep.subr.mxu0 0.0
    %8324 = vmatpush1.xpose.msra.mxu0 0.0
    %8325 = vmatprep.subr.mxu0 0.0
    %8326 = vmatpush1.xpose.msra.mxu0 0.0
    %8327 = vmatprep.subr.mxu0 0.0
    %8328 = vmatpush1.xpose.msra.mxu0 0.0
    %8329 = vmatprep.subr.mxu0 0.0
    %8330 = vmatpush1.xpose.msra.mxu0 0.0
    %8331 = vmatprep.subr.mxu0 0.0
    %8332 = vmatpush1.xpose.msra.mxu0 0.0
    %8333 = vmatprep.subr.mxu0 0.0
    %8334 = vmatpush1.xpose.msra.mxu0 0.0
    %8335 = vmatprep.subr.mxu0 0.0
    %8336 = vmatpush1.xpose.msra.mxu0 0.0
    %8337 = vmatprep.subr.mxu0 0.0
    %8338 = vmatpush1.xpose.msra.mxu0 0.0
    %8339 = vmatprep.subr.mxu0 0.0
    %8340 = vmatpush1.xpose.msra.mxu0 0.0
    %8341 = vmatprep.subr.mxu0 0.0
    %8342 = vmatpush1.xpose.msra.mxu0 0.0
    %8343 = vmatprep.subr.mxu0 0.0
    %8344 = vmatpush1.xpose.msra.mxu0 0.0
    %8345 = vmatprep.subr.mxu0 0.0
    %8346 = vmatpush1.xpose.msra.mxu0 0.0
    %8347 = vmatprep.subr.mxu0 0.0
    %8348 = vmatpush1.xpose.msra.mxu0 0.0
    %8349 = vmatprep.subr.mxu0 0.0
    %8350 = vmatpush1.xpose.msra.mxu0 0.0
    %8351 = vmatprep.subr.mxu0 0.0
    %8352 = vmatpush1.xpose.msra.mxu0 0.0
    %8353 = vmatprep.subr.mxu0 0.0
    %8354 = vmatpush1.xpose.msra.mxu0 0.0
    %8355 = vmatprep.subr.mxu0 0.0
    %8356 = vmatpush1.xpose.msra.mxu0 0.0
    %8357 = vmatprep.subr.mxu0 0.0
    %8358 = vmatpush1.xpose.msra.mxu0 0.0
    %8359 = vmatprep.subr.mxu0 0.0
    %8360 = vmatpush1.xpose.msra.mxu0 0.0
    %8361 = vmatprep.subr.mxu0 0.0
    %8362 = vmatpush1.xpose.msra.mxu0 0.0
    %8363 = vmatprep.mubr.f32.mxu0 0.0
    %8364 = vmatmul.mubr.f32.gmra.mrb[0].mxu0 %v8293
    %v8365 = vpop.f32.mrb[0].mxu0
    %v8366 = vadd.f32 0.0, %v8365
    %v8367 = vpop.f32.mrb[0].mxu0
    %8368 = vdwg.mxu0
    %v8369 = vsel %vm326, %v8257, 0
    %v8371 = vsel %vm326, %v8265, 0
    %v8373 = vsel %vm326, %v8267, 0
    %8375 = vmatprep.subr.mxu0 0.0
    %8376 = vmatpush1.xpose.msra.mxu0 %v8371
    %8377 = vmatprep.subr.mxu0 0.0
    %8378 = vmatpush1.xpose.msra.mxu0 %v8373
    %8379 = vmatprep.subr.mxu0 0.0
    %8380 = vmatpush1.xpose.msra.mxu0 0.0
    %8381 = vmatprep.subr.mxu0 0.0
    %8382 = vmatpush1.xpose.msra.mxu0 0.0
    %8383 = vmatprep.subr.mxu0 0.0
    %8384 = vmatpush1.xpose.msra.mxu0 0.0
    %8385 = vmatprep.subr.mxu0 0.0
    %8386 = vmatpush1.xpose.msra.mxu0 0.0
    %8387 = vmatprep.subr.mxu0 0.0
    %8388 = vmatpush1.xpose.msra.mxu0 0.0
    %8389 = vmatprep.subr.mxu0 0.0
    %8390 = vmatpush1.xpose.msra.mxu0 0.0
    %8391 = vmatprep.subr.mxu0 0.0
    %8392 = vmatpush1.xpose.msra.mxu0 0.0
    %8393 = vmatprep.subr.mxu0 0.0
    %8394 = vmatpush1.xpose.msra.mxu0 0.0
    %8395 = vmatprep.subr.mxu0 0.0
    %8396 = vmatpush1.xpose.msra.mxu0 0.0
    %8397 = vmatprep.subr.mxu0 0.0
    %8398 = vmatpush1.xpose.msra.mxu0 0.0
    %8399 = vmatprep.subr.mxu0 0.0
    %8400 = vmatpush1.xpose.msra.mxu0 0.0
    %8401 = vmatprep.subr.mxu0 0.0
    %8402 = vmatpush1.xpose.msra.mxu0 0.0
    %8403 = vmatprep.subr.mxu0 0.0
    %8404 = vmatpush1.xpose.msra.mxu0 0.0
    %8405 = vmatprep.subr.mxu0 0.0
    %8406 = vmatpush1.xpose.msra.mxu0 0.0
    %8407 = vmatprep.subr.mxu0 0.0
    %8408 = vmatpush1.xpose.msra.mxu0 0.0
    %8409 = vmatprep.subr.mxu0 0.0
    %8410 = vmatpush1.xpose.msra.mxu0 0.0
    %8411 = vmatprep.subr.mxu0 0.0
    %8412 = vmatpush1.xpose.msra.mxu0 0.0
    %8413 = vmatprep.subr.mxu0 0.0
    %8414 = vmatpush1.xpose.msra.mxu0 0.0
    %8415 = vmatprep.subr.mxu0 0.0
    %8416 = vmatpush1.xpose.msra.mxu0 0.0
    %8417 = vmatprep.subr.mxu0 0.0
    %8418 = vmatpush1.xpose.msra.mxu0 0.0
    %8419 = vmatprep.subr.mxu0 0.0
    %8420 = vmatpush1.xpose.msra.mxu0 0.0
    %8421 = vmatprep.subr.mxu0 0.0
    %8422 = vmatpush1.xpose.msra.mxu0 0.0
    %8423 = vmatprep.subr.mxu0 0.0
    %8424 = vmatpush1.xpose.msra.mxu0 0.0
    %8425 = vmatprep.subr.mxu0 0.0
    %8426 = vmatpush1.xpose.msra.mxu0 0.0
    %8427 = vmatprep.subr.mxu0 0.0
    %8428 = vmatpush1.xpose.msra.mxu0 0.0
    %8429 = vmatprep.subr.mxu0 0.0
    %8430 = vmatpush1.xpose.msra.mxu0 0.0
    %8431 = vmatprep.subr.mxu0 0.0
    %8432 = vmatpush1.xpose.msra.mxu0 0.0
    %8433 = vmatprep.subr.mxu0 0.0
    %8434 = vmatpush1.xpose.msra.mxu0 0.0
    %8435 = vmatprep.subr.mxu0 0.0
    %8436 = vmatpush1.xpose.msra.mxu0 0.0
    %8437 = vmatprep.subr.mxu0 0.0
    %8438 = vmatpush1.xpose.msra.mxu0 0.0
    %8439 = vmatprep.mubr.f32.mxu0 0.0
    %8440 = vmatmul.mubr.f32.gmra.mrb[0].mxu0 %v8369
    %v8441 = vpop.f32.mrb[0].mxu0
    %v8442 = vadd.f32 0.0, %v8441
    %v8443 = vpop.f32.mrb[0].mxu0
    %8444 = vdwg.mxu0
    %v8445 = vsel %vm326, %v8259, 0
    %v8447 = vsel %vm326, %v8269, 0
    %v8449 = vsel %vm326, %v8271, 0
    %8451 = vmatprep.subr.mxu0 0.0
    %8452 = vmatpush1.xpose.msra.mxu0 %v8447
    %8453 = vmatprep.subr.mxu0 0.0
    %8454 = vmatpush1.xpose.msra.mxu0 %v8449
    %8455 = vmatprep.subr.mxu0 0.0
    %8456 = vmatpush1.xpose.msra.mxu0 0.0
    %8457 = vmatprep.subr.mxu0 0.0
    %8458 = vmatpush1.xpose.msra.mxu0 0.0
    %8459 = vmatprep.subr.mxu0 0.0
    %8460 = vmatpush1.xpose.msra.mxu0 0.0
    %8461 = vmatprep.subr.mxu0 0.0
    %8462 = vmatpush1.xpose.msra.mxu0 0.0
    %8463 = vmatprep.subr.mxu0 0.0
    %8464 = vmatpush1.xpose.msra.mxu0 0.0
    %8465 = vmatprep.subr.mxu0 0.0
    %8466 = vmatpush1.xpose.msra.mxu0 0.0
    %8467 = vmatprep.subr.mxu0 0.0
    %8468 = vmatpush1.xpose.msra.mxu0 0.0
    %8469 = vmatprep.subr.mxu0 0.0
    %8470 = vmatpush1.xpose.msra.mxu0 0.0
    %8471 = vmatprep.subr.mxu0 0.0
    %8472 = vmatpush1.xpose.msra.mxu0 0.0
    %8473 = vmatprep.subr.mxu0 0.0
    %8474 = vmatpush1.xpose.msra.mxu0 0.0
    %8475 = vmatprep.subr.mxu0 0.0
    %8476 = vmatpush1.xpose.msra.mxu0 0.0
    %8477 = vmatprep.subr.mxu0 0.0
    %8478 = vmatpush1.xpose.msra.mxu0 0.0
    %8479 = vmatprep.subr.mxu0 0.0
    %8480 = vmatpush1.xpose.msra.mxu0 0.0
    %8481 = vmatprep.subr.mxu0 0.0
    %8482 = vmatpush1.xpose.msra.mxu0 0.0
    %8483 = vmatprep.subr.mxu0 0.0
    %8484 = vmatpush1.xpose.msra.mxu0 0.0
    %8485 = vmatprep.subr.mxu0 0.0
    %8486 = vmatpush1.xpose.msra.mxu0 0.0
    %8487 = vmatprep.subr.mxu0 0.0
    %8488 = vmatpush1.xpose.msra.mxu0 0.0
    %8489 = vmatprep.subr.mxu0 0.0
    %8490 = vmatpush1.xpose.msra.mxu0 0.0
    %8491 = vmatprep.subr.mxu0 0.0
    %8492 = vmatpush1.xpose.msra.mxu0 0.0
    %8493 = vmatprep.subr.mxu0 0.0
    %8494 = vmatpush1.xpose.msra.mxu0 0.0
    %8495 = vmatprep.subr.mxu0 0.0
    %8496 = vmatpush1.xpose.msra.mxu0 0.0
    %8497 = vmatprep.subr.mxu0 0.0
    %8498 = vmatpush1.xpose.msra.mxu0 0.0
    %8499 = vmatprep.subr.mxu0 0.0
    %8500 = vmatpush1.xpose.msra.mxu0 0.0
    %8501 = vmatprep.subr.mxu0 0.0
    %8502 = vmatpush1.xpose.msra.mxu0 0.0
    %8503 = vmatprep.subr.mxu0 0.0
    %8504 = vmatpush1.xpose.msra.mxu0 0.0
    %8505 = vmatprep.subr.mxu0 0.0
    %8506 = vmatpush1.xpose.msra.mxu0 0.0
    %8507 = vmatprep.subr.mxu0 0.0
    %8508 = vmatpush1.xpose.msra.mxu0 0.0
    %8509 = vmatprep.subr.mxu0 0.0
    %8510 = vmatpush1.xpose.msra.mxu0 0.0
    %8511 = vmatprep.subr.mxu0 0.0
    %8512 = vmatpush1.xpose.msra.mxu0 0.0
    %8513 = vmatprep.subr.mxu0 0.0
    %8514 = vmatpush1.xpose.msra.mxu0 0.0
    %8515 = vmatprep.mubr.f32.mxu0 0.0
    %8516 = vmatmul.mubr.f32.gmra.mrb[0].mxu0 %v8445
    %v8517 = vpop.f32.mrb[0].mxu0
    %v8518 = vadd.f32 0.0, %v8517
    %v8519 = vpop.f32.mrb[0].mxu0
    %8520 = vdwg.mxu0
    %v8521 = vsel %vm326, %v8261, 0
    %v8523 = vsel %vm326, %v8273, 0
    %v8525 = vsel %vm326, %v8275, 0
    %8527 = vmatprep.subr.mxu0 0.0
    %8528 = vmatpush1.xpose.msra.mxu0 %v8523
    %8529 = vmatprep.subr.mxu0 0.0
    %8530 = vmatpush1.xpose.msra.mxu0 %v8525
    %8531 = vmatprep.subr.mxu0 0.0
    %8532 = vmatpush1.xpose.msra.mxu0 0.0
    %8533 = vmatprep.subr.mxu0 0.0
    %8534 = vmatpush1.xpose.msra.mxu0 0.0
    %8535 = vmatprep.subr.mxu0 0.0
    %8536 = vmatpush1.xpose.msra.mxu0 0.0
    %8537 = vmatprep.subr.mxu0 0.0
    %8538 = vmatpush1.xpose.msra.mxu0 0.0
    %8539 = vmatprep.subr.mxu0 0.0
    %8540 = vmatpush1.xpose.msra.mxu0 0.0
    %8541 = vmatprep.subr.mxu0 0.0
    %8542 = vmatpush1.xpose.msra.mxu0 0.0
    %8543 = vmatprep.subr.mxu0 0.0
    %8544 = vmatpush1.xpose.msra.mxu0 0.0
    %8545 = vmatprep.subr.mxu0 0.0
    %8546 = vmatpush1.xpose.msra.mxu0 0.0
    %8547 = vmatprep.subr.mxu0 0.0
    %8548 = vmatpush1.xpose.msra.mxu0 0.0
    %8549 = vmatprep.subr.mxu0 0.0
    %8550 = vmatpush1.xpose.msra.mxu0 0.0
    %8551 = vmatprep.subr.mxu0 0.0
    %8552 = vmatpush1.xpose.msra.mxu0 0.0
    %8553 = vmatprep.subr.mxu0 0.0
    %8554 = vmatpush1.xpose.msra.mxu0 0.0
    %8555 = vmatprep.subr.mxu0 0.0
    %8556 = vmatpush1.xpose.msra.mxu0 0.0
    %8557 = vmatprep.subr.mxu0 0.0
    %8558 = vmatpush1.xpose.msra.mxu0 0.0
    %8559 = vmatprep.subr.mxu0 0.0
    %8560 = vmatpush1.xpose.msra.mxu0 0.0
    %8561 = vmatprep.subr.mxu0 0.0
    %8562 = vmatpush1.xpose.msra.mxu0 0.0
    %8563 = vmatprep.subr.mxu0 0.0
    %8564 = vmatpush1.xpose.msra.mxu0 0.0
    %8565 = vmatprep.subr.mxu0 0.0
    %8566 = vmatpush1.xpose.msra.mxu0 0.0
    %8567 = vmatprep.subr.mxu0 0.0
    %8568 = vmatpush1.xpose.msra.mxu0 0.0
    %8569 = vmatprep.subr.mxu0 0.0
    %8570 = vmatpush1.xpose.msra.mxu0 0.0
    %8571 = vmatprep.subr.mxu0 0.0
    %8572 = vmatpush1.xpose.msra.mxu0 0.0
    %8573 = vmatprep.subr.mxu0 0.0
    %8574 = vmatpush1.xpose.msra.mxu0 0.0
    %8575 = vmatprep.subr.mxu0 0.0
    %8576 = vmatpush1.xpose.msra.mxu0 0.0
    %8577 = vmatprep.subr.mxu0 0.0
    %8578 = vmatpush1.xpose.msra.mxu0 0.0
    %8579 = vmatprep.subr.mxu0 0.0
    %8580 = vmatpush1.xpose.msra.mxu0 0.0
    %8581 = vmatprep.subr.mxu0 0.0
    %8582 = vmatpush1.xpose.msra.mxu0 0.0
    %8583 = vmatprep.subr.mxu0 0.0
    %8584 = vmatpush1.xpose.msra.mxu0 0.0
    %8585 = vmatprep.subr.mxu0 0.0
    %8586 = vmatpush1.xpose.msra.mxu0 0.0
    %8587 = vmatprep.subr.mxu0 0.0
    %8588 = vmatpush1.xpose.msra.mxu0 0.0
    %8589 = vmatprep.subr.mxu0 0.0
    %8590 = vmatpush1.xpose.msra.mxu0 0.0
    %8591 = vmatprep.mubr.f32.mxu0 0.0
    %8592 = vmatmul.mubr.f32.gmra.mrb[0].mxu0 %v8521
    %v8593 = vpop.f32.mrb[0].mxu0
    %v8594 = vadd.f32 0.0, %v8593
    %v8595 = vpop.f32.mrb[0].mxu0
    %8596 = vdwg.mxu0
    %v8597 = vsel %vm1694, %v8366, -inf
    %8598 = vmax.xlane.f32.xlu0 %v8597
    %v8599 = vpop.xlane.xlu0 %8598
    %v8600 = vsel %vm1694, %v8442, -inf
    %8601 = vmax.xlane.f32.xlu0 %v8600
    %v8602 = vpop.xlane.xlu0 %8601
    %v8603 = vsel %vm1694, %v8518, -inf
    %8604 = vmax.xlane.f32.xlu0 %v8603
    %v8605 = vpop.xlane.xlu0 %8604
    %v8606 = vsel %vm1694, %v8594, -inf
    %8607 = vmax.xlane.f32.xlu0 %v8606
    %v8608 = vpop.xlane.xlu0 %8607
    %v8609 = vsub.f32 %v8366, %v8599
    %v8610 = vsub.f32 %v8442, %v8602
    %v8611 = vsub.f32 %v8518, %v8605
    %v8612 = vsub.f32 %v8594, %v8608
    %v8613 = vmul.f32 %v8609, 1.442695
    %v8614 = vpow.pop %v8613
    %v8615 = vmul.f32 %v8610, 1.442695
    %v8616 = vpow.pop %v8615
    %v8617 = vmul.f32 %v8611, 1.442695
    %v8618 = vpow.pop %v8617
    %v8619 = vmul.f32 %v8612, 1.442695
    %v8620 = vpow.pop %v8619
    %v8621 = vsel %vm1694, %v8614, 0.0
    %8622 = vadd.xlane.f32.xlu0 %v8621
    %v8623 = vpop.xlane.xlu0 %8622
    %v8624 = vsel %vm1694, %v8616, 0.0
    %8625 = vadd.xlane.f32.xlu0 %v8624
    %v8626 = vpop.xlane.xlu0 %8625
    %v8627 = vsel %vm1694, %v8618, 0.0
    %8628 = vadd.xlane.f32.xlu0 %v8627
    %v8629 = vpop.xlane.xlu0 %8628
    %v8630 = vsel %vm1694, %v8620, 0.0
    %8631 = vadd.xlane.f32.xlu0 %v8630
    %v8632 = vpop.xlane.xlu0 %8631
    %v8633 = vrcp.pop %v8623
    %v8634 = vrcp.pop %v8626
    %v8635 = vrcp.pop %v8629
    %v8636 = vrcp.pop %v8632
    %v8637 = vmul.f32 %v8614, %v8633
    %v8638 = vmul.f32 %v8616, %v8634
    %v8639 = vmul.f32 %v8618, %v8635
    %v8640 = vmul.f32 %v8620, %v8636
    %v8642 = vsel %vm1694, %v8637, 0
    %v8644 = vsel %vm1742, %v8252, 0
    %8646 = vmatprep.subr.mxu0 0.0
    %8647 = vmatpush1.msra.mxu0 %v8247
    %8648 = vmatprep.subr.mxu0 0.0
    %8649 = vmatpush1.msra.mxu0 %v8644
    %8650 = vmatprep.subr.mxu0 0.0
    %8651 = vmatpush1.msra.mxu0 0.0
    %8652 = vmatprep.subr.mxu0 0.0
    %8653 = vmatpush1.msra.mxu0 0.0
    %8654 = vmatprep.subr.mxu0 0.0
    %8655 = vmatpush1.msra.mxu0 0.0
    %8656 = vmatprep.subr.mxu0 0.0
    %8657 = vmatpush1.msra.mxu0 0.0
    %8658 = vmatprep.subr.mxu0 0.0
    %8659 = vmatpush1.msra.mxu0 0.0
    %8660 = vmatprep.subr.mxu0 0.0
    %8661 = vmatpush1.msra.mxu0 0.0
    %8662 = vmatprep.subr.mxu0 0.0
    %8663 = vmatpush1.msra.mxu0 0.0
    %8664 = vmatprep.subr.mxu0 0.0
    %8665 = vmatpush1.msra.mxu0 0.0
    %8666 = vmatprep.subr.mxu0 0.0
    %8667 = vmatpush1.msra.mxu0 0.0
    %8668 = vmatprep.subr.mxu0 0.0
    %8669 = vmatpush1.msra.mxu0 0.0
    %8670 = vmatprep.subr.mxu0 0.0
    %8671 = vmatpush1.msra.mxu0 0.0
    %8672 = vmatprep.subr.mxu0 0.0
    %8673 = vmatpush1.msra.mxu0 0.0
    %8674 = vmatprep.subr.mxu0 0.0
    %8675 = vmatpush1.msra.mxu0 0.0
    %8676 = vmatprep.subr.mxu0 0.0
    %8677 = vmatpush1.msra.mxu0 0.0
    %8678 = vmatprep.subr.mxu0 0.0
    %8679 = vmatpush1.msra.mxu0 0.0
    %8680 = vmatprep.subr.mxu0 0.0
    %8681 = vmatpush1.msra.mxu0 0.0
    %8682 = vmatprep.subr.mxu0 0.0
    %8683 = vmatpush1.msra.mxu0 0.0
    %8684 = vmatprep.subr.mxu0 0.0
    %8685 = vmatpush1.msra.mxu0 0.0
    %8686 = vmatprep.subr.mxu0 0.0
    %8687 = vmatpush1.msra.mxu0 0.0
    %8688 = vmatprep.subr.mxu0 0.0
    %8689 = vmatpush1.msra.mxu0 0.0
    %8690 = vmatprep.subr.mxu0 0.0
    %8691 = vmatpush1.msra.mxu0 0.0
    %8692 = vmatprep.subr.mxu0 0.0
    %8693 = vmatpush1.msra.mxu0 0.0
    %8694 = vmatprep.subr.mxu0 0.0
    %8695 = vmatpush1.msra.mxu0 0.0
    %8696 = vmatprep.subr.mxu0 0.0
    %8697 = vmatpush1.msra.mxu0 0.0
    %8698 = vmatprep.subr.mxu0 0.0
    %8699 = vmatpush1.msra.mxu0 0.0
    %8700 = vmatprep.subr.mxu0 0.0
    %8701 = vmatpush1.msra.mxu0 0.0
    %8702 = vmatprep.subr.mxu0 0.0
    %8703 = vmatpush1.msra.mxu0 0.0
    %8704 = vmatprep.subr.mxu0 0.0
    %8705 = vmatpush1.msra.mxu0 0.0
    %8706 = vmatprep.subr.mxu0 0.0
    %8707 = vmatpush1.msra.mxu0 0.0
    %8708 = vmatprep.subr.mxu0 0.0
    %8709 = vmatpush1.msra.mxu0 0.0
    %8710 = vmatprep.mubr.f32.mxu0 0.0
    %8711 = vmatmul.mubr.f32.gmra.mrb[0].mxu0 %v8642
    %v8712 = vpop.f32.mrb[0].mxu0
    %v8713 = vadd.f32 0.0, %v8712
    %v8714 = vpop.f32.mrb[0].mxu0
    %8715 = vdwg.mxu0
    %v8717 = vsel %vm1694, %v8638, 0
    %v8719 = vsel %vm1742, %v8281, 0
    %8721 = vmatprep.subr.mxu0 0.0
    %8722 = vmatpush1.msra.mxu0 %v8279
    %8723 = vmatprep.subr.mxu0 0.0
    %8724 = vmatpush1.msra.mxu0 %v8719
    %8725 = vmatprep.subr.mxu0 0.0
    %8726 = vmatpush1.msra.mxu0 0.0
    %8727 = vmatprep.subr.mxu0 0.0
    %8728 = vmatpush1.msra.mxu0 0.0
    %8729 = vmatprep.subr.mxu0 0.0
    %8730 = vmatpush1.msra.mxu0 0.0
    %8731 = vmatprep.subr.mxu0 0.0
    %8732 = vmatpush1.msra.mxu0 0.0
    %8733 = vmatprep.subr.mxu0 0.0
    %8734 = vmatpush1.msra.mxu0 0.0
    %8735 = vmatprep.subr.mxu0 0.0
    %8736 = vmatpush1.msra.mxu0 0.0
    %8737 = vmatprep.subr.mxu0 0.0
    %8738 = vmatpush1.msra.mxu0 0.0
    %8739 = vmatprep.subr.mxu0 0.0
    %8740 = vmatpush1.msra.mxu0 0.0
    %8741 = vmatprep.subr.mxu0 0.0
    %8742 = vmatpush1.msra.mxu0 0.0
    %8743 = vmatprep.subr.mxu0 0.0
    %8744 = vmatpush1.msra.mxu0 0.0
    %8745 = vmatprep.subr.mxu0 0.0
    %8746 = vmatpush1.msra.mxu0 0.0
    %8747 = vmatprep.subr.mxu0 0.0
    %8748 = vmatpush1.msra.mxu0 0.0
    %8749 = vmatprep.subr.mxu0 0.0
    %8750 = vmatpush1.msra.mxu0 0.0
    %8751 = vmatprep.subr.mxu0 0.0
    %8752 = vmatpush1.msra.mxu0 0.0
    %8753 = vmatprep.subr.mxu0 0.0
    %8754 = vmatpush1.msra.mxu0 0.0
    %8755 = vmatprep.subr.mxu0 0.0
    %8756 = vmatpush1.msra.mxu0 0.0
    %8757 = vmatprep.subr.mxu0 0.0
    %8758 = vmatpush1.msra.mxu0 0.0
    %8759 = vmatprep.subr.mxu0 0.0
    %8760 = vmatpush1.msra.mxu0 0.0
    %8761 = vmatprep.subr.mxu0 0.0
    %8762 = vmatpush1.msra.mxu0 0.0
    %8763 = vmatprep.subr.mxu0 0.0
    %8764 = vmatpush1.msra.mxu0 0.0
    %8765 = vmatprep.subr.mxu0 0.0
    %8766 = vmatpush1.msra.mxu0 0.0
    %8767 = vmatprep.subr.mxu0 0.0
    %8768 = vmatpush1.msra.mxu0 0.0
    %8769 = vmatprep.subr.mxu0 0.0
    %8770 = vmatpush1.msra.mxu0 0.0
    %8771 = vmatprep.subr.mxu0 0.0
    %8772 = vmatpush1.msra.mxu0 0.0
    %8773 = vmatprep.subr.mxu0 0.0
    %8774 = vmatpush1.msra.mxu0 0.0
    %8775 = vmatprep.subr.mxu0 0.0
    %8776 = vmatpush1.msra.mxu0 0.0
    %8777 = vmatprep.subr.mxu0 0.0
    %8778 = vmatpush1.msra.mxu0 0.0
    %8779 = vmatprep.subr.mxu0 0.0
    %8780 = vmatpush1.msra.mxu0 0.0
    %8781 = vmatprep.subr.mxu0 0.0
    %8782 = vmatpush1.msra.mxu0 0.0
    %8783 = vmatprep.subr.mxu0 0.0
    %8784 = vmatpush1.msra.mxu0 0.0
    %8785 = vmatprep.mubr.f32.mxu0 0.0
    %8786 = vmatmul.mubr.f32.gmra.mrb[0].mxu0 %v8717
    %v8787 = vpop.f32.mrb[0].mxu0
    %v8788 = vadd.f32 0.0, %v8787
    %v8789 = vpop.f32.mrb[0].mxu0
    %8790 = vdwg.mxu0
    %v8792 = vsel %vm1694, %v8639, 0
    %v8794 = vsel %vm1742, %v8286, 0
    %8796 = vmatprep.subr.mxu0 0.0
    %8797 = vmatpush1.msra.mxu0 %v8284
    %8798 = vmatprep.subr.mxu0 0.0
    %8799 = vmatpush1.msra.mxu0 %v8794
    %8800 = vmatprep.subr.mxu0 0.0
    %8801 = vmatpush1.msra.mxu0 0.0
    %8802 = vmatprep.subr.mxu0 0.0
    %8803 = vmatpush1.msra.mxu0 0.0
    %8804 = vmatprep.subr.mxu0 0.0
    %8805 = vmatpush1.msra.mxu0 0.0
    %8806 = vmatprep.subr.mxu0 0.0
    %8807 = vmatpush1.msra.mxu0 0.0
    %8808 = vmatprep.subr.mxu0 0.0
    %8809 = vmatpush1.msra.mxu0 0.0
    %8810 = vmatprep.subr.mxu0 0.0
    %8811 = vmatpush1.msra.mxu0 0.0
    %8812 = vmatprep.subr.mxu0 0.0
    %8813 = vmatpush1.msra.mxu0 0.0
    %8814 = vmatprep.subr.mxu0 0.0
    %8815 = vmatpush1.msra.mxu0 0.0
    %8816 = vmatprep.subr.mxu0 0.0
    %8817 = vmatpush1.msra.mxu0 0.0
    %8818 = vmatprep.subr.mxu0 0.0
    %8819 = vmatpush1.msra.mxu0 0.0
    %8820 = vmatprep.subr.mxu0 0.0
    %8821 = vmatpush1.msra.mxu0 0.0
    %8822 = vmatprep.subr.mxu0 0.0
    %8823 = vmatpush1.msra.mxu0 0.0
    %8824 = vmatprep.subr.mxu0 0.0
    %8825 = vmatpush1.msra.mxu0 0.0
    %8826 = vmatprep.subr.mxu0 0.0
    %8827 = vmatpush1.msra.mxu0 0.0
    %8828 = vmatprep.subr.mxu0 0.0
    %8829 = vmatpush1.msra.mxu0 0.0
    %8830 = vmatprep.subr.mxu0 0.0
    %8831 = vmatpush1.msra.mxu0 0.0
    %8832 = vmatprep.subr.mxu0 0.0
    %8833 = vmatpush1.msra.mxu0 0.0
    %8834 = vmatprep.subr.mxu0 0.0
    %8835 = vmatpush1.msra.mxu0 0.0
    %8836 = vmatprep.subr.mxu0 0.0
    %8837 = vmatpush1.msra.mxu0 0.0
    %8838 = vmatprep.subr.mxu0 0.0
    %8839 = vmatpush1.msra.mxu0 0.0
    %8840 = vmatprep.subr.mxu0 0.0
    %8841 = vmatpush1.msra.mxu0 0.0
    %8842 = vmatprep.subr.mxu0 0.0
    %8843 = vmatpush1.msra.mxu0 0.0
    %8844 = vmatprep.subr.mxu0 0.0
    %8845 = vmatpush1.msra.mxu0 0.0
    %8846 = vmatprep.subr.mxu0 0.0
    %8847 = vmatpush1.msra.mxu0 0.0
    %8848 = vmatprep.subr.mxu0 0.0
    %8849 = vmatpush1.msra.mxu0 0.0
    %8850 = vmatprep.subr.mxu0 0.0
    %8851 = vmatpush1.msra.mxu0 0.0
    %8852 = vmatprep.subr.mxu0 0.0
    %8853 = vmatpush1.msra.mxu0 0.0
    %8854 = vmatprep.subr.mxu0 0.0
    %8855 = vmatpush1.msra.mxu0 0.0
    %8856 = vmatprep.subr.mxu0 0.0
    %8857 = vmatpush1.msra.mxu0 0.0
    %8858 = vmatprep.subr.mxu0 0.0
    %8859 = vmatpush1.msra.mxu0 0.0
    %8860 = vmatprep.mubr.f32.mxu0 0.0
    %8861 = vmatmul.mubr.f32.gmra.mrb[0].mxu0 %v8792
    %v8862 = vpop.f32.mrb[0].mxu0
    %v8863 = vadd.f32 0.0, %v8862
    %v8864 = vpop.f32.mrb[0].mxu0
    %8865 = vdwg.mxu0
    %v8867 = vsel %vm1694, %v8640, 0
    %v8869 = vsel %vm1742, %v8291, 0
    %8871 = vmatprep.subr.mxu0 0.0
    %8872 = vmatpush1.msra.mxu0 %v8289
    %8873 = vmatprep.subr.mxu0 0.0
    %8874 = vmatpush1.msra.mxu0 %v8869
    %8875 = vmatprep.subr.mxu0 0.0
    %8876 = vmatpush1.msra.mxu0 0.0
    %8877 = vmatprep.subr.mxu0 0.0
    %8878 = vmatpush1.msra.mxu0 0.0
    %8879 = vmatprep.subr.mxu0 0.0
    %8880 = vmatpush1.msra.mxu0 0.0
    %8881 = vmatprep.subr.mxu0 0.0
    %8882 = vmatpush1.msra.mxu0 0.0
    %8883 = vmatprep.subr.mxu0 0.0
    %8884 = vmatpush1.msra.mxu0 0.0
    %8885 = vmatprep.subr.mxu0 0.0
    %8886 = vmatpush1.msra.mxu0 0.0
    %8887 = vmatprep.subr.mxu0 0.0
    %8888 = vmatpush1.msra.mxu0 0.0
    %8889 = vmatprep.subr.mxu0 0.0
    %8890 = vmatpush1.msra.mxu0 0.0
    %8891 = vmatprep.subr.mxu0 0.0
    %8892 = vmatpush1.msra.mxu0 0.0
    %8893 = vmatprep.subr.mxu0 0.0
    %8894 = vmatpush1.msra.mxu0 0.0
    %8895 = vmatprep.subr.mxu0 0.0
    %8896 = vmatpush1.msra.mxu0 0.0
    %8897 = vmatprep.subr.mxu0 0.0
    %8898 = vmatpush1.msra.mxu0 0.0
    %8899 = vmatprep.subr.mxu0 0.0
    %8900 = vmatpush1.msra.mxu0 0.0
    %8901 = vmatprep.subr.mxu0 0.0
    %8902 = vmatpush1.msra.mxu0 0.0
    %8903 = vmatprep.subr.mxu0 0.0
    %8904 = vmatpush1.msra.mxu0 0.0
    %8905 = vmatprep.subr.mxu0 0.0
    %8906 = vmatpush1.msra.mxu0 0.0
    %8907 = vmatprep.subr.mxu0 0.0
    %8908 = vmatpush1.msra.mxu0 0.0
    %8909 = vmatprep.subr.mxu0 0.0
    %8910 = vmatpush1.msra.mxu0 0.0
    %8911 = vmatprep.subr.mxu0 0.0
    %8912 = vmatpush1.msra.mxu0 0.0
    %8913 = vmatprep.subr.mxu0 0.0
    %8914 = vmatpush1.msra.mxu0 0.0
    %8915 = vmatprep.subr.mxu0 0.0
    %8916 = vmatpush1.msra.mxu0 0.0
    %8917 = vmatprep.subr.mxu0 0.0
    %8918 = vmatpush1.msra.mxu0 0.0
    %8919 = vmatprep.subr.mxu0 0.0
    %8920 = vmatpush1.msra.mxu0 0.0
    %8921 = vmatprep.subr.mxu0 0.0
    %8922 = vmatpush1.msra.mxu0 0.0
    %8923 = vmatprep.subr.mxu0 0.0
    %8924 = vmatpush1.msra.mxu0 0.0
    %8925 = vmatprep.subr.mxu0 0.0
    %8926 = vmatpush1.msra.mxu0 0.0
    %8927 = vmatprep.subr.mxu0 0.0
    %8928 = vmatpush1.msra.mxu0 0.0
    %8929 = vmatprep.subr.mxu0 0.0
    %8930 = vmatpush1.msra.mxu0 0.0
    %8931 = vmatprep.subr.mxu0 0.0
    %8932 = vmatpush1.msra.mxu0 0.0
    %8933 = vmatprep.subr.mxu0 0.0
    %8934 = vmatpush1.msra.mxu0 0.0
    %8935 = vmatprep.mubr.f32.mxu0 0.0
    %8936 = vmatmul.mubr.f32.gmra.mrb[0].mxu0 %v8867
    %v8937 = vpop.f32.mrb[0].mxu0
    %v8938 = vadd.f32 0.0, %v8937
    %v8939 = vpop.f32.mrb[0].mxu0
    %8940 = vdwg.mxu0
    %8942 = vrot.lane.b32.xlu0 %v8788, 8
    %v8943 = vpop.permute.xlu0 %8942
    %8946 = vrot.lane.b32.xlu0 %v8863, 16
    %v8947 = vpop.permute.xlu0 %8946
    %8950 = vrot.lane.b32.xlu0 %v8938, 24
    %v8951 = vpop.permute.xlu0 %8950
    %v8953 = vsel %vm326, %v8713, %v8943
    %v8954 = vsel %vm978, %v8953, %v8947
    %v8955 = vsel %vm980, %v8954, %v8951
    %v8956 = vld [vmem:[%s4348] sm:$0xff]
    %v8957 = vld [vmem:[%s4348 + $0x8] sm:$0xff]
    %v8958 = vld [vmem:[%s4348 + $0x10] sm:$0xff]
    %v8959 = vld [vmem:[%s4348 + $0x18] sm:$0xff]
    %v8960 = vld [vmem:[%s2369 + $0x7] sm:$0x1]
    %v8961 = vlaneseq
    %v8962 = vshrl.u32 %v8961, 7
    %v8963 = vsub.s32 0, %v8962
    %v8964 = vrot.slane %v8960, %v8963
    %v8966 = vsel %vm67, %v8955, 0
    %8968 = vmatprep.subr.mxu0 0.0
    %8969 = vmatpush1.msra.mxu0 %v8956
    %8970 = vmatprep.subr.mxu0 0.0
    %8971 = vmatpush1.msra.mxu0 %v8957
    %8972 = vmatprep.subr.mxu0 0.0
    %8973 = vmatpush1.msra.mxu0 %v8958
    %8974 = vmatprep.subr.mxu0 0.0
    %8975 = vmatpush1.msra.mxu0 %v8959
    %8976 = vmatprep.subr.mxu0 0.0
    %8977 = vmatpush1.msra.mxu0 0.0
    %8978 = vmatprep.subr.mxu0 0.0
    %8979 = vmatpush1.msra.mxu0 0.0
    %8980 = vmatprep.subr.mxu0 0.0
    %8981 = vmatpush1.msra.mxu0 0.0
    %8982 = vmatprep.subr.mxu0 0.0
    %8983 = vmatpush1.msra.mxu0 0.0
    %8984 = vmatprep.subr.mxu0 0.0
    %8985 = vmatpush1.msra.mxu0 0.0
    %8986 = vmatprep.subr.mxu0 0.0
    %8987 = vmatpush1.msra.mxu0 0.0
    %8988 = vmatprep.subr.mxu0 0.0
    %8989 = vmatpush1.msra.mxu0 0.0
    %8990 = vmatprep.subr.mxu0 0.0
    %8991 = vmatpush1.msra.mxu0 0.0
    %8992 = vmatprep.subr.mxu0 0.0
    %8993 = vmatpush1.msra.mxu0 0.0
    %8994 = vmatprep.subr.mxu0 0.0
    %8995 = vmatpush1.msra.mxu0 0.0
    %8996 = vmatprep.subr.mxu0 0.0
    %8997 = vmatpush1.msra.mxu0 0.0
    %8998 = vmatprep.subr.mxu0 0.0
    %8999 = vmatpush1.msra.mxu0 0.0
    %9000 = vmatprep.subr.mxu0 0.0
    %9001 = vmatpush1.msra.mxu0 0.0
    %9002 = vmatprep.subr.mxu0 0.0
    %9003 = vmatpush1.msra.mxu0 0.0
    %9004 = vmatprep.subr.mxu0 0.0
    %9005 = vmatpush1.msra.mxu0 0.0
    %9006 = vmatprep.subr.mxu0 0.0
    %9007 = vmatpush1.msra.mxu0 0.0
    %9008 = vmatprep.subr.mxu0 0.0
    %9009 = vmatpush1.msra.mxu0 0.0
    %9010 = vmatprep.subr.mxu0 0.0
    %9011 = vmatpush1.msra.mxu0 0.0
    %9012 = vmatprep.subr.mxu0 0.0
    %9013 = vmatpush1.msra.mxu0 0.0
    %9014 = vmatprep.subr.mxu0 0.0
    %9015 = vmatpush1.msra.mxu0 0.0
    %9016 = vmatprep.subr.mxu0 0.0
    %9017 = vmatpush1.msra.mxu0 0.0
    %9018 = vmatprep.subr.mxu0 0.0
    %9019 = vmatpush1.msra.mxu0 0.0
    %9020 = vmatprep.subr.mxu0 0.0
    %9021 = vmatpush1.msra.mxu0 0.0
    %9022 = vmatprep.subr.mxu0 0.0
    %9023 = vmatpush1.msra.mxu0 0.0
    %9024 = vmatprep.subr.mxu0 0.0
    %9025 = vmatpush1.msra.mxu0 0.0
    %9026 = vmatprep.subr.mxu0 0.0
    %9027 = vmatpush1.msra.mxu0 0.0
    %9028 = vmatprep.subr.mxu0 0.0
    %9029 = vmatpush1.msra.mxu0 0.0
    %9030 = vmatprep.subr.mxu0 0.0
    %9031 = vmatpush1.msra.mxu0 0.0
    %9032 = vmatprep.mubr.f32.mxu0 0.0
    %9033 = vmatmul.mubr.f32.gmra.mrb[0].mxu0 %v8966
    %v9034 = vpop.f32.mrb[0].mxu0
    %v9035 = vadd.f32 %v8964, %v9034
    %v9036 = vpop.f32.mrb[0].mxu0
    %9037 = vdwg.mxu0
    %v9038 = vadd.f32 %v8003, %v9035
    %v9039 = vld [vmem:[%s4 + $0x4] sm:$0x1]
    %v9040 = vld [vmem:[%s5 + $0x4] sm:$0x1]
    %v9041 = vsel %vm67, %v9038, 0.0
    %9042 = vadd.xlane.f32.xlu0 %v9041
    %v9043 = vpop.xlane.xlu0 %9042
    %v9044 = vmul.f32 %v9043, %v1071
    %v9045 = vsub.f32 %v9038, %v9044
    %v9046 = vmul.f32 %v9045, %v9045
    %v9047 = vsel %vm67, %v9046, 0.0
    %9048 = vadd.xlane.f32.xlu0 %v9047
    %v9049 = vpop.xlane.xlu0 %9048
    %v9050 = vmul.f32 %v9049, %v1071
    %v9051 = vadd.f32 %v9050, 1e-05
    %v9052 = vrsqrt.pop %v9051
    %v9053 = vmul.f32 %v9045, %v9052
    %v9054 = vlaneseq
    %v9055 = vshrl.u32 %v9054, 7
    %v9056 = vsub.s32 0, %v9055
    %v9057 = vrot.slane %v9039, %v9056
    %v9058 = vmul.f32 %v9053, %v9057
    %v9059 = vlaneseq
    %v9060 = vshrl.u32 %v9059, 7
    %v9061 = vsub.s32 0, %v9060
    %v9062 = vrot.slane %v9040, %v9061
    %v9063 = vadd.f32 %v9058, %v9062
    %v9064 = vld [vmem:[%s4457] sm:$0xff]
    %v9065 = vld [vmem:[%s4457 + $0x8] sm:$0xff]
    %v9066 = vld [vmem:[%s4457 + $0x10] sm:$0xff]
    %v9067 = vld [vmem:[%s4457 + $0x18] sm:$0xff]
    %v9068 = vld [vmem:[%s4462] sm:$0x1]
    %v9070 = vlaneseq
    %v9071 = vshrl.u32 %v9070, 7
    %v9072 = vsub.s32 0, %v9071
    %v9073 = vrot.slane %v9068, %v9072
    %v9076 = vsel %vm67, %v9063, 0
    %9078 = vmatprep.subr.mxu0 0.0
    %9079 = vmatpush1.msra.mxu0 %v9064
    %9080 = vmatprep.subr.mxu0 0.0
    %9081 = vmatpush1.msra.mxu0 %v9065
    %9082 = vmatprep.subr.mxu0 0.0
    %9083 = vmatpush1.msra.mxu0 %v9066
    %9084 = vmatprep.subr.mxu0 0.0
    %9085 = vmatpush1.msra.mxu0 %v9067
    %9086 = vmatprep.subr.mxu0 0.0
    %9087 = vmatpush1.msra.mxu0 0.0
    %9088 = vmatprep.subr.mxu0 0.0
    %9089 = vmatpush1.msra.mxu0 0.0
    %9090 = vmatprep.subr.mxu0 0.0
    %9091 = vmatpush1.msra.mxu0 0.0
    %9092 = vmatprep.subr.mxu0 0.0
    %9093 = vmatpush1.msra.mxu0 0.0
    %9094 = vmatprep.subr.mxu0 0.0
    %9095 = vmatpush1.msra.mxu0 0.0
    %9096 = vmatprep.subr.mxu0 0.0
    %9097 = vmatpush1.msra.mxu0 0.0
    %9098 = vmatprep.subr.mxu0 0.0
    %9099 = vmatpush1.msra.mxu0 0.0
    %9100 = vmatprep.subr.mxu0 0.0
    %9101 = vmatpush1.msra.mxu0 0.0
    %9102 = vmatprep.subr.mxu0 0.0
    %9103 = vmatpush1.msra.mxu0 0.0
    %9104 = vmatprep.subr.mxu0 0.0
    %9105 = vmatpush1.msra.mxu0 0.0
    %9106 = vmatprep.subr.mxu0 0.0
    %9107 = vmatpush1.msra.mxu0 0.0
    %9108 = vmatprep.subr.mxu0 0.0
    %9109 = vmatpush1.msra.mxu0 0.0
    %9110 = vmatprep.subr.mxu0 0.0
    %9111 = vmatpush1.msra.mxu0 0.0
    %9112 = vmatprep.subr.mxu0 0.0
    %9113 = vmatpush1.msra.mxu0 0.0
    %9114 = vmatprep.subr.mxu0 0.0
    %9115 = vmatpush1.msra.mxu0 0.0
    %9116 = vmatprep.subr.mxu0 0.0
    %9117 = vmatpush1.msra.mxu0 0.0
    %9118 = vmatprep.subr.mxu0 0.0
    %9119 = vmatpush1.msra.mxu0 0.0
    %9120 = vmatprep.subr.mxu0 0.0
    %9121 = vmatpush1.msra.mxu0 0.0
    %9122 = vmatprep.subr.mxu0 0.0
    %9123 = vmatpush1.msra.mxu0 0.0
    %9124 = vmatprep.subr.mxu0 0.0
    %9125 = vmatpush1.msra.mxu0 0.0
    %9126 = vmatprep.subr.mxu0 0.0
    %9127 = vmatpush1.msra.mxu0 0.0
    %9128 = vmatprep.subr.mxu0 0.0
    %9129 = vmatpush1.msra.mxu0 0.0
    %9130 = vmatprep.subr.mxu0 0.0
    %9131 = vmatpush1.msra.mxu0 0.0
    %9132 = vmatprep.subr.mxu0 0.0
    %9133 = vmatpush1.msra.mxu0 0.0
    %9134 = vmatprep.subr.mxu0 0.0
    %9135 = vmatpush1.msra.mxu0 0.0
    %9136 = vmatprep.subr.mxu0 0.0
    %9137 = vmatpush1.msra.mxu0 0.0
    %9138 = vmatprep.subr.mxu0 0.0
    %9139 = vmatpush1.msra.mxu0 0.0
    %9140 = vmatprep.subr.mxu0 0.0
    %9141 = vmatpush1.msra.mxu0 0.0
    %9142 = vmatprep.mubr.f32.mxu0 0.0
    %9143 = vmatmul.mubr.f32.gmra.mrb[0].mxu0 %v9076
    %v9144 = vpop.f32.mrb[0].mxu0
    %v9145 = vadd.f32 %v9073, %v9144
    %v9146 = vpop.f32.mrb[0].mxu0
    %9147 = vdwg.mxu0
    %v9148 = vmax.f32 %v9145, 0.0
    %v9149 = vld [vmem:[%s4544] sm:$0xff]
    %v9150 = vld [vmem:[%s4544 + $0x8] sm:$0xff]
    %v9151 = vld [vmem:[%s4544 + $0x10] sm:$0xff]
    %v9152 = vld [vmem:[%s4544 + $0x18] sm:$0xff]
    %v9153 = vld [vmem:[%s4544 + $0x20] sm:$0xff]
    %v9154 = vld [vmem:[%s4544 + $0x28] sm:$0xff]
    %v9155 = vld [vmem:[%s4544 + $0x30] sm:$0xff]
    %v9156 = vld [vmem:[%s4544 + $0x38] sm:$0xff]
    %v9157 = vld [vmem:[%s4553] sm:$0x1]
    %v9159 = vlaneseq
    %v9160 = vshrl.u32 %v9159, 7
    %v9161 = vsub.s32 0, %v9160
    %v9162 = vrot.slane %v9157, %v9161
    %v9165 = vsel %vm2264, %v9148, 0
    %9167 = vmatprep.subr.mxu0 0.0
    %9168 = vmatpush1.msra.mxu0 %v9149
    %9169 = vmatprep.subr.mxu0 0.0
    %9170 = vmatpush1.msra.mxu0 %v9150
    %9171 = vmatprep.subr.mxu0 0.0
    %9172 = vmatpush1.msra.mxu0 %v9151
    %9173 = vmatprep.subr.mxu0 0.0
    %9174 = vmatpush1.msra.mxu0 %v9152
    %9175 = vmatprep.subr.mxu0 0.0
    %9176 = vmatpush1.msra.mxu0 %v9153
    %9177 = vmatprep.subr.mxu0 0.0
    %9178 = vmatpush1.msra.mxu0 %v9154
    %9179 = vmatprep.subr.mxu0 0.0
    %9180 = vmatpush1.msra.mxu0 %v9155
    %9181 = vmatprep.subr.mxu0 0.0
    %9182 = vmatpush1.msra.mxu0 %v9156
    %9183 = vmatprep.subr.mxu0 0.0
    %9184 = vmatpush1.msra.mxu0 0.0
    %9185 = vmatprep.subr.mxu0 0.0
    %9186 = vmatpush1.msra.mxu0 0.0
    %9187 = vmatprep.subr.mxu0 0.0
    %9188 = vmatpush1.msra.mxu0 0.0
    %9189 = vmatprep.subr.mxu0 0.0
    %9190 = vmatpush1.msra.mxu0 0.0
    %9191 = vmatprep.subr.mxu0 0.0
    %9192 = vmatpush1.msra.mxu0 0.0
    %9193 = vmatprep.subr.mxu0 0.0
    %9194 = vmatpush1.msra.mxu0 0.0
    %9195 = vmatprep.subr.mxu0 0.0
    %9196 = vmatpush1.msra.mxu0 0.0
    %9197 = vmatprep.subr.mxu0 0.0
    %9198 = vmatpush1.msra.mxu0 0.0
    %9199 = vmatprep.subr.mxu0 0.0
    %9200 = vmatpush1.msra.mxu0 0.0
    %9201 = vmatprep.subr.mxu0 0.0
    %9202 = vmatpush1.msra.mxu0 0.0
    %9203 = vmatprep.subr.mxu0 0.0
    %9204 = vmatpush1.msra.mxu0 0.0
    %9205 = vmatprep.subr.mxu0 0.0
    %9206 = vmatpush1.msra.mxu0 0.0
    %9207 = vmatprep.subr.mxu0 0.0
    %9208 = vmatpush1.msra.mxu0 0.0
    %9209 = vmatprep.subr.mxu0 0.0
    %9210 = vmatpush1.msra.mxu0 0.0
    %9211 = vmatprep.subr.mxu0 0.0
    %9212 = vmatpush1.msra.mxu0 0.0
    %9213 = vmatprep.subr.mxu0 0.0
    %9214 = vmatpush1.msra.mxu0 0.0
    %9215 = vmatprep.subr.mxu0 0.0
    %9216 = vmatpush1.msra.mxu0 0.0
    %9217 = vmatprep.subr.mxu0 0.0
    %9218 = vmatpush1.msra.mxu0 0.0
    %9219 = vmatprep.subr.mxu0 0.0
    %9220 = vmatpush1.msra.mxu0 0.0
    %9221 = vmatprep.subr.mxu0 0.0
    %9222 = vmatpush1.msra.mxu0 0.0
    %9223 = vmatprep.subr.mxu0 0.0
    %9224 = vmatpush1.msra.mxu0 0.0
    %9225 = vmatprep.subr.mxu0 0.0
    %9226 = vmatpush1.msra.mxu0 0.0
    %9227 = vmatprep.subr.mxu0 0.0
    %9228 = vmatpush1.msra.mxu0 0.0
    %9229 = vmatprep.subr.mxu0 0.0
    %9230 = vmatpush1.msra.mxu0 0.0
    %9231 = vmatprep.mubr.f32.mxu0 0.0
    %9232 = vmatmul.mubr.f32.gmra.mrb[0].mxu0 %v9165
    %v9233 = vpop.f32.mrb[0].mxu0
    %v9234 = vadd.f32 %v9162, %v9233
    %v9235 = vpop.f32.mrb[0].mxu0
    %9236 = vdwg.mxu0
    %v9237 = vadd.f32 %v9063, %v9234
    %v9238 = vld [vmem:[%s4 + $0x5] sm:$0x1]
    %v9239 = vld [vmem:[%s5 + $0x5] sm:$0x1]
    %v9240 = vsel %vm67, %v9237, 0.0
    %9241 = vadd.xlane.f32.xlu0 %v9240
    %v9242 = vpop.xlane.xlu0 %9241
    %v9243 = vmul.f32 %v9242, %v1071
    %v9244 = vsub.f32 %v9237, %v9243
    %v9245 = vmul.f32 %v9244, %v9244
    %v9246 = vsel %vm67, %v9245, 0.0
    %9247 = vadd.xlane.f32.xlu0 %v9246
    %v9248 = vpop.xlane.xlu0 %9247
    %v9249 = vmul.f32 %v9248, %v1071
    %v9250 = vadd.f32 %v9249, 1e-05
    %v9251 = vrsqrt.pop %v9250
    %v9252 = vmul.f32 %v9244, %v9251
    %v9253 = vlaneseq
    %v9254 = vshrl.u32 %v9253, 7
    %v9255 = vsub.s32 0, %v9254
    %v9256 = vrot.slane %v9238, %v9255
    %v9257 = vmul.f32 %v9252, %v9256
    %v9258 = vlaneseq
    %v9259 = vshrl.u32 %v9258, 7
    %v9260 = vsub.s32 0, %v9259
    %v9261 = vrot.slane %v9239, %v9260
    %v9262 = vadd.f32 %v9257, %v9261
    %v9263 = vld [vmem:[%s4 + $0x6] sm:$0x1]
    %v9264 = vld [vmem:[%s5 + $0x6] sm:$0x1]
    %v9265 = vsel %vm67, %v9262, 0.0
    %9266 = vadd.xlane.f32.xlu0 %v9265
    %v9267 = vpop.xlane.xlu0 %9266
    %v9268 = vmul.f32 %v9267, %v1071
    %v9269 = vsub.f32 %v9262, %v9268
    %v9270 = vmul.f32 %v9269, %v9269
    %v9271 = vsel %vm67, %v9270, 0.0
    %9272 = vadd.xlane.f32.xlu0 %v9271
    %v9273 = vpop.xlane.xlu0 %9272
    %v9274 = vmul.f32 %v9273, %v1071
    %v9275 = vadd.f32 %v9274, 1e-05
    %v9276 = vrsqrt.pop %v9275
    %v9277 = vmul.f32 %v9269, %v9276
    %v9278 = vlaneseq
    %v9279 = vshrl.u32 %v9278, 7
    %v9280 = vsub.s32 0, %v9279
    %v9281 = vrot.slane %v9263, %v9280
    %v9282 = vmul.f32 %v9277, %v9281
    %v9283 = vlaneseq
    %v9284 = vshrl.u32 %v9283, 7
    %v9285 = vsub.s32 0, %v9284
    %v9286 = vrot.slane %v9264, %v9285
    %v9287 = vadd.f32 %v9282, %v9286
    %s9288 = scalar_lea.vmem [#allocation5], 8
    %9289 = vst.msk [vmem:[%s9288] sm:$0xff] %vm67, %v9287
    // Predicated region
    $region46: #{decoder_forward.1} parent=1 // pred_check
      _
    $region47: #{decoder_forward.1} parent=1 // pred_check_branch
      %9291 = sbr.rel (0) target = $region49
    $region48: #{decoder_forward.1} parent=1 // pred_region
      %s9293 = ssub.s32 256, 256
      %9294 = vsyncadd [#allocation4], %s9293
      %s9295 = sshll.u32 [#allocation5], 4
      %s9296 = int_to_ptr.vmem [resolvable:$true] %s9295
      %9301 = dma.vmem_to_hbm [thread:$0]  %s9296, 256, %s10, [#allocation4], 128, 128, 8
    $region49: #{decoder_forward.1} parent=1 // pred_fallthru
      _
    // Predicated region
    $region50: #{decoder_forward.1} parent=1 // pred_check
      _
    $region51: #{decoder_forward.1} parent=1 // pred_check_branch
      %9303 = sbr.rel (0) target = $region53
    $region52: #{decoder_forward.1} parent=1 // pred_region
      %9304 = dma.done [#allocation4], 256
    $region53: #{decoder_forward.1} parent=1 // pred_fallthru
      _
    %9305 = vsyncpa [#allocation3], 1
    %9306 = vsyncpa [#allocation4], 1

</llo_original>
